<compile_context>
chip_gen: v5e
topology: v5e:2x2
jax: 0.10.0
libtpu: 0.0.40
codegen_flags: <defaults>
</compile_context>

<pallas_src>
import math

import jax
import jax.numpy as jnp
from jax import lax
from jax.experimental import pallas as pl
from jax.experimental.pallas import tpu as pltpu


# ----------------------------------------------------------------------------
# Static sizes (flat-spatial "full-width" indexing, see kernel comments)
# ----------------------------------------------------------------------------
LANE = 128          # every matmul output / channel axis is padded to 128 lanes
K1 = 80             # conv1 im2col contraction: 25 taps * 3 ch = 75, padded to 80
M1 = 904            # conv1 rows computed at flat q = 32*oh + ow   (needs >= 897)
L1 = 864            # pool1 rows computed                          (needs >= 864)
M2 = 600            # conv2 rows computed at flat p = 64*h2 + 2*w2 (needs >= 595)
L2 = 529            # pool2 rows computed                          (needs >= 529)
ZROWS = M2 + 256    # rows per dj-shifted copy of pool1 output (856 <= L1 - 8)


# ----------------------------------------------------------------------------
# The single fused kernel (one sample per grid step)
# ----------------------------------------------------------------------------
def _toy_fwd_kernel(x_ref, w1_ref, b1_ref, w2_ref, b2_ref,
                    wf1_ref, bf1_ref, wf2_ref, bf2_ref, wf3_ref, bf3_ref,
                    o_ref):
    f32 = jnp.float32
    lhs = x_ref[0]                                       # (M1, 80) im2col rows

    # ---- conv1 (5x5, 3->6) + bias + ReLU: ONE lane-dense MXU matmul ---------
    # Row q = 32*oh + ow of `lhs` already holds the 75 im2col taps (built in the
    # wrapper); rows with ow >= 28 / oh >= 28 are zero and their outputs are
    # garbage that is never consumed downstream.
    y1 = jnp.maximum(jnp.dot(lhs, w1_ref[...], preferred_element_type=f32)
                     + b1_ref[...], 0.0)                 # (M1, 128), cols>=6 are 0

    # ---- maxpool1 2x2/2 (shift-and-max) --------------------------------------
    # pooled1(po,qo) lives at z1 row 64*po + 2*qo.
    z1 = jnp.maximum(jnp.maximum(y1[0:L1], y1[1:1 + L1]),
                     jnp.maximum(y1[32:32 + L1], y1[33:33 + L1]))   # (L1, 128)

    # ---- conv2 (5x5, 6->16) + bias + ReLU ------------------------------------
    # y2[p, oc] for p = 64*h2 + 2*w2; tap offset in z1 is 64*di + 2*dj.
    # Hoist the 5 sublane-misaligned "+2*dj" shifts out of the 25-tap loop so the
    # per-tap slices are 64-aligned (multiples of 8 sublanes).
    z1s = [z1[2 * dj: 2 * dj + ZROWS] for dj in range(5)]           # 5 x (856,128)
    acc2 = jnp.zeros((M2, LANE), f32)
    for di in range(5):
        base = 64 * di
        for dj in range(5):
            acc2 = acc2 + jnp.dot(z1s[dj][base:base + M2, 0:6],
                                  w2_ref[di * 5 + dj],
                                  preferred_element_type=f32)
    y2 = jnp.maximum(acc2 + b2_ref[...], 0.0)             # (M2, 128), cols>=16 are 0

    # ---- maxpool2 2x2/2 (shift-and-max) --------------------------------------
    # pooled2(po2,qo2) lives at z2 row 128*po2 + 4*qo2.
    z2 = jnp.maximum(jnp.maximum(y2[0:L2], y2[2:2 + L2]),
                     jnp.maximum(y2[64:64 + L2], y2[66:66 + L2]))   # (L2, 128)

    # ---- fc1 (400 -> 120) + ReLU ---------------------------------------------
    # The PyTorch flatten order (c*25 + po*5 + qo) is folded into the pre-permuted
    # fc1 weight (wf1_ref[s] handles spatial position s for all 16 channels).
    acc3 = jnp.zeros((1, LANE), f32)
    for po in range(5):
        for qo in range(5):
            r = 128 * po + 4 * qo
            acc3 = acc3 + jnp.dot(z2[r:r + 1, 0:16], wf1_ref[po * 5 + qo],
                                  preferred_element_type=f32)
    h1 = jnp.maximum(acc3 + bf1_ref[...], 0.0)            # (1,128), cols>=120 are 0

    # ---- fc2 (120 -> 84) + ReLU, fc3 (84 -> 10) ------------------------------
    h2 = jnp.maximum(jnp.dot(h1, wf2_ref[...], preferred_element_type=f32)
                     + bf2_ref[...], 0.0)                 # (1,128), cols>=84 are 0
    out = jnp.dot(h2, wf3_ref[...], preferred_element_type=f32) + bf3_ref[...]
    o_ref[0] = out.astype(o_ref.dtype)                    # (1,128); cols>=10 are 0


# ----------------------------------------------------------------------------
# One-time parameter prep: permute / transpose / zero-pad to MXU-native layout
# ----------------------------------------------------------------------------
def prepare_params(params):
    f32 = jnp.float32

    def pad_cols(a, rows):
        out = jnp.zeros((rows, LANE), f32)
        return out.at[:a.shape[0], :a.shape[1]].set(a.astype(f32))

    # conv1: (6,3,5,5) -> single im2col weight (80,128):
    #        w1t[3*(5*di+dj)+c, oc] = w[oc, c, di, dj]
    w1 = params["conv1_w"].transpose(2, 3, 1, 0).reshape(75, 6).astype(f32)
    w1t = jnp.zeros((K1, LANE), f32).at[:75, :6].set(w1)
    b1 = jnp.zeros((1, LANE), f32).at[0, :6].set(params["conv1_b"])

    # conv2: (16,6,5,5) -> taps (25,6,128): w2t[di*5+dj, c, oc] = w[oc, c, di, dj]
    w2 = params["conv2_w"].transpose(2, 3, 1, 0).reshape(25, 6, 16)
    w2t = jnp.zeros((25, 6, LANE), f32).at[:, :, :16].set(w2)
    b2 = jnp.zeros((1, LANE), f32).at[0, :16].set(params["conv2_b"])

    # fc1: (120,400), input index = c*25 + (po*5+qo)  ->  (25,16,128): [s, c, j]
    wf1 = params["fc1_w"].reshape(120, 16, 25).transpose(2, 1, 0)   # (25,16,120)
    wf1t = jnp.zeros((25, 16, LANE), f32).at[:, :, :120].set(wf1)
    bf1 = jnp.zeros((1, LANE), f32).at[0, :120].set(params["fc1_b"])

    # fc2 / fc3: pre-transposed and zero-padded to (128,128)
    wf2t = pad_cols(params["fc2_w"].T, LANE)
    bf2 = jnp.zeros((1, LANE), f32).at[0, :84].set(params["fc2_b"])
    wf3t = pad_cols(params["fc3_w"].T, LANE)
    bf3 = jnp.zeros((1, LANE), f32).at[0, :10].set(params["fc3_b"])

    return dict(w1=w1t, b1=b1, w2=w2t, b2=b2, wf1=wf1t, bf1=bf1,
                wf2=wf2t, bf2=bf2, wf3=wf3t, bf3=bf3)


# ----------------------------------------------------------------------------
# Forward wrapper: one pallas_call for the whole model
# ----------------------------------------------------------------------------
def toy_model_forward(prepped, x):
    """x: (N, 3, 32, 32) float32 -> logits (N, 10)."""
    N = x.shape[0]

    # Layout plumbing only (traced XLA, outside the kernel): build the conv1
    # im2col rows at flat index q = 32*oh + ow.  Lane s = 3*(5*di+dj)+c holds
    # x[oh+di, ow+dj, c]; columns ow>=28 and the K tail (75..79) are zero.
    xp = jnp.transpose(x, (0, 2, 3, 1)).astype(jnp.float32)        # (N,32,32,3)
    taps = []
    for di in range(5):
        for dj in range(5):
            taps.append(xp[:, di:di + 28, dj:dj + 28, :])          # (N,28,28,3)
    lhs = jnp.concatenate(taps, axis=-1)                           # (N,28,28,75)
    lhs = jnp.pad(lhs, ((0, 0), (0, 0), (0, 4), (0, K1 - 75)))     # (N,28,32,80)
    lhs = lhs.reshape(N, 28 * 32, K1)                              # q = 32*oh+ow
    lhs = jnp.pad(lhs, ((0, 0), (0, M1 - 28 * 32), (0, 0)))        # (N,M1,80)

    const2 = lambda n: (0, 0)
    const3 = lambda n: (0, 0, 0)

    out = pl.pallas_call(
        _toy_fwd_kernel,
        out_shape=jax.ShapeDtypeStruct((N, 1, LANE), x.dtype),
        grid=(N,),
        in_specs=[
            pl.BlockSpec((1, M1, K1), lambda n: (n, 0, 0)),      # per-sample im2col
            pl.BlockSpec((K1, LANE), const2),                    # conv1 weight
            pl.BlockSpec((1, LANE), const2),                     # conv1 bias
            pl.BlockSpec((25, 6, LANE), const3),                 # conv2 taps
            pl.BlockSpec((1, LANE), const2),                     # conv2 bias
            pl.BlockSpec((25, 16, LANE), const3),                # fc1 (per position)
            pl.BlockSpec((1, LANE), const2),                     # fc1 bias
            pl.BlockSpec((LANE, LANE), const2),                  # fc2
            pl.BlockSpec((1, LANE), const2),                     # fc2 bias
            pl.BlockSpec((LANE, LANE), const2),                  # fc3
            pl.BlockSpec((1, LANE), const2),                     # fc3 bias
        ],
        out_specs=pl.BlockSpec((1, 1, LANE), lambda n: (n, 0, 0)),
        compiler_params=pltpu.CompilerParams(
            dimension_semantics=("parallel",),
            vmem_limit_bytes=32 * 1024 * 1024),
    )(lhs, prepped["w1"], prepped["b1"], prepped["w2"], prepped["b2"],
      prepped["wf1"], prepped["bf1"], prepped["wf2"], prepped["bf2"],
      prepped["wf3"], prepped["bf3"])
    return out.reshape(N, LANE)[:, :10]


# ----------------------------------------------------------------------------
# Deterministic parameter init (PyTorch default-style U(-1/sqrt(fan_in), +..))
# ----------------------------------------------------------------------------
def init_params(key):
    def u(k, shape, fan_in):
        bound = 1.0 / math.sqrt(fan_in)
        return jax.random.uniform(k, shape, jnp.float32, -bound, bound)

    ks = jax.random.split(key, 10)
    return {
        "conv1_w": u(ks[0], (6, 3, 5, 5), 3 * 5 * 5),
        "conv1_b": u(ks[1], (6,), 3 * 5 * 5),
        "conv2_w": u(ks[2], (16, 6, 5, 5), 6 * 5 * 5),
        "conv2_b": u(ks[3], (16,), 6 * 5 * 5),
        "fc1_w": u(ks[4], (120, 400), 400),
        "fc1_b": u(ks[5], (120,), 400),
        "fc2_w": u(ks[6], (84, 120), 120),
        "fc2_b": u(ks[7], (84,), 120),
        "fc3_w": u(ks[8], (10, 84), 84),
        "fc3_b": u(ks[9], (10,), 84),
    }


# Pure-JAX reference (not part of the kernel path) for a correctness check.
def reference_forward(params, x):
    def conv(x, w, b):
        y = lax.conv_general_dilated(
            x, w, (1, 1), "VALID",
            dimension_numbers=("NCHW", "OIHW", "NCHW"),
            precision=lax.Precision.HIGHEST)
        return jax.nn.relu(y + b[None, :, None, None])

    def pool(x):
        return lax.reduce_window(x, -jnp.inf, lax.max,
                                 (1, 1, 2, 2), (1, 1, 2, 2), "VALID")

    def fc(x, w, b, relu):
        y = jnp.dot(x, w.T, precision=lax.Precision.HIGHEST) + b
        return jax.nn.relu(y) if relu else y

    x = pool(conv(x, params["conv1_w"], params["conv1_b"]))
    x = pool(conv(x, params["conv2_w"], params["conv2_b"]))
    x = x.reshape(-1, 16 * 5 * 5)
    x = fc(x, params["fc1_w"], params["fc1_b"], True)
    x = fc(x, params["fc2_w"], params["fc2_b"], True)
    x = fc(x, params["fc3_w"], params["fc3_b"], False)
    return x


if __name__ == "__main__":
    key = jax.random.PRNGKey(0)
    params = init_params(key)
    prepped = prepare_params(params)
    # Spatial size must be 32x32 so the flatten is 16*5*5 (as the module implies).
    x = jax.random.normal(jax.random.fold_in(key, 123), (2, 3, 32, 32), jnp.float32)

    out = toy_model_forward(prepped, x)
    out = jax.block_until_ready(out)
    assert out.shape == (2, 10), out.shape

    ref = reference_forward(params, x)
    assert jnp.allclose(out, ref, atol=2e-3, rtol=2e-3), (
        float(jnp.max(jnp.abs(out - ref))))

    print("KERNEL_OK")
</pallas_src>

<mosaic_0001>
module attributes {stable_mosaic.version = 11 : i64} {
  func.func @_toy_fwd_kernel(%arg0: i32, %arg1: memref<1x904x80xf32, #tpu.memory_space<vmem>>, %arg2: memref<80x128xf32, #tpu.memory_space<vmem>>, %arg3: memref<1x128xf32, #tpu.memory_space<vmem>>, %arg4: memref<25x6x128xf32, #tpu.memory_space<vmem>>, %arg5: memref<1x128xf32, #tpu.memory_space<vmem>>, %arg6: memref<25x16x128xf32, #tpu.memory_space<vmem>>, %arg7: memref<1x128xf32, #tpu.memory_space<vmem>>, %arg8: memref<128x128xf32, #tpu.memory_space<vmem>>, %arg9: memref<1x128xf32, #tpu.memory_space<vmem>>, %arg10: memref<128x128xf32, #tpu.memory_space<vmem>>, %arg11: memref<1x128xf32, #tpu.memory_space<vmem>>, %arg12: memref<1x1x128xf32, #tpu.memory_space<vmem>>) attributes {dimension_semantics = [#tpu.dimension_semantics<parallel>], iteration_bounds = array<i64: 2>, scalar_prefetch = 0 : i64, scratch_operands = 0 : i64, tpu.core_type = #tpu.core_type<tc>, window_params = [{transform_indices = @transform_0, window_bounds = array<i64: 1, 904, 80>}, {pipeline_mode = #tpu.pipeline_mode<synchronous>, transform_indices = @transform_1, window_bounds = array<i64: 80, 128>}, {pipeline_mode = #tpu.pipeline_mode<synchronous>, transform_indices = @transform_2, window_bounds = array<i64: 1, 128>}, {pipeline_mode = #tpu.pipeline_mode<synchronous>, transform_indices = @transform_3, window_bounds = array<i64: 25, 6, 128>}, {pipeline_mode = #tpu.pipeline_mode<synchronous>, transform_indices = @transform_4, window_bounds = array<i64: 1, 128>}, {pipeline_mode = #tpu.pipeline_mode<synchronous>, transform_indices = @transform_5, window_bounds = array<i64: 25, 16, 128>}, {pipeline_mode = #tpu.pipeline_mode<synchronous>, transform_indices = @transform_6, window_bounds = array<i64: 1, 128>}, {pipeline_mode = #tpu.pipeline_mode<synchronous>, transform_indices = @transform_7, window_bounds = array<i64: 128, 128>}, {pipeline_mode = #tpu.pipeline_mode<synchronous>, transform_indices = @transform_8, window_bounds = array<i64: 1, 128>}, {pipeline_mode = #tpu.pipeline_mode<synchronous>, transform_indices = @transform_9, window_bounds = array<i64: 128, 128>}, {pipeline_mode = #tpu.pipeline_mode<synchronous>, transform_indices = @transform_10, window_bounds = array<i64: 1, 128>}, {transform_indices = @transform_11, window_bounds = array<i64: 1, 1, 128>}]} {
    %c0 = arith.constant 0 : index
    %c0_0 = arith.constant 0 : index
    %c0_1 = arith.constant 0 : index
    %0 = vector.load %arg1[%c0, %c0_0, %c0_1] : memref<1x904x80xf32, #tpu.memory_space<vmem>>, vector<1x904x80xf32>
    %1 = vector.shape_cast %0 : vector<1x904x80xf32> to vector<904x80xf32>
    %c0_2 = arith.constant 0 : index
    %c0_3 = arith.constant 0 : index
    %2 = vector.load %arg2[%c0_2, %c0_3] : memref<80x128xf32, #tpu.memory_space<vmem>>, vector<80x128xf32>
    %cst = arith.constant dense<0.000000e+00> : vector<904x128xf32>
    %3 = tpu.matmul %1, %2, %cst {dimension_numbers = #tpu.dot_dimension_numbers<[1], [0], [0], [1], [0, 0, 1, 1], [], []>} : vector<904x80xf32>, vector<80x128xf32>, vector<904x128xf32> -> vector<904x128xf32>
    %c0_4 = arith.constant 0 : index
    %c0_5 = arith.constant 0 : index
    %4 = vector.load %arg3[%c0_4, %c0_5] : memref<1x128xf32, #tpu.memory_space<vmem>>, vector<1x128xf32>
    %5 = vector.broadcast %4 : vector<1x128xf32> to vector<904x128xf32>
    %6 = arith.addf %3, %5 : vector<904x128xf32>
    %cst_6 = arith.constant 0.000000e+00 : f32
    %7 = vector.broadcast %cst_6 : f32 to vector<904x128xf32>
    %8 = arith.maximumf %6, %7 : vector<904x128xf32>
    %9 = vector.extract_strided_slice %8 {offsets = [0, 0], sizes = [864, 128], strides = [1, 1]} : vector<904x128xf32> to vector<864x128xf32>
    %10 = vector.extract_strided_slice %8 {offsets = [1, 0], sizes = [864, 128], strides = [1, 1]} : vector<904x128xf32> to vector<864x128xf32>
    %11 = arith.maximumf %9, %10 : vector<864x128xf32>
    %12 = vector.extract_strided_slice %8 {offsets = [32, 0], sizes = [864, 128], strides = [1, 1]} : vector<904x128xf32> to vector<864x128xf32>
    %13 = vector.extract_strided_slice %8 {offsets = [33, 0], sizes = [864, 128], strides = [1, 1]} : vector<904x128xf32> to vector<864x128xf32>
    %14 = arith.maximumf %12, %13 : vector<864x128xf32>
    %15 = arith.maximumf %11, %14 : vector<864x128xf32>
    %16 = vector.extract_strided_slice %15 {offsets = [0, 0], sizes = [856, 128], strides = [1, 1]} : vector<864x128xf32> to vector<856x128xf32>
    %17 = vector.extract_strided_slice %15 {offsets = [2, 0], sizes = [856, 128], strides = [1, 1]} : vector<864x128xf32> to vector<856x128xf32>
    %18 = vector.extract_strided_slice %15 {offsets = [4, 0], sizes = [856, 128], strides = [1, 1]} : vector<864x128xf32> to vector<856x128xf32>
    %19 = vector.extract_strided_slice %15 {offsets = [6, 0], sizes = [856, 128], strides = [1, 1]} : vector<864x128xf32> to vector<856x128xf32>
    %20 = vector.extract_strided_slice %15 {offsets = [8, 0], sizes = [856, 128], strides = [1, 1]} : vector<864x128xf32> to vector<856x128xf32>
    %cst_7 = arith.constant 0.000000e+00 : f32
    %21 = vector.broadcast %cst_7 : f32 to vector<600x128xf32>
    %22 = vector.extract_strided_slice %16 {offsets = [0, 0], sizes = [600, 6], strides = [1, 1]} : vector<856x128xf32> to vector<600x6xf32>
    %c0_8 = arith.constant 0 : index
    %c0_9 = arith.constant 0 : index
    %c0_10 = arith.constant 0 : index
    %23 = vector.load %arg4[%c0_8, %c0_9, %c0_10] : memref<25x6x128xf32, #tpu.memory_space<vmem>>, vector<1x6x128xf32>
    %24 = vector.shape_cast %23 : vector<1x6x128xf32> to vector<6x128xf32>
    %cst_11 = arith.constant dense<0.000000e+00> : vector<600x128xf32>
    %25 = tpu.matmul %22, %24, %cst_11 {dimension_numbers = #tpu.dot_dimension_numbers<[1], [0], [0], [1], [0, 0, 1, 1], [], []>} : vector<600x6xf32>, vector<6x128xf32>, vector<600x128xf32> -> vector<600x128xf32>
    %26 = arith.addf %21, %25 : vector<600x128xf32>
    %27 = vector.extract_strided_slice %17 {offsets = [0, 0], sizes = [600, 6], strides = [1, 1]} : vector<856x128xf32> to vector<600x6xf32>
    %c1 = arith.constant 1 : index
    %c0_12 = arith.constant 0 : index
    %c0_13 = arith.constant 0 : index
    %28 = vector.load %arg4[%c1, %c0_12, %c0_13] : memref<25x6x128xf32, #tpu.memory_space<vmem>>, vector<1x6x128xf32>
    %29 = vector.shape_cast %28 : vector<1x6x128xf32> to vector<6x128xf32>
    %cst_14 = arith.constant dense<0.000000e+00> : vector<600x128xf32>
    %30 = tpu.matmul %27, %29, %cst_14 {dimension_numbers = #tpu.dot_dimension_numbers<[1], [0], [0], [1], [0, 0, 1, 1], [], []>} : vector<600x6xf32>, vector<6x128xf32>, vector<600x128xf32> -> vector<600x128xf32>
    %31 = arith.addf %26, %30 : vector<600x128xf32>
    %32 = vector.extract_strided_slice %18 {offsets = [0, 0], sizes = [600, 6], strides = [1, 1]} : vector<856x128xf32> to vector<600x6xf32>
    %c2 = arith.constant 2 : index
    %c0_15 = arith.constant 0 : index
    %c0_16 = arith.constant 0 : index
    %33 = vector.load %arg4[%c2, %c0_15, %c0_16] : memref<25x6x128xf32, #tpu.memory_space<vmem>>, vector<1x6x128xf32>
    %34 = vector.shape_cast %33 : vector<1x6x128xf32> to vector<6x128xf32>
    %cst_17 = arith.constant dense<0.000000e+00> : vector<600x128xf32>
    %35 = tpu.matmul %32, %34, %cst_17 {dimension_numbers = #tpu.dot_dimension_numbers<[1], [0], [0], [1], [0, 0, 1, 1], [], []>} : vector<600x6xf32>, vector<6x128xf32>, vector<600x128xf32> -> vector<600x128xf32>
    %36 = arith.addf %31, %35 : vector<600x128xf32>
    %37 = vector.extract_strided_slice %19 {offsets = [0, 0], sizes = [600, 6], strides = [1, 1]} : vector<856x128xf32> to vector<600x6xf32>
    %c3 = arith.constant 3 : index
    %c0_18 = arith.constant 0 : index
    %c0_19 = arith.constant 0 : index
    %38 = vector.load %arg4[%c3, %c0_18, %c0_19] : memref<25x6x128xf32, #tpu.memory_space<vmem>>, vector<1x6x128xf32>
    %39 = vector.shape_cast %38 : vector<1x6x128xf32> to vector<6x128xf32>
    %cst_20 = arith.constant dense<0.000000e+00> : vector<600x128xf32>
    %40 = tpu.matmul %37, %39, %cst_20 {dimension_numbers = #tpu.dot_dimension_numbers<[1], [0], [0], [1], [0, 0, 1, 1], [], []>} : vector<600x6xf32>, vector<6x128xf32>, vector<600x128xf32> -> vector<600x128xf32>
    %41 = arith.addf %36, %40 : vector<600x128xf32>
    %42 = vector.extract_strided_slice %20 {offsets = [0, 0], sizes = [600, 6], strides = [1, 1]} : vector<856x128xf32> to vector<600x6xf32>
    %c4 = arith.constant 4 : index
    %c0_21 = arith.constant 0 : index
    %c0_22 = arith.constant 0 : index
    %43 = vector.load %arg4[%c4, %c0_21, %c0_22] : memref<25x6x128xf32, #tpu.memory_space<vmem>>, vector<1x6x128xf32>
    %44 = vector.shape_cast %43 : vector<1x6x128xf32> to vector<6x128xf32>
    %cst_23 = arith.constant dense<0.000000e+00> : vector<600x128xf32>
    %45 = tpu.matmul %42, %44, %cst_23 {dimension_numbers = #tpu.dot_dimension_numbers<[1], [0], [0], [1], [0, 0, 1, 1], [], []>} : vector<600x6xf32>, vector<6x128xf32>, vector<600x128xf32> -> vector<600x128xf32>
    %46 = arith.addf %41, %45 : vector<600x128xf32>
    %47 = vector.extract_strided_slice %16 {offsets = [64, 0], sizes = [600, 6], strides = [1, 1]} : vector<856x128xf32> to vector<600x6xf32>
    %c5 = arith.constant 5 : index
    %c0_24 = arith.constant 0 : index
    %c0_25 = arith.constant 0 : index
    %48 = vector.load %arg4[%c5, %c0_24, %c0_25] : memref<25x6x128xf32, #tpu.memory_space<vmem>>, vector<1x6x128xf32>
    %49 = vector.shape_cast %48 : vector<1x6x128xf32> to vector<6x128xf32>
    %cst_26 = arith.constant dense<0.000000e+00> : vector<600x128xf32>
    %50 = tpu.matmul %47, %49, %cst_26 {dimension_numbers = #tpu.dot_dimension_numbers<[1], [0], [0], [1], [0, 0, 1, 1], [], []>} : vector<600x6xf32>, vector<6x128xf32>, vector<600x128xf32> -> vector<600x128xf32>
    %51 = arith.addf %46, %50 : vector<600x128xf32>
    %52 = vector.extract_strided_slice %17 {offsets = [64, 0], sizes = [600, 6], strides = [1, 1]} : vector<856x128xf32> to vector<600x6xf32>
    %c6 = arith.constant 6 : index
    %c0_27 = arith.constant 0 : index
    %c0_28 = arith.constant 0 : index
    %53 = vector.load %arg4[%c6, %c0_27, %c0_28] : memref<25x6x128xf32, #tpu.memory_space<vmem>>, vector<1x6x128xf32>
    %54 = vector.shape_cast %53 : vector<1x6x128xf32> to vector<6x128xf32>
    %cst_29 = arith.constant dense<0.000000e+00> : vector<600x128xf32>
    %55 = tpu.matmul %52, %54, %cst_29 {dimension_numbers = #tpu.dot_dimension_numbers<[1], [0], [0], [1], [0, 0, 1, 1], [], []>} : vector<600x6xf32>, vector<6x128xf32>, vector<600x128xf32> -> vector<600x128xf32>
    %56 = arith.addf %51, %55 : vector<600x128xf32>
    %57 = vector.extract_strided_slice %18 {offsets = [64, 0], sizes = [600, 6], strides = [1, 1]} : vector<856x128xf32> to vector<600x6xf32>
    %c7 = arith.constant 7 : index
    %c0_30 = arith.constant 0 : index
    %c0_31 = arith.constant 0 : index
    %58 = vector.load %arg4[%c7, %c0_30, %c0_31] : memref<25x6x128xf32, #tpu.memory_space<vmem>>, vector<1x6x128xf32>
    %59 = vector.shape_cast %58 : vector<1x6x128xf32> to vector<6x128xf32>
    %cst_32 = arith.constant dense<0.000000e+00> : vector<600x128xf32>
    %60 = tpu.matmul %57, %59, %cst_32 {dimension_numbers = #tpu.dot_dimension_numbers<[1], [0], [0], [1], [0, 0, 1, 1], [], []>} : vector<600x6xf32>, vector<6x128xf32>, vector<600x128xf32> -> vector<600x128xf32>
    %61 = arith.addf %56, %60 : vector<600x128xf32>
    %62 = vector.extract_strided_slice %19 {offsets = [64, 0], sizes = [600, 6], strides = [1, 1]} : vector<856x128xf32> to vector<600x6xf32>
    %c8 = arith.constant 8 : index
    %c0_33 = arith.constant 0 : index
    %c0_34 = arith.constant 0 : index
    %63 = vector.load %arg4[%c8, %c0_33, %c0_34] : memref<25x6x128xf32, #tpu.memory_space<vmem>>, vector<1x6x128xf32>
    %64 = vector.shape_cast %63 : vector<1x6x128xf32> to vector<6x128xf32>
    %cst_35 = arith.constant dense<0.000000e+00> : vector<600x128xf32>
    %65 = tpu.matmul %62, %64, %cst_35 {dimension_numbers = #tpu.dot_dimension_numbers<[1], [0], [0], [1], [0, 0, 1, 1], [], []>} : vector<600x6xf32>, vector<6x128xf32>, vector<600x128xf32> -> vector<600x128xf32>
    %66 = arith.addf %61, %65 : vector<600x128xf32>
    %67 = vector.extract_strided_slice %20 {offsets = [64, 0], sizes = [600, 6], strides = [1, 1]} : vector<856x128xf32> to vector<600x6xf32>
    %c9 = arith.constant 9 : index
    %c0_36 = arith.constant 0 : index
    %c0_37 = arith.constant 0 : index
    %68 = vector.load %arg4[%c9, %c0_36, %c0_37] : memref<25x6x128xf32, #tpu.memory_space<vmem>>, vector<1x6x128xf32>
    %69 = vector.shape_cast %68 : vector<1x6x128xf32> to vector<6x128xf32>
    %cst_38 = arith.constant dense<0.000000e+00> : vector<600x128xf32>
    %70 = tpu.matmul %67, %69, %cst_38 {dimension_numbers = #tpu.dot_dimension_numbers<[1], [0], [0], [1], [0, 0, 1, 1], [], []>} : vector<600x6xf32>, vector<6x128xf32>, vector<600x128xf32> -> vector<600x128xf32>
    %71 = arith.addf %66, %70 : vector<600x128xf32>
    %72 = vector.extract_strided_slice %16 {offsets = [128, 0], sizes = [600, 6], strides = [1, 1]} : vector<856x128xf32> to vector<600x6xf32>
    %c10 = arith.constant 10 : index
    %c0_39 = arith.constant 0 : index
    %c0_40 = arith.constant 0 : index
    %73 = vector.load %arg4[%c10, %c0_39, %c0_40] : memref<25x6x128xf32, #tpu.memory_space<vmem>>, vector<1x6x128xf32>
    %74 = vector.shape_cast %73 : vector<1x6x128xf32> to vector<6x128xf32>
    %cst_41 = arith.constant dense<0.000000e+00> : vector<600x128xf32>
    %75 = tpu.matmul %72, %74, %cst_41 {dimension_numbers = #tpu.dot_dimension_numbers<[1], [0], [0], [1], [0, 0, 1, 1], [], []>} : vector<600x6xf32>, vector<6x128xf32>, vector<600x128xf32> -> vector<600x128xf32>
    %76 = arith.addf %71, %75 : vector<600x128xf32>
    %77 = vector.extract_strided_slice %17 {offsets = [128, 0], sizes = [600, 6], strides = [1, 1]} : vector<856x128xf32> to vector<600x6xf32>
    %c11 = arith.constant 11 : index
    %c0_42 = arith.constant 0 : index
    %c0_43 = arith.constant 0 : index
    %78 = vector.load %arg4[%c11, %c0_42, %c0_43] : memref<25x6x128xf32, #tpu.memory_space<vmem>>, vector<1x6x128xf32>
    %79 = vector.shape_cast %78 : vector<1x6x128xf32> to vector<6x128xf32>
    %cst_44 = arith.constant dense<0.000000e+00> : vector<600x128xf32>
    %80 = tpu.matmul %77, %79, %cst_44 {dimension_numbers = #tpu.dot_dimension_numbers<[1], [0], [0], [1], [0, 0, 1, 1], [], []>} : vector<600x6xf32>, vector<6x128xf32>, vector<600x128xf32> -> vector<600x128xf32>
    %81 = arith.addf %76, %80 : vector<600x128xf32>
    %82 = vector.extract_strided_slice %18 {offsets = [128, 0], sizes = [600, 6], strides = [1, 1]} : vector<856x128xf32> to vector<600x6xf32>
    %c12 = arith.constant 12 : index
    %c0_45 = arith.constant 0 : index
    %c0_46 = arith.constant 0 : index
    %83 = vector.load %arg4[%c12, %c0_45, %c0_46] : memref<25x6x128xf32, #tpu.memory_space<vmem>>, vector<1x6x128xf32>
    %84 = vector.shape_cast %83 : vector<1x6x128xf32> to vector<6x128xf32>
    %cst_47 = arith.constant dense<0.000000e+00> : vector<600x128xf32>
    %85 = tpu.matmul %82, %84, %cst_47 {dimension_numbers = #tpu.dot_dimension_numbers<[1], [0], [0], [1], [0, 0, 1, 1], [], []>} : vector<600x6xf32>, vector<6x128xf32>, vector<600x128xf32> -> vector<600x128xf32>
    %86 = arith.addf %81, %85 : vector<600x128xf32>
    %87 = vector.extract_strided_slice %19 {offsets = [128, 0], sizes = [600, 6], strides = [1, 1]} : vector<856x128xf32> to vector<600x6xf32>
    %c13 = arith.constant 13 : index
    %c0_48 = arith.constant 0 : index
    %c0_49 = arith.constant 0 : index
    %88 = vector.load %arg4[%c13, %c0_48, %c0_49] : memref<25x6x128xf32, #tpu.memory_space<vmem>>, vector<1x6x128xf32>
    %89 = vector.shape_cast %88 : vector<1x6x128xf32> to vector<6x128xf32>
    %cst_50 = arith.constant dense<0.000000e+00> : vector<600x128xf32>
    %90 = tpu.matmul %87, %89, %cst_50 {dimension_numbers = #tpu.dot_dimension_numbers<[1], [0], [0], [1], [0, 0, 1, 1], [], []>} : vector<600x6xf32>, vector<6x128xf32>, vector<600x128xf32> -> vector<600x128xf32>
    %91 = arith.addf %86, %90 : vector<600x128xf32>
    %92 = vector.extract_strided_slice %20 {offsets = [128, 0], sizes = [600, 6], strides = [1, 1]} : vector<856x128xf32> to vector<600x6xf32>
    %c14 = arith.constant 14 : index
    %c0_51 = arith.constant 0 : index
    %c0_52 = arith.constant 0 : index
    %93 = vector.load %arg4[%c14, %c0_51, %c0_52] : memref<25x6x128xf32, #tpu.memory_space<vmem>>, vector<1x6x128xf32>
    %94 = vector.shape_cast %93 : vector<1x6x128xf32> to vector<6x128xf32>
    %cst_53 = arith.constant dense<0.000000e+00> : vector<600x128xf32>
    %95 = tpu.matmul %92, %94, %cst_53 {dimension_numbers = #tpu.dot_dimension_numbers<[1], [0], [0], [1], [0, 0, 1, 1], [], []>} : vector<600x6xf32>, vector<6x128xf32>, vector<600x128xf32> -> vector<600x128xf32>
    %96 = arith.addf %91, %95 : vector<600x128xf32>
    %97 = vector.extract_strided_slice %16 {offsets = [192, 0], sizes = [600, 6], strides = [1, 1]} : vector<856x128xf32> to vector<600x6xf32>
    %c15 = arith.constant 15 : index
    %c0_54 = arith.constant 0 : index
    %c0_55 = arith.constant 0 : index
    %98 = vector.load %arg4[%c15, %c0_54, %c0_55] : memref<25x6x128xf32, #tpu.memory_space<vmem>>, vector<1x6x128xf32>
    %99 = vector.shape_cast %98 : vector<1x6x128xf32> to vector<6x128xf32>
    %cst_56 = arith.constant dense<0.000000e+00> : vector<600x128xf32>
    %100 = tpu.matmul %97, %99, %cst_56 {dimension_numbers = #tpu.dot_dimension_numbers<[1], [0], [0], [1], [0, 0, 1, 1], [], []>} : vector<600x6xf32>, vector<6x128xf32>, vector<600x128xf32> -> vector<600x128xf32>
    %101 = arith.addf %96, %100 : vector<600x128xf32>
    %102 = vector.extract_strided_slice %17 {offsets = [192, 0], sizes = [600, 6], strides = [1, 1]} : vector<856x128xf32> to vector<600x6xf32>
    %c16 = arith.constant 16 : index
    %c0_57 = arith.constant 0 : index
    %c0_58 = arith.constant 0 : index
    %103 = vector.load %arg4[%c16, %c0_57, %c0_58] : memref<25x6x128xf32, #tpu.memory_space<vmem>>, vector<1x6x128xf32>
    %104 = vector.shape_cast %103 : vector<1x6x128xf32> to vector<6x128xf32>
    %cst_59 = arith.constant dense<0.000000e+00> : vector<600x128xf32>
    %105 = tpu.matmul %102, %104, %cst_59 {dimension_numbers = #tpu.dot_dimension_numbers<[1], [0], [0], [1], [0, 0, 1, 1], [], []>} : vector<600x6xf32>, vector<6x128xf32>, vector<600x128xf32> -> vector<600x128xf32>
    %106 = arith.addf %101, %105 : vector<600x128xf32>
    %107 = vector.extract_strided_slice %18 {offsets = [192, 0], sizes = [600, 6], strides = [1, 1]} : vector<856x128xf32> to vector<600x6xf32>
    %c17 = arith.constant 17 : index
    %c0_60 = arith.constant 0 : index
    %c0_61 = arith.constant 0 : index
    %108 = vector.load %arg4[%c17, %c0_60, %c0_61] : memref<25x6x128xf32, #tpu.memory_space<vmem>>, vector<1x6x128xf32>
    %109 = vector.shape_cast %108 : vector<1x6x128xf32> to vector<6x128xf32>
    %cst_62 = arith.constant dense<0.000000e+00> : vector<600x128xf32>
    %110 = tpu.matmul %107, %109, %cst_62 {dimension_numbers = #tpu.dot_dimension_numbers<[1], [0], [0], [1], [0, 0, 1, 1], [], []>} : vector<600x6xf32>, vector<6x128xf32>, vector<600x128xf32> -> vector<600x128xf32>
    %111 = arith.addf %106, %110 : vector<600x128xf32>
    %112 = vector.extract_strided_slice %19 {offsets = [192, 0], sizes = [600, 6], strides = [1, 1]} : vector<856x128xf32> to vector<600x6xf32>
    %c18 = arith.constant 18 : index
    %c0_63 = arith.constant 0 : index
    %c0_64 = arith.constant 0 : index
    %113 = vector.load %arg4[%c18, %c0_63, %c0_64] : memref<25x6x128xf32, #tpu.memory_space<vmem>>, vector<1x6x128xf32>
    %114 = vector.shape_cast %113 : vector<1x6x128xf32> to vector<6x128xf32>
    %cst_65 = arith.constant dense<0.000000e+00> : vector<600x128xf32>
    %115 = tpu.matmul %112, %114, %cst_65 {dimension_numbers = #tpu.dot_dimension_numbers<[1], [0], [0], [1], [0, 0, 1, 1], [], []>} : vector<600x6xf32>, vector<6x128xf32>, vector<600x128xf32> -> vector<600x128xf32>
    %116 = arith.addf %111, %115 : vector<600x128xf32>
    %117 = vector.extract_strided_slice %20 {offsets = [192, 0], sizes = [600, 6], strides = [1, 1]} : vector<856x128xf32> to vector<600x6xf32>
    %c19 = arith.constant 19 : index
    %c0_66 = arith.constant 0 : index
    %c0_67 = arith.constant 0 : index
    %118 = vector.load %arg4[%c19, %c0_66, %c0_67] : memref<25x6x128xf32, #tpu.memory_space<vmem>>, vector<1x6x128xf32>
    %119 = vector.shape_cast %118 : vector<1x6x128xf32> to vector<6x128xf32>
    %cst_68 = arith.constant dense<0.000000e+00> : vector<600x128xf32>
    %120 = tpu.matmul %117, %119, %cst_68 {dimension_numbers = #tpu.dot_dimension_numbers<[1], [0], [0], [1], [0, 0, 1, 1], [], []>} : vector<600x6xf32>, vector<6x128xf32>, vector<600x128xf32> -> vector<600x128xf32>
    %121 = arith.addf %116, %120 : vector<600x128xf32>
    %122 = vector.extract_strided_slice %16 {offsets = [256, 0], sizes = [600, 6], strides = [1, 1]} : vector<856x128xf32> to vector<600x6xf32>
    %c20 = arith.constant 20 : index
    %c0_69 = arith.constant 0 : index
    %c0_70 = arith.constant 0 : index
    %123 = vector.load %arg4[%c20, %c0_69, %c0_70] : memref<25x6x128xf32, #tpu.memory_space<vmem>>, vector<1x6x128xf32>
    %124 = vector.shape_cast %123 : vector<1x6x128xf32> to vector<6x128xf32>
    %cst_71 = arith.constant dense<0.000000e+00> : vector<600x128xf32>
    %125 = tpu.matmul %122, %124, %cst_71 {dimension_numbers = #tpu.dot_dimension_numbers<[1], [0], [0], [1], [0, 0, 1, 1], [], []>} : vector<600x6xf32>, vector<6x128xf32>, vector<600x128xf32> -> vector<600x128xf32>
    %126 = arith.addf %121, %125 : vector<600x128xf32>
    %127 = vector.extract_strided_slice %17 {offsets = [256, 0], sizes = [600, 6], strides = [1, 1]} : vector<856x128xf32> to vector<600x6xf32>
    %c21 = arith.constant 21 : index
    %c0_72 = arith.constant 0 : index
    %c0_73 = arith.constant 0 : index
    %128 = vector.load %arg4[%c21, %c0_72, %c0_73] : memref<25x6x128xf32, #tpu.memory_space<vmem>>, vector<1x6x128xf32>
    %129 = vector.shape_cast %128 : vector<1x6x128xf32> to vector<6x128xf32>
    %cst_74 = arith.constant dense<0.000000e+00> : vector<600x128xf32>
    %130 = tpu.matmul %127, %129, %cst_74 {dimension_numbers = #tpu.dot_dimension_numbers<[1], [0], [0], [1], [0, 0, 1, 1], [], []>} : vector<600x6xf32>, vector<6x128xf32>, vector<600x128xf32> -> vector<600x128xf32>
    %131 = arith.addf %126, %130 : vector<600x128xf32>
    %132 = vector.extract_strided_slice %18 {offsets = [256, 0], sizes = [600, 6], strides = [1, 1]} : vector<856x128xf32> to vector<600x6xf32>
    %c22 = arith.constant 22 : index
    %c0_75 = arith.constant 0 : index
    %c0_76 = arith.constant 0 : index
    %133 = vector.load %arg4[%c22, %c0_75, %c0_76] : memref<25x6x128xf32, #tpu.memory_space<vmem>>, vector<1x6x128xf32>
    %134 = vector.shape_cast %133 : vector<1x6x128xf32> to vector<6x128xf32>
    %cst_77 = arith.constant dense<0.000000e+00> : vector<600x128xf32>
    %135 = tpu.matmul %132, %134, %cst_77 {dimension_numbers = #tpu.dot_dimension_numbers<[1], [0], [0], [1], [0, 0, 1, 1], [], []>} : vector<600x6xf32>, vector<6x128xf32>, vector<600x128xf32> -> vector<600x128xf32>
    %136 = arith.addf %131, %135 : vector<600x128xf32>
    %137 = vector.extract_strided_slice %19 {offsets = [256, 0], sizes = [600, 6], strides = [1, 1]} : vector<856x128xf32> to vector<600x6xf32>
    %c23 = arith.constant 23 : index
    %c0_78 = arith.constant 0 : index
    %c0_79 = arith.constant 0 : index
    %138 = vector.load %arg4[%c23, %c0_78, %c0_79] : memref<25x6x128xf32, #tpu.memory_space<vmem>>, vector<1x6x128xf32>
    %139 = vector.shape_cast %138 : vector<1x6x128xf32> to vector<6x128xf32>
    %cst_80 = arith.constant dense<0.000000e+00> : vector<600x128xf32>
    %140 = tpu.matmul %137, %139, %cst_80 {dimension_numbers = #tpu.dot_dimension_numbers<[1], [0], [0], [1], [0, 0, 1, 1], [], []>} : vector<600x6xf32>, vector<6x128xf32>, vector<600x128xf32> -> vector<600x128xf32>
    %141 = arith.addf %136, %140 : vector<600x128xf32>
    %142 = vector.extract_strided_slice %20 {offsets = [256, 0], sizes = [600, 6], strides = [1, 1]} : vector<856x128xf32> to vector<600x6xf32>
    %c24 = arith.constant 24 : index
    %c0_81 = arith.constant 0 : index
    %c0_82 = arith.constant 0 : index
    %143 = vector.load %arg4[%c24, %c0_81, %c0_82] : memref<25x6x128xf32, #tpu.memory_space<vmem>>, vector<1x6x128xf32>
    %144 = vector.shape_cast %143 : vector<1x6x128xf32> to vector<6x128xf32>
    %cst_83 = arith.constant dense<0.000000e+00> : vector<600x128xf32>
    %145 = tpu.matmul %142, %144, %cst_83 {dimension_numbers = #tpu.dot_dimension_numbers<[1], [0], [0], [1], [0, 0, 1, 1], [], []>} : vector<600x6xf32>, vector<6x128xf32>, vector<600x128xf32> -> vector<600x128xf32>
    %146 = arith.addf %141, %145 : vector<600x128xf32>
    %c0_84 = arith.constant 0 : index
    %c0_85 = arith.constant 0 : index
    %147 = vector.load %arg5[%c0_84, %c0_85] : memref<1x128xf32, #tpu.memory_space<vmem>>, vector<1x128xf32>
    %148 = vector.broadcast %147 : vector<1x128xf32> to vector<600x128xf32>
    %149 = arith.addf %146, %148 : vector<600x128xf32>
    %cst_86 = arith.constant 0.000000e+00 : f32
    %150 = vector.broadcast %cst_86 : f32 to vector<600x128xf32>
    %151 = arith.maximumf %149, %150 : vector<600x128xf32>
    %152 = vector.extract_strided_slice %151 {offsets = [0, 0], sizes = [529, 128], strides = [1, 1]} : vector<600x128xf32> to vector<529x128xf32>
    %153 = vector.extract_strided_slice %151 {offsets = [2, 0], sizes = [529, 128], strides = [1, 1]} : vector<600x128xf32> to vector<529x128xf32>
    %154 = arith.maximumf %152, %153 : vector<529x128xf32>
    %155 = vector.extract_strided_slice %151 {offsets = [64, 0], sizes = [529, 128], strides = [1, 1]} : vector<600x128xf32> to vector<529x128xf32>
    %156 = vector.extract_strided_slice %151 {offsets = [66, 0], sizes = [529, 128], strides = [1, 1]} : vector<600x128xf32> to vector<529x128xf32>
    %157 = arith.maximumf %155, %156 : vector<529x128xf32>
    %158 = arith.maximumf %154, %157 : vector<529x128xf32>
    %cst_87 = arith.constant 0.000000e+00 : f32
    %159 = vector.broadcast %cst_87 : f32 to vector<1x128xf32>
    %160 = vector.extract_strided_slice %158 {offsets = [0, 0], sizes = [1, 16], strides = [1, 1]} : vector<529x128xf32> to vector<1x16xf32>
    %c0_88 = arith.constant 0 : index
    %c0_89 = arith.constant 0 : index
    %c0_90 = arith.constant 0 : index
    %161 = vector.load %arg6[%c0_88, %c0_89, %c0_90] : memref<25x16x128xf32, #tpu.memory_space<vmem>>, vector<1x16x128xf32>
    %162 = vector.shape_cast %161 : vector<1x16x128xf32> to vector<16x128xf32>
    %cst_91 = arith.constant dense<0.000000e+00> : vector<1x128xf32>
    %163 = tpu.matmul %160, %162, %cst_91 {dimension_numbers = #tpu.dot_dimension_numbers<[1], [0], [0], [1], [0, 0, 1, 1], [], []>} : vector<1x16xf32>, vector<16x128xf32>, vector<1x128xf32> -> vector<1x128xf32>
    %164 = arith.addf %159, %163 : vector<1x128xf32>
    %165 = vector.extract_strided_slice %158 {offsets = [4, 0], sizes = [1, 16], strides = [1, 1]} : vector<529x128xf32> to vector<1x16xf32>
    %c1_92 = arith.constant 1 : index
    %c0_93 = arith.constant 0 : index
    %c0_94 = arith.constant 0 : index
    %166 = vector.load %arg6[%c1_92, %c0_93, %c0_94] : memref<25x16x128xf32, #tpu.memory_space<vmem>>, vector<1x16x128xf32>
    %167 = vector.shape_cast %166 : vector<1x16x128xf32> to vector<16x128xf32>
    %cst_95 = arith.constant dense<0.000000e+00> : vector<1x128xf32>
    %168 = tpu.matmul %165, %167, %cst_95 {dimension_numbers = #tpu.dot_dimension_numbers<[1], [0], [0], [1], [0, 0, 1, 1], [], []>} : vector<1x16xf32>, vector<16x128xf32>, vector<1x128xf32> -> vector<1x128xf32>
    %169 = arith.addf %164, %168 : vector<1x128xf32>
    %170 = vector.extract_strided_slice %158 {offsets = [8, 0], sizes = [1, 16], strides = [1, 1]} : vector<529x128xf32> to vector<1x16xf32>
    %c2_96 = arith.constant 2 : index
    %c0_97 = arith.constant 0 : index
    %c0_98 = arith.constant 0 : index
    %171 = vector.load %arg6[%c2_96, %c0_97, %c0_98] : memref<25x16x128xf32, #tpu.memory_space<vmem>>, vector<1x16x128xf32>
    %172 = vector.shape_cast %171 : vector<1x16x128xf32> to vector<16x128xf32>
    %cst_99 = arith.constant dense<0.000000e+00> : vector<1x128xf32>
    %173 = tpu.matmul %170, %172, %cst_99 {dimension_numbers = #tpu.dot_dimension_numbers<[1], [0], [0], [1], [0, 0, 1, 1], [], []>} : vector<1x16xf32>, vector<16x128xf32>, vector<1x128xf32> -> vector<1x128xf32>
    %174 = arith.addf %169, %173 : vector<1x128xf32>
    %175 = vector.extract_strided_slice %158 {offsets = [12, 0], sizes = [1, 16], strides = [1, 1]} : vector<529x128xf32> to vector<1x16xf32>
    %c3_100 = arith.constant 3 : index
    %c0_101 = arith.constant 0 : index
    %c0_102 = arith.constant 0 : index
    %176 = vector.load %arg6[%c3_100, %c0_101, %c0_102] : memref<25x16x128xf32, #tpu.memory_space<vmem>>, vector<1x16x128xf32>
    %177 = vector.shape_cast %176 : vector<1x16x128xf32> to vector<16x128xf32>
    %cst_103 = arith.constant dense<0.000000e+00> : vector<1x128xf32>
    %178 = tpu.matmul %175, %177, %cst_103 {dimension_numbers = #tpu.dot_dimension_numbers<[1], [0], [0], [1], [0, 0, 1, 1], [], []>} : vector<1x16xf32>, vector<16x128xf32>, vector<1x128xf32> -> vector<1x128xf32>
    %179 = arith.addf %174, %178 : vector<1x128xf32>
    %180 = vector.extract_strided_slice %158 {offsets = [16, 0], sizes = [1, 16], strides = [1, 1]} : vector<529x128xf32> to vector<1x16xf32>
    %c4_104 = arith.constant 4 : index
    %c0_105 = arith.constant 0 : index
    %c0_106 = arith.constant 0 : index
    %181 = vector.load %arg6[%c4_104, %c0_105, %c0_106] : memref<25x16x128xf32, #tpu.memory_space<vmem>>, vector<1x16x128xf32>
    %182 = vector.shape_cast %181 : vector<1x16x128xf32> to vector<16x128xf32>
    %cst_107 = arith.constant dense<0.000000e+00> : vector<1x128xf32>
    %183 = tpu.matmul %180, %182, %cst_107 {dimension_numbers = #tpu.dot_dimension_numbers<[1], [0], [0], [1], [0, 0, 1, 1], [], []>} : vector<1x16xf32>, vector<16x128xf32>, vector<1x128xf32> -> vector<1x128xf32>
    %184 = arith.addf %179, %183 : vector<1x128xf32>
    %185 = vector.extract_strided_slice %158 {offsets = [128, 0], sizes = [1, 16], strides = [1, 1]} : vector<529x128xf32> to vector<1x16xf32>
    %c5_108 = arith.constant 5 : index
    %c0_109 = arith.constant 0 : index
    %c0_110 = arith.constant 0 : index
    %186 = vector.load %arg6[%c5_108, %c0_109, %c0_110] : memref<25x16x128xf32, #tpu.memory_space<vmem>>, vector<1x16x128xf32>
    %187 = vector.shape_cast %186 : vector<1x16x128xf32> to vector<16x128xf32>
    %cst_111 = arith.constant dense<0.000000e+00> : vector<1x128xf32>
    %188 = tpu.matmul %185, %187, %cst_111 {dimension_numbers = #tpu.dot_dimension_numbers<[1], [0], [0], [1], [0, 0, 1, 1], [], []>} : vector<1x16xf32>, vector<16x128xf32>, vector<1x128xf32> -> vector<1x128xf32>
    %189 = arith.addf %184, %188 : vector<1x128xf32>
    %190 = vector.extract_strided_slice %158 {offsets = [132, 0], sizes = [1, 16], strides = [1, 1]} : vector<529x128xf32> to vector<1x16xf32>
    %c6_112 = arith.constant 6 : index
    %c0_113 = arith.constant 0 : index
    %c0_114 = arith.constant 0 : index
    %191 = vector.load %arg6[%c6_112, %c0_113, %c0_114] : memref<25x16x128xf32, #tpu.memory_space<vmem>>, vector<1x16x128xf32>
    %192 = vector.shape_cast %191 : vector<1x16x128xf32> to vector<16x128xf32>
    %cst_115 = arith.constant dense<0.000000e+00> : vector<1x128xf32>
    %193 = tpu.matmul %190, %192, %cst_115 {dimension_numbers = #tpu.dot_dimension_numbers<[1], [0], [0], [1], [0, 0, 1, 1], [], []>} : vector<1x16xf32>, vector<16x128xf32>, vector<1x128xf32> -> vector<1x128xf32>
    %194 = arith.addf %189, %193 : vector<1x128xf32>
    %195 = vector.extract_strided_slice %158 {offsets = [136, 0], sizes = [1, 16], strides = [1, 1]} : vector<529x128xf32> to vector<1x16xf32>
    %c7_116 = arith.constant 7 : index
    %c0_117 = arith.constant 0 : index
    %c0_118 = arith.constant 0 : index
    %196 = vector.load %arg6[%c7_116, %c0_117, %c0_118] : memref<25x16x128xf32, #tpu.memory_space<vmem>>, vector<1x16x128xf32>
    %197 = vector.shape_cast %196 : vector<1x16x128xf32> to vector<16x128xf32>
    %cst_119 = arith.constant dense<0.000000e+00> : vector<1x128xf32>
    %198 = tpu.matmul %195, %197, %cst_119 {dimension_numbers = #tpu.dot_dimension_numbers<[1], [0], [0], [1], [0, 0, 1, 1], [], []>} : vector<1x16xf32>, vector<16x128xf32>, vector<1x128xf32> -> vector<1x128xf32>
    %199 = arith.addf %194, %198 : vector<1x128xf32>
    %200 = vector.extract_strided_slice %158 {offsets = [140, 0], sizes = [1, 16], strides = [1, 1]} : vector<529x128xf32> to vector<1x16xf32>
    %c8_120 = arith.constant 8 : index
    %c0_121 = arith.constant 0 : index
    %c0_122 = arith.constant 0 : index
    %201 = vector.load %arg6[%c8_120, %c0_121, %c0_122] : memref<25x16x128xf32, #tpu.memory_space<vmem>>, vector<1x16x128xf32>
    %202 = vector.shape_cast %201 : vector<1x16x128xf32> to vector<16x128xf32>
    %cst_123 = arith.constant dense<0.000000e+00> : vector<1x128xf32>
    %203 = tpu.matmul %200, %202, %cst_123 {dimension_numbers = #tpu.dot_dimension_numbers<[1], [0], [0], [1], [0, 0, 1, 1], [], []>} : vector<1x16xf32>, vector<16x128xf32>, vector<1x128xf32> -> vector<1x128xf32>
    %204 = arith.addf %199, %203 : vector<1x128xf32>
    %205 = vector.extract_strided_slice %158 {offsets = [144, 0], sizes = [1, 16], strides = [1, 1]} : vector<529x128xf32> to vector<1x16xf32>
    %c9_124 = arith.constant 9 : index
    %c0_125 = arith.constant 0 : index
    %c0_126 = arith.constant 0 : index
    %206 = vector.load %arg6[%c9_124, %c0_125, %c0_126] : memref<25x16x128xf32, #tpu.memory_space<vmem>>, vector<1x16x128xf32>
    %207 = vector.shape_cast %206 : vector<1x16x128xf32> to vector<16x128xf32>
    %cst_127 = arith.constant dense<0.000000e+00> : vector<1x128xf32>
    %208 = tpu.matmul %205, %207, %cst_127 {dimension_numbers = #tpu.dot_dimension_numbers<[1], [0], [0], [1], [0, 0, 1, 1], [], []>} : vector<1x16xf32>, vector<16x128xf32>, vector<1x128xf32> -> vector<1x128xf32>
    %209 = arith.addf %204, %208 : vector<1x128xf32>
    %210 = vector.extract_strided_slice %158 {offsets = [256, 0], sizes = [1, 16], strides = [1, 1]} : vector<529x128xf32> to vector<1x16xf32>
    %c10_128 = arith.constant 10 : index
    %c0_129 = arith.constant 0 : index
    %c0_130 = arith.constant 0 : index
    %211 = vector.load %arg6[%c10_128, %c0_129, %c0_130] : memref<25x16x128xf32, #tpu.memory_space<vmem>>, vector<1x16x128xf32>
    %212 = vector.shape_cast %211 : vector<1x16x128xf32> to vector<16x128xf32>
    %cst_131 = arith.constant dense<0.000000e+00> : vector<1x128xf32>
    %213 = tpu.matmul %210, %212, %cst_131 {dimension_numbers = #tpu.dot_dimension_numbers<[1], [0], [0], [1], [0, 0, 1, 1], [], []>} : vector<1x16xf32>, vector<16x128xf32>, vector<1x128xf32> -> vector<1x128xf32>
    %214 = arith.addf %209, %213 : vector<1x128xf32>
    %215 = vector.extract_strided_slice %158 {offsets = [260, 0], sizes = [1, 16], strides = [1, 1]} : vector<529x128xf32> to vector<1x16xf32>
    %c11_132 = arith.constant 11 : index
    %c0_133 = arith.constant 0 : index
    %c0_134 = arith.constant 0 : index
    %216 = vector.load %arg6[%c11_132, %c0_133, %c0_134] : memref<25x16x128xf32, #tpu.memory_space<vmem>>, vector<1x16x128xf32>
    %217 = vector.shape_cast %216 : vector<1x16x128xf32> to vector<16x128xf32>
    %cst_135 = arith.constant dense<0.000000e+00> : vector<1x128xf32>
    %218 = tpu.matmul %215, %217, %cst_135 {dimension_numbers = #tpu.dot_dimension_numbers<[1], [0], [0], [1], [0, 0, 1, 1], [], []>} : vector<1x16xf32>, vector<16x128xf32>, vector<1x128xf32> -> vector<1x128xf32>
    %219 = arith.addf %214, %218 : vector<1x128xf32>
    %220 = vector.extract_strided_slice %158 {offsets = [264, 0], sizes = [1, 16], strides = [1, 1]} : vector<529x128xf32> to vector<1x16xf32>
    %c12_136 = arith.constant 12 : index
    %c0_137 = arith.constant 0 : index
    %c0_138 = arith.constant 0 : index
    %221 = vector.load %arg6[%c12_136, %c0_137, %c0_138] : memref<25x16x128xf32, #tpu.memory_space<vmem>>, vector<1x16x128xf32>
    %222 = vector.shape_cast %221 : vector<1x16x128xf32> to vector<16x128xf32>
    %cst_139 = arith.constant dense<0.000000e+00> : vector<1x128xf32>
    %223 = tpu.matmul %220, %222, %cst_139 {dimension_numbers = #tpu.dot_dimension_numbers<[1], [0], [0], [1], [0, 0, 1, 1], [], []>} : vector<1x16xf32>, vector<16x128xf32>, vector<1x128xf32> -> vector<1x128xf32>
    %224 = arith.addf %219, %223 : vector<1x128xf32>
    %225 = vector.extract_strided_slice %158 {offsets = [268, 0], sizes = [1, 16], strides = [1, 1]} : vector<529x128xf32> to vector<1x16xf32>
    %c13_140 = arith.constant 13 : index
    %c0_141 = arith.constant 0 : index
    %c0_142 = arith.constant 0 : index
    %226 = vector.load %arg6[%c13_140, %c0_141, %c0_142] : memref<25x16x128xf32, #tpu.memory_space<vmem>>, vector<1x16x128xf32>
    %227 = vector.shape_cast %226 : vector<1x16x128xf32> to vector<16x128xf32>
    %cst_143 = arith.constant dense<0.000000e+00> : vector<1x128xf32>
    %228 = tpu.matmul %225, %227, %cst_143 {dimension_numbers = #tpu.dot_dimension_numbers<[1], [0], [0], [1], [0, 0, 1, 1], [], []>} : vector<1x16xf32>, vector<16x128xf32>, vector<1x128xf32> -> vector<1x128xf32>
    %229 = arith.addf %224, %228 : vector<1x128xf32>
    %230 = vector.extract_strided_slice %158 {offsets = [272, 0], sizes = [1, 16], strides = [1, 1]} : vector<529x128xf32> to vector<1x16xf32>
    %c14_144 = arith.constant 14 : index
    %c0_145 = arith.constant 0 : index
    %c0_146 = arith.constant 0 : index
    %231 = vector.load %arg6[%c14_144, %c0_145, %c0_146] : memref<25x16x128xf32, #tpu.memory_space<vmem>>, vector<1x16x128xf32>
    %232 = vector.shape_cast %231 : vector<1x16x128xf32> to vector<16x128xf32>
    %cst_147 = arith.constant dense<0.000000e+00> : vector<1x128xf32>
    %233 = tpu.matmul %230, %232, %cst_147 {dimension_numbers = #tpu.dot_dimension_numbers<[1], [0], [0], [1], [0, 0, 1, 1], [], []>} : vector<1x16xf32>, vector<16x128xf32>, vector<1x128xf32> -> vector<1x128xf32>
    %234 = arith.addf %229, %233 : vector<1x128xf32>
    %235 = vector.extract_strided_slice %158 {offsets = [384, 0], sizes = [1, 16], strides = [1, 1]} : vector<529x128xf32> to vector<1x16xf32>
    %c15_148 = arith.constant 15 : index
    %c0_149 = arith.constant 0 : index
    %c0_150 = arith.constant 0 : index
    %236 = vector.load %arg6[%c15_148, %c0_149, %c0_150] : memref<25x16x128xf32, #tpu.memory_space<vmem>>, vector<1x16x128xf32>
    %237 = vector.shape_cast %236 : vector<1x16x128xf32> to vector<16x128xf32>
    %cst_151 = arith.constant dense<0.000000e+00> : vector<1x128xf32>
    %238 = tpu.matmul %235, %237, %cst_151 {dimension_numbers = #tpu.dot_dimension_numbers<[1], [0], [0], [1], [0, 0, 1, 1], [], []>} : vector<1x16xf32>, vector<16x128xf32>, vector<1x128xf32> -> vector<1x128xf32>
    %239 = arith.addf %234, %238 : vector<1x128xf32>
    %240 = vector.extract_strided_slice %158 {offsets = [388, 0], sizes = [1, 16], strides = [1, 1]} : vector<529x128xf32> to vector<1x16xf32>
    %c16_152 = arith.constant 16 : index
    %c0_153 = arith.constant 0 : index
    %c0_154 = arith.constant 0 : index
    %241 = vector.load %arg6[%c16_152, %c0_153, %c0_154] : memref<25x16x128xf32, #tpu.memory_space<vmem>>, vector<1x16x128xf32>
    %242 = vector.shape_cast %241 : vector<1x16x128xf32> to vector<16x128xf32>
    %cst_155 = arith.constant dense<0.000000e+00> : vector<1x128xf32>
    %243 = tpu.matmul %240, %242, %cst_155 {dimension_numbers = #tpu.dot_dimension_numbers<[1], [0], [0], [1], [0, 0, 1, 1], [], []>} : vector<1x16xf32>, vector<16x128xf32>, vector<1x128xf32> -> vector<1x128xf32>
    %244 = arith.addf %239, %243 : vector<1x128xf32>
    %245 = vector.extract_strided_slice %158 {offsets = [392, 0], sizes = [1, 16], strides = [1, 1]} : vector<529x128xf32> to vector<1x16xf32>
    %c17_156 = arith.constant 17 : index
    %c0_157 = arith.constant 0 : index
    %c0_158 = arith.constant 0 : index
    %246 = vector.load %arg6[%c17_156, %c0_157, %c0_158] : memref<25x16x128xf32, #tpu.memory_space<vmem>>, vector<1x16x128xf32>
    %247 = vector.shape_cast %246 : vector<1x16x128xf32> to vector<16x128xf32>
    %cst_159 = arith.constant dense<0.000000e+00> : vector<1x128xf32>
    %248 = tpu.matmul %245, %247, %cst_159 {dimension_numbers = #tpu.dot_dimension_numbers<[1], [0], [0], [1], [0, 0, 1, 1], [], []>} : vector<1x16xf32>, vector<16x128xf32>, vector<1x128xf32> -> vector<1x128xf32>
    %249 = arith.addf %244, %248 : vector<1x128xf32>
    %250 = vector.extract_strided_slice %158 {offsets = [396, 0], sizes = [1, 16], strides = [1, 1]} : vector<529x128xf32> to vector<1x16xf32>
    %c18_160 = arith.constant 18 : index
    %c0_161 = arith.constant 0 : index
    %c0_162 = arith.constant 0 : index
    %251 = vector.load %arg6[%c18_160, %c0_161, %c0_162] : memref<25x16x128xf32, #tpu.memory_space<vmem>>, vector<1x16x128xf32>
    %252 = vector.shape_cast %251 : vector<1x16x128xf32> to vector<16x128xf32>
    %cst_163 = arith.constant dense<0.000000e+00> : vector<1x128xf32>
    %253 = tpu.matmul %250, %252, %cst_163 {dimension_numbers = #tpu.dot_dimension_numbers<[1], [0], [0], [1], [0, 0, 1, 1], [], []>} : vector<1x16xf32>, vector<16x128xf32>, vector<1x128xf32> -> vector<1x128xf32>
    %254 = arith.addf %249, %253 : vector<1x128xf32>
    %255 = vector.extract_strided_slice %158 {offsets = [400, 0], sizes = [1, 16], strides = [1, 1]} : vector<529x128xf32> to vector<1x16xf32>
    %c19_164 = arith.constant 19 : index
    %c0_165 = arith.constant 0 : index
    %c0_166 = arith.constant 0 : index
    %256 = vector.load %arg6[%c19_164, %c0_165, %c0_166] : memref<25x16x128xf32, #tpu.memory_space<vmem>>, vector<1x16x128xf32>
    %257 = vector.shape_cast %256 : vector<1x16x128xf32> to vector<16x128xf32>
    %cst_167 = arith.constant dense<0.000000e+00> : vector<1x128xf32>
    %258 = tpu.matmul %255, %257, %cst_167 {dimension_numbers = #tpu.dot_dimension_numbers<[1], [0], [0], [1], [0, 0, 1, 1], [], []>} : vector<1x16xf32>, vector<16x128xf32>, vector<1x128xf32> -> vector<1x128xf32>
    %259 = arith.addf %254, %258 : vector<1x128xf32>
    %260 = vector.extract_strided_slice %158 {offsets = [512, 0], sizes = [1, 16], strides = [1, 1]} : vector<529x128xf32> to vector<1x16xf32>
    %c20_168 = arith.constant 20 : index
    %c0_169 = arith.constant 0 : index
    %c0_170 = arith.constant 0 : index
    %261 = vector.load %arg6[%c20_168, %c0_169, %c0_170] : memref<25x16x128xf32, #tpu.memory_space<vmem>>, vector<1x16x128xf32>
    %262 = vector.shape_cast %261 : vector<1x16x128xf32> to vector<16x128xf32>
    %cst_171 = arith.constant dense<0.000000e+00> : vector<1x128xf32>
    %263 = tpu.matmul %260, %262, %cst_171 {dimension_numbers = #tpu.dot_dimension_numbers<[1], [0], [0], [1], [0, 0, 1, 1], [], []>} : vector<1x16xf32>, vector<16x128xf32>, vector<1x128xf32> -> vector<1x128xf32>
    %264 = arith.addf %259, %263 : vector<1x128xf32>
    %265 = vector.extract_strided_slice %158 {offsets = [516, 0], sizes = [1, 16], strides = [1, 1]} : vector<529x128xf32> to vector<1x16xf32>
    %c21_172 = arith.constant 21 : index
    %c0_173 = arith.constant 0 : index
    %c0_174 = arith.constant 0 : index
    %266 = vector.load %arg6[%c21_172, %c0_173, %c0_174] : memref<25x16x128xf32, #tpu.memory_space<vmem>>, vector<1x16x128xf32>
    %267 = vector.shape_cast %266 : vector<1x16x128xf32> to vector<16x128xf32>
    %cst_175 = arith.constant dense<0.000000e+00> : vector<1x128xf32>
    %268 = tpu.matmul %265, %267, %cst_175 {dimension_numbers = #tpu.dot_dimension_numbers<[1], [0], [0], [1], [0, 0, 1, 1], [], []>} : vector<1x16xf32>, vector<16x128xf32>, vector<1x128xf32> -> vector<1x128xf32>
    %269 = arith.addf %264, %268 : vector<1x128xf32>
    %270 = vector.extract_strided_slice %158 {offsets = [520, 0], sizes = [1, 16], strides = [1, 1]} : vector<529x128xf32> to vector<1x16xf32>
    %c22_176 = arith.constant 22 : index
    %c0_177 = arith.constant 0 : index
    %c0_178 = arith.constant 0 : index
    %271 = vector.load %arg6[%c22_176, %c0_177, %c0_178] : memref<25x16x128xf32, #tpu.memory_space<vmem>>, vector<1x16x128xf32>
    %272 = vector.shape_cast %271 : vector<1x16x128xf32> to vector<16x128xf32>
    %cst_179 = arith.constant dense<0.000000e+00> : vector<1x128xf32>
    %273 = tpu.matmul %270, %272, %cst_179 {dimension_numbers = #tpu.dot_dimension_numbers<[1], [0], [0], [1], [0, 0, 1, 1], [], []>} : vector<1x16xf32>, vector<16x128xf32>, vector<1x128xf32> -> vector<1x128xf32>
    %274 = arith.addf %269, %273 : vector<1x128xf32>
    %275 = vector.extract_strided_slice %158 {offsets = [524, 0], sizes = [1, 16], strides = [1, 1]} : vector<529x128xf32> to vector<1x16xf32>
    %c23_180 = arith.constant 23 : index
    %c0_181 = arith.constant 0 : index
    %c0_182 = arith.constant 0 : index
    %276 = vector.load %arg6[%c23_180, %c0_181, %c0_182] : memref<25x16x128xf32, #tpu.memory_space<vmem>>, vector<1x16x128xf32>
    %277 = vector.shape_cast %276 : vector<1x16x128xf32> to vector<16x128xf32>
    %cst_183 = arith.constant dense<0.000000e+00> : vector<1x128xf32>
    %278 = tpu.matmul %275, %277, %cst_183 {dimension_numbers = #tpu.dot_dimension_numbers<[1], [0], [0], [1], [0, 0, 1, 1], [], []>} : vector<1x16xf32>, vector<16x128xf32>, vector<1x128xf32> -> vector<1x128xf32>
    %279 = arith.addf %274, %278 : vector<1x128xf32>
    %280 = vector.extract_strided_slice %158 {offsets = [528, 0], sizes = [1, 16], strides = [1, 1]} : vector<529x128xf32> to vector<1x16xf32>
    %c24_184 = arith.constant 24 : index
    %c0_185 = arith.constant 0 : index
    %c0_186 = arith.constant 0 : index
    %281 = vector.load %arg6[%c24_184, %c0_185, %c0_186] : memref<25x16x128xf32, #tpu.memory_space<vmem>>, vector<1x16x128xf32>
    %282 = vector.shape_cast %281 : vector<1x16x128xf32> to vector<16x128xf32>
    %cst_187 = arith.constant dense<0.000000e+00> : vector<1x128xf32>
    %283 = tpu.matmul %280, %282, %cst_187 {dimension_numbers = #tpu.dot_dimension_numbers<[1], [0], [0], [1], [0, 0, 1, 1], [], []>} : vector<1x16xf32>, vector<16x128xf32>, vector<1x128xf32> -> vector<1x128xf32>
    %284 = arith.addf %279, %283 : vector<1x128xf32>
    %c0_188 = arith.constant 0 : index
    %c0_189 = arith.constant 0 : index
    %285 = vector.load %arg7[%c0_188, %c0_189] : memref<1x128xf32, #tpu.memory_space<vmem>>, vector<1x128xf32>
    %286 = arith.addf %284, %285 : vector<1x128xf32>
    %cst_190 = arith.constant 0.000000e+00 : f32
    %287 = vector.broadcast %cst_190 : f32 to vector<1x128xf32>
    %288 = arith.maximumf %286, %287 : vector<1x128xf32>
    %c0_191 = arith.constant 0 : index
    %c0_192 = arith.constant 0 : index
    %289 = vector.load %arg8[%c0_191, %c0_192] : memref<128x128xf32, #tpu.memory_space<vmem>>, vector<128x128xf32>
    %cst_193 = arith.constant dense<0.000000e+00> : vector<1x128xf32>
    %290 = tpu.matmul %288, %289, %cst_193 {dimension_numbers = #tpu.dot_dimension_numbers<[1], [0], [0], [1], [0, 0, 1, 1], [], []>} : vector<1x128xf32>, vector<128x128xf32>, vector<1x128xf32> -> vector<1x128xf32>
    %c0_194 = arith.constant 0 : index
    %c0_195 = arith.constant 0 : index
    %291 = vector.load %arg9[%c0_194, %c0_195] : memref<1x128xf32, #tpu.memory_space<vmem>>, vector<1x128xf32>
    %292 = arith.addf %290, %291 : vector<1x128xf32>
    %cst_196 = arith.constant 0.000000e+00 : f32
    %293 = vector.broadcast %cst_196 : f32 to vector<1x128xf32>
    %294 = arith.maximumf %292, %293 : vector<1x128xf32>
    %c0_197 = arith.constant 0 : index
    %c0_198 = arith.constant 0 : index
    %295 = vector.load %arg10[%c0_197, %c0_198] : memref<128x128xf32, #tpu.memory_space<vmem>>, vector<128x128xf32>
    %cst_199 = arith.constant dense<0.000000e+00> : vector<1x128xf32>
    %296 = tpu.matmul %294, %295, %cst_199 {dimension_numbers = #tpu.dot_dimension_numbers<[1], [0], [0], [1], [0, 0, 1, 1], [], []>} : vector<1x128xf32>, vector<128x128xf32>, vector<1x128xf32> -> vector<1x128xf32>
    %c0_200 = arith.constant 0 : index
    %c0_201 = arith.constant 0 : index
    %297 = vector.load %arg11[%c0_200, %c0_201] : memref<1x128xf32, #tpu.memory_space<vmem>>, vector<1x128xf32>
    %298 = arith.addf %296, %297 : vector<1x128xf32>
    %c0_202 = arith.constant 0 : index
    %c0_203 = arith.constant 0 : index
    %c0_204 = arith.constant 0 : index
    %299 = vector.load %arg12[%c0_202, %c0_203, %c0_204] : memref<1x1x128xf32, #tpu.memory_space<vmem>>, vector<1x1x128xf32>
    %300 = vector.shape_cast %299 : vector<1x1x128xf32> to vector<1x128xf32>
    %301 = vector.shape_cast %298 : vector<1x128xf32> to vector<1x1x128xf32>
    tpu.vector_store %arg12[%c0_202, %c0_203, %c0_204], %301 {strides = array<i32>} : memref<1x1x128xf32, #tpu.memory_space<vmem>>, vector<1x1x128xf32>,
    return
  }
  func.func @transform_0(%arg0: i32) -> (i32, i32, i32) {
    %c0_i32 = arith.constant 0 : i32
    %c0_i32_0 = arith.constant 0 : i32
    %c0_i32_1 = arith.constant 0 : i32
    return %arg0, %c0_i32, %c0_i32_0 : i32, i32, i32
  }
  func.func @transform_1(%arg0: i32) -> (i32, i32) {
    %c0_i32 = arith.constant 0 : i32
    %c0_i32_0 = arith.constant 0 : i32
    %c0_i32_1 = arith.constant 0 : i32
    return %c0_i32, %c0_i32_0 : i32, i32
  }
  func.func @transform_2(%arg0: i32) -> (i32, i32) {
    %c0_i32 = arith.constant 0 : i32
    %c0_i32_0 = arith.constant 0 : i32
    %c0_i32_1 = arith.constant 0 : i32
    return %c0_i32, %c0_i32_0 : i32, i32
  }
  func.func @transform_3(%arg0: i32) -> (i32, i32, i32) {
    %c0_i32 = arith.constant 0 : i32
    %c0_i32_0 = arith.constant 0 : i32
    %c0_i32_1 = arith.constant 0 : i32
    %c0_i32_2 = arith.constant 0 : i32
    return %c0_i32, %c0_i32_0, %c0_i32_1 : i32, i32, i32
  }
  func.func @transform_4(%arg0: i32) -> (i32, i32) {
    %c0_i32 = arith.constant 0 : i32
    %c0_i32_0 = arith.constant 0 : i32
    %c0_i32_1 = arith.constant 0 : i32
    return %c0_i32, %c0_i32_0 : i32, i32
  }
  func.func @transform_5(%arg0: i32) -> (i32, i32, i32) {
    %c0_i32 = arith.constant 0 : i32
    %c0_i32_0 = arith.constant 0 : i32
    %c0_i32_1 = arith.constant 0 : i32
    %c0_i32_2 = arith.constant 0 : i32
    return %c0_i32, %c0_i32_0, %c0_i32_1 : i32, i32, i32
  }
  func.func @transform_6(%arg0: i32) -> (i32, i32) {
    %c0_i32 = arith.constant 0 : i32
    %c0_i32_0 = arith.constant 0 : i32
    %c0_i32_1 = arith.constant 0 : i32
    return %c0_i32, %c0_i32_0 : i32, i32
  }
  func.func @transform_7(%arg0: i32) -> (i32, i32) {
    %c0_i32 = arith.constant 0 : i32
    %c0_i32_0 = arith.constant 0 : i32
    %c0_i32_1 = arith.constant 0 : i32
    return %c0_i32, %c0_i32_0 : i32, i32
  }
  func.func @transform_8(%arg0: i32) -> (i32, i32) {
    %c0_i32 = arith.constant 0 : i32
    %c0_i32_0 = arith.constant 0 : i32
    %c0_i32_1 = arith.constant 0 : i32
    return %c0_i32, %c0_i32_0 : i32, i32
  }
  func.func @transform_9(%arg0: i32) -> (i32, i32) {
    %c0_i32 = arith.constant 0 : i32
    %c0_i32_0 = arith.constant 0 : i32
    %c0_i32_1 = arith.constant 0 : i32
    return %c0_i32, %c0_i32_0 : i32, i32
  }
  func.func @transform_10(%arg0: i32) -> (i32, i32) {
    %c0_i32 = arith.constant 0 : i32
    %c0_i32_0 = arith.constant 0 : i32
    %c0_i32_1 = arith.constant 0 : i32
    return %c0_i32, %c0_i32_0 : i32, i32
  }
  func.func @transform_11(%arg0: i32) -> (i32, i32, i32) {
    %c0_i32 = arith.constant 0 : i32
    %c0_i32_0 = arith.constant 0 : i32
    %c0_i32_1 = arith.constant 0 : i32
    return %arg0, %c0_i32, %c0_i32_0 : i32, i32, i32
  }
}

</mosaic_0001>

<llo_original>
// kernel: tpu_custom_call.1
$region0: #{tpu_custom_call.1}
  #allocation0 [shape = 'u32[]', space=smem, size = 0x4, offset = 0x4, fixed_abs, tag = 'smem constant byte address 0x4 - core index']
  #allocation1 [shape = 'u32[72,128]{1,0:T(1,128)}', space=vmem, size = 0x9000, scoped, tag = 'internal scratch']
  %s0 = inlined_call_operand.vmem [shape: f32[2,904,80], index: 0, kind: input, shape index: {}]
  %s1 = inlined_call_operand.vmem [shape: f32[80,128], index: 1, kind: input, shape index: {}]
  %s2 = inlined_call_operand.vmem [shape: f32[1,128], index: 2, kind: input, shape index: {}]
  %s3 = inlined_call_operand.vmem [shape: f32[25,6,128], index: 3, kind: input, shape index: {}]
  %s4 = inlined_call_operand.vmem [shape: f32[1,128], index: 4, kind: input, shape index: {}]
  %s5 = inlined_call_operand.vmem [shape: f32[25,16,128], index: 5, kind: input, shape index: {}]
  %s6 = inlined_call_operand.vmem [shape: f32[1,128], index: 6, kind: input, shape index: {}]
  %s7 = inlined_call_operand.vmem [shape: f32[128,128], index: 7, kind: input, shape index: {}]
  %s8 = inlined_call_operand.vmem [shape: f32[1,128], index: 8, kind: input, shape index: {}]
  %s9 = inlined_call_operand.vmem [shape: f32[128,128], index: 9, kind: input, shape index: {}]
  %s10 = inlined_call_operand.vmem [shape: f32[1,128], index: 10, kind: input, shape index: {}]
  %s11 = inlined_call_operand.hbm [shape: f32[2,1,128], index: 11, kind: output, shape index: {}]
  %s12 = sld [smem:[#allocation0]]
  $region77: #{tpu_custom_call.1} parent=0
    _
  %s14 = ssub.s32 1, %s12
  %s15 = scalar_select 0, %s14, %s12
  $region1: #{tpu_custom_call.1} parent=0
    #allocation2 [shape = 'u8[1024]{0}', space=vmem, size = 0x400, scoped, tag = 'output window, operand 0']
    #allocation3 [shape = 's32[2]{0}', space=sflag, size = 0x8, scoped, tag = 'scoped memory for tpu_custom_call.1']
    %16 = vsyncpa [#allocation3], 0
    %s17 = scalar_lea.sflag [#allocation3], 1
    %18 = vsyncpa %s17, 0
    loop: start=0, step=1, limit=4
    $region2: #{tpu_custom_call.1} parent=1 // loop_pre_header
      _
    $region3: #{tpu_custom_call.1} parent=1 // loop_header
      %s20 = sphi 0, %s24
      %p21 = scmp.ge.s32.totalorder %s20, 4
      %s30 = sphi 0, %s32
      %s33 = sphi 0, %s30
      %s34 = sphi 0, %s33
      %s50 = sphi 0, %s34
      %s54 = sphi 0, %s54
      %s56 = sphi 0, %s54
      %s57 = sphi 0, %s56
      %s71 = sphi 0, %s57
      %s75 = sphi 0, %s75
      %s77 = sphi 0, %s75
      %s78 = sphi 0, %s77
      %s92 = sphi 0, %s78
      %s96 = sphi 0, %s96
      %s98 = sphi 0, %s96
      %s99 = sphi 0, %s98
      %s113 = sphi 0, %s99
      %s117 = sphi 0, %s117
      %s119 = sphi 0, %s117
      %s120 = sphi 0, %s119
      %s134 = sphi 0, %s120
      %s138 = sphi 0, %s138
      %s140 = sphi 0, %s138
      %s141 = sphi 0, %s140
      %s155 = sphi 0, %s141
      %s159 = sphi 0, %s159
      %s161 = sphi 0, %s159
      %s162 = sphi 0, %s161
      %s176 = sphi 0, %s162
      %s180 = sphi 0, %s180
      %s182 = sphi 0, %s180
      %s183 = sphi 0, %s182
      %s197 = sphi 0, %s183
      %s201 = sphi 0, %s201
      %s203 = sphi 0, %s201
      %s204 = sphi 0, %s203
      %s218 = sphi 0, %s204
      %s222 = sphi 0, %s222
      %s224 = sphi 0, %s222
      %s225 = sphi 0, %s224
      %s239 = sphi 0, %s225
      %s243 = sphi 0, %s243
      %s245 = sphi 0, %s243
      %s246 = sphi 0, %s245
      %s260 = sphi 0, %s246
      %s266 = sphi 0, %s268
      %s269 = sphi 0, %s266
      %s270 = sphi 0, %s269
      %s286 = sphi 0, %s270
    $region4: #{tpu_custom_call.1} parent=1 // loop_header_branch
      %23 = sbr.rel (%p21) target = $region8
    $region5: #{tpu_custom_call.1} parent=1 // loop_body
      %s25 = ssub.s32 %s20, 1
      %s26 = ssub.s32 %s20, 2
      %s27 = sadd.s32 %s20, 1
      %s28 = ssub.s32 %s20, %s27
      %p29 = scmp.eq.s32.totalorder %s28, 0
      %s31 = sadd.s32 %s30, 1
      %s32 = scalar_select %p29, %s30, %s31
      %p35 = pneg %p29
      %p36 = scmp.eq.s32.totalorder %s20, 1
      %p37 = por %p35, %p36
      %p38 = scmp.ne.s32.totalorder %s30, %s33
      %p39 = scmp.eq.s32.totalorder %s20, 0
      %p40 = por %p38, %p39
      %p41 = scmp.ne.s32.totalorder %s30, %s33
      %p42 = scmp.eq.s32.totalorder %s25, 1
      %p43 = por %p41, %p42
      %p44 = scmp.ne.s32.totalorder %s33, %s34
      %p45 = scmp.eq.s32.totalorder %s25, 0
      %p46 = por %p44, %p45
      %p47 = scmp.ne.s32.totalorder %s33, %s34
      %p48 = scmp.eq.s32.totalorder %s26, 1
      %p49 = por %p47, %p48
      %p51 = scmp.ne.s32.totalorder %s34, %s50
      %p52 = scmp.eq.s32.totalorder %s26, 0
      %p53 = por %p51, %p52
      %s55 = sadd.s32 %s54, 1
      %p58 = scmp.eq.s32.totalorder %s20, 1
      %p59 = scmp.ne.s32.totalorder %s54, %s56
      %p60 = scmp.eq.s32.totalorder %s20, 0
      %p61 = por %p59, %p60
      %p62 = scmp.ne.s32.totalorder %s54, %s56
      %p63 = scmp.eq.s32.totalorder %s25, 1
      %p64 = por %p62, %p63
      %p65 = scmp.ne.s32.totalorder %s56, %s57
      %p66 = scmp.eq.s32.totalorder %s25, 0
      %p67 = por %p65, %p66
      %p68 = scmp.ne.s32.totalorder %s56, %s57
      %p69 = scmp.eq.s32.totalorder %s26, 1
      %p70 = por %p68, %p69
      %p72 = scmp.ne.s32.totalorder %s57, %s71
      %p73 = scmp.eq.s32.totalorder %s26, 0
      %p74 = por %p72, %p73
      %s76 = sadd.s32 %s75, 1
      %p79 = scmp.eq.s32.totalorder %s20, 1
      %p80 = scmp.ne.s32.totalorder %s75, %s77
      %p81 = scmp.eq.s32.totalorder %s20, 0
      %p82 = por %p80, %p81
      %p83 = scmp.ne.s32.totalorder %s75, %s77
      %p84 = scmp.eq.s32.totalorder %s25, 1
      %p85 = por %p83, %p84
      %p86 = scmp.ne.s32.totalorder %s77, %s78
      %p87 = scmp.eq.s32.totalorder %s25, 0
      %p88 = por %p86, %p87
      %p89 = scmp.ne.s32.totalorder %s77, %s78
      %p90 = scmp.eq.s32.totalorder %s26, 1
      %p91 = por %p89, %p90
      %p93 = scmp.ne.s32.totalorder %s78, %s92
      %p94 = scmp.eq.s32.totalorder %s26, 0
      %p95 = por %p93, %p94
      %s97 = sadd.s32 %s96, 1
      %p100 = scmp.eq.s32.totalorder %s20, 1
      %p101 = scmp.ne.s32.totalorder %s96, %s98
      %p102 = scmp.eq.s32.totalorder %s20, 0
      %p103 = por %p101, %p102
      %p104 = scmp.ne.s32.totalorder %s96, %s98
      %p105 = scmp.eq.s32.totalorder %s25, 1
      %p106 = por %p104, %p105
      %p107 = scmp.ne.s32.totalorder %s98, %s99
      %p108 = scmp.eq.s32.totalorder %s25, 0
      %p109 = por %p107, %p108
      %p110 = scmp.ne.s32.totalorder %s98, %s99
      %p111 = scmp.eq.s32.totalorder %s26, 1
      %p112 = por %p110, %p111
      %p114 = scmp.ne.s32.totalorder %s99, %s113
      %p115 = scmp.eq.s32.totalorder %s26, 0
      %p116 = por %p114, %p115
      %s118 = sadd.s32 %s117, 1
      %p121 = scmp.eq.s32.totalorder %s20, 1
      %p122 = scmp.ne.s32.totalorder %s117, %s119
      %p123 = scmp.eq.s32.totalorder %s20, 0
      %p124 = por %p122, %p123
      %p125 = scmp.ne.s32.totalorder %s117, %s119
      %p126 = scmp.eq.s32.totalorder %s25, 1
      %p127 = por %p125, %p126
      %p128 = scmp.ne.s32.totalorder %s119, %s120
      %p129 = scmp.eq.s32.totalorder %s25, 0
      %p130 = por %p128, %p129
      %p131 = scmp.ne.s32.totalorder %s119, %s120
      %p132 = scmp.eq.s32.totalorder %s26, 1
      %p133 = por %p131, %p132
      %p135 = scmp.ne.s32.totalorder %s120, %s134
      %p136 = scmp.eq.s32.totalorder %s26, 0
      %p137 = por %p135, %p136
      %s139 = sadd.s32 %s138, 1
      %p142 = scmp.eq.s32.totalorder %s20, 1
      %p143 = scmp.ne.s32.totalorder %s138, %s140
      %p144 = scmp.eq.s32.totalorder %s20, 0
      %p145 = por %p143, %p144
      %p146 = scmp.ne.s32.totalorder %s138, %s140
      %p147 = scmp.eq.s32.totalorder %s25, 1
      %p148 = por %p146, %p147
      %p149 = scmp.ne.s32.totalorder %s140, %s141
      %p150 = scmp.eq.s32.totalorder %s25, 0
      %p151 = por %p149, %p150
      %p152 = scmp.ne.s32.totalorder %s140, %s141
      %p153 = scmp.eq.s32.totalorder %s26, 1
      %p154 = por %p152, %p153
      %p156 = scmp.ne.s32.totalorder %s141, %s155
      %p157 = scmp.eq.s32.totalorder %s26, 0
      %p158 = por %p156, %p157
      %s160 = sadd.s32 %s159, 1
      %p163 = scmp.eq.s32.totalorder %s20, 1
      %p164 = scmp.ne.s32.totalorder %s159, %s161
      %p165 = scmp.eq.s32.totalorder %s20, 0
      %p166 = por %p164, %p165
      %p167 = scmp.ne.s32.totalorder %s159, %s161
      %p168 = scmp.eq.s32.totalorder %s25, 1
      %p169 = por %p167, %p168
      %p170 = scmp.ne.s32.totalorder %s161, %s162
      %p171 = scmp.eq.s32.totalorder %s25, 0
      %p172 = por %p170, %p171
      %p173 = scmp.ne.s32.totalorder %s161, %s162
      %p174 = scmp.eq.s32.totalorder %s26, 1
      %p175 = por %p173, %p174
      %p177 = scmp.ne.s32.totalorder %s162, %s176
      %p178 = scmp.eq.s32.totalorder %s26, 0
      %p179 = por %p177, %p178
      %s181 = sadd.s32 %s180, 1
      %p184 = scmp.eq.s32.totalorder %s20, 1
      %p185 = scmp.ne.s32.totalorder %s180, %s182
      %p186 = scmp.eq.s32.totalorder %s20, 0
      %p187 = por %p185, %p186
      %p188 = scmp.ne.s32.totalorder %s180, %s182
      %p189 = scmp.eq.s32.totalorder %s25, 1
      %p190 = por %p188, %p189
      %p191 = scmp.ne.s32.totalorder %s182, %s183
      %p192 = scmp.eq.s32.totalorder %s25, 0
      %p193 = por %p191, %p192
      %p194 = scmp.ne.s32.totalorder %s182, %s183
      %p195 = scmp.eq.s32.totalorder %s26, 1
      %p196 = por %p194, %p195
      %p198 = scmp.ne.s32.totalorder %s183, %s197
      %p199 = scmp.eq.s32.totalorder %s26, 0
      %p200 = por %p198, %p199
      %s202 = sadd.s32 %s201, 1
      %p205 = scmp.eq.s32.totalorder %s20, 1
      %p206 = scmp.ne.s32.totalorder %s201, %s203
      %p207 = scmp.eq.s32.totalorder %s20, 0
      %p208 = por %p206, %p207
      %p209 = scmp.ne.s32.totalorder %s201, %s203
      %p210 = scmp.eq.s32.totalorder %s25, 1
      %p211 = por %p209, %p210
      %p212 = scmp.ne.s32.totalorder %s203, %s204
      %p213 = scmp.eq.s32.totalorder %s25, 0
      %p214 = por %p212, %p213
      %p215 = scmp.ne.s32.totalorder %s203, %s204
      %p216 = scmp.eq.s32.totalorder %s26, 1
      %p217 = por %p215, %p216
      %p219 = scmp.ne.s32.totalorder %s204, %s218
      %p220 = scmp.eq.s32.totalorder %s26, 0
      %p221 = por %p219, %p220
      %s223 = sadd.s32 %s222, 1
      %p226 = scmp.eq.s32.totalorder %s20, 1
      %p227 = scmp.ne.s32.totalorder %s222, %s224
      %p228 = scmp.eq.s32.totalorder %s20, 0
      %p229 = por %p227, %p228
      %p230 = scmp.ne.s32.totalorder %s222, %s224
      %p231 = scmp.eq.s32.totalorder %s25, 1
      %p232 = por %p230, %p231
      %p233 = scmp.ne.s32.totalorder %s224, %s225
      %p234 = scmp.eq.s32.totalorder %s25, 0
      %p235 = por %p233, %p234
      %p236 = scmp.ne.s32.totalorder %s224, %s225
      %p237 = scmp.eq.s32.totalorder %s26, 1
      %p238 = por %p236, %p237
      %p240 = scmp.ne.s32.totalorder %s225, %s239
      %p241 = scmp.eq.s32.totalorder %s26, 0
      %p242 = por %p240, %p241
      %s244 = sadd.s32 %s243, 1
      %p247 = scmp.eq.s32.totalorder %s20, 1
      %p248 = scmp.ne.s32.totalorder %s243, %s245
      %p249 = scmp.eq.s32.totalorder %s20, 0
      %p250 = por %p248, %p249
      %p251 = scmp.ne.s32.totalorder %s243, %s245
      %p252 = scmp.eq.s32.totalorder %s25, 1
      %p253 = por %p251, %p252
      %p254 = scmp.ne.s32.totalorder %s245, %s246
      %p255 = scmp.eq.s32.totalorder %s25, 0
      %p256 = por %p254, %p255
      %p257 = scmp.ne.s32.totalorder %s245, %s246
      %p258 = scmp.eq.s32.totalorder %s26, 1
      %p259 = por %p257, %p258
      %p261 = scmp.ne.s32.totalorder %s246, %s260
      %p262 = scmp.eq.s32.totalorder %s26, 0
      %p263 = por %p261, %p262
      %s264 = ssub.s32 %s20, %s27
      %p265 = scmp.eq.s32.totalorder %s264, 0
      %s267 = sadd.s32 %s266, 1
      %s268 = scalar_select %p265, %s266, %s267
      %p271 = pneg %p265
      %p272 = scmp.eq.s32.totalorder %s20, 1
      %p273 = por %p271, %p272
      %p274 = scmp.ne.s32.totalorder %s266, %s269
      %p275 = scmp.eq.s32.totalorder %s20, 0
      %p276 = por %p274, %p275
      %p277 = scmp.ne.s32.totalorder %s266, %s269
      %p278 = scmp.eq.s32.totalorder %s25, 1
      %p279 = por %p277, %p278
      %p280 = scmp.ne.s32.totalorder %s269, %s270
      %p281 = scmp.eq.s32.totalorder %s25, 0
      %p282 = por %p280, %p281
      %p283 = scmp.ne.s32.totalorder %s269, %s270
      %p284 = scmp.eq.s32.totalorder %s26, 1
      %p285 = por %p283, %p284
      %p287 = scmp.ne.s32.totalorder %s270, %s286
      %p288 = scmp.eq.s32.totalorder %s26, 0
      %p289 = por %p287, %p288
      %p290 = scmp.le.s32.totalorder 1, %s20
      %p291 = scmp.lt.s32.totalorder %s20, 3
      %p292 = pnand %p290, %p291
      %p293 = pneg %p292
      // Predicated region
      $region9: #{tpu_custom_call.1} parent=5 // pred_check
        _
      $region10: #{tpu_custom_call.1} parent=5 // pred_check_branch
        %295 = sbr.rel (%p292) target = $region12
      $region11: #{tpu_custom_call.1} parent=5 // pred_region
        %s296 = ssub.s32 %s20, 1
        // Predicated region
        $region13: #{tpu_custom_call.1} parent=11 // pred_check
          %p297 = pneg %p67
        $region14: #{tpu_custom_call.1} parent=11 // pred_check_branch
          %299 = sbr.rel (%p297) target = $region16
        $region15: #{tpu_custom_call.1} parent=11 // pred_region
          _
        $region16: #{tpu_custom_call.1} parent=11 // pred_fallthru
          _
        // Predicated region
        $region17: #{tpu_custom_call.1} parent=11 // pred_check
          %p300 = pneg %p88
        $region18: #{tpu_custom_call.1} parent=11 // pred_check_branch
          %302 = sbr.rel (%p300) target = $region20
        $region19: #{tpu_custom_call.1} parent=11 // pred_region
          _
        $region20: #{tpu_custom_call.1} parent=11 // pred_fallthru
          _
        // Predicated region
        $region21: #{tpu_custom_call.1} parent=11 // pred_check
          %p303 = pneg %p109
        $region22: #{tpu_custom_call.1} parent=11 // pred_check_branch
          %305 = sbr.rel (%p303) target = $region24
        $region23: #{tpu_custom_call.1} parent=11 // pred_region
          _
        $region24: #{tpu_custom_call.1} parent=11 // pred_fallthru
          _
        // Predicated region
        $region25: #{tpu_custom_call.1} parent=11 // pred_check
          %p306 = pneg %p130
        $region26: #{tpu_custom_call.1} parent=11 // pred_check_branch
          %308 = sbr.rel (%p306) target = $region28
        $region27: #{tpu_custom_call.1} parent=11 // pred_region
          _
        $region28: #{tpu_custom_call.1} parent=11 // pred_fallthru
          _
        // Predicated region
        $region29: #{tpu_custom_call.1} parent=11 // pred_check
          %p309 = pneg %p151
        $region30: #{tpu_custom_call.1} parent=11 // pred_check_branch
          %311 = sbr.rel (%p309) target = $region32
        $region31: #{tpu_custom_call.1} parent=11 // pred_region
          _
        $region32: #{tpu_custom_call.1} parent=11 // pred_fallthru
          _
        // Predicated region
        $region33: #{tpu_custom_call.1} parent=11 // pred_check
          %p312 = pneg %p172
        $region34: #{tpu_custom_call.1} parent=11 // pred_check_branch
          %314 = sbr.rel (%p312) target = $region36
        $region35: #{tpu_custom_call.1} parent=11 // pred_region
          _
        $region36: #{tpu_custom_call.1} parent=11 // pred_fallthru
          _
        // Predicated region
        $region37: #{tpu_custom_call.1} parent=11 // pred_check
          %p315 = pneg %p193
        $region38: #{tpu_custom_call.1} parent=11 // pred_check_branch
          %317 = sbr.rel (%p315) target = $region40
        $region39: #{tpu_custom_call.1} parent=11 // pred_region
          _
        $region40: #{tpu_custom_call.1} parent=11 // pred_fallthru
          _
        // Predicated region
        $region41: #{tpu_custom_call.1} parent=11 // pred_check
          %p318 = pneg %p214
        $region42: #{tpu_custom_call.1} parent=11 // pred_check_branch
          %320 = sbr.rel (%p318) target = $region44
        $region43: #{tpu_custom_call.1} parent=11 // pred_region
          _
        $region44: #{tpu_custom_call.1} parent=11 // pred_fallthru
          _
        // Predicated region
        $region45: #{tpu_custom_call.1} parent=11 // pred_check
          %p321 = pneg %p235
        $region46: #{tpu_custom_call.1} parent=11 // pred_check_branch
          %323 = sbr.rel (%p321) target = $region48
        $region47: #{tpu_custom_call.1} parent=11 // pred_region
          _
        $region48: #{tpu_custom_call.1} parent=11 // pred_fallthru
          _
        // Predicated region
        $region49: #{tpu_custom_call.1} parent=11 // pred_check
          %p324 = pneg %p256
        $region50: #{tpu_custom_call.1} parent=11 // pred_check_branch
          %326 = sbr.rel (%p324) target = $region52
        $region51: #{tpu_custom_call.1} parent=11 // pred_region
          _
        $region52: #{tpu_custom_call.1} parent=11 // pred_fallthru
          _
      $region12: #{tpu_custom_call.1} parent=5 // pred_fallthru
        _
      %p327 = scmp.lt.s32.totalorder %s20, 2
      // Predicated region
      $region53: #{tpu_custom_call.1} parent=5 // pred_check
        %p328 = pneg %p327
      $region54: #{tpu_custom_call.1} parent=5 // pred_check_branch
        %330 = sbr.rel (%p328) target = $region56
      $region55: #{tpu_custom_call.1} parent=5 // pred_region
        // Predicated region
        $region57: #{tpu_custom_call.1} parent=55 // pred_check
          %p331 = pneg %p40
        $region58: #{tpu_custom_call.1} parent=55 // pred_check_branch
          %333 = sbr.rel (%p331) target = $region60
        $region59: #{tpu_custom_call.1} parent=55 // pred_region
          %p334 = scmp.lt.s32.totalorder %s20, 1
          %s335 = scalar_select %p334, %s20, 1
          %s336 = smul.addr %s335, 113
          %s337 = smul.addr %s336, 8
          %s338 = scalar_lea.vmem %s0, %s337
        $region60: #{tpu_custom_call.1} parent=55 // pred_fallthru
          _
      $region56: #{tpu_custom_call.1} parent=5 // pred_fallthru
        _
      %p339 = scmp.le.s32.totalorder 1, %s20
      %p340 = scmp.lt.s32.totalorder %s20, 3
      %p341 = pnand %p339, %p340
      %p342 = pneg %p341
      // Predicated region
      $region61: #{tpu_custom_call.1} parent=5 // pred_check
        _
      $region62: #{tpu_custom_call.1} parent=5 // pred_check_branch
        %344 = sbr.rel (%p341) target = $region64
      $region63: #{tpu_custom_call.1} parent=5 // pred_region
        %s345 = ssub.s32 %s20, 1
        %p346 = scmp.lt.s32.totalorder %s25, 1
        %s347 = scalar_select %p346, %s25, 1
        %s348 = smul.addr %s347, 113
        %s349 = smul.addr %s348, 8
        %s350 = scalar_lea.vmem %s0, %s349
        %p351 = pneg %p46
        %p352 = pneg %p43
        %p353 = pneg %p67
        %p354 = pneg %p64
        %p355 = pneg %p88
        %p356 = pneg %p85
        %p357 = pneg %p109
        %p358 = pneg %p106
        %p359 = pneg %p130
        %p360 = pneg %p127
        %p361 = pneg %p151
        %p362 = pneg %p148
        %p363 = pneg %p172
        %p364 = pneg %p169
        %p365 = pneg %p193
        %p366 = pneg %p190
        %p367 = pneg %p214
        %p368 = pneg %p211
        %p369 = pneg %p235
        %p370 = pneg %p232
        %p371 = pneg %p256
        %p372 = pneg %p253
        %p373 = pneg %p282
        %p374 = pneg %p279
        %s375 = sand.u32 %s269, 1
        %s376 = scalar_lea.sflag [#allocation3], %s375
        %s377 = sand.u32 %s269, 1
        %s378 = scalar_lea.vmem [#allocation2], %s377
        %p379 = scmp.lt.s32.totalorder %s25, 1
        %s380 = scalar_select %p379, %s25, 1
        %s381 = smul.addr %s380, 113
        %s382 = smul.addr %s381, 8
        %s383 = scalar_lea.vmem %s0, %s382
        %v384 = vld [vmem:[%s383] sm:$0xff]
        %v385 = vld [vmem:[%s383 + $0x8] sm:$0xff]
        %v386 = vld [vmem:[%s383 + $0x10] sm:$0xff]
        %v387 = vld [vmem:[%s383 + $0x18] sm:$0xff]
        %v388 = vld [vmem:[%s383 + $0x20] sm:$0xff]
        %v389 = vld [vmem:[%s383 + $0x28] sm:$0xff]
        %v390 = vld [vmem:[%s383 + $0x30] sm:$0xff]
        %v391 = vld [vmem:[%s383 + $0x38] sm:$0xff]
        %v392 = vld [vmem:[%s383 + $0x40] sm:$0xff]
        %v393 = vld [vmem:[%s383 + $0x48] sm:$0xff]
        %v394 = vld [vmem:[%s383 + $0x50] sm:$0xff]
        %v395 = vld [vmem:[%s383 + $0x58] sm:$0xff]
        %v396 = vld [vmem:[%s383 + $0x60] sm:$0xff]
        %v397 = vld [vmem:[%s383 + $0x68] sm:$0xff]
        %v398 = vld [vmem:[%s383 + $0x70] sm:$0xff]
        %v399 = vld [vmem:[%s383 + $0x78] sm:$0xff]
        %v400 = vld [vmem:[%s383 + $0x80] sm:$0xff]
        %v401 = vld [vmem:[%s383 + $0x88] sm:$0xff]
        %v402 = vld [vmem:[%s383 + $0x90] sm:$0xff]
        %v403 = vld [vmem:[%s383 + $0x98] sm:$0xff]
        %v404 = vld [vmem:[%s383 + $0xa0] sm:$0xff]
        %v405 = vld [vmem:[%s383 + $0xa8] sm:$0xff]
        %v406 = vld [vmem:[%s383 + $0xb0] sm:$0xff]
        %v407 = vld [vmem:[%s383 + $0xb8] sm:$0xff]
        %v408 = vld [vmem:[%s383 + $0xc0] sm:$0xff]
        %v409 = vld [vmem:[%s383 + $0xc8] sm:$0xff]
        %v410 = vld [vmem:[%s383 + $0xd0] sm:$0xff]
        %v411 = vld [vmem:[%s383 + $0xd8] sm:$0xff]
        %v412 = vld [vmem:[%s383 + $0xe0] sm:$0xff]
        %v413 = vld [vmem:[%s383 + $0xe8] sm:$0xff]
        %v414 = vld [vmem:[%s383 + $0xf0] sm:$0xff]
        %v415 = vld [vmem:[%s383 + $0xf8] sm:$0xff]
        %v416 = vld [vmem:[%s383 + $0x100] sm:$0xff]
        %v417 = vld [vmem:[%s383 + $0x108] sm:$0xff]
        %v418 = vld [vmem:[%s383 + $0x110] sm:$0xff]
        %v419 = vld [vmem:[%s383 + $0x118] sm:$0xff]
        %v420 = vld [vmem:[%s383 + $0x120] sm:$0xff]
        %v421 = vld [vmem:[%s383 + $0x128] sm:$0xff]
        %v422 = vld [vmem:[%s383 + $0x130] sm:$0xff]
        %v423 = vld [vmem:[%s383 + $0x138] sm:$0xff]
        %v424 = vld [vmem:[%s383 + $0x140] sm:$0xff]
        %v425 = vld [vmem:[%s383 + $0x148] sm:$0xff]
        %v426 = vld [vmem:[%s383 + $0x150] sm:$0xff]
        %v427 = vld [vmem:[%s383 + $0x158] sm:$0xff]
        %v428 = vld [vmem:[%s383 + $0x160] sm:$0xff]
        %v429 = vld [vmem:[%s383 + $0x168] sm:$0xff]
        %v430 = vld [vmem:[%s383 + $0x170] sm:$0xff]
        %v431 = vld [vmem:[%s383 + $0x178] sm:$0xff]
        %v432 = vld [vmem:[%s383 + $0x180] sm:$0xff]
        %v433 = vld [vmem:[%s383 + $0x188] sm:$0xff]
        %v434 = vld [vmem:[%s383 + $0x190] sm:$0xff]
        %v435 = vld [vmem:[%s383 + $0x198] sm:$0xff]
        %v436 = vld [vmem:[%s383 + $0x1a0] sm:$0xff]
        %v437 = vld [vmem:[%s383 + $0x1a8] sm:$0xff]
        %v438 = vld [vmem:[%s383 + $0x1b0] sm:$0xff]
        %v439 = vld [vmem:[%s383 + $0x1b8] sm:$0xff]
        %v440 = vld [vmem:[%s383 + $0x1c0] sm:$0xff]
        %v441 = vld [vmem:[%s383 + $0x1c8] sm:$0xff]
        %v442 = vld [vmem:[%s383 + $0x1d0] sm:$0xff]
        %v443 = vld [vmem:[%s383 + $0x1d8] sm:$0xff]
        %v444 = vld [vmem:[%s383 + $0x1e0] sm:$0xff]
        %v445 = vld [vmem:[%s383 + $0x1e8] sm:$0xff]
        %v446 = vld [vmem:[%s383 + $0x1f0] sm:$0xff]
        %v447 = vld [vmem:[%s383 + $0x1f8] sm:$0xff]
        %v448 = vld [vmem:[%s383 + $0x200] sm:$0xff]
        %v449 = vld [vmem:[%s383 + $0x208] sm:$0xff]
        %v450 = vld [vmem:[%s383 + $0x210] sm:$0xff]
        %v451 = vld [vmem:[%s383 + $0x218] sm:$0xff]
        %v452 = vld [vmem:[%s383 + $0x220] sm:$0xff]
        %v453 = vld [vmem:[%s383 + $0x228] sm:$0xff]
        %v454 = vld [vmem:[%s383 + $0x230] sm:$0xff]
        %v455 = vld [vmem:[%s383 + $0x238] sm:$0xff]
        %v456 = vld [vmem:[%s383 + $0x240] sm:$0xff]
        %v457 = vld [vmem:[%s383 + $0x248] sm:$0xff]
        %v458 = vld [vmem:[%s383 + $0x250] sm:$0xff]
        %v459 = vld [vmem:[%s383 + $0x258] sm:$0xff]
        %v460 = vld [vmem:[%s383 + $0x260] sm:$0xff]
        %v461 = vld [vmem:[%s383 + $0x268] sm:$0xff]
        %v462 = vld [vmem:[%s383 + $0x270] sm:$0xff]
        %v463 = vld [vmem:[%s383 + $0x278] sm:$0xff]
        %v464 = vld [vmem:[%s383 + $0x280] sm:$0xff]
        %v465 = vld [vmem:[%s383 + $0x288] sm:$0xff]
        %v466 = vld [vmem:[%s383 + $0x290] sm:$0xff]
        %v467 = vld [vmem:[%s383 + $0x298] sm:$0xff]
        %v468 = vld [vmem:[%s383 + $0x2a0] sm:$0xff]
        %v469 = vld [vmem:[%s383 + $0x2a8] sm:$0xff]
        %v470 = vld [vmem:[%s383 + $0x2b0] sm:$0xff]
        %v471 = vld [vmem:[%s383 + $0x2b8] sm:$0xff]
        %v472 = vld [vmem:[%s383 + $0x2c0] sm:$0xff]
        %v473 = vld [vmem:[%s383 + $0x2c8] sm:$0xff]
        %v474 = vld [vmem:[%s383 + $0x2d0] sm:$0xff]
        %v475 = vld [vmem:[%s383 + $0x2d8] sm:$0xff]
        %v476 = vld [vmem:[%s383 + $0x2e0] sm:$0xff]
        %v477 = vld [vmem:[%s383 + $0x2e8] sm:$0xff]
        %v478 = vld [vmem:[%s383 + $0x2f0] sm:$0xff]
        %v479 = vld [vmem:[%s383 + $0x2f8] sm:$0xff]
        %v480 = vld [vmem:[%s383 + $0x300] sm:$0xff]
        %v481 = vld [vmem:[%s383 + $0x308] sm:$0xff]
        %v482 = vld [vmem:[%s383 + $0x310] sm:$0xff]
        %v483 = vld [vmem:[%s383 + $0x318] sm:$0xff]
        %v484 = vld [vmem:[%s383 + $0x320] sm:$0xff]
        %v485 = vld [vmem:[%s383 + $0x328] sm:$0xff]
        %v486 = vld [vmem:[%s383 + $0x330] sm:$0xff]
        %v487 = vld [vmem:[%s383 + $0x338] sm:$0xff]
        %v488 = vld [vmem:[%s383 + $0x340] sm:$0xff]
        %v489 = vld [vmem:[%s383 + $0x348] sm:$0xff]
        %v490 = vld [vmem:[%s383 + $0x350] sm:$0xff]
        %v491 = vld [vmem:[%s383 + $0x358] sm:$0xff]
        %v492 = vld [vmem:[%s383 + $0x360] sm:$0xff]
        %v493 = vld [vmem:[%s383 + $0x368] sm:$0xff]
        %v494 = vld [vmem:[%s383 + $0x370] sm:$0xff]
        %v495 = vld [vmem:[%s383 + $0x378] sm:$0xff]
        %v496 = vld [vmem:[%s383 + $0x380] sm:$0xff]
        %v497 = vld [vmem:[%s1] sm:$0xff]
        %v498 = vld [vmem:[%s1 + $0x8] sm:$0xff]
        %v499 = vld [vmem:[%s1 + $0x10] sm:$0xff]
        %v500 = vld [vmem:[%s1 + $0x18] sm:$0xff]
        %v501 = vld [vmem:[%s1 + $0x20] sm:$0xff]
        %v502 = vld [vmem:[%s1 + $0x28] sm:$0xff]
        %v503 = vld [vmem:[%s1 + $0x30] sm:$0xff]
        %v504 = vld [vmem:[%s1 + $0x38] sm:$0xff]
        %v505 = vld [vmem:[%s1 + $0x40] sm:$0xff]
        %v506 = vld [vmem:[%s1 + $0x48] sm:$0xff]
        %v507 = vld [vmem:[%s2] sm:$0x1]
        %v509 = vperm.slane %v507, 0
        %vm511 = vcmask 654336
        %v513 = vsel %vm511, %v384, 0
        %v516 = vsel %vm511, %v385, 0
        %v519 = vsel %vm511, %v386, 0
        %v522 = vsel %vm511, %v387, 0
        %v525 = vsel %vm511, %v388, 0
        %v528 = vsel %vm511, %v389, 0
        %v531 = vsel %vm511, %v390, 0
        %v534 = vsel %vm511, %v391, 0
        %v537 = vsel %vm511, %v392, 0
        %v540 = vsel %vm511, %v393, 0
        %v543 = vsel %vm511, %v394, 0
        %v546 = vsel %vm511, %v395, 0
        %v549 = vsel %vm511, %v396, 0
        %v552 = vsel %vm511, %v397, 0
        %v555 = vsel %vm511, %v398, 0
        %v558 = vsel %vm511, %v399, 0
        %v561 = vsel %vm511, %v400, 0
        %v564 = vsel %vm511, %v401, 0
        %v567 = vsel %vm511, %v402, 0
        %v570 = vsel %vm511, %v403, 0
        %v573 = vsel %vm511, %v404, 0
        %v576 = vsel %vm511, %v405, 0
        %v579 = vsel %vm511, %v406, 0
        %v582 = vsel %vm511, %v407, 0
        %v585 = vsel %vm511, %v408, 0
        %v588 = vsel %vm511, %v409, 0
        %v591 = vsel %vm511, %v410, 0
        %v594 = vsel %vm511, %v411, 0
        %v597 = vsel %vm511, %v412, 0
        %v600 = vsel %vm511, %v413, 0
        %v603 = vsel %vm511, %v414, 0
        %v606 = vsel %vm511, %v415, 0
        %v609 = vsel %vm511, %v416, 0
        %v612 = vsel %vm511, %v417, 0
        %v615 = vsel %vm511, %v418, 0
        %v618 = vsel %vm511, %v419, 0
        %v621 = vsel %vm511, %v420, 0
        %v624 = vsel %vm511, %v421, 0
        %v627 = vsel %vm511, %v422, 0
        %v630 = vsel %vm511, %v423, 0
        %v633 = vsel %vm511, %v424, 0
        %v636 = vsel %vm511, %v425, 0
        %v639 = vsel %vm511, %v426, 0
        %v642 = vsel %vm511, %v427, 0
        %v645 = vsel %vm511, %v428, 0
        %v648 = vsel %vm511, %v429, 0
        %v651 = vsel %vm511, %v430, 0
        %v654 = vsel %vm511, %v431, 0
        %v657 = vsel %vm511, %v432, 0
        %v660 = vsel %vm511, %v433, 0
        %v663 = vsel %vm511, %v434, 0
        %v666 = vsel %vm511, %v435, 0
        %v669 = vsel %vm511, %v436, 0
        %v672 = vsel %vm511, %v437, 0
        %v675 = vsel %vm511, %v438, 0
        %v678 = vsel %vm511, %v439, 0
        %v681 = vsel %vm511, %v440, 0
        %v684 = vsel %vm511, %v441, 0
        %v687 = vsel %vm511, %v442, 0
        %v690 = vsel %vm511, %v443, 0
        %v693 = vsel %vm511, %v444, 0
        %v696 = vsel %vm511, %v445, 0
        %v699 = vsel %vm511, %v446, 0
        %v702 = vsel %vm511, %v447, 0
        %v705 = vsel %vm511, %v448, 0
        %v708 = vsel %vm511, %v449, 0
        %v711 = vsel %vm511, %v450, 0
        %v714 = vsel %vm511, %v451, 0
        %v717 = vsel %vm511, %v452, 0
        %v720 = vsel %vm511, %v453, 0
        %v723 = vsel %vm511, %v454, 0
        %v726 = vsel %vm511, %v455, 0
        %v729 = vsel %vm511, %v456, 0
        %v732 = vsel %vm511, %v457, 0
        %v735 = vsel %vm511, %v458, 0
        %v738 = vsel %vm511, %v459, 0
        %v741 = vsel %vm511, %v460, 0
        %v744 = vsel %vm511, %v461, 0
        %v747 = vsel %vm511, %v462, 0
        %v750 = vsel %vm511, %v463, 0
        %v753 = vsel %vm511, %v464, 0
        %v756 = vsel %vm511, %v465, 0
        %v759 = vsel %vm511, %v466, 0
        %v762 = vsel %vm511, %v467, 0
        %v765 = vsel %vm511, %v468, 0
        %v768 = vsel %vm511, %v469, 0
        %v771 = vsel %vm511, %v470, 0
        %v774 = vsel %vm511, %v471, 0
        %v777 = vsel %vm511, %v472, 0
        %v780 = vsel %vm511, %v473, 0
        %v783 = vsel %vm511, %v474, 0
        %v786 = vsel %vm511, %v475, 0
        %v789 = vsel %vm511, %v476, 0
        %v792 = vsel %vm511, %v477, 0
        %v795 = vsel %vm511, %v478, 0
        %v798 = vsel %vm511, %v479, 0
        %v801 = vsel %vm511, %v480, 0
        %v804 = vsel %vm511, %v481, 0
        %v807 = vsel %vm511, %v482, 0
        %v810 = vsel %vm511, %v483, 0
        %v813 = vsel %vm511, %v484, 0
        %v816 = vsel %vm511, %v485, 0
        %v819 = vsel %vm511, %v486, 0
        %v822 = vsel %vm511, %v487, 0
        %v825 = vsel %vm511, %v488, 0
        %v828 = vsel %vm511, %v489, 0
        %v831 = vsel %vm511, %v490, 0
        %v834 = vsel %vm511, %v491, 0
        %v837 = vsel %vm511, %v492, 0
        %v840 = vsel %vm511, %v493, 0
        %v843 = vsel %vm511, %v494, 0
        %v846 = vsel %vm511, %v495, 0
        %v849 = vsel %vm511, %v496, 0
        %851 = vmatpush.msra.mxu0 0.0
        %852 = vmatpush.msra.mxu0 0.0
        %853 = vmatpush.msra.mxu0 0.0
        %854 = vmatpush.msra.mxu0 0.0
        %855 = vmatpush.msra.mxu0 0.0
        %856 = vmatpush.msra.mxu0 0.0
        %857 = vmatpush.msra.mxu0 %v506
        %858 = vmatpush.msra.mxu0 %v505
        %859 = vmatpush.msra.mxu0 %v504
        %860 = vmatpush.msra.mxu0 %v503
        %861 = vmatpush.msra.mxu0 %v502
        %862 = vmatpush.msra.mxu0 %v501
        %863 = vmatpush.msra.mxu0 %v500
        %864 = vmatpush.msra.mxu0 %v499
        %865 = vmatpush.msra.mxu0 %v498
        %866 = vmatpush.msra.mxu0 %v497
        %867 = vmatmul.f32.gmra.mxu0 %v513
        %v868 = vpop.f32.mrf.mxu0
        %v869 = vadd.f32 %v509, %v868
        %870 = vmatmul.f32.gmra.mxu0 %v516
        %v871 = vpop.f32.mrf.mxu0
        %v872 = vadd.f32 %v509, %v871
        %873 = vmatmul.f32.gmra.mxu0 %v519
        %v874 = vpop.f32.mrf.mxu0
        %v875 = vadd.f32 %v509, %v874
        %876 = vmatmul.f32.gmra.mxu0 %v522
        %v877 = vpop.f32.mrf.mxu0
        %v878 = vadd.f32 %v509, %v877
        %879 = vmatmul.f32.gmra.mxu0 %v525
        %v880 = vpop.f32.mrf.mxu0
        %v881 = vadd.f32 %v509, %v880
        %882 = vmatmul.f32.gmra.mxu0 %v528
        %v883 = vpop.f32.mrf.mxu0
        %v884 = vadd.f32 %v509, %v883
        %885 = vmatmul.f32.gmra.mxu0 %v531
        %v886 = vpop.f32.mrf.mxu0
        %v887 = vadd.f32 %v509, %v886
        %888 = vmatmul.f32.gmra.mxu0 %v534
        %v889 = vpop.f32.mrf.mxu0
        %v890 = vadd.f32 %v509, %v889
        %891 = vmatmul.f32.gmra.mxu0 %v537
        %v892 = vpop.f32.mrf.mxu0
        %v893 = vadd.f32 %v509, %v892
        %894 = vmatmul.f32.gmra.mxu0 %v540
        %v895 = vpop.f32.mrf.mxu0
        %v896 = vadd.f32 %v509, %v895
        %897 = vmatmul.f32.gmra.mxu0 %v543
        %v898 = vpop.f32.mrf.mxu0
        %v899 = vadd.f32 %v509, %v898
        %900 = vmatmul.f32.gmra.mxu0 %v546
        %v901 = vpop.f32.mrf.mxu0
        %v902 = vadd.f32 %v509, %v901
        %903 = vmatmul.f32.gmra.mxu0 %v549
        %v904 = vpop.f32.mrf.mxu0
        %v905 = vadd.f32 %v509, %v904
        %906 = vmatmul.f32.gmra.mxu0 %v552
        %v907 = vpop.f32.mrf.mxu0
        %v908 = vadd.f32 %v509, %v907
        %909 = vmatmul.f32.gmra.mxu0 %v555
        %v910 = vpop.f32.mrf.mxu0
        %v911 = vadd.f32 %v509, %v910
        %912 = vmatmul.f32.gmra.mxu0 %v558
        %v913 = vpop.f32.mrf.mxu0
        %v914 = vadd.f32 %v509, %v913
        %915 = vmatmul.f32.gmra.mxu0 %v561
        %v916 = vpop.f32.mrf.mxu0
        %v917 = vadd.f32 %v509, %v916
        %918 = vmatmul.f32.gmra.mxu0 %v564
        %v919 = vpop.f32.mrf.mxu0
        %v920 = vadd.f32 %v509, %v919
        %921 = vmatmul.f32.gmra.mxu0 %v567
        %v922 = vpop.f32.mrf.mxu0
        %v923 = vadd.f32 %v509, %v922
        %924 = vmatmul.f32.gmra.mxu0 %v570
        %v925 = vpop.f32.mrf.mxu0
        %v926 = vadd.f32 %v509, %v925
        %927 = vmatmul.f32.gmra.mxu0 %v573
        %v928 = vpop.f32.mrf.mxu0
        %v929 = vadd.f32 %v509, %v928
        %930 = vmatmul.f32.gmra.mxu0 %v576
        %v931 = vpop.f32.mrf.mxu0
        %v932 = vadd.f32 %v509, %v931
        %933 = vmatmul.f32.gmra.mxu0 %v579
        %v934 = vpop.f32.mrf.mxu0
        %v935 = vadd.f32 %v509, %v934
        %936 = vmatmul.f32.gmra.mxu0 %v582
        %v937 = vpop.f32.mrf.mxu0
        %v938 = vadd.f32 %v509, %v937
        %939 = vmatmul.f32.gmra.mxu0 %v585
        %v940 = vpop.f32.mrf.mxu0
        %v941 = vadd.f32 %v509, %v940
        %942 = vmatmul.f32.gmra.mxu0 %v588
        %v943 = vpop.f32.mrf.mxu0
        %v944 = vadd.f32 %v509, %v943
        %945 = vmatmul.f32.gmra.mxu0 %v591
        %v946 = vpop.f32.mrf.mxu0
        %v947 = vadd.f32 %v509, %v946
        %948 = vmatmul.f32.gmra.mxu0 %v594
        %v949 = vpop.f32.mrf.mxu0
        %v950 = vadd.f32 %v509, %v949
        %951 = vmatmul.f32.gmra.mxu0 %v597
        %v952 = vpop.f32.mrf.mxu0
        %v953 = vadd.f32 %v509, %v952
        %954 = vmatmul.f32.gmra.mxu0 %v600
        %v955 = vpop.f32.mrf.mxu0
        %v956 = vadd.f32 %v509, %v955
        %957 = vmatmul.f32.gmra.mxu0 %v603
        %v958 = vpop.f32.mrf.mxu0
        %v959 = vadd.f32 %v509, %v958
        %960 = vmatmul.f32.gmra.mxu0 %v606
        %v961 = vpop.f32.mrf.mxu0
        %v962 = vadd.f32 %v509, %v961
        %963 = vmatmul.f32.gmra.mxu0 %v609
        %v964 = vpop.f32.mrf.mxu0
        %v965 = vadd.f32 %v509, %v964
        %966 = vmatmul.f32.gmra.mxu0 %v612
        %v967 = vpop.f32.mrf.mxu0
        %v968 = vadd.f32 %v509, %v967
        %969 = vmatmul.f32.gmra.mxu0 %v615
        %v970 = vpop.f32.mrf.mxu0
        %v971 = vadd.f32 %v509, %v970
        %972 = vmatmul.f32.gmra.mxu0 %v618
        %v973 = vpop.f32.mrf.mxu0
        %v974 = vadd.f32 %v509, %v973
        %975 = vmatmul.f32.gmra.mxu0 %v621
        %v976 = vpop.f32.mrf.mxu0
        %v977 = vadd.f32 %v509, %v976
        %978 = vmatmul.f32.gmra.mxu0 %v624
        %v979 = vpop.f32.mrf.mxu0
        %v980 = vadd.f32 %v509, %v979
        %981 = vmatmul.f32.gmra.mxu0 %v627
        %v982 = vpop.f32.mrf.mxu0
        %v983 = vadd.f32 %v509, %v982
        %984 = vmatmul.f32.gmra.mxu0 %v630
        %v985 = vpop.f32.mrf.mxu0
        %v986 = vadd.f32 %v509, %v985
        %987 = vmatmul.f32.gmra.mxu0 %v633
        %v988 = vpop.f32.mrf.mxu0
        %v989 = vadd.f32 %v509, %v988
        %990 = vmatmul.f32.gmra.mxu0 %v636
        %v991 = vpop.f32.mrf.mxu0
        %v992 = vadd.f32 %v509, %v991
        %993 = vmatmul.f32.gmra.mxu0 %v639
        %v994 = vpop.f32.mrf.mxu0
        %v995 = vadd.f32 %v509, %v994
        %996 = vmatmul.f32.gmra.mxu0 %v642
        %v997 = vpop.f32.mrf.mxu0
        %v998 = vadd.f32 %v509, %v997
        %999 = vmatmul.f32.gmra.mxu0 %v645
        %v1000 = vpop.f32.mrf.mxu0
        %v1001 = vadd.f32 %v509, %v1000
        %1002 = vmatmul.f32.gmra.mxu0 %v648
        %v1003 = vpop.f32.mrf.mxu0
        %v1004 = vadd.f32 %v509, %v1003
        %1005 = vmatmul.f32.gmra.mxu0 %v651
        %v1006 = vpop.f32.mrf.mxu0
        %v1007 = vadd.f32 %v509, %v1006
        %1008 = vmatmul.f32.gmra.mxu0 %v654
        %v1009 = vpop.f32.mrf.mxu0
        %v1010 = vadd.f32 %v509, %v1009
        %1011 = vmatmul.f32.gmra.mxu0 %v657
        %v1012 = vpop.f32.mrf.mxu0
        %v1013 = vadd.f32 %v509, %v1012
        %1014 = vmatmul.f32.gmra.mxu0 %v660
        %v1015 = vpop.f32.mrf.mxu0
        %v1016 = vadd.f32 %v509, %v1015
        %1017 = vmatmul.f32.gmra.mxu0 %v663
        %v1018 = vpop.f32.mrf.mxu0
        %v1019 = vadd.f32 %v509, %v1018
        %1020 = vmatmul.f32.gmra.mxu0 %v666
        %v1021 = vpop.f32.mrf.mxu0
        %v1022 = vadd.f32 %v509, %v1021
        %1023 = vmatmul.f32.gmra.mxu0 %v669
        %v1024 = vpop.f32.mrf.mxu0
        %v1025 = vadd.f32 %v509, %v1024
        %1026 = vmatmul.f32.gmra.mxu0 %v672
        %v1027 = vpop.f32.mrf.mxu0
        %v1028 = vadd.f32 %v509, %v1027
        %1029 = vmatmul.f32.gmra.mxu0 %v675
        %v1030 = vpop.f32.mrf.mxu0
        %v1031 = vadd.f32 %v509, %v1030
        %1032 = vmatmul.f32.gmra.mxu0 %v678
        %v1033 = vpop.f32.mrf.mxu0
        %v1034 = vadd.f32 %v509, %v1033
        %1035 = vmatmul.f32.gmra.mxu0 %v681
        %v1036 = vpop.f32.mrf.mxu0
        %v1037 = vadd.f32 %v509, %v1036
        %1038 = vmatmul.f32.gmra.mxu0 %v684
        %v1039 = vpop.f32.mrf.mxu0
        %v1040 = vadd.f32 %v509, %v1039
        %1041 = vmatmul.f32.gmra.mxu0 %v687
        %v1042 = vpop.f32.mrf.mxu0
        %v1043 = vadd.f32 %v509, %v1042
        %1044 = vmatmul.f32.gmra.mxu0 %v690
        %v1045 = vpop.f32.mrf.mxu0
        %v1046 = vadd.f32 %v509, %v1045
        %1047 = vmatmul.f32.gmra.mxu0 %v693
        %v1048 = vpop.f32.mrf.mxu0
        %v1049 = vadd.f32 %v509, %v1048
        %1050 = vmatmul.f32.gmra.mxu0 %v696
        %v1051 = vpop.f32.mrf.mxu0
        %v1052 = vadd.f32 %v509, %v1051
        %1053 = vmatmul.f32.gmra.mxu0 %v699
        %v1054 = vpop.f32.mrf.mxu0
        %v1055 = vadd.f32 %v509, %v1054
        %1056 = vmatmul.f32.gmra.mxu0 %v702
        %v1057 = vpop.f32.mrf.mxu0
        %v1058 = vadd.f32 %v509, %v1057
        %1059 = vmatmul.f32.gmra.mxu0 %v705
        %v1060 = vpop.f32.mrf.mxu0
        %v1061 = vadd.f32 %v509, %v1060
        %1062 = vmatmul.f32.gmra.mxu0 %v708
        %v1063 = vpop.f32.mrf.mxu0
        %v1064 = vadd.f32 %v509, %v1063
        %1065 = vmatmul.f32.gmra.mxu0 %v711
        %v1066 = vpop.f32.mrf.mxu0
        %v1067 = vadd.f32 %v509, %v1066
        %1068 = vmatmul.f32.gmra.mxu0 %v714
        %v1069 = vpop.f32.mrf.mxu0
        %v1070 = vadd.f32 %v509, %v1069
        %1071 = vmatmul.f32.gmra.mxu0 %v717
        %v1072 = vpop.f32.mrf.mxu0
        %v1073 = vadd.f32 %v509, %v1072
        %1074 = vmatmul.f32.gmra.mxu0 %v720
        %v1075 = vpop.f32.mrf.mxu0
        %v1076 = vadd.f32 %v509, %v1075
        %1077 = vmatmul.f32.gmra.mxu0 %v723
        %v1078 = vpop.f32.mrf.mxu0
        %v1079 = vadd.f32 %v509, %v1078
        %1080 = vmatmul.f32.gmra.mxu0 %v726
        %v1081 = vpop.f32.mrf.mxu0
        %v1082 = vadd.f32 %v509, %v1081
        %1083 = vmatmul.f32.gmra.mxu0 %v729
        %v1084 = vpop.f32.mrf.mxu0
        %v1085 = vadd.f32 %v509, %v1084
        %1086 = vmatmul.f32.gmra.mxu0 %v732
        %v1087 = vpop.f32.mrf.mxu0
        %v1088 = vadd.f32 %v509, %v1087
        %1089 = vmatmul.f32.gmra.mxu0 %v735
        %v1090 = vpop.f32.mrf.mxu0
        %v1091 = vadd.f32 %v509, %v1090
        %1092 = vmatmul.f32.gmra.mxu0 %v738
        %v1093 = vpop.f32.mrf.mxu0
        %v1094 = vadd.f32 %v509, %v1093
        %1095 = vmatmul.f32.gmra.mxu0 %v741
        %v1096 = vpop.f32.mrf.mxu0
        %v1097 = vadd.f32 %v509, %v1096
        %1098 = vmatmul.f32.gmra.mxu0 %v744
        %v1099 = vpop.f32.mrf.mxu0
        %v1100 = vadd.f32 %v509, %v1099
        %1101 = vmatmul.f32.gmra.mxu0 %v747
        %v1102 = vpop.f32.mrf.mxu0
        %v1103 = vadd.f32 %v509, %v1102
        %1104 = vmatmul.f32.gmra.mxu0 %v750
        %v1105 = vpop.f32.mrf.mxu0
        %v1106 = vadd.f32 %v509, %v1105
        %1107 = vmatmul.f32.gmra.mxu0 %v753
        %v1108 = vpop.f32.mrf.mxu0
        %v1109 = vadd.f32 %v509, %v1108
        %1110 = vmatmul.f32.gmra.mxu0 %v756
        %v1111 = vpop.f32.mrf.mxu0
        %v1112 = vadd.f32 %v509, %v1111
        %1113 = vmatmul.f32.gmra.mxu0 %v759
        %v1114 = vpop.f32.mrf.mxu0
        %v1115 = vadd.f32 %v509, %v1114
        %1116 = vmatmul.f32.gmra.mxu0 %v762
        %v1117 = vpop.f32.mrf.mxu0
        %v1118 = vadd.f32 %v509, %v1117
        %1119 = vmatmul.f32.gmra.mxu0 %v765
        %v1120 = vpop.f32.mrf.mxu0
        %v1121 = vadd.f32 %v509, %v1120
        %1122 = vmatmul.f32.gmra.mxu0 %v768
        %v1123 = vpop.f32.mrf.mxu0
        %v1124 = vadd.f32 %v509, %v1123
        %1125 = vmatmul.f32.gmra.mxu0 %v771
        %v1126 = vpop.f32.mrf.mxu0
        %v1127 = vadd.f32 %v509, %v1126
        %1128 = vmatmul.f32.gmra.mxu0 %v774
        %v1129 = vpop.f32.mrf.mxu0
        %v1130 = vadd.f32 %v509, %v1129
        %1131 = vmatmul.f32.gmra.mxu0 %v777
        %v1132 = vpop.f32.mrf.mxu0
        %v1133 = vadd.f32 %v509, %v1132
        %1134 = vmatmul.f32.gmra.mxu0 %v780
        %v1135 = vpop.f32.mrf.mxu0
        %v1136 = vadd.f32 %v509, %v1135
        %1137 = vmatmul.f32.gmra.mxu0 %v783
        %v1138 = vpop.f32.mrf.mxu0
        %v1139 = vadd.f32 %v509, %v1138
        %1140 = vmatmul.f32.gmra.mxu0 %v786
        %v1141 = vpop.f32.mrf.mxu0
        %v1142 = vadd.f32 %v509, %v1141
        %1143 = vmatmul.f32.gmra.mxu0 %v789
        %v1144 = vpop.f32.mrf.mxu0
        %v1145 = vadd.f32 %v509, %v1144
        %1146 = vmatmul.f32.gmra.mxu0 %v792
        %v1147 = vpop.f32.mrf.mxu0
        %v1148 = vadd.f32 %v509, %v1147
        %1149 = vmatmul.f32.gmra.mxu0 %v795
        %v1150 = vpop.f32.mrf.mxu0
        %v1151 = vadd.f32 %v509, %v1150
        %1152 = vmatmul.f32.gmra.mxu0 %v798
        %v1153 = vpop.f32.mrf.mxu0
        %v1154 = vadd.f32 %v509, %v1153
        %1155 = vmatmul.f32.gmra.mxu0 %v801
        %v1156 = vpop.f32.mrf.mxu0
        %v1157 = vadd.f32 %v509, %v1156
        %1158 = vmatmul.f32.gmra.mxu0 %v804
        %v1159 = vpop.f32.mrf.mxu0
        %v1160 = vadd.f32 %v509, %v1159
        %1161 = vmatmul.f32.gmra.mxu0 %v807
        %v1162 = vpop.f32.mrf.mxu0
        %v1163 = vadd.f32 %v509, %v1162
        %1164 = vmatmul.f32.gmra.mxu0 %v810
        %v1165 = vpop.f32.mrf.mxu0
        %v1166 = vadd.f32 %v509, %v1165
        %1167 = vmatmul.f32.gmra.mxu0 %v813
        %v1168 = vpop.f32.mrf.mxu0
        %v1169 = vadd.f32 %v509, %v1168
        %1170 = vmatmul.f32.gmra.mxu0 %v816
        %v1171 = vpop.f32.mrf.mxu0
        %v1172 = vadd.f32 %v509, %v1171
        %1173 = vmatmul.f32.gmra.mxu0 %v819
        %v1174 = vpop.f32.mrf.mxu0
        %v1175 = vadd.f32 %v509, %v1174
        %1176 = vmatmul.f32.gmra.mxu0 %v822
        %v1177 = vpop.f32.mrf.mxu0
        %v1178 = vadd.f32 %v509, %v1177
        %1179 = vmatmul.f32.gmra.mxu0 %v825
        %v1180 = vpop.f32.mrf.mxu0
        %v1181 = vadd.f32 %v509, %v1180
        %1182 = vmatmul.f32.gmra.mxu0 %v828
        %v1183 = vpop.f32.mrf.mxu0
        %v1184 = vadd.f32 %v509, %v1183
        %1185 = vmatmul.f32.gmra.mxu0 %v831
        %v1186 = vpop.f32.mrf.mxu0
        %v1187 = vadd.f32 %v509, %v1186
        %1188 = vmatmul.f32.gmra.mxu0 %v834
        %v1189 = vpop.f32.mrf.mxu0
        %v1190 = vadd.f32 %v509, %v1189
        %1191 = vmatmul.f32.gmra.mxu0 %v837
        %v1192 = vpop.f32.mrf.mxu0
        %v1193 = vadd.f32 %v509, %v1192
        %1194 = vmatmul.f32.gmra.mxu0 %v840
        %v1195 = vpop.f32.mrf.mxu0
        %v1196 = vadd.f32 %v509, %v1195
        %1197 = vmatmul.f32.gmra.mxu0 %v843
        %v1198 = vpop.f32.mrf.mxu0
        %v1199 = vadd.f32 %v509, %v1198
        %1200 = vmatmul.f32.gmra.mxu0 %v846
        %v1201 = vpop.f32.mrf.mxu0
        %v1202 = vadd.f32 %v509, %v1201
        %1203 = vmatmul.f32.gmra.mxu0 %v849
        %v1204 = vpop.f32.mrf.mxu0
        %v1205 = vadd.f32 %v509, %v1204
        %1206 = vdwg.mxu0
        %v1207 = vmax.f32 %v869, 0.0
        %v1208 = vmax.f32 %v872, 0.0
        %v1209 = vmax.f32 %v875, 0.0
        %v1210 = vmax.f32 %v878, 0.0
        %v1211 = vmax.f32 %v881, 0.0
        %v1212 = vmax.f32 %v884, 0.0
        %v1213 = vmax.f32 %v887, 0.0
        %v1214 = vmax.f32 %v890, 0.0
        %v1215 = vmax.f32 %v893, 0.0
        %v1216 = vmax.f32 %v896, 0.0
        %v1217 = vmax.f32 %v899, 0.0
        %v1218 = vmax.f32 %v902, 0.0
        %v1219 = vmax.f32 %v905, 0.0
        %v1220 = vmax.f32 %v908, 0.0
        %v1221 = vmax.f32 %v911, 0.0
        %v1222 = vmax.f32 %v914, 0.0
        %v1223 = vmax.f32 %v917, 0.0
        %v1224 = vmax.f32 %v920, 0.0
        %v1225 = vmax.f32 %v923, 0.0
        %v1226 = vmax.f32 %v926, 0.0
        %v1227 = vmax.f32 %v929, 0.0
        %v1228 = vmax.f32 %v932, 0.0
        %v1229 = vmax.f32 %v935, 0.0
        %v1230 = vmax.f32 %v938, 0.0
        %v1231 = vmax.f32 %v941, 0.0
        %v1232 = vmax.f32 %v944, 0.0
        %v1233 = vmax.f32 %v947, 0.0
        %v1234 = vmax.f32 %v950, 0.0
        %v1235 = vmax.f32 %v953, 0.0
        %v1236 = vmax.f32 %v956, 0.0
        %v1237 = vmax.f32 %v959, 0.0
        %v1238 = vmax.f32 %v962, 0.0
        %v1239 = vmax.f32 %v965, 0.0
        %v1240 = vmax.f32 %v968, 0.0
        %v1241 = vmax.f32 %v971, 0.0
        %v1242 = vmax.f32 %v974, 0.0
        %v1243 = vmax.f32 %v977, 0.0
        %v1244 = vmax.f32 %v980, 0.0
        %v1245 = vmax.f32 %v983, 0.0
        %v1246 = vmax.f32 %v986, 0.0
        %v1247 = vmax.f32 %v989, 0.0
        %v1248 = vmax.f32 %v992, 0.0
        %v1249 = vmax.f32 %v995, 0.0
        %v1250 = vmax.f32 %v998, 0.0
        %v1251 = vmax.f32 %v1001, 0.0
        %v1252 = vmax.f32 %v1004, 0.0
        %v1253 = vmax.f32 %v1007, 0.0
        %v1254 = vmax.f32 %v1010, 0.0
        %v1255 = vmax.f32 %v1013, 0.0
        %v1256 = vmax.f32 %v1016, 0.0
        %v1257 = vmax.f32 %v1019, 0.0
        %v1258 = vmax.f32 %v1022, 0.0
        %v1259 = vmax.f32 %v1025, 0.0
        %v1260 = vmax.f32 %v1028, 0.0
        %v1261 = vmax.f32 %v1031, 0.0
        %v1262 = vmax.f32 %v1034, 0.0
        %v1263 = vmax.f32 %v1037, 0.0
        %v1264 = vmax.f32 %v1040, 0.0
        %v1265 = vmax.f32 %v1043, 0.0
        %v1266 = vmax.f32 %v1046, 0.0
        %v1267 = vmax.f32 %v1049, 0.0
        %v1268 = vmax.f32 %v1052, 0.0
        %v1269 = vmax.f32 %v1055, 0.0
        %v1270 = vmax.f32 %v1058, 0.0
        %v1271 = vmax.f32 %v1061, 0.0
        %v1272 = vmax.f32 %v1064, 0.0
        %v1273 = vmax.f32 %v1067, 0.0
        %v1274 = vmax.f32 %v1070, 0.0
        %v1275 = vmax.f32 %v1073, 0.0
        %v1276 = vmax.f32 %v1076, 0.0
        %v1277 = vmax.f32 %v1079, 0.0
        %v1278 = vmax.f32 %v1082, 0.0
        %v1279 = vmax.f32 %v1085, 0.0
        %v1280 = vmax.f32 %v1088, 0.0
        %v1281 = vmax.f32 %v1091, 0.0
        %v1282 = vmax.f32 %v1094, 0.0
        %v1283 = vmax.f32 %v1097, 0.0
        %v1284 = vmax.f32 %v1100, 0.0
        %v1285 = vmax.f32 %v1103, 0.0
        %v1286 = vmax.f32 %v1106, 0.0
        %v1287 = vmax.f32 %v1109, 0.0
        %v1288 = vmax.f32 %v1112, 0.0
        %v1289 = vmax.f32 %v1115, 0.0
        %v1290 = vmax.f32 %v1118, 0.0
        %v1291 = vmax.f32 %v1121, 0.0
        %v1292 = vmax.f32 %v1124, 0.0
        %v1293 = vmax.f32 %v1127, 0.0
        %v1294 = vmax.f32 %v1130, 0.0
        %v1295 = vmax.f32 %v1133, 0.0
        %v1296 = vmax.f32 %v1136, 0.0
        %v1297 = vmax.f32 %v1139, 0.0
        %v1298 = vmax.f32 %v1142, 0.0
        %v1299 = vmax.f32 %v1145, 0.0
        %v1300 = vmax.f32 %v1148, 0.0
        %v1301 = vmax.f32 %v1151, 0.0
        %v1302 = vmax.f32 %v1154, 0.0
        %v1303 = vmax.f32 %v1157, 0.0
        %v1304 = vmax.f32 %v1160, 0.0
        %v1305 = vmax.f32 %v1163, 0.0
        %v1306 = vmax.f32 %v1166, 0.0
        %v1307 = vmax.f32 %v1169, 0.0
        %v1308 = vmax.f32 %v1172, 0.0
        %v1309 = vmax.f32 %v1175, 0.0
        %v1310 = vmax.f32 %v1178, 0.0
        %v1311 = vmax.f32 %v1181, 0.0
        %v1312 = vmax.f32 %v1184, 0.0
        %v1313 = vmax.f32 %v1187, 0.0
        %v1314 = vmax.f32 %v1190, 0.0
        %v1315 = vmax.f32 %v1193, 0.0
        %v1316 = vmax.f32 %v1196, 0.0
        %v1317 = vmax.f32 %v1199, 0.0
        %v1318 = vmax.f32 %v1202, 0.0
        %v1319 = vmax.f32 %v1205, 0.0
        %vm1429 = vcmask 1046528
        %v1430 = vrot.slane %v1207, 1
        %v1431 = vrot.slane %v1208, 1
        %v1432 = vsel %vm1429, %v1430, %v1431
        %v1433 = vrot.slane %v1209, 1
        %v1434 = vsel %vm1429, %v1431, %v1433
        %v1435 = vrot.slane %v1210, 1
        %v1436 = vsel %vm1429, %v1433, %v1435
        %v1437 = vrot.slane %v1211, 1
        %v1438 = vsel %vm1429, %v1435, %v1437
        %v1439 = vrot.slane %v1212, 1
        %v1440 = vsel %vm1429, %v1437, %v1439
        %v1441 = vrot.slane %v1213, 1
        %v1442 = vsel %vm1429, %v1439, %v1441
        %v1443 = vrot.slane %v1214, 1
        %v1444 = vsel %vm1429, %v1441, %v1443
        %v1445 = vrot.slane %v1215, 1
        %v1446 = vsel %vm1429, %v1443, %v1445
        %v1447 = vrot.slane %v1216, 1
        %v1448 = vsel %vm1429, %v1445, %v1447
        %v1449 = vrot.slane %v1217, 1
        %v1450 = vsel %vm1429, %v1447, %v1449
        %v1451 = vrot.slane %v1218, 1
        %v1452 = vsel %vm1429, %v1449, %v1451
        %v1453 = vrot.slane %v1219, 1
        %v1454 = vsel %vm1429, %v1451, %v1453
        %v1455 = vrot.slane %v1220, 1
        %v1456 = vsel %vm1429, %v1453, %v1455
        %v1457 = vrot.slane %v1221, 1
        %v1458 = vsel %vm1429, %v1455, %v1457
        %v1459 = vrot.slane %v1222, 1
        %v1460 = vsel %vm1429, %v1457, %v1459
        %v1461 = vrot.slane %v1223, 1
        %v1462 = vsel %vm1429, %v1459, %v1461
        %v1463 = vrot.slane %v1224, 1
        %v1464 = vsel %vm1429, %v1461, %v1463
        %v1465 = vrot.slane %v1225, 1
        %v1466 = vsel %vm1429, %v1463, %v1465
        %v1467 = vrot.slane %v1226, 1
        %v1468 = vsel %vm1429, %v1465, %v1467
        %v1469 = vrot.slane %v1227, 1
        %v1470 = vsel %vm1429, %v1467, %v1469
        %v1471 = vrot.slane %v1228, 1
        %v1472 = vsel %vm1429, %v1469, %v1471
        %v1473 = vrot.slane %v1229, 1
        %v1474 = vsel %vm1429, %v1471, %v1473
        %v1475 = vrot.slane %v1230, 1
        %v1476 = vsel %vm1429, %v1473, %v1475
        %v1477 = vrot.slane %v1231, 1
        %v1478 = vsel %vm1429, %v1475, %v1477
        %v1479 = vrot.slane %v1232, 1
        %v1480 = vsel %vm1429, %v1477, %v1479
        %v1481 = vrot.slane %v1233, 1
        %v1482 = vsel %vm1429, %v1479, %v1481
        %v1483 = vrot.slane %v1234, 1
        %v1484 = vsel %vm1429, %v1481, %v1483
        %v1485 = vrot.slane %v1235, 1
        %v1486 = vsel %vm1429, %v1483, %v1485
        %v1487 = vrot.slane %v1236, 1
        %v1488 = vsel %vm1429, %v1485, %v1487
        %v1489 = vrot.slane %v1237, 1
        %v1490 = vsel %vm1429, %v1487, %v1489
        %v1491 = vrot.slane %v1238, 1
        %v1492 = vsel %vm1429, %v1489, %v1491
        %v1493 = vrot.slane %v1239, 1
        %v1494 = vsel %vm1429, %v1491, %v1493
        %v1495 = vrot.slane %v1240, 1
        %v1496 = vsel %vm1429, %v1493, %v1495
        %v1497 = vrot.slane %v1241, 1
        %v1498 = vsel %vm1429, %v1495, %v1497
        %v1499 = vrot.slane %v1242, 1
        %v1500 = vsel %vm1429, %v1497, %v1499
        %v1501 = vrot.slane %v1243, 1
        %v1502 = vsel %vm1429, %v1499, %v1501
        %v1503 = vrot.slane %v1244, 1
        %v1504 = vsel %vm1429, %v1501, %v1503
        %v1505 = vrot.slane %v1245, 1
        %v1506 = vsel %vm1429, %v1503, %v1505
        %v1507 = vrot.slane %v1246, 1
        %v1508 = vsel %vm1429, %v1505, %v1507
        %v1509 = vrot.slane %v1247, 1
        %v1510 = vsel %vm1429, %v1507, %v1509
        %v1511 = vrot.slane %v1248, 1
        %v1512 = vsel %vm1429, %v1509, %v1511
        %v1513 = vrot.slane %v1249, 1
        %v1514 = vsel %vm1429, %v1511, %v1513
        %v1515 = vrot.slane %v1250, 1
        %v1516 = vsel %vm1429, %v1513, %v1515
        %v1517 = vrot.slane %v1251, 1
        %v1518 = vsel %vm1429, %v1515, %v1517
        %v1519 = vrot.slane %v1252, 1
        %v1520 = vsel %vm1429, %v1517, %v1519
        %v1521 = vrot.slane %v1253, 1
        %v1522 = vsel %vm1429, %v1519, %v1521
        %v1523 = vrot.slane %v1254, 1
        %v1524 = vsel %vm1429, %v1521, %v1523
        %v1525 = vrot.slane %v1255, 1
        %v1526 = vsel %vm1429, %v1523, %v1525
        %v1527 = vrot.slane %v1256, 1
        %v1528 = vsel %vm1429, %v1525, %v1527
        %v1529 = vrot.slane %v1257, 1
        %v1530 = vsel %vm1429, %v1527, %v1529
        %v1531 = vrot.slane %v1258, 1
        %v1532 = vsel %vm1429, %v1529, %v1531
        %v1533 = vrot.slane %v1259, 1
        %v1534 = vsel %vm1429, %v1531, %v1533
        %v1535 = vrot.slane %v1260, 1
        %v1536 = vsel %vm1429, %v1533, %v1535
        %v1537 = vrot.slane %v1261, 1
        %v1538 = vsel %vm1429, %v1535, %v1537
        %v1539 = vrot.slane %v1262, 1
        %v1540 = vsel %vm1429, %v1537, %v1539
        %v1541 = vrot.slane %v1263, 1
        %v1542 = vsel %vm1429, %v1539, %v1541
        %v1543 = vrot.slane %v1264, 1
        %v1544 = vsel %vm1429, %v1541, %v1543
        %v1545 = vrot.slane %v1265, 1
        %v1546 = vsel %vm1429, %v1543, %v1545
        %v1547 = vrot.slane %v1266, 1
        %v1548 = vsel %vm1429, %v1545, %v1547
        %v1549 = vrot.slane %v1267, 1
        %v1550 = vsel %vm1429, %v1547, %v1549
        %v1551 = vrot.slane %v1268, 1
        %v1552 = vsel %vm1429, %v1549, %v1551
        %v1553 = vrot.slane %v1269, 1
        %v1554 = vsel %vm1429, %v1551, %v1553
        %v1555 = vrot.slane %v1270, 1
        %v1556 = vsel %vm1429, %v1553, %v1555
        %v1557 = vrot.slane %v1271, 1
        %v1558 = vsel %vm1429, %v1555, %v1557
        %v1559 = vrot.slane %v1272, 1
        %v1560 = vsel %vm1429, %v1557, %v1559
        %v1561 = vrot.slane %v1273, 1
        %v1562 = vsel %vm1429, %v1559, %v1561
        %v1563 = vrot.slane %v1274, 1
        %v1564 = vsel %vm1429, %v1561, %v1563
        %v1565 = vrot.slane %v1275, 1
        %v1566 = vsel %vm1429, %v1563, %v1565
        %v1567 = vrot.slane %v1276, 1
        %v1568 = vsel %vm1429, %v1565, %v1567
        %v1569 = vrot.slane %v1277, 1
        %v1570 = vsel %vm1429, %v1567, %v1569
        %v1571 = vrot.slane %v1278, 1
        %v1572 = vsel %vm1429, %v1569, %v1571
        %v1573 = vrot.slane %v1279, 1
        %v1574 = vsel %vm1429, %v1571, %v1573
        %v1575 = vrot.slane %v1280, 1
        %v1576 = vsel %vm1429, %v1573, %v1575
        %v1577 = vrot.slane %v1281, 1
        %v1578 = vsel %vm1429, %v1575, %v1577
        %v1579 = vrot.slane %v1282, 1
        %v1580 = vsel %vm1429, %v1577, %v1579
        %v1581 = vrot.slane %v1283, 1
        %v1582 = vsel %vm1429, %v1579, %v1581
        %v1583 = vrot.slane %v1284, 1
        %v1584 = vsel %vm1429, %v1581, %v1583
        %v1585 = vrot.slane %v1285, 1
        %v1586 = vsel %vm1429, %v1583, %v1585
        %v1587 = vrot.slane %v1286, 1
        %v1588 = vsel %vm1429, %v1585, %v1587
        %v1589 = vrot.slane %v1287, 1
        %v1590 = vsel %vm1429, %v1587, %v1589
        %v1591 = vrot.slane %v1288, 1
        %v1592 = vsel %vm1429, %v1589, %v1591
        %v1593 = vrot.slane %v1289, 1
        %v1594 = vsel %vm1429, %v1591, %v1593
        %v1595 = vrot.slane %v1290, 1
        %v1596 = vsel %vm1429, %v1593, %v1595
        %v1597 = vrot.slane %v1291, 1
        %v1598 = vsel %vm1429, %v1595, %v1597
        %v1599 = vrot.slane %v1292, 1
        %v1600 = vsel %vm1429, %v1597, %v1599
        %v1601 = vrot.slane %v1293, 1
        %v1602 = vsel %vm1429, %v1599, %v1601
        %v1603 = vrot.slane %v1294, 1
        %v1604 = vsel %vm1429, %v1601, %v1603
        %v1605 = vrot.slane %v1295, 1
        %v1606 = vsel %vm1429, %v1603, %v1605
        %v1607 = vrot.slane %v1296, 1
        %v1608 = vsel %vm1429, %v1605, %v1607
        %v1609 = vrot.slane %v1297, 1
        %v1610 = vsel %vm1429, %v1607, %v1609
        %v1611 = vrot.slane %v1298, 1
        %v1612 = vsel %vm1429, %v1609, %v1611
        %v1613 = vrot.slane %v1299, 1
        %v1614 = vsel %vm1429, %v1611, %v1613
        %v1615 = vrot.slane %v1300, 1
        %v1616 = vsel %vm1429, %v1613, %v1615
        %v1617 = vrot.slane %v1301, 1
        %v1618 = vsel %vm1429, %v1615, %v1617
        %v1619 = vrot.slane %v1302, 1
        %v1620 = vsel %vm1429, %v1617, %v1619
        %v1621 = vrot.slane %v1303, 1
        %v1622 = vsel %vm1429, %v1619, %v1621
        %v1623 = vrot.slane %v1304, 1
        %v1624 = vsel %vm1429, %v1621, %v1623
        %v1625 = vrot.slane %v1305, 1
        %v1626 = vsel %vm1429, %v1623, %v1625
        %v1627 = vrot.slane %v1306, 1
        %v1628 = vsel %vm1429, %v1625, %v1627
        %v1629 = vrot.slane %v1307, 1
        %v1630 = vsel %vm1429, %v1627, %v1629
        %v1631 = vrot.slane %v1308, 1
        %v1632 = vsel %vm1429, %v1629, %v1631
        %v1633 = vrot.slane %v1309, 1
        %v1634 = vsel %vm1429, %v1631, %v1633
        %v1635 = vrot.slane %v1310, 1
        %v1636 = vsel %vm1429, %v1633, %v1635
        %v1637 = vrot.slane %v1311, 1
        %v1638 = vsel %vm1429, %v1635, %v1637
        %v1639 = vrot.slane %v1312, 1
        %v1640 = vsel %vm1429, %v1637, %v1639
        %v1641 = vrot.slane %v1313, 1
        %v1642 = vsel %vm1429, %v1639, %v1641
        %v1643 = vrot.slane %v1314, 1
        %v1644 = vsel %vm1429, %v1641, %v1643
        %v1645 = vrot.slane %v1315, 1
        %v1646 = vsel %vm1429, %v1643, %v1645
        %v1755 = vmax.f32 %v1207, %v1432
        %v1756 = vmax.f32 %v1208, %v1434
        %v1757 = vmax.f32 %v1209, %v1436
        %v1758 = vmax.f32 %v1210, %v1438
        %v1759 = vmax.f32 %v1211, %v1440
        %v1760 = vmax.f32 %v1212, %v1442
        %v1761 = vmax.f32 %v1213, %v1444
        %v1762 = vmax.f32 %v1214, %v1446
        %v1763 = vmax.f32 %v1215, %v1448
        %v1764 = vmax.f32 %v1216, %v1450
        %v1765 = vmax.f32 %v1217, %v1452
        %v1766 = vmax.f32 %v1218, %v1454
        %v1767 = vmax.f32 %v1219, %v1456
        %v1768 = vmax.f32 %v1220, %v1458
        %v1769 = vmax.f32 %v1221, %v1460
        %v1770 = vmax.f32 %v1222, %v1462
        %v1771 = vmax.f32 %v1223, %v1464
        %v1772 = vmax.f32 %v1224, %v1466
        %v1773 = vmax.f32 %v1225, %v1468
        %v1774 = vmax.f32 %v1226, %v1470
        %v1775 = vmax.f32 %v1227, %v1472
        %v1776 = vmax.f32 %v1228, %v1474
        %v1777 = vmax.f32 %v1229, %v1476
        %v1778 = vmax.f32 %v1230, %v1478
        %v1779 = vmax.f32 %v1231, %v1480
        %v1780 = vmax.f32 %v1232, %v1482
        %v1781 = vmax.f32 %v1233, %v1484
        %v1782 = vmax.f32 %v1234, %v1486
        %v1783 = vmax.f32 %v1235, %v1488
        %v1784 = vmax.f32 %v1236, %v1490
        %v1785 = vmax.f32 %v1237, %v1492
        %v1786 = vmax.f32 %v1238, %v1494
        %v1787 = vmax.f32 %v1239, %v1496
        %v1788 = vmax.f32 %v1240, %v1498
        %v1789 = vmax.f32 %v1241, %v1500
        %v1790 = vmax.f32 %v1242, %v1502
        %v1791 = vmax.f32 %v1243, %v1504
        %v1792 = vmax.f32 %v1244, %v1506
        %v1793 = vmax.f32 %v1245, %v1508
        %v1794 = vmax.f32 %v1246, %v1510
        %v1795 = vmax.f32 %v1247, %v1512
        %v1796 = vmax.f32 %v1248, %v1514
        %v1797 = vmax.f32 %v1249, %v1516
        %v1798 = vmax.f32 %v1250, %v1518
        %v1799 = vmax.f32 %v1251, %v1520
        %v1800 = vmax.f32 %v1252, %v1522
        %v1801 = vmax.f32 %v1253, %v1524
        %v1802 = vmax.f32 %v1254, %v1526
        %v1803 = vmax.f32 %v1255, %v1528
        %v1804 = vmax.f32 %v1256, %v1530
        %v1805 = vmax.f32 %v1257, %v1532
        %v1806 = vmax.f32 %v1258, %v1534
        %v1807 = vmax.f32 %v1259, %v1536
        %v1808 = vmax.f32 %v1260, %v1538
        %v1809 = vmax.f32 %v1261, %v1540
        %v1810 = vmax.f32 %v1262, %v1542
        %v1811 = vmax.f32 %v1263, %v1544
        %v1812 = vmax.f32 %v1264, %v1546
        %v1813 = vmax.f32 %v1265, %v1548
        %v1814 = vmax.f32 %v1266, %v1550
        %v1815 = vmax.f32 %v1267, %v1552
        %v1816 = vmax.f32 %v1268, %v1554
        %v1817 = vmax.f32 %v1269, %v1556
        %v1818 = vmax.f32 %v1270, %v1558
        %v1819 = vmax.f32 %v1271, %v1560
        %v1820 = vmax.f32 %v1272, %v1562
        %v1821 = vmax.f32 %v1273, %v1564
        %v1822 = vmax.f32 %v1274, %v1566
        %v1823 = vmax.f32 %v1275, %v1568
        %v1824 = vmax.f32 %v1276, %v1570
        %v1825 = vmax.f32 %v1277, %v1572
        %v1826 = vmax.f32 %v1278, %v1574
        %v1827 = vmax.f32 %v1279, %v1576
        %v1828 = vmax.f32 %v1280, %v1578
        %v1829 = vmax.f32 %v1281, %v1580
        %v1830 = vmax.f32 %v1282, %v1582
        %v1831 = vmax.f32 %v1283, %v1584
        %v1832 = vmax.f32 %v1284, %v1586
        %v1833 = vmax.f32 %v1285, %v1588
        %v1834 = vmax.f32 %v1286, %v1590
        %v1835 = vmax.f32 %v1287, %v1592
        %v1836 = vmax.f32 %v1288, %v1594
        %v1837 = vmax.f32 %v1289, %v1596
        %v1838 = vmax.f32 %v1290, %v1598
        %v1839 = vmax.f32 %v1291, %v1600
        %v1840 = vmax.f32 %v1292, %v1602
        %v1841 = vmax.f32 %v1293, %v1604
        %v1842 = vmax.f32 %v1294, %v1606
        %v1843 = vmax.f32 %v1295, %v1608
        %v1844 = vmax.f32 %v1296, %v1610
        %v1845 = vmax.f32 %v1297, %v1612
        %v1846 = vmax.f32 %v1298, %v1614
        %v1847 = vmax.f32 %v1299, %v1616
        %v1848 = vmax.f32 %v1300, %v1618
        %v1849 = vmax.f32 %v1301, %v1620
        %v1850 = vmax.f32 %v1302, %v1622
        %v1851 = vmax.f32 %v1303, %v1624
        %v1852 = vmax.f32 %v1304, %v1626
        %v1853 = vmax.f32 %v1305, %v1628
        %v1854 = vmax.f32 %v1306, %v1630
        %v1855 = vmax.f32 %v1307, %v1632
        %v1856 = vmax.f32 %v1308, %v1634
        %v1857 = vmax.f32 %v1309, %v1636
        %v1858 = vmax.f32 %v1310, %v1638
        %v1859 = vmax.f32 %v1311, %v1640
        %v1860 = vmax.f32 %v1312, %v1642
        %v1861 = vmax.f32 %v1313, %v1644
        %v1862 = vmax.f32 %v1314, %v1646
        %v1867 = vrot.slane %v1316, 1
        %v1868 = vsel %vm1429, %v1645, %v1867
        %v1869 = vrot.slane %v1317, 1
        %v1870 = vsel %vm1429, %v1867, %v1869
        %v1871 = vrot.slane %v1318, 1
        %v1872 = vsel %vm1429, %v1869, %v1871
        %v1873 = vrot.slane %v1319, 1
        %v1874 = vsel %vm1429, %v1871, %v1873
        %v1879 = vmax.f32 %v1315, %v1868
        %v1880 = vmax.f32 %v1316, %v1870
        %v1881 = vmax.f32 %v1317, %v1872
        %v1882 = vmax.f32 %v1318, %v1874
        %v1883 = vmax.f32 %v1755, %v1759
        %v1884 = vmax.f32 %v1756, %v1760
        %v1885 = vmax.f32 %v1757, %v1761
        %v1886 = vmax.f32 %v1758, %v1762
        %v1887 = vmax.f32 %v1759, %v1763
        %v1888 = vmax.f32 %v1760, %v1764
        %v1889 = vmax.f32 %v1761, %v1765
        %v1890 = vmax.f32 %v1762, %v1766
        %v1891 = vmax.f32 %v1763, %v1767
        %v1892 = vmax.f32 %v1764, %v1768
        %v1893 = vmax.f32 %v1765, %v1769
        %v1894 = vmax.f32 %v1766, %v1770
        %v1895 = vmax.f32 %v1767, %v1771
        %v1896 = vmax.f32 %v1768, %v1772
        %v1897 = vmax.f32 %v1769, %v1773
        %v1898 = vmax.f32 %v1770, %v1774
        %v1899 = vmax.f32 %v1771, %v1775
        %v1900 = vmax.f32 %v1772, %v1776
        %v1901 = vmax.f32 %v1773, %v1777
        %v1902 = vmax.f32 %v1774, %v1778
        %v1903 = vmax.f32 %v1775, %v1779
        %v1904 = vmax.f32 %v1776, %v1780
        %v1905 = vmax.f32 %v1777, %v1781
        %v1906 = vmax.f32 %v1778, %v1782
        %v1907 = vmax.f32 %v1779, %v1783
        %v1908 = vmax.f32 %v1780, %v1784
        %v1909 = vmax.f32 %v1781, %v1785
        %v1910 = vmax.f32 %v1782, %v1786
        %v1911 = vmax.f32 %v1783, %v1787
        %v1912 = vmax.f32 %v1784, %v1788
        %v1913 = vmax.f32 %v1785, %v1789
        %v1914 = vmax.f32 %v1786, %v1790
        %v1915 = vmax.f32 %v1787, %v1791
        %v1916 = vmax.f32 %v1788, %v1792
        %v1917 = vmax.f32 %v1789, %v1793
        %v1918 = vmax.f32 %v1790, %v1794
        %v1919 = vmax.f32 %v1791, %v1795
        %v1920 = vmax.f32 %v1792, %v1796
        %v1921 = vmax.f32 %v1793, %v1797
        %v1922 = vmax.f32 %v1794, %v1798
        %v1923 = vmax.f32 %v1795, %v1799
        %v1924 = vmax.f32 %v1796, %v1800
        %v1925 = vmax.f32 %v1797, %v1801
        %v1926 = vmax.f32 %v1798, %v1802
        %v1927 = vmax.f32 %v1799, %v1803
        %v1928 = vmax.f32 %v1800, %v1804
        %v1929 = vmax.f32 %v1801, %v1805
        %v1930 = vmax.f32 %v1802, %v1806
        %v1931 = vmax.f32 %v1803, %v1807
        %v1932 = vmax.f32 %v1804, %v1808
        %v1933 = vmax.f32 %v1805, %v1809
        %v1934 = vmax.f32 %v1806, %v1810
        %v1935 = vmax.f32 %v1807, %v1811
        %v1936 = vmax.f32 %v1808, %v1812
        %v1937 = vmax.f32 %v1809, %v1813
        %v1938 = vmax.f32 %v1810, %v1814
        %v1939 = vmax.f32 %v1811, %v1815
        %v1940 = vmax.f32 %v1812, %v1816
        %v1941 = vmax.f32 %v1813, %v1817
        %v1942 = vmax.f32 %v1814, %v1818
        %v1943 = vmax.f32 %v1815, %v1819
        %v1944 = vmax.f32 %v1816, %v1820
        %v1945 = vmax.f32 %v1817, %v1821
        %v1946 = vmax.f32 %v1818, %v1822
        %v1947 = vmax.f32 %v1819, %v1823
        %v1948 = vmax.f32 %v1820, %v1824
        %v1949 = vmax.f32 %v1821, %v1825
        %v1950 = vmax.f32 %v1822, %v1826
        %v1951 = vmax.f32 %v1823, %v1827
        %v1952 = vmax.f32 %v1824, %v1828
        %v1953 = vmax.f32 %v1825, %v1829
        %v1954 = vmax.f32 %v1826, %v1830
        %v1955 = vmax.f32 %v1827, %v1831
        %v1956 = vmax.f32 %v1828, %v1832
        %v1957 = vmax.f32 %v1829, %v1833
        %v1958 = vmax.f32 %v1830, %v1834
        %v1959 = vmax.f32 %v1831, %v1835
        %v1960 = vmax.f32 %v1832, %v1836
        %v1961 = vmax.f32 %v1833, %v1837
        %v1962 = vmax.f32 %v1834, %v1838
        %v1963 = vmax.f32 %v1835, %v1839
        %v1964 = vmax.f32 %v1836, %v1840
        %v1965 = vmax.f32 %v1837, %v1841
        %v1966 = vmax.f32 %v1838, %v1842
        %v1967 = vmax.f32 %v1839, %v1843
        %v1968 = vmax.f32 %v1840, %v1844
        %v1969 = vmax.f32 %v1841, %v1845
        %v1970 = vmax.f32 %v1842, %v1846
        %v1971 = vmax.f32 %v1843, %v1847
        %v1972 = vmax.f32 %v1844, %v1848
        %v1973 = vmax.f32 %v1845, %v1849
        %v1974 = vmax.f32 %v1846, %v1850
        %v1975 = vmax.f32 %v1847, %v1851
        %v1976 = vmax.f32 %v1848, %v1852
        %v1977 = vmax.f32 %v1849, %v1853
        %v1978 = vmax.f32 %v1850, %v1854
        %v1979 = vmax.f32 %v1851, %v1855
        %v1980 = vmax.f32 %v1852, %v1856
        %v1981 = vmax.f32 %v1853, %v1857
        %v1982 = vmax.f32 %v1854, %v1858
        %v1983 = vmax.f32 %v1855, %v1859
        %v1984 = vmax.f32 %v1856, %v1860
        %v1985 = vmax.f32 %v1857, %v1861
        %v1986 = vmax.f32 %v1858, %v1862
        %v1987 = vmax.f32 %v1859, %v1879
        %v1988 = vmax.f32 %v1860, %v1880
        %v1989 = vmax.f32 %v1861, %v1881
        %v1990 = vmax.f32 %v1862, %v1882
        %v1991 = vld [vmem:[%s3] sm:$0x3f]
        %s1992 = scalar_lea.vmem %s3, 8
        %v1993 = vld [vmem:[%s1992] sm:$0x3f]
        %vm2070 = vcmask 1045504
        %v2071 = vrot.slane %v1883, 2
        %v2072 = vrot.slane %v1884, 2
        %v2073 = vsel %vm2070, %v2071, %v2072
        %v2074 = vrot.slane %v1885, 2
        %v2075 = vsel %vm2070, %v2072, %v2074
        %v2076 = vrot.slane %v1886, 2
        %v2077 = vsel %vm2070, %v2074, %v2076
        %v2078 = vrot.slane %v1887, 2
        %v2079 = vsel %vm2070, %v2076, %v2078
        %v2080 = vrot.slane %v1888, 2
        %v2081 = vsel %vm2070, %v2078, %v2080
        %v2082 = vrot.slane %v1889, 2
        %v2083 = vsel %vm2070, %v2080, %v2082
        %v2084 = vrot.slane %v1890, 2
        %v2085 = vsel %vm2070, %v2082, %v2084
        %v2086 = vrot.slane %v1891, 2
        %v2087 = vsel %vm2070, %v2084, %v2086
        %v2088 = vrot.slane %v1892, 2
        %v2089 = vsel %vm2070, %v2086, %v2088
        %v2090 = vrot.slane %v1893, 2
        %v2091 = vsel %vm2070, %v2088, %v2090
        %v2092 = vrot.slane %v1894, 2
        %v2093 = vsel %vm2070, %v2090, %v2092
        %v2094 = vrot.slane %v1895, 2
        %v2095 = vsel %vm2070, %v2092, %v2094
        %v2096 = vrot.slane %v1896, 2
        %v2097 = vsel %vm2070, %v2094, %v2096
        %v2098 = vrot.slane %v1897, 2
        %v2099 = vsel %vm2070, %v2096, %v2098
        %v2100 = vrot.slane %v1898, 2
        %v2101 = vsel %vm2070, %v2098, %v2100
        %v2102 = vrot.slane %v1899, 2
        %v2103 = vsel %vm2070, %v2100, %v2102
        %v2104 = vrot.slane %v1900, 2
        %v2105 = vsel %vm2070, %v2102, %v2104
        %v2106 = vrot.slane %v1901, 2
        %v2107 = vsel %vm2070, %v2104, %v2106
        %v2108 = vrot.slane %v1902, 2
        %v2109 = vsel %vm2070, %v2106, %v2108
        %v2110 = vrot.slane %v1903, 2
        %v2111 = vsel %vm2070, %v2108, %v2110
        %v2112 = vrot.slane %v1904, 2
        %v2113 = vsel %vm2070, %v2110, %v2112
        %v2114 = vrot.slane %v1905, 2
        %v2115 = vsel %vm2070, %v2112, %v2114
        %v2116 = vrot.slane %v1906, 2
        %v2117 = vsel %vm2070, %v2114, %v2116
        %v2118 = vrot.slane %v1907, 2
        %v2119 = vsel %vm2070, %v2116, %v2118
        %v2120 = vrot.slane %v1908, 2
        %v2121 = vsel %vm2070, %v2118, %v2120
        %v2122 = vrot.slane %v1909, 2
        %v2123 = vsel %vm2070, %v2120, %v2122
        %v2124 = vrot.slane %v1910, 2
        %v2125 = vsel %vm2070, %v2122, %v2124
        %v2126 = vrot.slane %v1911, 2
        %v2127 = vsel %vm2070, %v2124, %v2126
        %v2128 = vrot.slane %v1912, 2
        %v2129 = vsel %vm2070, %v2126, %v2128
        %v2130 = vrot.slane %v1913, 2
        %v2131 = vsel %vm2070, %v2128, %v2130
        %v2132 = vrot.slane %v1914, 2
        %v2133 = vsel %vm2070, %v2130, %v2132
        %v2134 = vrot.slane %v1915, 2
        %v2135 = vsel %vm2070, %v2132, %v2134
        %v2136 = vrot.slane %v1916, 2
        %v2137 = vsel %vm2070, %v2134, %v2136
        %v2138 = vrot.slane %v1917, 2
        %v2139 = vsel %vm2070, %v2136, %v2138
        %v2140 = vrot.slane %v1918, 2
        %v2141 = vsel %vm2070, %v2138, %v2140
        %v2142 = vrot.slane %v1919, 2
        %v2143 = vsel %vm2070, %v2140, %v2142
        %v2144 = vrot.slane %v1920, 2
        %v2145 = vsel %vm2070, %v2142, %v2144
        %v2146 = vrot.slane %v1921, 2
        %v2147 = vsel %vm2070, %v2144, %v2146
        %v2148 = vrot.slane %v1922, 2
        %v2149 = vsel %vm2070, %v2146, %v2148
        %v2150 = vrot.slane %v1923, 2
        %v2151 = vsel %vm2070, %v2148, %v2150
        %v2152 = vrot.slane %v1924, 2
        %v2153 = vsel %vm2070, %v2150, %v2152
        %v2154 = vrot.slane %v1925, 2
        %v2155 = vsel %vm2070, %v2152, %v2154
        %v2156 = vrot.slane %v1926, 2
        %v2157 = vsel %vm2070, %v2154, %v2156
        %v2158 = vrot.slane %v1927, 2
        %v2159 = vsel %vm2070, %v2156, %v2158
        %v2160 = vrot.slane %v1928, 2
        %v2161 = vsel %vm2070, %v2158, %v2160
        %v2162 = vrot.slane %v1929, 2
        %v2163 = vsel %vm2070, %v2160, %v2162
        %v2164 = vrot.slane %v1930, 2
        %v2165 = vsel %vm2070, %v2162, %v2164
        %v2166 = vrot.slane %v1931, 2
        %v2167 = vsel %vm2070, %v2164, %v2166
        %v2168 = vrot.slane %v1932, 2
        %v2169 = vsel %vm2070, %v2166, %v2168
        %v2170 = vrot.slane %v1933, 2
        %v2171 = vsel %vm2070, %v2168, %v2170
        %v2172 = vrot.slane %v1934, 2
        %v2173 = vsel %vm2070, %v2170, %v2172
        %v2174 = vrot.slane %v1935, 2
        %v2175 = vsel %vm2070, %v2172, %v2174
        %v2176 = vrot.slane %v1936, 2
        %v2177 = vsel %vm2070, %v2174, %v2176
        %v2178 = vrot.slane %v1937, 2
        %v2179 = vsel %vm2070, %v2176, %v2178
        %v2180 = vrot.slane %v1938, 2
        %v2181 = vsel %vm2070, %v2178, %v2180
        %v2182 = vrot.slane %v1939, 2
        %v2183 = vsel %vm2070, %v2180, %v2182
        %v2184 = vrot.slane %v1940, 2
        %v2185 = vsel %vm2070, %v2182, %v2184
        %v2186 = vrot.slane %v1941, 2
        %v2187 = vsel %vm2070, %v2184, %v2186
        %v2188 = vrot.slane %v1942, 2
        %v2189 = vsel %vm2070, %v2186, %v2188
        %v2190 = vrot.slane %v1943, 2
        %v2191 = vsel %vm2070, %v2188, %v2190
        %v2192 = vrot.slane %v1944, 2
        %v2193 = vsel %vm2070, %v2190, %v2192
        %v2194 = vrot.slane %v1945, 2
        %v2195 = vsel %vm2070, %v2192, %v2194
        %v2196 = vrot.slane %v1946, 2
        %v2197 = vsel %vm2070, %v2194, %v2196
        %v2198 = vrot.slane %v1947, 2
        %v2199 = vsel %vm2070, %v2196, %v2198
        %v2200 = vrot.slane %v1948, 2
        %v2201 = vsel %vm2070, %v2198, %v2200
        %v2202 = vrot.slane %v1949, 2
        %v2203 = vsel %vm2070, %v2200, %v2202
        %v2204 = vrot.slane %v1950, 2
        %v2205 = vsel %vm2070, %v2202, %v2204
        %v2206 = vrot.slane %v1951, 2
        %v2207 = vsel %vm2070, %v2204, %v2206
        %v2208 = vrot.slane %v1952, 2
        %v2209 = vsel %vm2070, %v2206, %v2208
        %v2210 = vrot.slane %v1953, 2
        %v2211 = vsel %vm2070, %v2208, %v2210
        %v2212 = vrot.slane %v1954, 2
        %v2213 = vsel %vm2070, %v2210, %v2212
        %v2214 = vrot.slane %v1955, 2
        %v2215 = vsel %vm2070, %v2212, %v2214
        %v2216 = vrot.slane %v1956, 2
        %v2217 = vsel %vm2070, %v2214, %v2216
        %v2218 = vrot.slane %v1957, 2
        %v2219 = vsel %vm2070, %v2216, %v2218
        %v2220 = vrot.slane %v1958, 2
        %v2221 = vsel %vm2070, %v2218, %v2220
        %vm2222 = vcmask 48128
        %v2223 = vsel %vm2222, %v2073, 0
        %v2225 = vsel %vm2222, %v2075, 0
        %v2227 = vsel %vm2222, %v2077, 0
        %v2229 = vsel %vm2222, %v2079, 0
        %v2231 = vsel %vm2222, %v2081, 0
        %v2233 = vsel %vm2222, %v2083, 0
        %v2235 = vsel %vm2222, %v2085, 0
        %v2237 = vsel %vm2222, %v2087, 0
        %v2239 = vsel %vm2222, %v2089, 0
        %v2241 = vsel %vm2222, %v2091, 0
        %v2243 = vsel %vm2222, %v2093, 0
        %v2245 = vsel %vm2222, %v2095, 0
        %v2247 = vsel %vm2222, %v2097, 0
        %v2249 = vsel %vm2222, %v2099, 0
        %v2251 = vsel %vm2222, %v2101, 0
        %v2253 = vsel %vm2222, %v2103, 0
        %v2255 = vsel %vm2222, %v2105, 0
        %v2257 = vsel %vm2222, %v2107, 0
        %v2259 = vsel %vm2222, %v2109, 0
        %v2261 = vsel %vm2222, %v2111, 0
        %v2263 = vsel %vm2222, %v2113, 0
        %v2265 = vsel %vm2222, %v2115, 0
        %v2267 = vsel %vm2222, %v2117, 0
        %v2269 = vsel %vm2222, %v2119, 0
        %v2271 = vsel %vm2222, %v2121, 0
        %v2273 = vsel %vm2222, %v2123, 0
        %v2275 = vsel %vm2222, %v2125, 0
        %v2277 = vsel %vm2222, %v2127, 0
        %v2279 = vsel %vm2222, %v2129, 0
        %v2281 = vsel %vm2222, %v2131, 0
        %v2283 = vsel %vm2222, %v2133, 0
        %v2285 = vsel %vm2222, %v2135, 0
        %v2287 = vsel %vm2222, %v2137, 0
        %v2289 = vsel %vm2222, %v2139, 0
        %v2291 = vsel %vm2222, %v2141, 0
        %v2293 = vsel %vm2222, %v2143, 0
        %v2295 = vsel %vm2222, %v2145, 0
        %v2297 = vsel %vm2222, %v2147, 0
        %v2299 = vsel %vm2222, %v2149, 0
        %v2301 = vsel %vm2222, %v2151, 0
        %v2303 = vsel %vm2222, %v2153, 0
        %v2305 = vsel %vm2222, %v2155, 0
        %v2307 = vsel %vm2222, %v2157, 0
        %v2309 = vsel %vm2222, %v2159, 0
        %v2311 = vsel %vm2222, %v2161, 0
        %v2313 = vsel %vm2222, %v2163, 0
        %v2315 = vsel %vm2222, %v2165, 0
        %v2317 = vsel %vm2222, %v2167, 0
        %v2319 = vsel %vm2222, %v2169, 0
        %v2321 = vsel %vm2222, %v2171, 0
        %v2323 = vsel %vm2222, %v2173, 0
        %v2325 = vsel %vm2222, %v2175, 0
        %v2327 = vsel %vm2222, %v2177, 0
        %v2329 = vsel %vm2222, %v2179, 0
        %v2331 = vsel %vm2222, %v2181, 0
        %v2333 = vsel %vm2222, %v2183, 0
        %v2335 = vsel %vm2222, %v2185, 0
        %v2337 = vsel %vm2222, %v2187, 0
        %v2339 = vsel %vm2222, %v2189, 0
        %v2341 = vsel %vm2222, %v2191, 0
        %v2343 = vsel %vm2222, %v2193, 0
        %v2345 = vsel %vm2222, %v2195, 0
        %v2347 = vsel %vm2222, %v2197, 0
        %v2349 = vsel %vm2222, %v2199, 0
        %v2351 = vsel %vm2222, %v2201, 0
        %v2353 = vsel %vm2222, %v2203, 0
        %v2355 = vsel %vm2222, %v2205, 0
        %v2357 = vsel %vm2222, %v2207, 0
        %v2359 = vsel %vm2222, %v2209, 0
        %v2361 = vsel %vm2222, %v2211, 0
        %v2363 = vsel %vm2222, %v2213, 0
        %v2365 = vsel %vm2222, %v2215, 0
        %v2367 = vsel %vm2222, %v2217, 0
        %v2369 = vsel %vm2222, %v2219, 0
        %v2371 = vsel %vm2222, %v2221, 0
        %v2374 = vsel %vm2070, %v1993, 0
        %2376 = vmatpush.msra.mxu0 0.0
        %2377 = vmatpush.msra.mxu0 0.0
        %2378 = vmatpush.msra.mxu0 0.0
        %2379 = vmatpush.msra.mxu0 0.0
        %2380 = vmatpush.msra.mxu0 0.0
        %2381 = vmatpush.msra.mxu0 0.0
        %2382 = vmatpush.msra.mxu0 0.0
        %2383 = vmatpush.msra.mxu0 0.0
        %2384 = vmatpush.msra.mxu0 0.0
        %2385 = vmatpush.msra.mxu0 0.0
        %2386 = vmatpush.msra.mxu0 0.0
        %2387 = vmatpush.msra.mxu0 0.0
        %2388 = vmatpush.msra.mxu0 0.0
        %2389 = vmatpush.msra.mxu0 0.0
        %2390 = vmatpush.msra.mxu0 0.0
        %2391 = vmatpush.msra.mxu0 %v2374
        %2392 = vmatmul.f32.gmra.mxu0 %v2223
        %v2393 = vpop.f32.mrf.mxu0
        %v2394 = vadd.f32 0.0, %v2393
        %2395 = vmatmul.f32.gmra.mxu0 %v2225
        %v2396 = vpop.f32.mrf.mxu0
        %v2397 = vadd.f32 0.0, %v2396
        %2398 = vmatmul.f32.gmra.mxu0 %v2227
        %v2399 = vpop.f32.mrf.mxu0
        %v2400 = vadd.f32 0.0, %v2399
        %2401 = vmatmul.f32.gmra.mxu0 %v2229
        %v2402 = vpop.f32.mrf.mxu0
        %v2403 = vadd.f32 0.0, %v2402
        %2404 = vmatmul.f32.gmra.mxu0 %v2231
        %v2405 = vpop.f32.mrf.mxu0
        %2406 = vmatmul.f32.gmra.mxu0 %v2233
        %v2407 = vpop.f32.mrf.mxu0
        %2408 = vmatmul.f32.gmra.mxu0 %v2235
        %v2409 = vpop.f32.mrf.mxu0
        %2410 = vmatmul.f32.gmra.mxu0 %v2237
        %v2411 = vpop.f32.mrf.mxu0
        %2412 = vmatmul.f32.gmra.mxu0 %v2239
        %v2413 = vpop.f32.mrf.mxu0
        %v2414 = vadd.f32 0.0, %v2413
        %2415 = vmatmul.f32.gmra.mxu0 %v2241
        %v2416 = vpop.f32.mrf.mxu0
        %v2417 = vadd.f32 0.0, %v2416
        %2418 = vmatmul.f32.gmra.mxu0 %v2243
        %v2419 = vpop.f32.mrf.mxu0
        %v2420 = vadd.f32 0.0, %v2419
        %2421 = vmatmul.f32.gmra.mxu0 %v2245
        %v2422 = vpop.f32.mrf.mxu0
        %v2423 = vadd.f32 0.0, %v2422
        %2424 = vmatmul.f32.gmra.mxu0 %v2247
        %v2425 = vpop.f32.mrf.mxu0
        %2426 = vmatmul.f32.gmra.mxu0 %v2249
        %v2427 = vpop.f32.mrf.mxu0
        %2428 = vmatmul.f32.gmra.mxu0 %v2251
        %v2429 = vpop.f32.mrf.mxu0
        %2430 = vmatmul.f32.gmra.mxu0 %v2253
        %v2431 = vpop.f32.mrf.mxu0
        %2432 = vmatmul.f32.gmra.mxu0 %v2255
        %v2433 = vpop.f32.mrf.mxu0
        %v2434 = vadd.f32 0.0, %v2433
        %2435 = vmatmul.f32.gmra.mxu0 %v2257
        %v2436 = vpop.f32.mrf.mxu0
        %v2437 = vadd.f32 0.0, %v2436
        %2438 = vmatmul.f32.gmra.mxu0 %v2259
        %v2439 = vpop.f32.mrf.mxu0
        %v2440 = vadd.f32 0.0, %v2439
        %2441 = vmatmul.f32.gmra.mxu0 %v2261
        %v2442 = vpop.f32.mrf.mxu0
        %v2443 = vadd.f32 0.0, %v2442
        %2444 = vmatmul.f32.gmra.mxu0 %v2263
        %v2445 = vpop.f32.mrf.mxu0
        %2446 = vmatmul.f32.gmra.mxu0 %v2265
        %v2447 = vpop.f32.mrf.mxu0
        %2448 = vmatmul.f32.gmra.mxu0 %v2267
        %v2449 = vpop.f32.mrf.mxu0
        %2450 = vmatmul.f32.gmra.mxu0 %v2269
        %v2451 = vpop.f32.mrf.mxu0
        %2452 = vmatmul.f32.gmra.mxu0 %v2271
        %v2453 = vpop.f32.mrf.mxu0
        %v2454 = vadd.f32 0.0, %v2453
        %2455 = vmatmul.f32.gmra.mxu0 %v2273
        %v2456 = vpop.f32.mrf.mxu0
        %v2457 = vadd.f32 0.0, %v2456
        %2458 = vmatmul.f32.gmra.mxu0 %v2275
        %v2459 = vpop.f32.mrf.mxu0
        %v2460 = vadd.f32 0.0, %v2459
        %2461 = vmatmul.f32.gmra.mxu0 %v2277
        %v2462 = vpop.f32.mrf.mxu0
        %v2463 = vadd.f32 0.0, %v2462
        %2464 = vmatmul.f32.gmra.mxu0 %v2279
        %v2465 = vpop.f32.mrf.mxu0
        %2466 = vmatmul.f32.gmra.mxu0 %v2281
        %v2467 = vpop.f32.mrf.mxu0
        %2468 = vmatmul.f32.gmra.mxu0 %v2283
        %v2469 = vpop.f32.mrf.mxu0
        %2470 = vmatmul.f32.gmra.mxu0 %v2285
        %v2471 = vpop.f32.mrf.mxu0
        %2472 = vmatmul.f32.gmra.mxu0 %v2287
        %v2473 = vpop.f32.mrf.mxu0
        %v2474 = vadd.f32 0.0, %v2473
        %2475 = vmatmul.f32.gmra.mxu0 %v2289
        %v2476 = vpop.f32.mrf.mxu0
        %v2477 = vadd.f32 0.0, %v2476
        %2478 = vmatmul.f32.gmra.mxu0 %v2291
        %v2479 = vpop.f32.mrf.mxu0
        %v2480 = vadd.f32 0.0, %v2479
        %2481 = vmatmul.f32.gmra.mxu0 %v2293
        %v2482 = vpop.f32.mrf.mxu0
        %v2483 = vadd.f32 0.0, %v2482
        %2484 = vmatmul.f32.gmra.mxu0 %v2295
        %v2485 = vpop.f32.mrf.mxu0
        %2486 = vmatmul.f32.gmra.mxu0 %v2297
        %v2487 = vpop.f32.mrf.mxu0
        %2488 = vmatmul.f32.gmra.mxu0 %v2299
        %v2489 = vpop.f32.mrf.mxu0
        %2490 = vmatmul.f32.gmra.mxu0 %v2301
        %v2491 = vpop.f32.mrf.mxu0
        %2492 = vmatmul.f32.gmra.mxu0 %v2303
        %v2493 = vpop.f32.mrf.mxu0
        %v2494 = vadd.f32 0.0, %v2493
        %2495 = vmatmul.f32.gmra.mxu0 %v2305
        %v2496 = vpop.f32.mrf.mxu0
        %v2497 = vadd.f32 0.0, %v2496
        %2498 = vmatmul.f32.gmra.mxu0 %v2307
        %v2499 = vpop.f32.mrf.mxu0
        %v2500 = vadd.f32 0.0, %v2499
        %2501 = vmatmul.f32.gmra.mxu0 %v2309
        %v2502 = vpop.f32.mrf.mxu0
        %v2503 = vadd.f32 0.0, %v2502
        %2504 = vmatmul.f32.gmra.mxu0 %v2311
        %v2505 = vpop.f32.mrf.mxu0
        %2506 = vmatmul.f32.gmra.mxu0 %v2313
        %v2507 = vpop.f32.mrf.mxu0
        %2508 = vmatmul.f32.gmra.mxu0 %v2315
        %v2509 = vpop.f32.mrf.mxu0
        %2510 = vmatmul.f32.gmra.mxu0 %v2317
        %v2511 = vpop.f32.mrf.mxu0
        %2512 = vmatmul.f32.gmra.mxu0 %v2319
        %v2513 = vpop.f32.mrf.mxu0
        %v2514 = vadd.f32 0.0, %v2513
        %2515 = vmatmul.f32.gmra.mxu0 %v2321
        %v2516 = vpop.f32.mrf.mxu0
        %v2517 = vadd.f32 0.0, %v2516
        %2518 = vmatmul.f32.gmra.mxu0 %v2323
        %v2519 = vpop.f32.mrf.mxu0
        %v2520 = vadd.f32 0.0, %v2519
        %2521 = vmatmul.f32.gmra.mxu0 %v2325
        %v2522 = vpop.f32.mrf.mxu0
        %v2523 = vadd.f32 0.0, %v2522
        %2524 = vmatmul.f32.gmra.mxu0 %v2327
        %v2525 = vpop.f32.mrf.mxu0
        %2526 = vmatmul.f32.gmra.mxu0 %v2329
        %v2527 = vpop.f32.mrf.mxu0
        %2528 = vmatmul.f32.gmra.mxu0 %v2331
        %v2529 = vpop.f32.mrf.mxu0
        %2530 = vmatmul.f32.gmra.mxu0 %v2333
        %v2531 = vpop.f32.mrf.mxu0
        %2532 = vmatmul.f32.gmra.mxu0 %v2335
        %v2533 = vpop.f32.mrf.mxu0
        %v2534 = vadd.f32 0.0, %v2533
        %2535 = vmatmul.f32.gmra.mxu0 %v2337
        %v2536 = vpop.f32.mrf.mxu0
        %v2537 = vadd.f32 0.0, %v2536
        %2538 = vmatmul.f32.gmra.mxu0 %v2339
        %v2539 = vpop.f32.mrf.mxu0
        %v2540 = vadd.f32 0.0, %v2539
        %2541 = vmatmul.f32.gmra.mxu0 %v2341
        %v2542 = vpop.f32.mrf.mxu0
        %v2543 = vadd.f32 0.0, %v2542
        %2544 = vmatmul.f32.gmra.mxu0 %v2343
        %v2545 = vpop.f32.mrf.mxu0
        %2546 = vmatmul.f32.gmra.mxu0 %v2345
        %v2547 = vpop.f32.mrf.mxu0
        %2548 = vmatmul.f32.gmra.mxu0 %v2347
        %v2549 = vpop.f32.mrf.mxu0
        %2550 = vmatmul.f32.gmra.mxu0 %v2349
        %v2551 = vpop.f32.mrf.mxu0
        %2552 = vmatmul.f32.gmra.mxu0 %v2351
        %v2553 = vpop.f32.mrf.mxu0
        %v2554 = vadd.f32 0.0, %v2553
        %2555 = vmatmul.f32.gmra.mxu0 %v2353
        %v2556 = vpop.f32.mrf.mxu0
        %v2557 = vadd.f32 0.0, %v2556
        %2558 = vmatmul.f32.gmra.mxu0 %v2355
        %v2559 = vpop.f32.mrf.mxu0
        %v2560 = vadd.f32 0.0, %v2559
        %2561 = vmatmul.f32.gmra.mxu0 %v2357
        %v2562 = vpop.f32.mrf.mxu0
        %2563 = vmatmul.f32.gmra.mxu0 %v2359
        %v2564 = vpop.f32.mrf.mxu0
        %2565 = vmatmul.f32.gmra.mxu0 %v2361
        %v2566 = vpop.f32.mrf.mxu0
        %2567 = vmatmul.f32.gmra.mxu0 %v2363
        %v2568 = vpop.f32.mrf.mxu0
        %2569 = vmatmul.f32.gmra.mxu0 %v2365
        %v2570 = vpop.f32.mrf.mxu0
        %2571 = vmatmul.f32.gmra.mxu0 %v2367
        %v2572 = vpop.f32.mrf.mxu0
        %v2573 = vadd.f32 0.0, %v2572
        %2574 = vmatmul.f32.gmra.mxu0 %v2369
        %v2575 = vpop.f32.mrf.mxu0
        %v2576 = vadd.f32 0.0, %v2575
        %2577 = vmatmul.f32.gmra.mxu0 %v2371
        %v2578 = vpop.f32.mrf.mxu0
        %v2579 = vadd.f32 0.0, %v2578
        %2580 = vdwg.mxu0
        %v2581 = vsel %vm2222, %v1883, 0
        %v2583 = vsel %vm2222, %v1884, 0
        %v2585 = vsel %vm2222, %v1885, 0
        %v2587 = vsel %vm2222, %v1886, 0
        %v2589 = vsel %vm2222, %v1887, 0
        %v2591 = vsel %vm2222, %v1888, 0
        %v2593 = vsel %vm2222, %v1889, 0
        %v2595 = vsel %vm2222, %v1890, 0
        %v2597 = vsel %vm2222, %v1891, 0
        %v2599 = vsel %vm2222, %v1892, 0
        %v2601 = vsel %vm2222, %v1893, 0
        %v2603 = vsel %vm2222, %v1894, 0
        %v2605 = vsel %vm2222, %v1895, 0
        %v2607 = vsel %vm2222, %v1896, 0
        %v2609 = vsel %vm2222, %v1897, 0
        %v2611 = vsel %vm2222, %v1898, 0
        %v2613 = vsel %vm2222, %v1899, 0
        %v2615 = vsel %vm2222, %v1900, 0
        %v2617 = vsel %vm2222, %v1901, 0
        %v2619 = vsel %vm2222, %v1902, 0
        %v2621 = vsel %vm2222, %v1903, 0
        %v2623 = vsel %vm2222, %v1904, 0
        %v2625 = vsel %vm2222, %v1905, 0
        %v2627 = vsel %vm2222, %v1906, 0
        %v2629 = vsel %vm2222, %v1907, 0
        %v2631 = vsel %vm2222, %v1908, 0
        %v2633 = vsel %vm2222, %v1909, 0
        %v2635 = vsel %vm2222, %v1910, 0
        %v2637 = vsel %vm2222, %v1911, 0
        %v2639 = vsel %vm2222, %v1912, 0
        %v2641 = vsel %vm2222, %v1913, 0
        %v2643 = vsel %vm2222, %v1914, 0
        %v2645 = vsel %vm2222, %v1915, 0
        %v2647 = vsel %vm2222, %v1916, 0
        %v2649 = vsel %vm2222, %v1917, 0
        %v2651 = vsel %vm2222, %v1918, 0
        %v2653 = vsel %vm2222, %v1919, 0
        %v2655 = vsel %vm2222, %v1920, 0
        %v2657 = vsel %vm2222, %v1921, 0
        %v2659 = vsel %vm2222, %v1922, 0
        %v2661 = vsel %vm2222, %v1923, 0
        %v2663 = vsel %vm2222, %v1924, 0
        %v2665 = vsel %vm2222, %v1925, 0
        %v2667 = vsel %vm2222, %v1926, 0
        %v2669 = vsel %vm2222, %v1927, 0
        %v2671 = vsel %vm2222, %v1928, 0
        %v2673 = vsel %vm2222, %v1929, 0
        %v2675 = vsel %vm2222, %v1930, 0
        %v2677 = vsel %vm2222, %v1931, 0
        %v2679 = vsel %vm2222, %v1932, 0
        %v2681 = vsel %vm2222, %v1933, 0
        %v2683 = vsel %vm2222, %v1934, 0
        %v2685 = vsel %vm2222, %v1935, 0
        %v2687 = vsel %vm2222, %v1936, 0
        %v2689 = vsel %vm2222, %v1937, 0
        %v2691 = vsel %vm2222, %v1938, 0
        %v2693 = vsel %vm2222, %v1939, 0
        %v2695 = vsel %vm2222, %v1940, 0
        %v2697 = vsel %vm2222, %v1941, 0
        %v2699 = vsel %vm2222, %v1942, 0
        %v2701 = vsel %vm2222, %v1943, 0
        %v2703 = vsel %vm2222, %v1944, 0
        %v2705 = vsel %vm2222, %v1945, 0
        %v2707 = vsel %vm2222, %v1946, 0
        %v2709 = vsel %vm2222, %v1947, 0
        %v2711 = vsel %vm2222, %v1948, 0
        %v2713 = vsel %vm2222, %v1949, 0
        %v2715 = vsel %vm2222, %v1950, 0
        %v2717 = vsel %vm2222, %v1951, 0
        %v2719 = vsel %vm2222, %v1952, 0
        %v2721 = vsel %vm2222, %v1953, 0
        %v2723 = vsel %vm2222, %v1954, 0
        %v2725 = vsel %vm2222, %v1955, 0
        %v2727 = vsel %vm2222, %v1956, 0
        %v2729 = vsel %vm2222, %v1957, 0
        %v2732 = vsel %vm2070, %v1991, 0
        %2734 = vmatpush.msra.mxu0 0.0
        %2735 = vmatpush.msra.mxu0 0.0
        %2736 = vmatpush.msra.mxu0 0.0
        %2737 = vmatpush.msra.mxu0 0.0
        %2738 = vmatpush.msra.mxu0 0.0
        %2739 = vmatpush.msra.mxu0 0.0
        %2740 = vmatpush.msra.mxu0 0.0
        %2741 = vmatpush.msra.mxu0 0.0
        %2742 = vmatpush.msra.mxu0 0.0
        %2743 = vmatpush.msra.mxu0 0.0
        %2744 = vmatpush.msra.mxu0 0.0
        %2745 = vmatpush.msra.mxu0 0.0
        %2746 = vmatpush.msra.mxu0 0.0
        %2747 = vmatpush.msra.mxu0 0.0
        %2748 = vmatpush.msra.mxu0 0.0
        %2749 = vmatpush.msra.mxu0 %v2732
        %2750 = vmatmul.f32.gmra.mxu0 %v2581
        %v2751 = vpop.f32.mrf.mxu0
        %v2752 = vadd.f32 %v2394, %v2751
        %2753 = vmatmul.f32.gmra.mxu0 %v2583
        %v2754 = vpop.f32.mrf.mxu0
        %v2755 = vadd.f32 %v2397, %v2754
        %2756 = vmatmul.f32.gmra.mxu0 %v2585
        %v2757 = vpop.f32.mrf.mxu0
        %v2758 = vadd.f32 %v2400, %v2757
        %2759 = vmatmul.f32.gmra.mxu0 %v2587
        %v2760 = vpop.f32.mrf.mxu0
        %v2761 = vadd.f32 %v2403, %v2760
        %2762 = vmatmul.f32.gmra.mxu0 %v2589
        %v2763 = vpop.f32.mrf.mxu0
        %2764 = vmatmul.f32.gmra.mxu0 %v2591
        %v2765 = vpop.f32.mrf.mxu0
        %2766 = vmatmul.f32.gmra.mxu0 %v2593
        %v2767 = vpop.f32.mrf.mxu0
        %2768 = vmatmul.f32.gmra.mxu0 %v2595
        %v2769 = vpop.f32.mrf.mxu0
        %2770 = vmatmul.f32.gmra.mxu0 %v2597
        %v2771 = vpop.f32.mrf.mxu0
        %v2772 = vadd.f32 %v2414, %v2771
        %2773 = vmatmul.f32.gmra.mxu0 %v2599
        %v2774 = vpop.f32.mrf.mxu0
        %v2775 = vadd.f32 %v2417, %v2774
        %2776 = vmatmul.f32.gmra.mxu0 %v2601
        %v2777 = vpop.f32.mrf.mxu0
        %v2778 = vadd.f32 %v2420, %v2777
        %2779 = vmatmul.f32.gmra.mxu0 %v2603
        %v2780 = vpop.f32.mrf.mxu0
        %v2781 = vadd.f32 %v2423, %v2780
        %2782 = vmatmul.f32.gmra.mxu0 %v2605
        %v2783 = vpop.f32.mrf.mxu0
        %2784 = vmatmul.f32.gmra.mxu0 %v2607
        %v2785 = vpop.f32.mrf.mxu0
        %2786 = vmatmul.f32.gmra.mxu0 %v2609
        %v2787 = vpop.f32.mrf.mxu0
        %2788 = vmatmul.f32.gmra.mxu0 %v2611
        %v2789 = vpop.f32.mrf.mxu0
        %2790 = vmatmul.f32.gmra.mxu0 %v2613
        %v2791 = vpop.f32.mrf.mxu0
        %v2792 = vadd.f32 %v2434, %v2791
        %2793 = vmatmul.f32.gmra.mxu0 %v2615
        %v2794 = vpop.f32.mrf.mxu0
        %v2795 = vadd.f32 %v2437, %v2794
        %2796 = vmatmul.f32.gmra.mxu0 %v2617
        %v2797 = vpop.f32.mrf.mxu0
        %v2798 = vadd.f32 %v2440, %v2797
        %2799 = vmatmul.f32.gmra.mxu0 %v2619
        %v2800 = vpop.f32.mrf.mxu0
        %v2801 = vadd.f32 %v2443, %v2800
        %2802 = vmatmul.f32.gmra.mxu0 %v2621
        %v2803 = vpop.f32.mrf.mxu0
        %2804 = vmatmul.f32.gmra.mxu0 %v2623
        %v2805 = vpop.f32.mrf.mxu0
        %2806 = vmatmul.f32.gmra.mxu0 %v2625
        %v2807 = vpop.f32.mrf.mxu0
        %2808 = vmatmul.f32.gmra.mxu0 %v2627
        %v2809 = vpop.f32.mrf.mxu0
        %2810 = vmatmul.f32.gmra.mxu0 %v2629
        %v2811 = vpop.f32.mrf.mxu0
        %v2812 = vadd.f32 %v2454, %v2811
        %2813 = vmatmul.f32.gmra.mxu0 %v2631
        %v2814 = vpop.f32.mrf.mxu0
        %v2815 = vadd.f32 %v2457, %v2814
        %2816 = vmatmul.f32.gmra.mxu0 %v2633
        %v2817 = vpop.f32.mrf.mxu0
        %v2818 = vadd.f32 %v2460, %v2817
        %2819 = vmatmul.f32.gmra.mxu0 %v2635
        %v2820 = vpop.f32.mrf.mxu0
        %v2821 = vadd.f32 %v2463, %v2820
        %2822 = vmatmul.f32.gmra.mxu0 %v2637
        %v2823 = vpop.f32.mrf.mxu0
        %2824 = vmatmul.f32.gmra.mxu0 %v2639
        %v2825 = vpop.f32.mrf.mxu0
        %2826 = vmatmul.f32.gmra.mxu0 %v2641
        %v2827 = vpop.f32.mrf.mxu0
        %2828 = vmatmul.f32.gmra.mxu0 %v2643
        %v2829 = vpop.f32.mrf.mxu0
        %2830 = vmatmul.f32.gmra.mxu0 %v2645
        %v2831 = vpop.f32.mrf.mxu0
        %v2832 = vadd.f32 %v2474, %v2831
        %2833 = vmatmul.f32.gmra.mxu0 %v2647
        %v2834 = vpop.f32.mrf.mxu0
        %v2835 = vadd.f32 %v2477, %v2834
        %2836 = vmatmul.f32.gmra.mxu0 %v2649
        %v2837 = vpop.f32.mrf.mxu0
        %v2838 = vadd.f32 %v2480, %v2837
        %2839 = vmatmul.f32.gmra.mxu0 %v2651
        %v2840 = vpop.f32.mrf.mxu0
        %v2841 = vadd.f32 %v2483, %v2840
        %2842 = vmatmul.f32.gmra.mxu0 %v2653
        %v2843 = vpop.f32.mrf.mxu0
        %2844 = vmatmul.f32.gmra.mxu0 %v2655
        %v2845 = vpop.f32.mrf.mxu0
        %2846 = vmatmul.f32.gmra.mxu0 %v2657
        %v2847 = vpop.f32.mrf.mxu0
        %2848 = vmatmul.f32.gmra.mxu0 %v2659
        %v2849 = vpop.f32.mrf.mxu0
        %2850 = vmatmul.f32.gmra.mxu0 %v2661
        %v2851 = vpop.f32.mrf.mxu0
        %v2852 = vadd.f32 %v2494, %v2851
        %2853 = vmatmul.f32.gmra.mxu0 %v2663
        %v2854 = vpop.f32.mrf.mxu0
        %v2855 = vadd.f32 %v2497, %v2854
        %2856 = vmatmul.f32.gmra.mxu0 %v2665
        %v2857 = vpop.f32.mrf.mxu0
        %v2858 = vadd.f32 %v2500, %v2857
        %2859 = vmatmul.f32.gmra.mxu0 %v2667
        %v2860 = vpop.f32.mrf.mxu0
        %v2861 = vadd.f32 %v2503, %v2860
        %2862 = vmatmul.f32.gmra.mxu0 %v2669
        %v2863 = vpop.f32.mrf.mxu0
        %2864 = vmatmul.f32.gmra.mxu0 %v2671
        %v2865 = vpop.f32.mrf.mxu0
        %2866 = vmatmul.f32.gmra.mxu0 %v2673
        %v2867 = vpop.f32.mrf.mxu0
        %2868 = vmatmul.f32.gmra.mxu0 %v2675
        %v2869 = vpop.f32.mrf.mxu0
        %2870 = vmatmul.f32.gmra.mxu0 %v2677
        %v2871 = vpop.f32.mrf.mxu0
        %v2872 = vadd.f32 %v2514, %v2871
        %2873 = vmatmul.f32.gmra.mxu0 %v2679
        %v2874 = vpop.f32.mrf.mxu0
        %v2875 = vadd.f32 %v2517, %v2874
        %2876 = vmatmul.f32.gmra.mxu0 %v2681
        %v2877 = vpop.f32.mrf.mxu0
        %v2878 = vadd.f32 %v2520, %v2877
        %2879 = vmatmul.f32.gmra.mxu0 %v2683
        %v2880 = vpop.f32.mrf.mxu0
        %v2881 = vadd.f32 %v2523, %v2880
        %2882 = vmatmul.f32.gmra.mxu0 %v2685
        %v2883 = vpop.f32.mrf.mxu0
        %2884 = vmatmul.f32.gmra.mxu0 %v2687
        %v2885 = vpop.f32.mrf.mxu0
        %2886 = vmatmul.f32.gmra.mxu0 %v2689
        %v2887 = vpop.f32.mrf.mxu0
        %2888 = vmatmul.f32.gmra.mxu0 %v2691
        %v2889 = vpop.f32.mrf.mxu0
        %2890 = vmatmul.f32.gmra.mxu0 %v2693
        %v2891 = vpop.f32.mrf.mxu0
        %v2892 = vadd.f32 %v2534, %v2891
        %2893 = vmatmul.f32.gmra.mxu0 %v2695
        %v2894 = vpop.f32.mrf.mxu0
        %v2895 = vadd.f32 %v2537, %v2894
        %2896 = vmatmul.f32.gmra.mxu0 %v2697
        %v2897 = vpop.f32.mrf.mxu0
        %v2898 = vadd.f32 %v2540, %v2897
        %2899 = vmatmul.f32.gmra.mxu0 %v2699
        %v2900 = vpop.f32.mrf.mxu0
        %v2901 = vadd.f32 %v2543, %v2900
        %2902 = vmatmul.f32.gmra.mxu0 %v2701
        %v2903 = vpop.f32.mrf.mxu0
        %2904 = vmatmul.f32.gmra.mxu0 %v2703
        %v2905 = vpop.f32.mrf.mxu0
        %2906 = vmatmul.f32.gmra.mxu0 %v2705
        %v2907 = vpop.f32.mrf.mxu0
        %2908 = vmatmul.f32.gmra.mxu0 %v2707
        %v2909 = vpop.f32.mrf.mxu0
        %2910 = vmatmul.f32.gmra.mxu0 %v2709
        %v2911 = vpop.f32.mrf.mxu0
        %v2912 = vadd.f32 %v2554, %v2911
        %2913 = vmatmul.f32.gmra.mxu0 %v2711
        %v2914 = vpop.f32.mrf.mxu0
        %v2915 = vadd.f32 %v2557, %v2914
        %2916 = vmatmul.f32.gmra.mxu0 %v2713
        %v2917 = vpop.f32.mrf.mxu0
        %v2918 = vadd.f32 %v2560, %v2917
        %2919 = vmatmul.f32.gmra.mxu0 %v2715
        %v2920 = vpop.f32.mrf.mxu0
        %2921 = vmatmul.f32.gmra.mxu0 %v2717
        %v2922 = vpop.f32.mrf.mxu0
        %2923 = vmatmul.f32.gmra.mxu0 %v2719
        %v2924 = vpop.f32.mrf.mxu0
        %2925 = vmatmul.f32.gmra.mxu0 %v2721
        %v2926 = vpop.f32.mrf.mxu0
        %2927 = vmatmul.f32.gmra.mxu0 %v2723
        %v2928 = vpop.f32.mrf.mxu0
        %2929 = vmatmul.f32.gmra.mxu0 %v2725
        %v2930 = vpop.f32.mrf.mxu0
        %v2931 = vadd.f32 %v2573, %v2930
        %2932 = vmatmul.f32.gmra.mxu0 %v2727
        %v2933 = vpop.f32.mrf.mxu0
        %v2934 = vadd.f32 %v2576, %v2933
        %2935 = vmatmul.f32.gmra.mxu0 %v2729
        %v2936 = vpop.f32.mrf.mxu0
        %v2937 = vadd.f32 %v2579, %v2936
        %2938 = vdwg.mxu0
        %s2939 = scalar_lea.vmem %s3, 16
        %v2940 = vld [vmem:[%s2939] sm:$0x3f]
        %vm2941 = vcmask 1043456
        %v2942 = vrot.slane %v1883, 4
        %v2943 = vrot.slane %v1884, 4
        %v2944 = vsel %vm2941, %v2942, %v2943
        %v2945 = vrot.slane %v1885, 4
        %v2946 = vsel %vm2941, %v2943, %v2945
        %v2947 = vrot.slane %v1886, 4
        %v2948 = vsel %vm2941, %v2945, %v2947
        %v2949 = vrot.slane %v1887, 4
        %v2950 = vsel %vm2941, %v2947, %v2949
        %v2951 = vrot.slane %v1888, 4
        %v2952 = vsel %vm2941, %v2949, %v2951
        %v2953 = vrot.slane %v1889, 4
        %v2954 = vsel %vm2941, %v2951, %v2953
        %v2955 = vrot.slane %v1890, 4
        %v2956 = vsel %vm2941, %v2953, %v2955
        %v2957 = vrot.slane %v1891, 4
        %v2958 = vsel %vm2941, %v2955, %v2957
        %v2959 = vrot.slane %v1892, 4
        %v2960 = vsel %vm2941, %v2957, %v2959
        %v2961 = vrot.slane %v1893, 4
        %v2962 = vsel %vm2941, %v2959, %v2961
        %v2963 = vrot.slane %v1894, 4
        %v2964 = vsel %vm2941, %v2961, %v2963
        %v2965 = vrot.slane %v1895, 4
        %v2966 = vsel %vm2941, %v2963, %v2965
        %v2967 = vrot.slane %v1896, 4
        %v2968 = vsel %vm2941, %v2965, %v2967
        %v2969 = vrot.slane %v1897, 4
        %v2970 = vsel %vm2941, %v2967, %v2969
        %v2971 = vrot.slane %v1898, 4
        %v2972 = vsel %vm2941, %v2969, %v2971
        %v2973 = vrot.slane %v1899, 4
        %v2974 = vsel %vm2941, %v2971, %v2973
        %v2975 = vrot.slane %v1900, 4
        %v2976 = vsel %vm2941, %v2973, %v2975
        %v2977 = vrot.slane %v1901, 4
        %v2978 = vsel %vm2941, %v2975, %v2977
        %v2979 = vrot.slane %v1902, 4
        %v2980 = vsel %vm2941, %v2977, %v2979
        %v2981 = vrot.slane %v1903, 4
        %v2982 = vsel %vm2941, %v2979, %v2981
        %v2983 = vrot.slane %v1904, 4
        %v2984 = vsel %vm2941, %v2981, %v2983
        %v2985 = vrot.slane %v1905, 4
        %v2986 = vsel %vm2941, %v2983, %v2985
        %v2987 = vrot.slane %v1906, 4
        %v2988 = vsel %vm2941, %v2985, %v2987
        %v2989 = vrot.slane %v1907, 4
        %v2990 = vsel %vm2941, %v2987, %v2989
        %v2991 = vrot.slane %v1908, 4
        %v2992 = vsel %vm2941, %v2989, %v2991
        %v2993 = vrot.slane %v1909, 4
        %v2994 = vsel %vm2941, %v2991, %v2993
        %v2995 = vrot.slane %v1910, 4
        %v2996 = vsel %vm2941, %v2993, %v2995
        %v2997 = vrot.slane %v1911, 4
        %v2998 = vsel %vm2941, %v2995, %v2997
        %v2999 = vrot.slane %v1912, 4
        %v3000 = vsel %vm2941, %v2997, %v2999
        %v3001 = vrot.slane %v1913, 4
        %v3002 = vsel %vm2941, %v2999, %v3001
        %v3003 = vrot.slane %v1914, 4
        %v3004 = vsel %vm2941, %v3001, %v3003
        %v3005 = vrot.slane %v1915, 4
        %v3006 = vsel %vm2941, %v3003, %v3005
        %v3007 = vrot.slane %v1916, 4
        %v3008 = vsel %vm2941, %v3005, %v3007
        %v3009 = vrot.slane %v1917, 4
        %v3010 = vsel %vm2941, %v3007, %v3009
        %v3011 = vrot.slane %v1918, 4
        %v3012 = vsel %vm2941, %v3009, %v3011
        %v3013 = vrot.slane %v1919, 4
        %v3014 = vsel %vm2941, %v3011, %v3013
        %v3015 = vrot.slane %v1920, 4
        %v3016 = vsel %vm2941, %v3013, %v3015
        %v3017 = vrot.slane %v1921, 4
        %v3018 = vsel %vm2941, %v3015, %v3017
        %v3019 = vrot.slane %v1922, 4
        %v3020 = vsel %vm2941, %v3017, %v3019
        %v3021 = vrot.slane %v1923, 4
        %v3022 = vsel %vm2941, %v3019, %v3021
        %v3023 = vrot.slane %v1924, 4
        %v3024 = vsel %vm2941, %v3021, %v3023
        %v3025 = vrot.slane %v1925, 4
        %v3026 = vsel %vm2941, %v3023, %v3025
        %v3027 = vrot.slane %v1926, 4
        %v3028 = vsel %vm2941, %v3025, %v3027
        %v3029 = vrot.slane %v1927, 4
        %v3030 = vsel %vm2941, %v3027, %v3029
        %v3031 = vrot.slane %v1928, 4
        %v3032 = vsel %vm2941, %v3029, %v3031
        %v3033 = vrot.slane %v1929, 4
        %v3034 = vsel %vm2941, %v3031, %v3033
        %v3035 = vrot.slane %v1930, 4
        %v3036 = vsel %vm2941, %v3033, %v3035
        %v3037 = vrot.slane %v1931, 4
        %v3038 = vsel %vm2941, %v3035, %v3037
        %v3039 = vrot.slane %v1932, 4
        %v3040 = vsel %vm2941, %v3037, %v3039
        %v3041 = vrot.slane %v1933, 4
        %v3042 = vsel %vm2941, %v3039, %v3041
        %v3043 = vrot.slane %v1934, 4
        %v3044 = vsel %vm2941, %v3041, %v3043
        %v3045 = vrot.slane %v1935, 4
        %v3046 = vsel %vm2941, %v3043, %v3045
        %v3047 = vrot.slane %v1936, 4
        %v3048 = vsel %vm2941, %v3045, %v3047
        %v3049 = vrot.slane %v1937, 4
        %v3050 = vsel %vm2941, %v3047, %v3049
        %v3051 = vrot.slane %v1938, 4
        %v3052 = vsel %vm2941, %v3049, %v3051
        %v3053 = vrot.slane %v1939, 4
        %v3054 = vsel %vm2941, %v3051, %v3053
        %v3055 = vrot.slane %v1940, 4
        %v3056 = vsel %vm2941, %v3053, %v3055
        %v3057 = vrot.slane %v1941, 4
        %v3058 = vsel %vm2941, %v3055, %v3057
        %v3059 = vrot.slane %v1942, 4
        %v3060 = vsel %vm2941, %v3057, %v3059
        %v3061 = vrot.slane %v1943, 4
        %v3062 = vsel %vm2941, %v3059, %v3061
        %v3063 = vrot.slane %v1944, 4
        %v3064 = vsel %vm2941, %v3061, %v3063
        %v3065 = vrot.slane %v1945, 4
        %v3066 = vsel %vm2941, %v3063, %v3065
        %v3067 = vrot.slane %v1946, 4
        %v3068 = vsel %vm2941, %v3065, %v3067
        %v3069 = vrot.slane %v1947, 4
        %v3070 = vsel %vm2941, %v3067, %v3069
        %v3071 = vrot.slane %v1948, 4
        %v3072 = vsel %vm2941, %v3069, %v3071
        %v3073 = vrot.slane %v1949, 4
        %v3074 = vsel %vm2941, %v3071, %v3073
        %v3075 = vrot.slane %v1950, 4
        %v3076 = vsel %vm2941, %v3073, %v3075
        %v3077 = vrot.slane %v1951, 4
        %v3078 = vsel %vm2941, %v3075, %v3077
        %v3079 = vrot.slane %v1952, 4
        %v3080 = vsel %vm2941, %v3077, %v3079
        %v3081 = vrot.slane %v1953, 4
        %v3082 = vsel %vm2941, %v3079, %v3081
        %v3083 = vrot.slane %v1954, 4
        %v3084 = vsel %vm2941, %v3081, %v3083
        %v3085 = vrot.slane %v1955, 4
        %v3086 = vsel %vm2941, %v3083, %v3085
        %v3087 = vrot.slane %v1956, 4
        %v3088 = vsel %vm2941, %v3085, %v3087
        %v3089 = vrot.slane %v1957, 4
        %v3090 = vsel %vm2941, %v3087, %v3089
        %v3091 = vrot.slane %v1958, 4
        %v3092 = vsel %vm2941, %v3089, %v3091
        %v3093 = vsel %vm2222, %v2944, 0
        %v3095 = vsel %vm2222, %v2946, 0
        %v3097 = vsel %vm2222, %v2948, 0
        %v3099 = vsel %vm2222, %v2950, 0
        %v3101 = vsel %vm2222, %v2952, 0
        %v3103 = vsel %vm2222, %v2954, 0
        %v3105 = vsel %vm2222, %v2956, 0
        %v3107 = vsel %vm2222, %v2958, 0
        %v3109 = vsel %vm2222, %v2960, 0
        %v3111 = vsel %vm2222, %v2962, 0
        %v3113 = vsel %vm2222, %v2964, 0
        %v3115 = vsel %vm2222, %v2966, 0
        %v3117 = vsel %vm2222, %v2968, 0
        %v3119 = vsel %vm2222, %v2970, 0
        %v3121 = vsel %vm2222, %v2972, 0
        %v3123 = vsel %vm2222, %v2974, 0
        %v3125 = vsel %vm2222, %v2976, 0
        %v3127 = vsel %vm2222, %v2978, 0
        %v3129 = vsel %vm2222, %v2980, 0
        %v3131 = vsel %vm2222, %v2982, 0
        %v3133 = vsel %vm2222, %v2984, 0
        %v3135 = vsel %vm2222, %v2986, 0
        %v3137 = vsel %vm2222, %v2988, 0
        %v3139 = vsel %vm2222, %v2990, 0
        %v3141 = vsel %vm2222, %v2992, 0
        %v3143 = vsel %vm2222, %v2994, 0
        %v3145 = vsel %vm2222, %v2996, 0
        %v3147 = vsel %vm2222, %v2998, 0
        %v3149 = vsel %vm2222, %v3000, 0
        %v3151 = vsel %vm2222, %v3002, 0
        %v3153 = vsel %vm2222, %v3004, 0
        %v3155 = vsel %vm2222, %v3006, 0
        %v3157 = vsel %vm2222, %v3008, 0
        %v3159 = vsel %vm2222, %v3010, 0
        %v3161 = vsel %vm2222, %v3012, 0
        %v3163 = vsel %vm2222, %v3014, 0
        %v3165 = vsel %vm2222, %v3016, 0
        %v3167 = vsel %vm2222, %v3018, 0
        %v3169 = vsel %vm2222, %v3020, 0
        %v3171 = vsel %vm2222, %v3022, 0
        %v3173 = vsel %vm2222, %v3024, 0
        %v3175 = vsel %vm2222, %v3026, 0
        %v3177 = vsel %vm2222, %v3028, 0
        %v3179 = vsel %vm2222, %v3030, 0
        %v3181 = vsel %vm2222, %v3032, 0
        %v3183 = vsel %vm2222, %v3034, 0
        %v3185 = vsel %vm2222, %v3036, 0
        %v3187 = vsel %vm2222, %v3038, 0
        %v3189 = vsel %vm2222, %v3040, 0
        %v3191 = vsel %vm2222, %v3042, 0
        %v3193 = vsel %vm2222, %v3044, 0
        %v3195 = vsel %vm2222, %v3046, 0
        %v3197 = vsel %vm2222, %v3048, 0
        %v3199 = vsel %vm2222, %v3050, 0
        %v3201 = vsel %vm2222, %v3052, 0
        %v3203 = vsel %vm2222, %v3054, 0
        %v3205 = vsel %vm2222, %v3056, 0
        %v3207 = vsel %vm2222, %v3058, 0
        %v3209 = vsel %vm2222, %v3060, 0
        %v3211 = vsel %vm2222, %v3062, 0
        %v3213 = vsel %vm2222, %v3064, 0
        %v3215 = vsel %vm2222, %v3066, 0
        %v3217 = vsel %vm2222, %v3068, 0
        %v3219 = vsel %vm2222, %v3070, 0
        %v3221 = vsel %vm2222, %v3072, 0
        %v3223 = vsel %vm2222, %v3074, 0
        %v3225 = vsel %vm2222, %v3076, 0
        %v3227 = vsel %vm2222, %v3078, 0
        %v3229 = vsel %vm2222, %v3080, 0
        %v3231 = vsel %vm2222, %v3082, 0
        %v3233 = vsel %vm2222, %v3084, 0
        %v3235 = vsel %vm2222, %v3086, 0
        %v3237 = vsel %vm2222, %v3088, 0
        %v3239 = vsel %vm2222, %v3090, 0
        %v3241 = vsel %vm2222, %v3092, 0
        %v3244 = vsel %vm2070, %v2940, 0
        %3246 = vmatpush.msra.mxu0 0.0
        %3247 = vmatpush.msra.mxu0 0.0
        %3248 = vmatpush.msra.mxu0 0.0
        %3249 = vmatpush.msra.mxu0 0.0
        %3250 = vmatpush.msra.mxu0 0.0
        %3251 = vmatpush.msra.mxu0 0.0
        %3252 = vmatpush.msra.mxu0 0.0
        %3253 = vmatpush.msra.mxu0 0.0
        %3254 = vmatpush.msra.mxu0 0.0
        %3255 = vmatpush.msra.mxu0 0.0
        %3256 = vmatpush.msra.mxu0 0.0
        %3257 = vmatpush.msra.mxu0 0.0
        %3258 = vmatpush.msra.mxu0 0.0
        %3259 = vmatpush.msra.mxu0 0.0
        %3260 = vmatpush.msra.mxu0 0.0
        %3261 = vmatpush.msra.mxu0 %v3244
        %3262 = vmatmul.f32.gmra.mxu0 %v3093
        %v3263 = vpop.f32.mrf.mxu0
        %v3264 = vadd.f32 0.0, %v3263
        %3265 = vmatmul.f32.gmra.mxu0 %v3095
        %v3266 = vpop.f32.mrf.mxu0
        %v3267 = vadd.f32 0.0, %v3266
        %3268 = vmatmul.f32.gmra.mxu0 %v3097
        %v3269 = vpop.f32.mrf.mxu0
        %v3270 = vadd.f32 0.0, %v3269
        %3271 = vmatmul.f32.gmra.mxu0 %v3099
        %v3272 = vpop.f32.mrf.mxu0
        %v3273 = vadd.f32 0.0, %v3272
        %3274 = vmatmul.f32.gmra.mxu0 %v3101
        %v3275 = vpop.f32.mrf.mxu0
        %3276 = vmatmul.f32.gmra.mxu0 %v3103
        %v3277 = vpop.f32.mrf.mxu0
        %3278 = vmatmul.f32.gmra.mxu0 %v3105
        %v3279 = vpop.f32.mrf.mxu0
        %3280 = vmatmul.f32.gmra.mxu0 %v3107
        %v3281 = vpop.f32.mrf.mxu0
        %3282 = vmatmul.f32.gmra.mxu0 %v3109
        %v3283 = vpop.f32.mrf.mxu0
        %v3284 = vadd.f32 0.0, %v3283
        %3285 = vmatmul.f32.gmra.mxu0 %v3111
        %v3286 = vpop.f32.mrf.mxu0
        %v3287 = vadd.f32 0.0, %v3286
        %3288 = vmatmul.f32.gmra.mxu0 %v3113
        %v3289 = vpop.f32.mrf.mxu0
        %v3290 = vadd.f32 0.0, %v3289
        %3291 = vmatmul.f32.gmra.mxu0 %v3115
        %v3292 = vpop.f32.mrf.mxu0
        %v3293 = vadd.f32 0.0, %v3292
        %3294 = vmatmul.f32.gmra.mxu0 %v3117
        %v3295 = vpop.f32.mrf.mxu0
        %3296 = vmatmul.f32.gmra.mxu0 %v3119
        %v3297 = vpop.f32.mrf.mxu0
        %3298 = vmatmul.f32.gmra.mxu0 %v3121
        %v3299 = vpop.f32.mrf.mxu0
        %3300 = vmatmul.f32.gmra.mxu0 %v3123
        %v3301 = vpop.f32.mrf.mxu0
        %3302 = vmatmul.f32.gmra.mxu0 %v3125
        %v3303 = vpop.f32.mrf.mxu0
        %v3304 = vadd.f32 0.0, %v3303
        %3305 = vmatmul.f32.gmra.mxu0 %v3127
        %v3306 = vpop.f32.mrf.mxu0
        %v3307 = vadd.f32 0.0, %v3306
        %3308 = vmatmul.f32.gmra.mxu0 %v3129
        %v3309 = vpop.f32.mrf.mxu0
        %v3310 = vadd.f32 0.0, %v3309
        %3311 = vmatmul.f32.gmra.mxu0 %v3131
        %v3312 = vpop.f32.mrf.mxu0
        %v3313 = vadd.f32 0.0, %v3312
        %3314 = vmatmul.f32.gmra.mxu0 %v3133
        %v3315 = vpop.f32.mrf.mxu0
        %3316 = vmatmul.f32.gmra.mxu0 %v3135
        %v3317 = vpop.f32.mrf.mxu0
        %3318 = vmatmul.f32.gmra.mxu0 %v3137
        %v3319 = vpop.f32.mrf.mxu0
        %3320 = vmatmul.f32.gmra.mxu0 %v3139
        %v3321 = vpop.f32.mrf.mxu0
        %3322 = vmatmul.f32.gmra.mxu0 %v3141
        %v3323 = vpop.f32.mrf.mxu0
        %v3324 = vadd.f32 0.0, %v3323
        %3325 = vmatmul.f32.gmra.mxu0 %v3143
        %v3326 = vpop.f32.mrf.mxu0
        %v3327 = vadd.f32 0.0, %v3326
        %3328 = vmatmul.f32.gmra.mxu0 %v3145
        %v3329 = vpop.f32.mrf.mxu0
        %v3330 = vadd.f32 0.0, %v3329
        %3331 = vmatmul.f32.gmra.mxu0 %v3147
        %v3332 = vpop.f32.mrf.mxu0
        %v3333 = vadd.f32 0.0, %v3332
        %3334 = vmatmul.f32.gmra.mxu0 %v3149
        %v3335 = vpop.f32.mrf.mxu0
        %3336 = vmatmul.f32.gmra.mxu0 %v3151
        %v3337 = vpop.f32.mrf.mxu0
        %3338 = vmatmul.f32.gmra.mxu0 %v3153
        %v3339 = vpop.f32.mrf.mxu0
        %3340 = vmatmul.f32.gmra.mxu0 %v3155
        %v3341 = vpop.f32.mrf.mxu0
        %3342 = vmatmul.f32.gmra.mxu0 %v3157
        %v3343 = vpop.f32.mrf.mxu0
        %v3344 = vadd.f32 0.0, %v3343
        %3345 = vmatmul.f32.gmra.mxu0 %v3159
        %v3346 = vpop.f32.mrf.mxu0
        %v3347 = vadd.f32 0.0, %v3346
        %3348 = vmatmul.f32.gmra.mxu0 %v3161
        %v3349 = vpop.f32.mrf.mxu0
        %v3350 = vadd.f32 0.0, %v3349
        %3351 = vmatmul.f32.gmra.mxu0 %v3163
        %v3352 = vpop.f32.mrf.mxu0
        %v3353 = vadd.f32 0.0, %v3352
        %3354 = vmatmul.f32.gmra.mxu0 %v3165
        %v3355 = vpop.f32.mrf.mxu0
        %3356 = vmatmul.f32.gmra.mxu0 %v3167
        %v3357 = vpop.f32.mrf.mxu0
        %3358 = vmatmul.f32.gmra.mxu0 %v3169
        %v3359 = vpop.f32.mrf.mxu0
        %3360 = vmatmul.f32.gmra.mxu0 %v3171
        %v3361 = vpop.f32.mrf.mxu0
        %3362 = vmatmul.f32.gmra.mxu0 %v3173
        %v3363 = vpop.f32.mrf.mxu0
        %v3364 = vadd.f32 0.0, %v3363
        %3365 = vmatmul.f32.gmra.mxu0 %v3175
        %v3366 = vpop.f32.mrf.mxu0
        %v3367 = vadd.f32 0.0, %v3366
        %3368 = vmatmul.f32.gmra.mxu0 %v3177
        %v3369 = vpop.f32.mrf.mxu0
        %v3370 = vadd.f32 0.0, %v3369
        %3371 = vmatmul.f32.gmra.mxu0 %v3179
        %v3372 = vpop.f32.mrf.mxu0
        %v3373 = vadd.f32 0.0, %v3372
        %3374 = vmatmul.f32.gmra.mxu0 %v3181
        %v3375 = vpop.f32.mrf.mxu0
        %3376 = vmatmul.f32.gmra.mxu0 %v3183
        %v3377 = vpop.f32.mrf.mxu0
        %3378 = vmatmul.f32.gmra.mxu0 %v3185
        %v3379 = vpop.f32.mrf.mxu0
        %3380 = vmatmul.f32.gmra.mxu0 %v3187
        %v3381 = vpop.f32.mrf.mxu0
        %3382 = vmatmul.f32.gmra.mxu0 %v3189
        %v3383 = vpop.f32.mrf.mxu0
        %v3384 = vadd.f32 0.0, %v3383
        %3385 = vmatmul.f32.gmra.mxu0 %v3191
        %v3386 = vpop.f32.mrf.mxu0
        %v3387 = vadd.f32 0.0, %v3386
        %3388 = vmatmul.f32.gmra.mxu0 %v3193
        %v3389 = vpop.f32.mrf.mxu0
        %v3390 = vadd.f32 0.0, %v3389
        %3391 = vmatmul.f32.gmra.mxu0 %v3195
        %v3392 = vpop.f32.mrf.mxu0
        %v3393 = vadd.f32 0.0, %v3392
        %3394 = vmatmul.f32.gmra.mxu0 %v3197
        %v3395 = vpop.f32.mrf.mxu0
        %3396 = vmatmul.f32.gmra.mxu0 %v3199
        %v3397 = vpop.f32.mrf.mxu0
        %3398 = vmatmul.f32.gmra.mxu0 %v3201
        %v3399 = vpop.f32.mrf.mxu0
        %3400 = vmatmul.f32.gmra.mxu0 %v3203
        %v3401 = vpop.f32.mrf.mxu0
        %3402 = vmatmul.f32.gmra.mxu0 %v3205
        %v3403 = vpop.f32.mrf.mxu0
        %v3404 = vadd.f32 0.0, %v3403
        %3405 = vmatmul.f32.gmra.mxu0 %v3207
        %v3406 = vpop.f32.mrf.mxu0
        %v3407 = vadd.f32 0.0, %v3406
        %3408 = vmatmul.f32.gmra.mxu0 %v3209
        %v3409 = vpop.f32.mrf.mxu0
        %v3410 = vadd.f32 0.0, %v3409
        %3411 = vmatmul.f32.gmra.mxu0 %v3211
        %v3412 = vpop.f32.mrf.mxu0
        %v3413 = vadd.f32 0.0, %v3412
        %3414 = vmatmul.f32.gmra.mxu0 %v3213
        %v3415 = vpop.f32.mrf.mxu0
        %3416 = vmatmul.f32.gmra.mxu0 %v3215
        %v3417 = vpop.f32.mrf.mxu0
        %3418 = vmatmul.f32.gmra.mxu0 %v3217
        %v3419 = vpop.f32.mrf.mxu0
        %3420 = vmatmul.f32.gmra.mxu0 %v3219
        %v3421 = vpop.f32.mrf.mxu0
        %3422 = vmatmul.f32.gmra.mxu0 %v3221
        %v3423 = vpop.f32.mrf.mxu0
        %v3424 = vadd.f32 0.0, %v3423
        %3425 = vmatmul.f32.gmra.mxu0 %v3223
        %v3426 = vpop.f32.mrf.mxu0
        %v3427 = vadd.f32 0.0, %v3426
        %3428 = vmatmul.f32.gmra.mxu0 %v3225
        %v3429 = vpop.f32.mrf.mxu0
        %v3430 = vadd.f32 0.0, %v3429
        %3431 = vmatmul.f32.gmra.mxu0 %v3227
        %v3432 = vpop.f32.mrf.mxu0
        %3433 = vmatmul.f32.gmra.mxu0 %v3229
        %v3434 = vpop.f32.mrf.mxu0
        %3435 = vmatmul.f32.gmra.mxu0 %v3231
        %v3436 = vpop.f32.mrf.mxu0
        %3437 = vmatmul.f32.gmra.mxu0 %v3233
        %v3438 = vpop.f32.mrf.mxu0
        %3439 = vmatmul.f32.gmra.mxu0 %v3235
        %v3440 = vpop.f32.mrf.mxu0
        %3441 = vmatmul.f32.gmra.mxu0 %v3237
        %v3442 = vpop.f32.mrf.mxu0
        %v3443 = vadd.f32 0.0, %v3442
        %3444 = vmatmul.f32.gmra.mxu0 %v3239
        %v3445 = vpop.f32.mrf.mxu0
        %v3446 = vadd.f32 0.0, %v3445
        %3447 = vmatmul.f32.gmra.mxu0 %v3241
        %v3448 = vpop.f32.mrf.mxu0
        %v3449 = vadd.f32 0.0, %v3448
        %3450 = vdwg.mxu0
        %v3451 = vadd.f32 %v2752, %v3264
        %v3452 = vadd.f32 %v2755, %v3267
        %v3453 = vadd.f32 %v2758, %v3270
        %v3454 = vadd.f32 %v2761, %v3273
        %v3455 = vadd.f32 %v2772, %v3284
        %v3456 = vadd.f32 %v2775, %v3287
        %v3457 = vadd.f32 %v2778, %v3290
        %v3458 = vadd.f32 %v2781, %v3293
        %v3459 = vadd.f32 %v2792, %v3304
        %v3460 = vadd.f32 %v2795, %v3307
        %v3461 = vadd.f32 %v2798, %v3310
        %v3462 = vadd.f32 %v2801, %v3313
        %v3463 = vadd.f32 %v2812, %v3324
        %v3464 = vadd.f32 %v2815, %v3327
        %v3465 = vadd.f32 %v2818, %v3330
        %v3466 = vadd.f32 %v2821, %v3333
        %v3467 = vadd.f32 %v2832, %v3344
        %v3468 = vadd.f32 %v2835, %v3347
        %v3469 = vadd.f32 %v2838, %v3350
        %v3470 = vadd.f32 %v2841, %v3353
        %v3471 = vadd.f32 %v2852, %v3364
        %v3472 = vadd.f32 %v2855, %v3367
        %v3473 = vadd.f32 %v2858, %v3370
        %v3474 = vadd.f32 %v2861, %v3373
        %v3475 = vadd.f32 %v2872, %v3384
        %v3476 = vadd.f32 %v2875, %v3387
        %v3477 = vadd.f32 %v2878, %v3390
        %v3478 = vadd.f32 %v2881, %v3393
        %v3479 = vadd.f32 %v2892, %v3404
        %v3480 = vadd.f32 %v2895, %v3407
        %v3481 = vadd.f32 %v2898, %v3410
        %v3482 = vadd.f32 %v2901, %v3413
        %v3483 = vadd.f32 %v2912, %v3424
        %v3484 = vadd.f32 %v2915, %v3427
        %v3485 = vadd.f32 %v2918, %v3430
        %v3486 = vadd.f32 %v2931, %v3443
        %v3487 = vadd.f32 %v2934, %v3446
        %v3488 = vadd.f32 %v2937, %v3449
        %s3489 = scalar_lea.vmem %s3, 24
        %v3490 = vld [vmem:[%s3489] sm:$0x3f]
        %vm3491 = vcmask 1041408
        %v3492 = vrot.slane %v1883, 6
        %v3493 = vrot.slane %v1884, 6
        %v3494 = vsel %vm3491, %v3492, %v3493
        %v3495 = vrot.slane %v1885, 6
        %v3496 = vsel %vm3491, %v3493, %v3495
        %v3497 = vrot.slane %v1886, 6
        %v3498 = vsel %vm3491, %v3495, %v3497
        %v3499 = vrot.slane %v1887, 6
        %v3500 = vsel %vm3491, %v3497, %v3499
        %v3501 = vrot.slane %v1888, 6
        %v3502 = vsel %vm3491, %v3499, %v3501
        %v3503 = vrot.slane %v1889, 6
        %v3504 = vsel %vm3491, %v3501, %v3503
        %v3505 = vrot.slane %v1890, 6
        %v3506 = vsel %vm3491, %v3503, %v3505
        %v3507 = vrot.slane %v1891, 6
        %v3508 = vsel %vm3491, %v3505, %v3507
        %v3509 = vrot.slane %v1892, 6
        %v3510 = vsel %vm3491, %v3507, %v3509
        %v3511 = vrot.slane %v1893, 6
        %v3512 = vsel %vm3491, %v3509, %v3511
        %v3513 = vrot.slane %v1894, 6
        %v3514 = vsel %vm3491, %v3511, %v3513
        %v3515 = vrot.slane %v1895, 6
        %v3516 = vsel %vm3491, %v3513, %v3515
        %v3517 = vrot.slane %v1896, 6
        %v3518 = vsel %vm3491, %v3515, %v3517
        %v3519 = vrot.slane %v1897, 6
        %v3520 = vsel %vm3491, %v3517, %v3519
        %v3521 = vrot.slane %v1898, 6
        %v3522 = vsel %vm3491, %v3519, %v3521
        %v3523 = vrot.slane %v1899, 6
        %v3524 = vsel %vm3491, %v3521, %v3523
        %v3525 = vrot.slane %v1900, 6
        %v3526 = vsel %vm3491, %v3523, %v3525
        %v3527 = vrot.slane %v1901, 6
        %v3528 = vsel %vm3491, %v3525, %v3527
        %v3529 = vrot.slane %v1902, 6
        %v3530 = vsel %vm3491, %v3527, %v3529
        %v3531 = vrot.slane %v1903, 6
        %v3532 = vsel %vm3491, %v3529, %v3531
        %v3533 = vrot.slane %v1904, 6
        %v3534 = vsel %vm3491, %v3531, %v3533
        %v3535 = vrot.slane %v1905, 6
        %v3536 = vsel %vm3491, %v3533, %v3535
        %v3537 = vrot.slane %v1906, 6
        %v3538 = vsel %vm3491, %v3535, %v3537
        %v3539 = vrot.slane %v1907, 6
        %v3540 = vsel %vm3491, %v3537, %v3539
        %v3541 = vrot.slane %v1908, 6
        %v3542 = vsel %vm3491, %v3539, %v3541
        %v3543 = vrot.slane %v1909, 6
        %v3544 = vsel %vm3491, %v3541, %v3543
        %v3545 = vrot.slane %v1910, 6
        %v3546 = vsel %vm3491, %v3543, %v3545
        %v3547 = vrot.slane %v1911, 6
        %v3548 = vsel %vm3491, %v3545, %v3547
        %v3549 = vrot.slane %v1912, 6
        %v3550 = vsel %vm3491, %v3547, %v3549
        %v3551 = vrot.slane %v1913, 6
        %v3552 = vsel %vm3491, %v3549, %v3551
        %v3553 = vrot.slane %v1914, 6
        %v3554 = vsel %vm3491, %v3551, %v3553
        %v3555 = vrot.slane %v1915, 6
        %v3556 = vsel %vm3491, %v3553, %v3555
        %v3557 = vrot.slane %v1916, 6
        %v3558 = vsel %vm3491, %v3555, %v3557
        %v3559 = vrot.slane %v1917, 6
        %v3560 = vsel %vm3491, %v3557, %v3559
        %v3561 = vrot.slane %v1918, 6
        %v3562 = vsel %vm3491, %v3559, %v3561
        %v3563 = vrot.slane %v1919, 6
        %v3564 = vsel %vm3491, %v3561, %v3563
        %v3565 = vrot.slane %v1920, 6
        %v3566 = vsel %vm3491, %v3563, %v3565
        %v3567 = vrot.slane %v1921, 6
        %v3568 = vsel %vm3491, %v3565, %v3567
        %v3569 = vrot.slane %v1922, 6
        %v3570 = vsel %vm3491, %v3567, %v3569
        %v3571 = vrot.slane %v1923, 6
        %v3572 = vsel %vm3491, %v3569, %v3571
        %v3573 = vrot.slane %v1924, 6
        %v3574 = vsel %vm3491, %v3571, %v3573
        %v3575 = vrot.slane %v1925, 6
        %v3576 = vsel %vm3491, %v3573, %v3575
        %v3577 = vrot.slane %v1926, 6
        %v3578 = vsel %vm3491, %v3575, %v3577
        %v3579 = vrot.slane %v1927, 6
        %v3580 = vsel %vm3491, %v3577, %v3579
        %v3581 = vrot.slane %v1928, 6
        %v3582 = vsel %vm3491, %v3579, %v3581
        %v3583 = vrot.slane %v1929, 6
        %v3584 = vsel %vm3491, %v3581, %v3583
        %v3585 = vrot.slane %v1930, 6
        %v3586 = vsel %vm3491, %v3583, %v3585
        %v3587 = vrot.slane %v1931, 6
        %v3588 = vsel %vm3491, %v3585, %v3587
        %v3589 = vrot.slane %v1932, 6
        %v3590 = vsel %vm3491, %v3587, %v3589
        %v3591 = vrot.slane %v1933, 6
        %v3592 = vsel %vm3491, %v3589, %v3591
        %v3593 = vrot.slane %v1934, 6
        %v3594 = vsel %vm3491, %v3591, %v3593
        %v3595 = vrot.slane %v1935, 6
        %v3596 = vsel %vm3491, %v3593, %v3595
        %v3597 = vrot.slane %v1936, 6
        %v3598 = vsel %vm3491, %v3595, %v3597
        %v3599 = vrot.slane %v1937, 6
        %v3600 = vsel %vm3491, %v3597, %v3599
        %v3601 = vrot.slane %v1938, 6
        %v3602 = vsel %vm3491, %v3599, %v3601
        %v3603 = vrot.slane %v1939, 6
        %v3604 = vsel %vm3491, %v3601, %v3603
        %v3605 = vrot.slane %v1940, 6
        %v3606 = vsel %vm3491, %v3603, %v3605
        %v3607 = vrot.slane %v1941, 6
        %v3608 = vsel %vm3491, %v3605, %v3607
        %v3609 = vrot.slane %v1942, 6
        %v3610 = vsel %vm3491, %v3607, %v3609
        %v3611 = vrot.slane %v1943, 6
        %v3612 = vsel %vm3491, %v3609, %v3611
        %v3613 = vrot.slane %v1944, 6
        %v3614 = vsel %vm3491, %v3611, %v3613
        %v3615 = vrot.slane %v1945, 6
        %v3616 = vsel %vm3491, %v3613, %v3615
        %v3617 = vrot.slane %v1946, 6
        %v3618 = vsel %vm3491, %v3615, %v3617
        %v3619 = vrot.slane %v1947, 6
        %v3620 = vsel %vm3491, %v3617, %v3619
        %v3621 = vrot.slane %v1948, 6
        %v3622 = vsel %vm3491, %v3619, %v3621
        %v3623 = vrot.slane %v1949, 6
        %v3624 = vsel %vm3491, %v3621, %v3623
        %v3625 = vrot.slane %v1950, 6
        %v3626 = vsel %vm3491, %v3623, %v3625
        %v3627 = vrot.slane %v1951, 6
        %v3628 = vsel %vm3491, %v3625, %v3627
        %v3629 = vrot.slane %v1952, 6
        %v3630 = vsel %vm3491, %v3627, %v3629
        %v3631 = vrot.slane %v1953, 6
        %v3632 = vsel %vm3491, %v3629, %v3631
        %v3633 = vrot.slane %v1954, 6
        %v3634 = vsel %vm3491, %v3631, %v3633
        %v3635 = vrot.slane %v1955, 6
        %v3636 = vsel %vm3491, %v3633, %v3635
        %v3637 = vrot.slane %v1956, 6
        %v3638 = vsel %vm3491, %v3635, %v3637
        %v3639 = vrot.slane %v1957, 6
        %v3640 = vsel %vm3491, %v3637, %v3639
        %v3641 = vrot.slane %v1958, 6
        %v3642 = vsel %vm3491, %v3639, %v3641
        %v3643 = vsel %vm2222, %v3494, 0
        %v3645 = vsel %vm2222, %v3496, 0
        %v3647 = vsel %vm2222, %v3498, 0
        %v3649 = vsel %vm2222, %v3500, 0
        %v3651 = vsel %vm2222, %v3502, 0
        %v3653 = vsel %vm2222, %v3504, 0
        %v3655 = vsel %vm2222, %v3506, 0
        %v3657 = vsel %vm2222, %v3508, 0
        %v3659 = vsel %vm2222, %v3510, 0
        %v3661 = vsel %vm2222, %v3512, 0
        %v3663 = vsel %vm2222, %v3514, 0
        %v3665 = vsel %vm2222, %v3516, 0
        %v3667 = vsel %vm2222, %v3518, 0
        %v3669 = vsel %vm2222, %v3520, 0
        %v3671 = vsel %vm2222, %v3522, 0
        %v3673 = vsel %vm2222, %v3524, 0
        %v3675 = vsel %vm2222, %v3526, 0
        %v3677 = vsel %vm2222, %v3528, 0
        %v3679 = vsel %vm2222, %v3530, 0
        %v3681 = vsel %vm2222, %v3532, 0
        %v3683 = vsel %vm2222, %v3534, 0
        %v3685 = vsel %vm2222, %v3536, 0
        %v3687 = vsel %vm2222, %v3538, 0
        %v3689 = vsel %vm2222, %v3540, 0
        %v3691 = vsel %vm2222, %v3542, 0
        %v3693 = vsel %vm2222, %v3544, 0
        %v3695 = vsel %vm2222, %v3546, 0
        %v3697 = vsel %vm2222, %v3548, 0
        %v3699 = vsel %vm2222, %v3550, 0
        %v3701 = vsel %vm2222, %v3552, 0
        %v3703 = vsel %vm2222, %v3554, 0
        %v3705 = vsel %vm2222, %v3556, 0
        %v3707 = vsel %vm2222, %v3558, 0
        %v3709 = vsel %vm2222, %v3560, 0
        %v3711 = vsel %vm2222, %v3562, 0
        %v3713 = vsel %vm2222, %v3564, 0
        %v3715 = vsel %vm2222, %v3566, 0
        %v3717 = vsel %vm2222, %v3568, 0
        %v3719 = vsel %vm2222, %v3570, 0
        %v3721 = vsel %vm2222, %v3572, 0
        %v3723 = vsel %vm2222, %v3574, 0
        %v3725 = vsel %vm2222, %v3576, 0
        %v3727 = vsel %vm2222, %v3578, 0
        %v3729 = vsel %vm2222, %v3580, 0
        %v3731 = vsel %vm2222, %v3582, 0
        %v3733 = vsel %vm2222, %v3584, 0
        %v3735 = vsel %vm2222, %v3586, 0
        %v3737 = vsel %vm2222, %v3588, 0
        %v3739 = vsel %vm2222, %v3590, 0
        %v3741 = vsel %vm2222, %v3592, 0
        %v3743 = vsel %vm2222, %v3594, 0
        %v3745 = vsel %vm2222, %v3596, 0
        %v3747 = vsel %vm2222, %v3598, 0
        %v3749 = vsel %vm2222, %v3600, 0
        %v3751 = vsel %vm2222, %v3602, 0
        %v3753 = vsel %vm2222, %v3604, 0
        %v3755 = vsel %vm2222, %v3606, 0
        %v3757 = vsel %vm2222, %v3608, 0
        %v3759 = vsel %vm2222, %v3610, 0
        %v3761 = vsel %vm2222, %v3612, 0
        %v3763 = vsel %vm2222, %v3614, 0
        %v3765 = vsel %vm2222, %v3616, 0
        %v3767 = vsel %vm2222, %v3618, 0
        %v3769 = vsel %vm2222, %v3620, 0
        %v3771 = vsel %vm2222, %v3622, 0
        %v3773 = vsel %vm2222, %v3624, 0
        %v3775 = vsel %vm2222, %v3626, 0
        %v3777 = vsel %vm2222, %v3628, 0
        %v3779 = vsel %vm2222, %v3630, 0
        %v3781 = vsel %vm2222, %v3632, 0
        %v3783 = vsel %vm2222, %v3634, 0
        %v3785 = vsel %vm2222, %v3636, 0
        %v3787 = vsel %vm2222, %v3638, 0
        %v3789 = vsel %vm2222, %v3640, 0
        %v3791 = vsel %vm2222, %v3642, 0
        %v3794 = vsel %vm2070, %v3490, 0
        %3796 = vmatpush.msra.mxu0 0.0
        %3797 = vmatpush.msra.mxu0 0.0
        %3798 = vmatpush.msra.mxu0 0.0
        %3799 = vmatpush.msra.mxu0 0.0
        %3800 = vmatpush.msra.mxu0 0.0
        %3801 = vmatpush.msra.mxu0 0.0
        %3802 = vmatpush.msra.mxu0 0.0
        %3803 = vmatpush.msra.mxu0 0.0
        %3804 = vmatpush.msra.mxu0 0.0
        %3805 = vmatpush.msra.mxu0 0.0
        %3806 = vmatpush.msra.mxu0 0.0
        %3807 = vmatpush.msra.mxu0 0.0
        %3808 = vmatpush.msra.mxu0 0.0
        %3809 = vmatpush.msra.mxu0 0.0
        %3810 = vmatpush.msra.mxu0 0.0
        %3811 = vmatpush.msra.mxu0 %v3794
        %3812 = vmatmul.f32.gmra.mxu0 %v3643
        %v3813 = vpop.f32.mrf.mxu0
        %v3814 = vadd.f32 0.0, %v3813
        %3815 = vmatmul.f32.gmra.mxu0 %v3645
        %v3816 = vpop.f32.mrf.mxu0
        %v3817 = vadd.f32 0.0, %v3816
        %3818 = vmatmul.f32.gmra.mxu0 %v3647
        %v3819 = vpop.f32.mrf.mxu0
        %v3820 = vadd.f32 0.0, %v3819
        %3821 = vmatmul.f32.gmra.mxu0 %v3649
        %v3822 = vpop.f32.mrf.mxu0
        %v3823 = vadd.f32 0.0, %v3822
        %3824 = vmatmul.f32.gmra.mxu0 %v3651
        %v3825 = vpop.f32.mrf.mxu0
        %3826 = vmatmul.f32.gmra.mxu0 %v3653
        %v3827 = vpop.f32.mrf.mxu0
        %3828 = vmatmul.f32.gmra.mxu0 %v3655
        %v3829 = vpop.f32.mrf.mxu0
        %3830 = vmatmul.f32.gmra.mxu0 %v3657
        %v3831 = vpop.f32.mrf.mxu0
        %3832 = vmatmul.f32.gmra.mxu0 %v3659
        %v3833 = vpop.f32.mrf.mxu0
        %v3834 = vadd.f32 0.0, %v3833
        %3835 = vmatmul.f32.gmra.mxu0 %v3661
        %v3836 = vpop.f32.mrf.mxu0
        %v3837 = vadd.f32 0.0, %v3836
        %3838 = vmatmul.f32.gmra.mxu0 %v3663
        %v3839 = vpop.f32.mrf.mxu0
        %v3840 = vadd.f32 0.0, %v3839
        %3841 = vmatmul.f32.gmra.mxu0 %v3665
        %v3842 = vpop.f32.mrf.mxu0
        %v3843 = vadd.f32 0.0, %v3842
        %3844 = vmatmul.f32.gmra.mxu0 %v3667
        %v3845 = vpop.f32.mrf.mxu0
        %3846 = vmatmul.f32.gmra.mxu0 %v3669
        %v3847 = vpop.f32.mrf.mxu0
        %3848 = vmatmul.f32.gmra.mxu0 %v3671
        %v3849 = vpop.f32.mrf.mxu0
        %3850 = vmatmul.f32.gmra.mxu0 %v3673
        %v3851 = vpop.f32.mrf.mxu0
        %3852 = vmatmul.f32.gmra.mxu0 %v3675
        %v3853 = vpop.f32.mrf.mxu0
        %v3854 = vadd.f32 0.0, %v3853
        %3855 = vmatmul.f32.gmra.mxu0 %v3677
        %v3856 = vpop.f32.mrf.mxu0
        %v3857 = vadd.f32 0.0, %v3856
        %3858 = vmatmul.f32.gmra.mxu0 %v3679
        %v3859 = vpop.f32.mrf.mxu0
        %v3860 = vadd.f32 0.0, %v3859
        %3861 = vmatmul.f32.gmra.mxu0 %v3681
        %v3862 = vpop.f32.mrf.mxu0
        %v3863 = vadd.f32 0.0, %v3862
        %3864 = vmatmul.f32.gmra.mxu0 %v3683
        %v3865 = vpop.f32.mrf.mxu0
        %3866 = vmatmul.f32.gmra.mxu0 %v3685
        %v3867 = vpop.f32.mrf.mxu0
        %3868 = vmatmul.f32.gmra.mxu0 %v3687
        %v3869 = vpop.f32.mrf.mxu0
        %3870 = vmatmul.f32.gmra.mxu0 %v3689
        %v3871 = vpop.f32.mrf.mxu0
        %3872 = vmatmul.f32.gmra.mxu0 %v3691
        %v3873 = vpop.f32.mrf.mxu0
        %v3874 = vadd.f32 0.0, %v3873
        %3875 = vmatmul.f32.gmra.mxu0 %v3693
        %v3876 = vpop.f32.mrf.mxu0
        %v3877 = vadd.f32 0.0, %v3876
        %3878 = vmatmul.f32.gmra.mxu0 %v3695
        %v3879 = vpop.f32.mrf.mxu0
        %v3880 = vadd.f32 0.0, %v3879
        %3881 = vmatmul.f32.gmra.mxu0 %v3697
        %v3882 = vpop.f32.mrf.mxu0
        %v3883 = vadd.f32 0.0, %v3882
        %3884 = vmatmul.f32.gmra.mxu0 %v3699
        %v3885 = vpop.f32.mrf.mxu0
        %3886 = vmatmul.f32.gmra.mxu0 %v3701
        %v3887 = vpop.f32.mrf.mxu0
        %3888 = vmatmul.f32.gmra.mxu0 %v3703
        %v3889 = vpop.f32.mrf.mxu0
        %3890 = vmatmul.f32.gmra.mxu0 %v3705
        %v3891 = vpop.f32.mrf.mxu0
        %3892 = vmatmul.f32.gmra.mxu0 %v3707
        %v3893 = vpop.f32.mrf.mxu0
        %v3894 = vadd.f32 0.0, %v3893
        %3895 = vmatmul.f32.gmra.mxu0 %v3709
        %v3896 = vpop.f32.mrf.mxu0
        %v3897 = vadd.f32 0.0, %v3896
        %3898 = vmatmul.f32.gmra.mxu0 %v3711
        %v3899 = vpop.f32.mrf.mxu0
        %v3900 = vadd.f32 0.0, %v3899
        %3901 = vmatmul.f32.gmra.mxu0 %v3713
        %v3902 = vpop.f32.mrf.mxu0
        %v3903 = vadd.f32 0.0, %v3902
        %3904 = vmatmul.f32.gmra.mxu0 %v3715
        %v3905 = vpop.f32.mrf.mxu0
        %3906 = vmatmul.f32.gmra.mxu0 %v3717
        %v3907 = vpop.f32.mrf.mxu0
        %3908 = vmatmul.f32.gmra.mxu0 %v3719
        %v3909 = vpop.f32.mrf.mxu0
        %3910 = vmatmul.f32.gmra.mxu0 %v3721
        %v3911 = vpop.f32.mrf.mxu0
        %3912 = vmatmul.f32.gmra.mxu0 %v3723
        %v3913 = vpop.f32.mrf.mxu0
        %v3914 = vadd.f32 0.0, %v3913
        %3915 = vmatmul.f32.gmra.mxu0 %v3725
        %v3916 = vpop.f32.mrf.mxu0
        %v3917 = vadd.f32 0.0, %v3916
        %3918 = vmatmul.f32.gmra.mxu0 %v3727
        %v3919 = vpop.f32.mrf.mxu0
        %v3920 = vadd.f32 0.0, %v3919
        %3921 = vmatmul.f32.gmra.mxu0 %v3729
        %v3922 = vpop.f32.mrf.mxu0
        %v3923 = vadd.f32 0.0, %v3922
        %3924 = vmatmul.f32.gmra.mxu0 %v3731
        %v3925 = vpop.f32.mrf.mxu0
        %3926 = vmatmul.f32.gmra.mxu0 %v3733
        %v3927 = vpop.f32.mrf.mxu0
        %3928 = vmatmul.f32.gmra.mxu0 %v3735
        %v3929 = vpop.f32.mrf.mxu0
        %3930 = vmatmul.f32.gmra.mxu0 %v3737
        %v3931 = vpop.f32.mrf.mxu0
        %3932 = vmatmul.f32.gmra.mxu0 %v3739
        %v3933 = vpop.f32.mrf.mxu0
        %v3934 = vadd.f32 0.0, %v3933
        %3935 = vmatmul.f32.gmra.mxu0 %v3741
        %v3936 = vpop.f32.mrf.mxu0
        %v3937 = vadd.f32 0.0, %v3936
        %3938 = vmatmul.f32.gmra.mxu0 %v3743
        %v3939 = vpop.f32.mrf.mxu0
        %v3940 = vadd.f32 0.0, %v3939
        %3941 = vmatmul.f32.gmra.mxu0 %v3745
        %v3942 = vpop.f32.mrf.mxu0
        %v3943 = vadd.f32 0.0, %v3942
        %3944 = vmatmul.f32.gmra.mxu0 %v3747
        %v3945 = vpop.f32.mrf.mxu0
        %3946 = vmatmul.f32.gmra.mxu0 %v3749
        %v3947 = vpop.f32.mrf.mxu0
        %3948 = vmatmul.f32.gmra.mxu0 %v3751
        %v3949 = vpop.f32.mrf.mxu0
        %3950 = vmatmul.f32.gmra.mxu0 %v3753
        %v3951 = vpop.f32.mrf.mxu0
        %3952 = vmatmul.f32.gmra.mxu0 %v3755
        %v3953 = vpop.f32.mrf.mxu0
        %v3954 = vadd.f32 0.0, %v3953
        %3955 = vmatmul.f32.gmra.mxu0 %v3757
        %v3956 = vpop.f32.mrf.mxu0
        %v3957 = vadd.f32 0.0, %v3956
        %3958 = vmatmul.f32.gmra.mxu0 %v3759
        %v3959 = vpop.f32.mrf.mxu0
        %v3960 = vadd.f32 0.0, %v3959
        %3961 = vmatmul.f32.gmra.mxu0 %v3761
        %v3962 = vpop.f32.mrf.mxu0
        %v3963 = vadd.f32 0.0, %v3962
        %3964 = vmatmul.f32.gmra.mxu0 %v3763
        %v3965 = vpop.f32.mrf.mxu0
        %3966 = vmatmul.f32.gmra.mxu0 %v3765
        %v3967 = vpop.f32.mrf.mxu0
        %3968 = vmatmul.f32.gmra.mxu0 %v3767
        %v3969 = vpop.f32.mrf.mxu0
        %3970 = vmatmul.f32.gmra.mxu0 %v3769
        %v3971 = vpop.f32.mrf.mxu0
        %3972 = vmatmul.f32.gmra.mxu0 %v3771
        %v3973 = vpop.f32.mrf.mxu0
        %v3974 = vadd.f32 0.0, %v3973
        %3975 = vmatmul.f32.gmra.mxu0 %v3773
        %v3976 = vpop.f32.mrf.mxu0
        %v3977 = vadd.f32 0.0, %v3976
        %3978 = vmatmul.f32.gmra.mxu0 %v3775
        %v3979 = vpop.f32.mrf.mxu0
        %v3980 = vadd.f32 0.0, %v3979
        %3981 = vmatmul.f32.gmra.mxu0 %v3777
        %v3982 = vpop.f32.mrf.mxu0
        %3983 = vmatmul.f32.gmra.mxu0 %v3779
        %v3984 = vpop.f32.mrf.mxu0
        %3985 = vmatmul.f32.gmra.mxu0 %v3781
        %v3986 = vpop.f32.mrf.mxu0
        %3987 = vmatmul.f32.gmra.mxu0 %v3783
        %v3988 = vpop.f32.mrf.mxu0
        %3989 = vmatmul.f32.gmra.mxu0 %v3785
        %v3990 = vpop.f32.mrf.mxu0
        %3991 = vmatmul.f32.gmra.mxu0 %v3787
        %v3992 = vpop.f32.mrf.mxu0
        %v3993 = vadd.f32 0.0, %v3992
        %3994 = vmatmul.f32.gmra.mxu0 %v3789
        %v3995 = vpop.f32.mrf.mxu0
        %v3996 = vadd.f32 0.0, %v3995
        %3997 = vmatmul.f32.gmra.mxu0 %v3791
        %v3998 = vpop.f32.mrf.mxu0
        %v3999 = vadd.f32 0.0, %v3998
        %4000 = vdwg.mxu0
        %v4001 = vadd.f32 %v3451, %v3814
        %v4002 = vadd.f32 %v3452, %v3817
        %v4003 = vadd.f32 %v3453, %v3820
        %v4004 = vadd.f32 %v3454, %v3823
        %v4005 = vadd.f32 %v3455, %v3834
        %v4006 = vadd.f32 %v3456, %v3837
        %v4007 = vadd.f32 %v3457, %v3840
        %v4008 = vadd.f32 %v3458, %v3843
        %v4009 = vadd.f32 %v3459, %v3854
        %v4010 = vadd.f32 %v3460, %v3857
        %v4011 = vadd.f32 %v3461, %v3860
        %v4012 = vadd.f32 %v3462, %v3863
        %v4013 = vadd.f32 %v3463, %v3874
        %v4014 = vadd.f32 %v3464, %v3877
        %v4015 = vadd.f32 %v3465, %v3880
        %v4016 = vadd.f32 %v3466, %v3883
        %v4017 = vadd.f32 %v3467, %v3894
        %v4018 = vadd.f32 %v3468, %v3897
        %v4019 = vadd.f32 %v3469, %v3900
        %v4020 = vadd.f32 %v3470, %v3903
        %v4021 = vadd.f32 %v3471, %v3914
        %v4022 = vadd.f32 %v3472, %v3917
        %v4023 = vadd.f32 %v3473, %v3920
        %v4024 = vadd.f32 %v3474, %v3923
        %v4025 = vadd.f32 %v3475, %v3934
        %v4026 = vadd.f32 %v3476, %v3937
        %v4027 = vadd.f32 %v3477, %v3940
        %v4028 = vadd.f32 %v3478, %v3943
        %v4029 = vadd.f32 %v3479, %v3954
        %v4030 = vadd.f32 %v3480, %v3957
        %v4031 = vadd.f32 %v3481, %v3960
        %v4032 = vadd.f32 %v3482, %v3963
        %v4033 = vadd.f32 %v3483, %v3974
        %v4034 = vadd.f32 %v3484, %v3977
        %v4035 = vadd.f32 %v3485, %v3980
        %v4036 = vadd.f32 %v3486, %v3993
        %v4037 = vadd.f32 %v3487, %v3996
        %v4038 = vadd.f32 %v3488, %v3999
        %s4039 = scalar_lea.vmem %s3, 32
        %v4040 = vld [vmem:[%s4039] sm:$0x3f]
        %v4041 = vsel %vm2222, %v1958, 0
        %v4044 = vsel %vm2070, %v4040, 0
        %4046 = vmatpush.msra.mxu0 0.0
        %4047 = vmatpush.msra.mxu0 0.0
        %4048 = vmatpush.msra.mxu0 0.0
        %4049 = vmatpush.msra.mxu0 0.0
        %4050 = vmatpush.msra.mxu0 0.0
        %4051 = vmatpush.msra.mxu0 0.0
        %4052 = vmatpush.msra.mxu0 0.0
        %4053 = vmatpush.msra.mxu0 0.0
        %4054 = vmatpush.msra.mxu0 0.0
        %4055 = vmatpush.msra.mxu0 0.0
        %4056 = vmatpush.msra.mxu0 0.0
        %4057 = vmatpush.msra.mxu0 0.0
        %4058 = vmatpush.msra.mxu0 0.0
        %4059 = vmatpush.msra.mxu0 0.0
        %4060 = vmatpush.msra.mxu0 0.0
        %4061 = vmatpush.msra.mxu0 %v4044
        %4062 = vmatmul.f32.gmra.mxu0 %v2583
        %v4063 = vpop.f32.mrf.mxu0
        %v4064 = vadd.f32 0.0, %v4063
        %4065 = vmatmul.f32.gmra.mxu0 %v2585
        %v4066 = vpop.f32.mrf.mxu0
        %v4067 = vadd.f32 0.0, %v4066
        %4068 = vmatmul.f32.gmra.mxu0 %v2587
        %v4069 = vpop.f32.mrf.mxu0
        %v4070 = vadd.f32 0.0, %v4069
        %4071 = vmatmul.f32.gmra.mxu0 %v2589
        %v4072 = vpop.f32.mrf.mxu0
        %v4073 = vadd.f32 0.0, %v4072
        %4074 = vmatmul.f32.gmra.mxu0 %v2591
        %v4075 = vpop.f32.mrf.mxu0
        %4076 = vmatmul.f32.gmra.mxu0 %v2593
        %v4077 = vpop.f32.mrf.mxu0
        %4078 = vmatmul.f32.gmra.mxu0 %v2595
        %v4079 = vpop.f32.mrf.mxu0
        %4080 = vmatmul.f32.gmra.mxu0 %v2597
        %v4081 = vpop.f32.mrf.mxu0
        %4082 = vmatmul.f32.gmra.mxu0 %v2599
        %v4083 = vpop.f32.mrf.mxu0
        %v4084 = vadd.f32 0.0, %v4083
        %4085 = vmatmul.f32.gmra.mxu0 %v2601
        %v4086 = vpop.f32.mrf.mxu0
        %v4087 = vadd.f32 0.0, %v4086
        %4088 = vmatmul.f32.gmra.mxu0 %v2603
        %v4089 = vpop.f32.mrf.mxu0
        %v4090 = vadd.f32 0.0, %v4089
        %4091 = vmatmul.f32.gmra.mxu0 %v2605
        %v4092 = vpop.f32.mrf.mxu0
        %v4093 = vadd.f32 0.0, %v4092
        %4094 = vmatmul.f32.gmra.mxu0 %v2607
        %v4095 = vpop.f32.mrf.mxu0
        %4096 = vmatmul.f32.gmra.mxu0 %v2609
        %v4097 = vpop.f32.mrf.mxu0
        %4098 = vmatmul.f32.gmra.mxu0 %v2611
        %v4099 = vpop.f32.mrf.mxu0
        %4100 = vmatmul.f32.gmra.mxu0 %v2613
        %v4101 = vpop.f32.mrf.mxu0
        %4102 = vmatmul.f32.gmra.mxu0 %v2615
        %v4103 = vpop.f32.mrf.mxu0
        %v4104 = vadd.f32 0.0, %v4103
        %4105 = vmatmul.f32.gmra.mxu0 %v2617
        %v4106 = vpop.f32.mrf.mxu0
        %v4107 = vadd.f32 0.0, %v4106
        %4108 = vmatmul.f32.gmra.mxu0 %v2619
        %v4109 = vpop.f32.mrf.mxu0
        %v4110 = vadd.f32 0.0, %v4109
        %4111 = vmatmul.f32.gmra.mxu0 %v2621
        %v4112 = vpop.f32.mrf.mxu0
        %v4113 = vadd.f32 0.0, %v4112
        %4114 = vmatmul.f32.gmra.mxu0 %v2623
        %v4115 = vpop.f32.mrf.mxu0
        %4116 = vmatmul.f32.gmra.mxu0 %v2625
        %v4117 = vpop.f32.mrf.mxu0
        %4118 = vmatmul.f32.gmra.mxu0 %v2627
        %v4119 = vpop.f32.mrf.mxu0
        %4120 = vmatmul.f32.gmra.mxu0 %v2629
        %v4121 = vpop.f32.mrf.mxu0
        %4122 = vmatmul.f32.gmra.mxu0 %v2631
        %v4123 = vpop.f32.mrf.mxu0
        %v4124 = vadd.f32 0.0, %v4123
        %4125 = vmatmul.f32.gmra.mxu0 %v2633
        %v4126 = vpop.f32.mrf.mxu0
        %v4127 = vadd.f32 0.0, %v4126
        %4128 = vmatmul.f32.gmra.mxu0 %v2635
        %v4129 = vpop.f32.mrf.mxu0
        %v4130 = vadd.f32 0.0, %v4129
        %4131 = vmatmul.f32.gmra.mxu0 %v2637
        %v4132 = vpop.f32.mrf.mxu0
        %v4133 = vadd.f32 0.0, %v4132
        %4134 = vmatmul.f32.gmra.mxu0 %v2639
        %v4135 = vpop.f32.mrf.mxu0
        %4136 = vmatmul.f32.gmra.mxu0 %v2641
        %v4137 = vpop.f32.mrf.mxu0
        %4138 = vmatmul.f32.gmra.mxu0 %v2643
        %v4139 = vpop.f32.mrf.mxu0
        %4140 = vmatmul.f32.gmra.mxu0 %v2645
        %v4141 = vpop.f32.mrf.mxu0
        %4142 = vmatmul.f32.gmra.mxu0 %v2647
        %v4143 = vpop.f32.mrf.mxu0
        %v4144 = vadd.f32 0.0, %v4143
        %4145 = vmatmul.f32.gmra.mxu0 %v2649
        %v4146 = vpop.f32.mrf.mxu0
        %v4147 = vadd.f32 0.0, %v4146
        %4148 = vmatmul.f32.gmra.mxu0 %v2651
        %v4149 = vpop.f32.mrf.mxu0
        %v4150 = vadd.f32 0.0, %v4149
        %4151 = vmatmul.f32.gmra.mxu0 %v2653
        %v4152 = vpop.f32.mrf.mxu0
        %v4153 = vadd.f32 0.0, %v4152
        %4154 = vmatmul.f32.gmra.mxu0 %v2655
        %v4155 = vpop.f32.mrf.mxu0
        %4156 = vmatmul.f32.gmra.mxu0 %v2657
        %v4157 = vpop.f32.mrf.mxu0
        %4158 = vmatmul.f32.gmra.mxu0 %v2659
        %v4159 = vpop.f32.mrf.mxu0
        %4160 = vmatmul.f32.gmra.mxu0 %v2661
        %v4161 = vpop.f32.mrf.mxu0
        %4162 = vmatmul.f32.gmra.mxu0 %v2663
        %v4163 = vpop.f32.mrf.mxu0
        %v4164 = vadd.f32 0.0, %v4163
        %4165 = vmatmul.f32.gmra.mxu0 %v2665
        %v4166 = vpop.f32.mrf.mxu0
        %v4167 = vadd.f32 0.0, %v4166
        %4168 = vmatmul.f32.gmra.mxu0 %v2667
        %v4169 = vpop.f32.mrf.mxu0
        %v4170 = vadd.f32 0.0, %v4169
        %4171 = vmatmul.f32.gmra.mxu0 %v2669
        %v4172 = vpop.f32.mrf.mxu0
        %v4173 = vadd.f32 0.0, %v4172
        %4174 = vmatmul.f32.gmra.mxu0 %v2671
        %v4175 = vpop.f32.mrf.mxu0
        %4176 = vmatmul.f32.gmra.mxu0 %v2673
        %v4177 = vpop.f32.mrf.mxu0
        %4178 = vmatmul.f32.gmra.mxu0 %v2675
        %v4179 = vpop.f32.mrf.mxu0
        %4180 = vmatmul.f32.gmra.mxu0 %v2677
        %v4181 = vpop.f32.mrf.mxu0
        %4182 = vmatmul.f32.gmra.mxu0 %v2679
        %v4183 = vpop.f32.mrf.mxu0
        %v4184 = vadd.f32 0.0, %v4183
        %4185 = vmatmul.f32.gmra.mxu0 %v2681
        %v4186 = vpop.f32.mrf.mxu0
        %v4187 = vadd.f32 0.0, %v4186
        %4188 = vmatmul.f32.gmra.mxu0 %v2683
        %v4189 = vpop.f32.mrf.mxu0
        %v4190 = vadd.f32 0.0, %v4189
        %4191 = vmatmul.f32.gmra.mxu0 %v2685
        %v4192 = vpop.f32.mrf.mxu0
        %v4193 = vadd.f32 0.0, %v4192
        %4194 = vmatmul.f32.gmra.mxu0 %v2687
        %v4195 = vpop.f32.mrf.mxu0
        %4196 = vmatmul.f32.gmra.mxu0 %v2689
        %v4197 = vpop.f32.mrf.mxu0
        %4198 = vmatmul.f32.gmra.mxu0 %v2691
        %v4199 = vpop.f32.mrf.mxu0
        %4200 = vmatmul.f32.gmra.mxu0 %v2693
        %v4201 = vpop.f32.mrf.mxu0
        %4202 = vmatmul.f32.gmra.mxu0 %v2695
        %v4203 = vpop.f32.mrf.mxu0
        %v4204 = vadd.f32 0.0, %v4203
        %4205 = vmatmul.f32.gmra.mxu0 %v2697
        %v4206 = vpop.f32.mrf.mxu0
        %v4207 = vadd.f32 0.0, %v4206
        %4208 = vmatmul.f32.gmra.mxu0 %v2699
        %v4209 = vpop.f32.mrf.mxu0
        %v4210 = vadd.f32 0.0, %v4209
        %4211 = vmatmul.f32.gmra.mxu0 %v2701
        %v4212 = vpop.f32.mrf.mxu0
        %v4213 = vadd.f32 0.0, %v4212
        %4214 = vmatmul.f32.gmra.mxu0 %v2703
        %v4215 = vpop.f32.mrf.mxu0
        %4216 = vmatmul.f32.gmra.mxu0 %v2705
        %v4217 = vpop.f32.mrf.mxu0
        %4218 = vmatmul.f32.gmra.mxu0 %v2707
        %v4219 = vpop.f32.mrf.mxu0
        %4220 = vmatmul.f32.gmra.mxu0 %v2709
        %v4221 = vpop.f32.mrf.mxu0
        %4222 = vmatmul.f32.gmra.mxu0 %v2711
        %v4223 = vpop.f32.mrf.mxu0
        %v4224 = vadd.f32 0.0, %v4223
        %4225 = vmatmul.f32.gmra.mxu0 %v2713
        %v4226 = vpop.f32.mrf.mxu0
        %v4227 = vadd.f32 0.0, %v4226
        %4228 = vmatmul.f32.gmra.mxu0 %v2715
        %v4229 = vpop.f32.mrf.mxu0
        %v4230 = vadd.f32 0.0, %v4229
        %4231 = vmatmul.f32.gmra.mxu0 %v2717
        %v4232 = vpop.f32.mrf.mxu0
        %4233 = vmatmul.f32.gmra.mxu0 %v2719
        %v4234 = vpop.f32.mrf.mxu0
        %4235 = vmatmul.f32.gmra.mxu0 %v2721
        %v4236 = vpop.f32.mrf.mxu0
        %4237 = vmatmul.f32.gmra.mxu0 %v2723
        %v4238 = vpop.f32.mrf.mxu0
        %4239 = vmatmul.f32.gmra.mxu0 %v2725
        %v4240 = vpop.f32.mrf.mxu0
        %4241 = vmatmul.f32.gmra.mxu0 %v2727
        %v4242 = vpop.f32.mrf.mxu0
        %v4243 = vadd.f32 0.0, %v4242
        %4244 = vmatmul.f32.gmra.mxu0 %v2729
        %v4245 = vpop.f32.mrf.mxu0
        %v4246 = vadd.f32 0.0, %v4245
        %4247 = vmatmul.f32.gmra.mxu0 %v4041
        %v4248 = vpop.f32.mrf.mxu0
        %v4249 = vadd.f32 0.0, %v4248
        %4250 = vdwg.mxu0
        %v4251 = vadd.f32 %v4001, %v4064
        %v4252 = vadd.f32 %v4002, %v4067
        %v4253 = vadd.f32 %v4003, %v4070
        %v4254 = vadd.f32 %v4004, %v4073
        %v4255 = vadd.f32 %v4005, %v4084
        %v4256 = vadd.f32 %v4006, %v4087
        %v4257 = vadd.f32 %v4007, %v4090
        %v4258 = vadd.f32 %v4008, %v4093
        %v4259 = vadd.f32 %v4009, %v4104
        %v4260 = vadd.f32 %v4010, %v4107
        %v4261 = vadd.f32 %v4011, %v4110
        %v4262 = vadd.f32 %v4012, %v4113
        %v4263 = vadd.f32 %v4013, %v4124
        %v4264 = vadd.f32 %v4014, %v4127
        %v4265 = vadd.f32 %v4015, %v4130
        %v4266 = vadd.f32 %v4016, %v4133
        %v4267 = vadd.f32 %v4017, %v4144
        %v4268 = vadd.f32 %v4018, %v4147
        %v4269 = vadd.f32 %v4019, %v4150
        %v4270 = vadd.f32 %v4020, %v4153
        %v4271 = vadd.f32 %v4021, %v4164
        %v4272 = vadd.f32 %v4022, %v4167
        %v4273 = vadd.f32 %v4023, %v4170
        %v4274 = vadd.f32 %v4024, %v4173
        %v4275 = vadd.f32 %v4025, %v4184
        %v4276 = vadd.f32 %v4026, %v4187
        %v4277 = vadd.f32 %v4027, %v4190
        %v4278 = vadd.f32 %v4028, %v4193
        %v4279 = vadd.f32 %v4029, %v4204
        %v4280 = vadd.f32 %v4030, %v4207
        %v4281 = vadd.f32 %v4031, %v4210
        %v4282 = vadd.f32 %v4032, %v4213
        %v4283 = vadd.f32 %v4033, %v4224
        %v4284 = vadd.f32 %v4034, %v4227
        %v4285 = vadd.f32 %v4035, %v4230
        %v4286 = vadd.f32 %v4036, %v4243
        %v4287 = vadd.f32 %v4037, %v4246
        %v4288 = vadd.f32 %v4038, %v4249
        %s4289 = scalar_lea.vmem %s3, 40
        %v4290 = vld [vmem:[%s4289] sm:$0x3f]
        %v4292 = vsel %vm2222, %v1959, 0
        %v4295 = vsel %vm2222, %v1960, 0
        %v4298 = vsel %vm2222, %v1961, 0
        %v4301 = vsel %vm2222, %v1962, 0
        %v4304 = vsel %vm2222, %v1963, 0
        %v4307 = vsel %vm2222, %v1964, 0
        %v4310 = vsel %vm2222, %v1965, 0
        %v4313 = vsel %vm2070, %v4290, 0
        %4315 = vmatpush.msra.mxu0 0.0
        %4316 = vmatpush.msra.mxu0 0.0
        %4317 = vmatpush.msra.mxu0 0.0
        %4318 = vmatpush.msra.mxu0 0.0
        %4319 = vmatpush.msra.mxu0 0.0
        %4320 = vmatpush.msra.mxu0 0.0
        %4321 = vmatpush.msra.mxu0 0.0
        %4322 = vmatpush.msra.mxu0 0.0
        %4323 = vmatpush.msra.mxu0 0.0
        %4324 = vmatpush.msra.mxu0 0.0
        %4325 = vmatpush.msra.mxu0 0.0
        %4326 = vmatpush.msra.mxu0 0.0
        %4327 = vmatpush.msra.mxu0 0.0
        %4328 = vmatpush.msra.mxu0 0.0
        %4329 = vmatpush.msra.mxu0 0.0
        %4330 = vmatpush.msra.mxu0 %v4313
        %4331 = vmatmul.f32.gmra.mxu0 %v2597
        %v4332 = vpop.f32.mrf.mxu0
        %v4333 = vadd.f32 0.0, %v4332
        %4334 = vmatmul.f32.gmra.mxu0 %v2599
        %v4335 = vpop.f32.mrf.mxu0
        %v4336 = vadd.f32 0.0, %v4335
        %4337 = vmatmul.f32.gmra.mxu0 %v2601
        %v4338 = vpop.f32.mrf.mxu0
        %v4339 = vadd.f32 0.0, %v4338
        %4340 = vmatmul.f32.gmra.mxu0 %v2603
        %v4341 = vpop.f32.mrf.mxu0
        %v4342 = vadd.f32 0.0, %v4341
        %4343 = vmatmul.f32.gmra.mxu0 %v2605
        %v4344 = vpop.f32.mrf.mxu0
        %4345 = vmatmul.f32.gmra.mxu0 %v2607
        %v4346 = vpop.f32.mrf.mxu0
        %4347 = vmatmul.f32.gmra.mxu0 %v2609
        %v4348 = vpop.f32.mrf.mxu0
        %4349 = vmatmul.f32.gmra.mxu0 %v2611
        %v4350 = vpop.f32.mrf.mxu0
        %4351 = vmatmul.f32.gmra.mxu0 %v2613
        %v4352 = vpop.f32.mrf.mxu0
        %v4353 = vadd.f32 0.0, %v4352
        %4354 = vmatmul.f32.gmra.mxu0 %v2615
        %v4355 = vpop.f32.mrf.mxu0
        %v4356 = vadd.f32 0.0, %v4355
        %4357 = vmatmul.f32.gmra.mxu0 %v2617
        %v4358 = vpop.f32.mrf.mxu0
        %v4359 = vadd.f32 0.0, %v4358
        %4360 = vmatmul.f32.gmra.mxu0 %v2619
        %v4361 = vpop.f32.mrf.mxu0
        %v4362 = vadd.f32 0.0, %v4361
        %4363 = vmatmul.f32.gmra.mxu0 %v2621
        %v4364 = vpop.f32.mrf.mxu0
        %4365 = vmatmul.f32.gmra.mxu0 %v2623
        %v4366 = vpop.f32.mrf.mxu0
        %4367 = vmatmul.f32.gmra.mxu0 %v2625
        %v4368 = vpop.f32.mrf.mxu0
        %4369 = vmatmul.f32.gmra.mxu0 %v2627
        %v4370 = vpop.f32.mrf.mxu0
        %4371 = vmatmul.f32.gmra.mxu0 %v2629
        %v4372 = vpop.f32.mrf.mxu0
        %v4373 = vadd.f32 0.0, %v4372
        %4374 = vmatmul.f32.gmra.mxu0 %v2631
        %v4375 = vpop.f32.mrf.mxu0
        %v4376 = vadd.f32 0.0, %v4375
        %4377 = vmatmul.f32.gmra.mxu0 %v2633
        %v4378 = vpop.f32.mrf.mxu0
        %v4379 = vadd.f32 0.0, %v4378
        %4380 = vmatmul.f32.gmra.mxu0 %v2635
        %v4381 = vpop.f32.mrf.mxu0
        %v4382 = vadd.f32 0.0, %v4381
        %4383 = vmatmul.f32.gmra.mxu0 %v2637
        %v4384 = vpop.f32.mrf.mxu0
        %4385 = vmatmul.f32.gmra.mxu0 %v2639
        %v4386 = vpop.f32.mrf.mxu0
        %4387 = vmatmul.f32.gmra.mxu0 %v2641
        %v4388 = vpop.f32.mrf.mxu0
        %4389 = vmatmul.f32.gmra.mxu0 %v2643
        %v4390 = vpop.f32.mrf.mxu0
        %4391 = vmatmul.f32.gmra.mxu0 %v2645
        %v4392 = vpop.f32.mrf.mxu0
        %v4393 = vadd.f32 0.0, %v4392
        %4394 = vmatmul.f32.gmra.mxu0 %v2647
        %v4395 = vpop.f32.mrf.mxu0
        %v4396 = vadd.f32 0.0, %v4395
        %4397 = vmatmul.f32.gmra.mxu0 %v2649
        %v4398 = vpop.f32.mrf.mxu0
        %v4399 = vadd.f32 0.0, %v4398
        %4400 = vmatmul.f32.gmra.mxu0 %v2651
        %v4401 = vpop.f32.mrf.mxu0
        %v4402 = vadd.f32 0.0, %v4401
        %4403 = vmatmul.f32.gmra.mxu0 %v2653
        %v4404 = vpop.f32.mrf.mxu0
        %4405 = vmatmul.f32.gmra.mxu0 %v2655
        %v4406 = vpop.f32.mrf.mxu0
        %4407 = vmatmul.f32.gmra.mxu0 %v2657
        %v4408 = vpop.f32.mrf.mxu0
        %4409 = vmatmul.f32.gmra.mxu0 %v2659
        %v4410 = vpop.f32.mrf.mxu0
        %4411 = vmatmul.f32.gmra.mxu0 %v2661
        %v4412 = vpop.f32.mrf.mxu0
        %v4413 = vadd.f32 0.0, %v4412
        %4414 = vmatmul.f32.gmra.mxu0 %v2663
        %v4415 = vpop.f32.mrf.mxu0
        %v4416 = vadd.f32 0.0, %v4415
        %4417 = vmatmul.f32.gmra.mxu0 %v2665
        %v4418 = vpop.f32.mrf.mxu0
        %v4419 = vadd.f32 0.0, %v4418
        %4420 = vmatmul.f32.gmra.mxu0 %v2667
        %v4421 = vpop.f32.mrf.mxu0
        %v4422 = vadd.f32 0.0, %v4421
        %4423 = vmatmul.f32.gmra.mxu0 %v2669
        %v4424 = vpop.f32.mrf.mxu0
        %4425 = vmatmul.f32.gmra.mxu0 %v2671
        %v4426 = vpop.f32.mrf.mxu0
        %4427 = vmatmul.f32.gmra.mxu0 %v2673
        %v4428 = vpop.f32.mrf.mxu0
        %4429 = vmatmul.f32.gmra.mxu0 %v2675
        %v4430 = vpop.f32.mrf.mxu0
        %4431 = vmatmul.f32.gmra.mxu0 %v2677
        %v4432 = vpop.f32.mrf.mxu0
        %v4433 = vadd.f32 0.0, %v4432
        %4434 = vmatmul.f32.gmra.mxu0 %v2679
        %v4435 = vpop.f32.mrf.mxu0
        %v4436 = vadd.f32 0.0, %v4435
        %4437 = vmatmul.f32.gmra.mxu0 %v2681
        %v4438 = vpop.f32.mrf.mxu0
        %v4439 = vadd.f32 0.0, %v4438
        %4440 = vmatmul.f32.gmra.mxu0 %v2683
        %v4441 = vpop.f32.mrf.mxu0
        %v4442 = vadd.f32 0.0, %v4441
        %4443 = vmatmul.f32.gmra.mxu0 %v2685
        %v4444 = vpop.f32.mrf.mxu0
        %4445 = vmatmul.f32.gmra.mxu0 %v2687
        %v4446 = vpop.f32.mrf.mxu0
        %4447 = vmatmul.f32.gmra.mxu0 %v2689
        %v4448 = vpop.f32.mrf.mxu0
        %4449 = vmatmul.f32.gmra.mxu0 %v2691
        %v4450 = vpop.f32.mrf.mxu0
        %4451 = vmatmul.f32.gmra.mxu0 %v2693
        %v4452 = vpop.f32.mrf.mxu0
        %v4453 = vadd.f32 0.0, %v4452
        %4454 = vmatmul.f32.gmra.mxu0 %v2695
        %v4455 = vpop.f32.mrf.mxu0
        %v4456 = vadd.f32 0.0, %v4455
        %4457 = vmatmul.f32.gmra.mxu0 %v2697
        %v4458 = vpop.f32.mrf.mxu0
        %v4459 = vadd.f32 0.0, %v4458
        %4460 = vmatmul.f32.gmra.mxu0 %v2699
        %v4461 = vpop.f32.mrf.mxu0
        %v4462 = vadd.f32 0.0, %v4461
        %4463 = vmatmul.f32.gmra.mxu0 %v2701
        %v4464 = vpop.f32.mrf.mxu0
        %4465 = vmatmul.f32.gmra.mxu0 %v2703
        %v4466 = vpop.f32.mrf.mxu0
        %4467 = vmatmul.f32.gmra.mxu0 %v2705
        %v4468 = vpop.f32.mrf.mxu0
        %4469 = vmatmul.f32.gmra.mxu0 %v2707
        %v4470 = vpop.f32.mrf.mxu0
        %4471 = vmatmul.f32.gmra.mxu0 %v2709
        %v4472 = vpop.f32.mrf.mxu0
        %v4473 = vadd.f32 0.0, %v4472
        %4474 = vmatmul.f32.gmra.mxu0 %v2711
        %v4475 = vpop.f32.mrf.mxu0
        %v4476 = vadd.f32 0.0, %v4475
        %4477 = vmatmul.f32.gmra.mxu0 %v2713
        %v4478 = vpop.f32.mrf.mxu0
        %v4479 = vadd.f32 0.0, %v4478
        %4480 = vmatmul.f32.gmra.mxu0 %v2715
        %v4481 = vpop.f32.mrf.mxu0
        %v4482 = vadd.f32 0.0, %v4481
        %4483 = vmatmul.f32.gmra.mxu0 %v2717
        %v4484 = vpop.f32.mrf.mxu0
        %4485 = vmatmul.f32.gmra.mxu0 %v2719
        %v4486 = vpop.f32.mrf.mxu0
        %4487 = vmatmul.f32.gmra.mxu0 %v2721
        %v4488 = vpop.f32.mrf.mxu0
        %4489 = vmatmul.f32.gmra.mxu0 %v2723
        %v4490 = vpop.f32.mrf.mxu0
        %4491 = vmatmul.f32.gmra.mxu0 %v2725
        %v4492 = vpop.f32.mrf.mxu0
        %v4493 = vadd.f32 0.0, %v4492
        %4494 = vmatmul.f32.gmra.mxu0 %v2727
        %v4495 = vpop.f32.mrf.mxu0
        %v4496 = vadd.f32 0.0, %v4495
        %4497 = vmatmul.f32.gmra.mxu0 %v2729
        %v4498 = vpop.f32.mrf.mxu0
        %v4499 = vadd.f32 0.0, %v4498
        %4500 = vmatmul.f32.gmra.mxu0 %v4041
        %v4501 = vpop.f32.mrf.mxu0
        %4502 = vmatmul.f32.gmra.mxu0 %v4292
        %v4503 = vpop.f32.mrf.mxu0
        %4504 = vmatmul.f32.gmra.mxu0 %v4295
        %v4505 = vpop.f32.mrf.mxu0
        %4506 = vmatmul.f32.gmra.mxu0 %v4298
        %v4507 = vpop.f32.mrf.mxu0
        %4508 = vmatmul.f32.gmra.mxu0 %v4301
        %v4509 = vpop.f32.mrf.mxu0
        %4510 = vmatmul.f32.gmra.mxu0 %v4304
        %v4511 = vpop.f32.mrf.mxu0
        %v4512 = vadd.f32 0.0, %v4511
        %4513 = vmatmul.f32.gmra.mxu0 %v4307
        %v4514 = vpop.f32.mrf.mxu0
        %v4515 = vadd.f32 0.0, %v4514
        %4516 = vmatmul.f32.gmra.mxu0 %v4310
        %v4517 = vpop.f32.mrf.mxu0
        %v4518 = vadd.f32 0.0, %v4517
        %4519 = vdwg.mxu0
        %v4520 = vadd.f32 %v4251, %v4333
        %v4521 = vadd.f32 %v4252, %v4336
        %v4522 = vadd.f32 %v4253, %v4339
        %v4523 = vadd.f32 %v4254, %v4342
        %v4524 = vadd.f32 %v4255, %v4353
        %v4525 = vadd.f32 %v4256, %v4356
        %v4526 = vadd.f32 %v4257, %v4359
        %v4527 = vadd.f32 %v4258, %v4362
        %v4528 = vadd.f32 %v4259, %v4373
        %v4529 = vadd.f32 %v4260, %v4376
        %v4530 = vadd.f32 %v4261, %v4379
        %v4531 = vadd.f32 %v4262, %v4382
        %v4532 = vadd.f32 %v4263, %v4393
        %v4533 = vadd.f32 %v4264, %v4396
        %v4534 = vadd.f32 %v4265, %v4399
        %v4535 = vadd.f32 %v4266, %v4402
        %v4536 = vadd.f32 %v4267, %v4413
        %v4537 = vadd.f32 %v4268, %v4416
        %v4538 = vadd.f32 %v4269, %v4419
        %v4539 = vadd.f32 %v4270, %v4422
        %v4540 = vadd.f32 %v4271, %v4433
        %v4541 = vadd.f32 %v4272, %v4436
        %v4542 = vadd.f32 %v4273, %v4439
        %v4543 = vadd.f32 %v4274, %v4442
        %v4544 = vadd.f32 %v4275, %v4453
        %v4545 = vadd.f32 %v4276, %v4456
        %v4546 = vadd.f32 %v4277, %v4459
        %v4547 = vadd.f32 %v4278, %v4462
        %v4548 = vadd.f32 %v4279, %v4473
        %v4549 = vadd.f32 %v4280, %v4476
        %v4550 = vadd.f32 %v4281, %v4479
        %v4551 = vadd.f32 %v4282, %v4482
        %v4552 = vadd.f32 %v4283, %v4493
        %v4553 = vadd.f32 %v4284, %v4496
        %v4554 = vadd.f32 %v4285, %v4499
        %v4555 = vadd.f32 %v4286, %v4512
        %v4556 = vadd.f32 %v4287, %v4515
        %v4557 = vadd.f32 %v4288, %v4518
        %s4558 = scalar_lea.vmem %s3, 48
        %v4559 = vld [vmem:[%s4558] sm:$0x3f]
        %v4561 = vrot.slane %v1959, 2
        %v4562 = vsel %vm2070, %v2220, %v4561
        %v4563 = vrot.slane %v1960, 2
        %v4564 = vsel %vm2070, %v4561, %v4563
        %v4565 = vrot.slane %v1961, 2
        %v4566 = vsel %vm2070, %v4563, %v4565
        %v4567 = vrot.slane %v1962, 2
        %v4568 = vsel %vm2070, %v4565, %v4567
        %v4569 = vrot.slane %v1963, 2
        %v4570 = vsel %vm2070, %v4567, %v4569
        %v4571 = vrot.slane %v1964, 2
        %v4572 = vsel %vm2070, %v4569, %v4571
        %v4573 = vrot.slane %v1965, 2
        %v4574 = vsel %vm2070, %v4571, %v4573
        %v4575 = vrot.slane %v1966, 2
        %v4576 = vsel %vm2070, %v4573, %v4575
        %v4577 = vsel %vm2222, %v4562, 0
        %v4579 = vsel %vm2222, %v4564, 0
        %v4581 = vsel %vm2222, %v4566, 0
        %v4583 = vsel %vm2222, %v4568, 0
        %v4585 = vsel %vm2222, %v4570, 0
        %v4587 = vsel %vm2222, %v4572, 0
        %v4589 = vsel %vm2222, %v4574, 0
        %v4591 = vsel %vm2222, %v4576, 0
        %v4594 = vsel %vm2070, %v4559, 0
        %4596 = vmatpush.msra.mxu0 0.0
        %4597 = vmatpush.msra.mxu0 0.0
        %4598 = vmatpush.msra.mxu0 0.0
        %4599 = vmatpush.msra.mxu0 0.0
        %4600 = vmatpush.msra.mxu0 0.0
        %4601 = vmatpush.msra.mxu0 0.0
        %4602 = vmatpush.msra.mxu0 0.0
        %4603 = vmatpush.msra.mxu0 0.0
        %4604 = vmatpush.msra.mxu0 0.0
        %4605 = vmatpush.msra.mxu0 0.0
        %4606 = vmatpush.msra.mxu0 0.0
        %4607 = vmatpush.msra.mxu0 0.0
        %4608 = vmatpush.msra.mxu0 0.0
        %4609 = vmatpush.msra.mxu0 0.0
        %4610 = vmatpush.msra.mxu0 0.0
        %4611 = vmatpush.msra.mxu0 %v4594
        %4612 = vmatmul.f32.gmra.mxu0 %v2239
        %v4613 = vpop.f32.mrf.mxu0
        %v4614 = vadd.f32 0.0, %v4613
        %4615 = vmatmul.f32.gmra.mxu0 %v2241
        %v4616 = vpop.f32.mrf.mxu0
        %v4617 = vadd.f32 0.0, %v4616
        %4618 = vmatmul.f32.gmra.mxu0 %v2243
        %v4619 = vpop.f32.mrf.mxu0
        %v4620 = vadd.f32 0.0, %v4619
        %4621 = vmatmul.f32.gmra.mxu0 %v2245
        %v4622 = vpop.f32.mrf.mxu0
        %v4623 = vadd.f32 0.0, %v4622
        %4624 = vmatmul.f32.gmra.mxu0 %v2247
        %v4625 = vpop.f32.mrf.mxu0
        %4626 = vmatmul.f32.gmra.mxu0 %v2249
        %v4627 = vpop.f32.mrf.mxu0
        %4628 = vmatmul.f32.gmra.mxu0 %v2251
        %v4629 = vpop.f32.mrf.mxu0
        %4630 = vmatmul.f32.gmra.mxu0 %v2253
        %v4631 = vpop.f32.mrf.mxu0
        %4632 = vmatmul.f32.gmra.mxu0 %v2255
        %v4633 = vpop.f32.mrf.mxu0
        %v4634 = vadd.f32 0.0, %v4633
        %4635 = vmatmul.f32.gmra.mxu0 %v2257
        %v4636 = vpop.f32.mrf.mxu0
        %v4637 = vadd.f32 0.0, %v4636
        %4638 = vmatmul.f32.gmra.mxu0 %v2259
        %v4639 = vpop.f32.mrf.mxu0
        %v4640 = vadd.f32 0.0, %v4639
        %4641 = vmatmul.f32.gmra.mxu0 %v2261
        %v4642 = vpop.f32.mrf.mxu0
        %v4643 = vadd.f32 0.0, %v4642
        %4644 = vmatmul.f32.gmra.mxu0 %v2263
        %v4645 = vpop.f32.mrf.mxu0
        %4646 = vmatmul.f32.gmra.mxu0 %v2265
        %v4647 = vpop.f32.mrf.mxu0
        %4648 = vmatmul.f32.gmra.mxu0 %v2267
        %v4649 = vpop.f32.mrf.mxu0
        %4650 = vmatmul.f32.gmra.mxu0 %v2269
        %v4651 = vpop.f32.mrf.mxu0
        %4652 = vmatmul.f32.gmra.mxu0 %v2271
        %v4653 = vpop.f32.mrf.mxu0
        %v4654 = vadd.f32 0.0, %v4653
        %4655 = vmatmul.f32.gmra.mxu0 %v2273
        %v4656 = vpop.f32.mrf.mxu0
        %v4657 = vadd.f32 0.0, %v4656
        %4658 = vmatmul.f32.gmra.mxu0 %v2275
        %v4659 = vpop.f32.mrf.mxu0
        %v4660 = vadd.f32 0.0, %v4659
        %4661 = vmatmul.f32.gmra.mxu0 %v2277
        %v4662 = vpop.f32.mrf.mxu0
        %v4663 = vadd.f32 0.0, %v4662
        %4664 = vmatmul.f32.gmra.mxu0 %v2279
        %v4665 = vpop.f32.mrf.mxu0
        %4666 = vmatmul.f32.gmra.mxu0 %v2281
        %v4667 = vpop.f32.mrf.mxu0
        %4668 = vmatmul.f32.gmra.mxu0 %v2283
        %v4669 = vpop.f32.mrf.mxu0
        %4670 = vmatmul.f32.gmra.mxu0 %v2285
        %v4671 = vpop.f32.mrf.mxu0
        %4672 = vmatmul.f32.gmra.mxu0 %v2287
        %v4673 = vpop.f32.mrf.mxu0
        %v4674 = vadd.f32 0.0, %v4673
        %4675 = vmatmul.f32.gmra.mxu0 %v2289
        %v4676 = vpop.f32.mrf.mxu0
        %v4677 = vadd.f32 0.0, %v4676
        %4678 = vmatmul.f32.gmra.mxu0 %v2291
        %v4679 = vpop.f32.mrf.mxu0
        %v4680 = vadd.f32 0.0, %v4679
        %4681 = vmatmul.f32.gmra.mxu0 %v2293
        %v4682 = vpop.f32.mrf.mxu0
        %v4683 = vadd.f32 0.0, %v4682
        %4684 = vmatmul.f32.gmra.mxu0 %v2295
        %v4685 = vpop.f32.mrf.mxu0
        %4686 = vmatmul.f32.gmra.mxu0 %v2297
        %v4687 = vpop.f32.mrf.mxu0
        %4688 = vmatmul.f32.gmra.mxu0 %v2299
        %v4689 = vpop.f32.mrf.mxu0
        %4690 = vmatmul.f32.gmra.mxu0 %v2301
        %v4691 = vpop.f32.mrf.mxu0
        %4692 = vmatmul.f32.gmra.mxu0 %v2303
        %v4693 = vpop.f32.mrf.mxu0
        %v4694 = vadd.f32 0.0, %v4693
        %4695 = vmatmul.f32.gmra.mxu0 %v2305
        %v4696 = vpop.f32.mrf.mxu0
        %v4697 = vadd.f32 0.0, %v4696
        %4698 = vmatmul.f32.gmra.mxu0 %v2307
        %v4699 = vpop.f32.mrf.mxu0
        %v4700 = vadd.f32 0.0, %v4699
        %4701 = vmatmul.f32.gmra.mxu0 %v2309
        %v4702 = vpop.f32.mrf.mxu0
        %v4703 = vadd.f32 0.0, %v4702
        %4704 = vmatmul.f32.gmra.mxu0 %v2311
        %v4705 = vpop.f32.mrf.mxu0
        %4706 = vmatmul.f32.gmra.mxu0 %v2313
        %v4707 = vpop.f32.mrf.mxu0
        %4708 = vmatmul.f32.gmra.mxu0 %v2315
        %v4709 = vpop.f32.mrf.mxu0
        %4710 = vmatmul.f32.gmra.mxu0 %v2317
        %v4711 = vpop.f32.mrf.mxu0
        %4712 = vmatmul.f32.gmra.mxu0 %v2319
        %v4713 = vpop.f32.mrf.mxu0
        %v4714 = vadd.f32 0.0, %v4713
        %4715 = vmatmul.f32.gmra.mxu0 %v2321
        %v4716 = vpop.f32.mrf.mxu0
        %v4717 = vadd.f32 0.0, %v4716
        %4718 = vmatmul.f32.gmra.mxu0 %v2323
        %v4719 = vpop.f32.mrf.mxu0
        %v4720 = vadd.f32 0.0, %v4719
        %4721 = vmatmul.f32.gmra.mxu0 %v2325
        %v4722 = vpop.f32.mrf.mxu0
        %v4723 = vadd.f32 0.0, %v4722
        %4724 = vmatmul.f32.gmra.mxu0 %v2327
        %v4725 = vpop.f32.mrf.mxu0
        %4726 = vmatmul.f32.gmra.mxu0 %v2329
        %v4727 = vpop.f32.mrf.mxu0
        %4728 = vmatmul.f32.gmra.mxu0 %v2331
        %v4729 = vpop.f32.mrf.mxu0
        %4730 = vmatmul.f32.gmra.mxu0 %v2333
        %v4731 = vpop.f32.mrf.mxu0
        %4732 = vmatmul.f32.gmra.mxu0 %v2335
        %v4733 = vpop.f32.mrf.mxu0
        %v4734 = vadd.f32 0.0, %v4733
        %4735 = vmatmul.f32.gmra.mxu0 %v2337
        %v4736 = vpop.f32.mrf.mxu0
        %v4737 = vadd.f32 0.0, %v4736
        %4738 = vmatmul.f32.gmra.mxu0 %v2339
        %v4739 = vpop.f32.mrf.mxu0
        %v4740 = vadd.f32 0.0, %v4739
        %4741 = vmatmul.f32.gmra.mxu0 %v2341
        %v4742 = vpop.f32.mrf.mxu0
        %v4743 = vadd.f32 0.0, %v4742
        %4744 = vmatmul.f32.gmra.mxu0 %v2343
        %v4745 = vpop.f32.mrf.mxu0
        %4746 = vmatmul.f32.gmra.mxu0 %v2345
        %v4747 = vpop.f32.mrf.mxu0
        %4748 = vmatmul.f32.gmra.mxu0 %v2347
        %v4749 = vpop.f32.mrf.mxu0
        %4750 = vmatmul.f32.gmra.mxu0 %v2349
        %v4751 = vpop.f32.mrf.mxu0
        %4752 = vmatmul.f32.gmra.mxu0 %v2351
        %v4753 = vpop.f32.mrf.mxu0
        %v4754 = vadd.f32 0.0, %v4753
        %4755 = vmatmul.f32.gmra.mxu0 %v2353
        %v4756 = vpop.f32.mrf.mxu0
        %v4757 = vadd.f32 0.0, %v4756
        %4758 = vmatmul.f32.gmra.mxu0 %v2355
        %v4759 = vpop.f32.mrf.mxu0
        %v4760 = vadd.f32 0.0, %v4759
        %4761 = vmatmul.f32.gmra.mxu0 %v2357
        %v4762 = vpop.f32.mrf.mxu0
        %v4763 = vadd.f32 0.0, %v4762
        %4764 = vmatmul.f32.gmra.mxu0 %v2359
        %v4765 = vpop.f32.mrf.mxu0
        %4766 = vmatmul.f32.gmra.mxu0 %v2361
        %v4767 = vpop.f32.mrf.mxu0
        %4768 = vmatmul.f32.gmra.mxu0 %v2363
        %v4769 = vpop.f32.mrf.mxu0
        %4770 = vmatmul.f32.gmra.mxu0 %v2365
        %v4771 = vpop.f32.mrf.mxu0
        %4772 = vmatmul.f32.gmra.mxu0 %v2367
        %v4773 = vpop.f32.mrf.mxu0
        %v4774 = vadd.f32 0.0, %v4773
        %4775 = vmatmul.f32.gmra.mxu0 %v2369
        %v4776 = vpop.f32.mrf.mxu0
        %v4777 = vadd.f32 0.0, %v4776
        %4778 = vmatmul.f32.gmra.mxu0 %v2371
        %v4779 = vpop.f32.mrf.mxu0
        %v4780 = vadd.f32 0.0, %v4779
        %4781 = vmatmul.f32.gmra.mxu0 %v4577
        %v4782 = vpop.f32.mrf.mxu0
        %4783 = vmatmul.f32.gmra.mxu0 %v4579
        %v4784 = vpop.f32.mrf.mxu0
        %4785 = vmatmul.f32.gmra.mxu0 %v4581
        %v4786 = vpop.f32.mrf.mxu0
        %4787 = vmatmul.f32.gmra.mxu0 %v4583
        %v4788 = vpop.f32.mrf.mxu0
        %4789 = vmatmul.f32.gmra.mxu0 %v4585
        %v4790 = vpop.f32.mrf.mxu0
        %4791 = vmatmul.f32.gmra.mxu0 %v4587
        %v4792 = vpop.f32.mrf.mxu0
        %v4793 = vadd.f32 0.0, %v4792
        %4794 = vmatmul.f32.gmra.mxu0 %v4589
        %v4795 = vpop.f32.mrf.mxu0
        %v4796 = vadd.f32 0.0, %v4795
        %4797 = vmatmul.f32.gmra.mxu0 %v4591
        %v4798 = vpop.f32.mrf.mxu0
        %v4799 = vadd.f32 0.0, %v4798
        %4800 = vdwg.mxu0
        %v4801 = vadd.f32 %v4520, %v4614
        %v4802 = vadd.f32 %v4521, %v4617
        %v4803 = vadd.f32 %v4522, %v4620
        %v4804 = vadd.f32 %v4523, %v4623
        %v4805 = vadd.f32 %v4524, %v4634
        %v4806 = vadd.f32 %v4525, %v4637
        %v4807 = vadd.f32 %v4526, %v4640
        %v4808 = vadd.f32 %v4527, %v4643
        %v4809 = vadd.f32 %v4528, %v4654
        %v4810 = vadd.f32 %v4529, %v4657
        %v4811 = vadd.f32 %v4530, %v4660
        %v4812 = vadd.f32 %v4531, %v4663
        %v4813 = vadd.f32 %v4532, %v4674
        %v4814 = vadd.f32 %v4533, %v4677
        %v4815 = vadd.f32 %v4534, %v4680
        %v4816 = vadd.f32 %v4535, %v4683
        %v4817 = vadd.f32 %v4536, %v4694
        %v4818 = vadd.f32 %v4537, %v4697
        %v4819 = vadd.f32 %v4538, %v4700
        %v4820 = vadd.f32 %v4539, %v4703
        %v4821 = vadd.f32 %v4540, %v4714
        %v4822 = vadd.f32 %v4541, %v4717
        %v4823 = vadd.f32 %v4542, %v4720
        %v4824 = vadd.f32 %v4543, %v4723
        %v4825 = vadd.f32 %v4544, %v4734
        %v4826 = vadd.f32 %v4545, %v4737
        %v4827 = vadd.f32 %v4546, %v4740
        %v4828 = vadd.f32 %v4547, %v4743
        %v4829 = vadd.f32 %v4548, %v4754
        %v4830 = vadd.f32 %v4549, %v4757
        %v4831 = vadd.f32 %v4550, %v4760
        %v4832 = vadd.f32 %v4551, %v4763
        %v4833 = vadd.f32 %v4552, %v4774
        %v4834 = vadd.f32 %v4553, %v4777
        %v4835 = vadd.f32 %v4554, %v4780
        %v4836 = vadd.f32 %v4555, %v4793
        %v4837 = vadd.f32 %v4556, %v4796
        %v4838 = vadd.f32 %v4557, %v4799
        %s4839 = scalar_lea.vmem %s3, 56
        %v4840 = vld [vmem:[%s4839] sm:$0x3f]
        %v4841 = vrot.slane %v1959, 4
        %v4842 = vsel %vm2941, %v3091, %v4841
        %v4843 = vrot.slane %v1960, 4
        %v4844 = vsel %vm2941, %v4841, %v4843
        %v4845 = vrot.slane %v1961, 4
        %v4846 = vsel %vm2941, %v4843, %v4845
        %v4847 = vrot.slane %v1962, 4
        %v4848 = vsel %vm2941, %v4845, %v4847
        %v4849 = vrot.slane %v1963, 4
        %v4850 = vsel %vm2941, %v4847, %v4849
        %v4851 = vrot.slane %v1964, 4
        %v4852 = vsel %vm2941, %v4849, %v4851
        %v4853 = vrot.slane %v1965, 4
        %v4854 = vsel %vm2941, %v4851, %v4853
        %v4855 = vrot.slane %v1966, 4
        %v4856 = vsel %vm2941, %v4853, %v4855
        %v4857 = vsel %vm2222, %v4842, 0
        %v4859 = vsel %vm2222, %v4844, 0
        %v4861 = vsel %vm2222, %v4846, 0
        %v4863 = vsel %vm2222, %v4848, 0
        %v4865 = vsel %vm2222, %v4850, 0
        %v4867 = vsel %vm2222, %v4852, 0
        %v4869 = vsel %vm2222, %v4854, 0
        %v4871 = vsel %vm2222, %v4856, 0
        %v4874 = vsel %vm2070, %v4840, 0
        %4876 = vmatpush.msra.mxu0 0.0
        %4877 = vmatpush.msra.mxu0 0.0
        %4878 = vmatpush.msra.mxu0 0.0
        %4879 = vmatpush.msra.mxu0 0.0
        %4880 = vmatpush.msra.mxu0 0.0
        %4881 = vmatpush.msra.mxu0 0.0
        %4882 = vmatpush.msra.mxu0 0.0
        %4883 = vmatpush.msra.mxu0 0.0
        %4884 = vmatpush.msra.mxu0 0.0
        %4885 = vmatpush.msra.mxu0 0.0
        %4886 = vmatpush.msra.mxu0 0.0
        %4887 = vmatpush.msra.mxu0 0.0
        %4888 = vmatpush.msra.mxu0 0.0
        %4889 = vmatpush.msra.mxu0 0.0
        %4890 = vmatpush.msra.mxu0 0.0
        %4891 = vmatpush.msra.mxu0 %v4874
        %4892 = vmatmul.f32.gmra.mxu0 %v3109
        %v4893 = vpop.f32.mrf.mxu0
        %v4894 = vadd.f32 0.0, %v4893
        %4895 = vmatmul.f32.gmra.mxu0 %v3111
        %v4896 = vpop.f32.mrf.mxu0
        %v4897 = vadd.f32 0.0, %v4896
        %4898 = vmatmul.f32.gmra.mxu0 %v3113
        %v4899 = vpop.f32.mrf.mxu0
        %v4900 = vadd.f32 0.0, %v4899
        %4901 = vmatmul.f32.gmra.mxu0 %v3115
        %v4902 = vpop.f32.mrf.mxu0
        %v4903 = vadd.f32 0.0, %v4902
        %4904 = vmatmul.f32.gmra.mxu0 %v3117
        %v4905 = vpop.f32.mrf.mxu0
        %4906 = vmatmul.f32.gmra.mxu0 %v3119
        %v4907 = vpop.f32.mrf.mxu0
        %4908 = vmatmul.f32.gmra.mxu0 %v3121
        %v4909 = vpop.f32.mrf.mxu0
        %4910 = vmatmul.f32.gmra.mxu0 %v3123
        %v4911 = vpop.f32.mrf.mxu0
        %4912 = vmatmul.f32.gmra.mxu0 %v3125
        %v4913 = vpop.f32.mrf.mxu0
        %v4914 = vadd.f32 0.0, %v4913
        %4915 = vmatmul.f32.gmra.mxu0 %v3127
        %v4916 = vpop.f32.mrf.mxu0
        %v4917 = vadd.f32 0.0, %v4916
        %4918 = vmatmul.f32.gmra.mxu0 %v3129
        %v4919 = vpop.f32.mrf.mxu0
        %v4920 = vadd.f32 0.0, %v4919
        %4921 = vmatmul.f32.gmra.mxu0 %v3131
        %v4922 = vpop.f32.mrf.mxu0
        %v4923 = vadd.f32 0.0, %v4922
        %4924 = vmatmul.f32.gmra.mxu0 %v3133
        %v4925 = vpop.f32.mrf.mxu0
        %4926 = vmatmul.f32.gmra.mxu0 %v3135
        %v4927 = vpop.f32.mrf.mxu0
        %4928 = vmatmul.f32.gmra.mxu0 %v3137
        %v4929 = vpop.f32.mrf.mxu0
        %4930 = vmatmul.f32.gmra.mxu0 %v3139
        %v4931 = vpop.f32.mrf.mxu0
        %4932 = vmatmul.f32.gmra.mxu0 %v3141
        %v4933 = vpop.f32.mrf.mxu0
        %v4934 = vadd.f32 0.0, %v4933
        %4935 = vmatmul.f32.gmra.mxu0 %v3143
        %v4936 = vpop.f32.mrf.mxu0
        %v4937 = vadd.f32 0.0, %v4936
        %4938 = vmatmul.f32.gmra.mxu0 %v3145
        %v4939 = vpop.f32.mrf.mxu0
        %v4940 = vadd.f32 0.0, %v4939
        %4941 = vmatmul.f32.gmra.mxu0 %v3147
        %v4942 = vpop.f32.mrf.mxu0
        %v4943 = vadd.f32 0.0, %v4942
        %4944 = vmatmul.f32.gmra.mxu0 %v3149
        %v4945 = vpop.f32.mrf.mxu0
        %4946 = vmatmul.f32.gmra.mxu0 %v3151
        %v4947 = vpop.f32.mrf.mxu0
        %4948 = vmatmul.f32.gmra.mxu0 %v3153
        %v4949 = vpop.f32.mrf.mxu0
        %4950 = vmatmul.f32.gmra.mxu0 %v3155
        %v4951 = vpop.f32.mrf.mxu0
        %4952 = vmatmul.f32.gmra.mxu0 %v3157
        %v4953 = vpop.f32.mrf.mxu0
        %v4954 = vadd.f32 0.0, %v4953
        %4955 = vmatmul.f32.gmra.mxu0 %v3159
        %v4956 = vpop.f32.mrf.mxu0
        %v4957 = vadd.f32 0.0, %v4956
        %4958 = vmatmul.f32.gmra.mxu0 %v3161
        %v4959 = vpop.f32.mrf.mxu0
        %v4960 = vadd.f32 0.0, %v4959
        %4961 = vmatmul.f32.gmra.mxu0 %v3163
        %v4962 = vpop.f32.mrf.mxu0
        %v4963 = vadd.f32 0.0, %v4962
        %4964 = vmatmul.f32.gmra.mxu0 %v3165
        %v4965 = vpop.f32.mrf.mxu0
        %4966 = vmatmul.f32.gmra.mxu0 %v3167
        %v4967 = vpop.f32.mrf.mxu0
        %4968 = vmatmul.f32.gmra.mxu0 %v3169
        %v4969 = vpop.f32.mrf.mxu0
        %4970 = vmatmul.f32.gmra.mxu0 %v3171
        %v4971 = vpop.f32.mrf.mxu0
        %4972 = vmatmul.f32.gmra.mxu0 %v3173
        %v4973 = vpop.f32.mrf.mxu0
        %v4974 = vadd.f32 0.0, %v4973
        %4975 = vmatmul.f32.gmra.mxu0 %v3175
        %v4976 = vpop.f32.mrf.mxu0
        %v4977 = vadd.f32 0.0, %v4976
        %4978 = vmatmul.f32.gmra.mxu0 %v3177
        %v4979 = vpop.f32.mrf.mxu0
        %v4980 = vadd.f32 0.0, %v4979
        %4981 = vmatmul.f32.gmra.mxu0 %v3179
        %v4982 = vpop.f32.mrf.mxu0
        %v4983 = vadd.f32 0.0, %v4982
        %4984 = vmatmul.f32.gmra.mxu0 %v3181
        %v4985 = vpop.f32.mrf.mxu0
        %4986 = vmatmul.f32.gmra.mxu0 %v3183
        %v4987 = vpop.f32.mrf.mxu0
        %4988 = vmatmul.f32.gmra.mxu0 %v3185
        %v4989 = vpop.f32.mrf.mxu0
        %4990 = vmatmul.f32.gmra.mxu0 %v3187
        %v4991 = vpop.f32.mrf.mxu0
        %4992 = vmatmul.f32.gmra.mxu0 %v3189
        %v4993 = vpop.f32.mrf.mxu0
        %v4994 = vadd.f32 0.0, %v4993
        %4995 = vmatmul.f32.gmra.mxu0 %v3191
        %v4996 = vpop.f32.mrf.mxu0
        %v4997 = vadd.f32 0.0, %v4996
        %4998 = vmatmul.f32.gmra.mxu0 %v3193
        %v4999 = vpop.f32.mrf.mxu0
        %v5000 = vadd.f32 0.0, %v4999
        %5001 = vmatmul.f32.gmra.mxu0 %v3195
        %v5002 = vpop.f32.mrf.mxu0
        %v5003 = vadd.f32 0.0, %v5002
        %5004 = vmatmul.f32.gmra.mxu0 %v3197
        %v5005 = vpop.f32.mrf.mxu0
        %5006 = vmatmul.f32.gmra.mxu0 %v3199
        %v5007 = vpop.f32.mrf.mxu0
        %5008 = vmatmul.f32.gmra.mxu0 %v3201
        %v5009 = vpop.f32.mrf.mxu0
        %5010 = vmatmul.f32.gmra.mxu0 %v3203
        %v5011 = vpop.f32.mrf.mxu0
        %5012 = vmatmul.f32.gmra.mxu0 %v3205
        %v5013 = vpop.f32.mrf.mxu0
        %v5014 = vadd.f32 0.0, %v5013
        %5015 = vmatmul.f32.gmra.mxu0 %v3207
        %v5016 = vpop.f32.mrf.mxu0
        %v5017 = vadd.f32 0.0, %v5016
        %5018 = vmatmul.f32.gmra.mxu0 %v3209
        %v5019 = vpop.f32.mrf.mxu0
        %v5020 = vadd.f32 0.0, %v5019
        %5021 = vmatmul.f32.gmra.mxu0 %v3211
        %v5022 = vpop.f32.mrf.mxu0
        %v5023 = vadd.f32 0.0, %v5022
        %5024 = vmatmul.f32.gmra.mxu0 %v3213
        %v5025 = vpop.f32.mrf.mxu0
        %5026 = vmatmul.f32.gmra.mxu0 %v3215
        %v5027 = vpop.f32.mrf.mxu0
        %5028 = vmatmul.f32.gmra.mxu0 %v3217
        %v5029 = vpop.f32.mrf.mxu0
        %5030 = vmatmul.f32.gmra.mxu0 %v3219
        %v5031 = vpop.f32.mrf.mxu0
        %5032 = vmatmul.f32.gmra.mxu0 %v3221
        %v5033 = vpop.f32.mrf.mxu0
        %v5034 = vadd.f32 0.0, %v5033
        %5035 = vmatmul.f32.gmra.mxu0 %v3223
        %v5036 = vpop.f32.mrf.mxu0
        %v5037 = vadd.f32 0.0, %v5036
        %5038 = vmatmul.f32.gmra.mxu0 %v3225
        %v5039 = vpop.f32.mrf.mxu0
        %v5040 = vadd.f32 0.0, %v5039
        %5041 = vmatmul.f32.gmra.mxu0 %v3227
        %v5042 = vpop.f32.mrf.mxu0
        %v5043 = vadd.f32 0.0, %v5042
        %5044 = vmatmul.f32.gmra.mxu0 %v3229
        %v5045 = vpop.f32.mrf.mxu0
        %5046 = vmatmul.f32.gmra.mxu0 %v3231
        %v5047 = vpop.f32.mrf.mxu0
        %5048 = vmatmul.f32.gmra.mxu0 %v3233
        %v5049 = vpop.f32.mrf.mxu0
        %5050 = vmatmul.f32.gmra.mxu0 %v3235
        %v5051 = vpop.f32.mrf.mxu0
        %5052 = vmatmul.f32.gmra.mxu0 %v3237
        %v5053 = vpop.f32.mrf.mxu0
        %v5054 = vadd.f32 0.0, %v5053
        %5055 = vmatmul.f32.gmra.mxu0 %v3239
        %v5056 = vpop.f32.mrf.mxu0
        %v5057 = vadd.f32 0.0, %v5056
        %5058 = vmatmul.f32.gmra.mxu0 %v3241
        %v5059 = vpop.f32.mrf.mxu0
        %v5060 = vadd.f32 0.0, %v5059
        %5061 = vmatmul.f32.gmra.mxu0 %v4857
        %v5062 = vpop.f32.mrf.mxu0
        %5063 = vmatmul.f32.gmra.mxu0 %v4859
        %v5064 = vpop.f32.mrf.mxu0
        %5065 = vmatmul.f32.gmra.mxu0 %v4861
        %v5066 = vpop.f32.mrf.mxu0
        %5067 = vmatmul.f32.gmra.mxu0 %v4863
        %v5068 = vpop.f32.mrf.mxu0
        %5069 = vmatmul.f32.gmra.mxu0 %v4865
        %v5070 = vpop.f32.mrf.mxu0
        %5071 = vmatmul.f32.gmra.mxu0 %v4867
        %v5072 = vpop.f32.mrf.mxu0
        %v5073 = vadd.f32 0.0, %v5072
        %5074 = vmatmul.f32.gmra.mxu0 %v4869
        %v5075 = vpop.f32.mrf.mxu0
        %v5076 = vadd.f32 0.0, %v5075
        %5077 = vmatmul.f32.gmra.mxu0 %v4871
        %v5078 = vpop.f32.mrf.mxu0
        %v5079 = vadd.f32 0.0, %v5078
        %5080 = vdwg.mxu0
        %v5081 = vadd.f32 %v4801, %v4894
        %v5082 = vadd.f32 %v4802, %v4897
        %v5083 = vadd.f32 %v4803, %v4900
        %v5084 = vadd.f32 %v4804, %v4903
        %v5085 = vadd.f32 %v4805, %v4914
        %v5086 = vadd.f32 %v4806, %v4917
        %v5087 = vadd.f32 %v4807, %v4920
        %v5088 = vadd.f32 %v4808, %v4923
        %v5089 = vadd.f32 %v4809, %v4934
        %v5090 = vadd.f32 %v4810, %v4937
        %v5091 = vadd.f32 %v4811, %v4940
        %v5092 = vadd.f32 %v4812, %v4943
        %v5093 = vadd.f32 %v4813, %v4954
        %v5094 = vadd.f32 %v4814, %v4957
        %v5095 = vadd.f32 %v4815, %v4960
        %v5096 = vadd.f32 %v4816, %v4963
        %v5097 = vadd.f32 %v4817, %v4974
        %v5098 = vadd.f32 %v4818, %v4977
        %v5099 = vadd.f32 %v4819, %v4980
        %v5100 = vadd.f32 %v4820, %v4983
        %v5101 = vadd.f32 %v4821, %v4994
        %v5102 = vadd.f32 %v4822, %v4997
        %v5103 = vadd.f32 %v4823, %v5000
        %v5104 = vadd.f32 %v4824, %v5003
        %v5105 = vadd.f32 %v4825, %v5014
        %v5106 = vadd.f32 %v4826, %v5017
        %v5107 = vadd.f32 %v4827, %v5020
        %v5108 = vadd.f32 %v4828, %v5023
        %v5109 = vadd.f32 %v4829, %v5034
        %v5110 = vadd.f32 %v4830, %v5037
        %v5111 = vadd.f32 %v4831, %v5040
        %v5112 = vadd.f32 %v4832, %v5043
        %v5113 = vadd.f32 %v4833, %v5054
        %v5114 = vadd.f32 %v4834, %v5057
        %v5115 = vadd.f32 %v4835, %v5060
        %v5116 = vadd.f32 %v4836, %v5073
        %v5117 = vadd.f32 %v4837, %v5076
        %v5118 = vadd.f32 %v4838, %v5079
        %s5119 = scalar_lea.vmem %s3, 64
        %v5120 = vld [vmem:[%s5119] sm:$0x3f]
        %v5121 = vrot.slane %v1959, 6
        %v5122 = vsel %vm3491, %v3641, %v5121
        %v5123 = vrot.slane %v1960, 6
        %v5124 = vsel %vm3491, %v5121, %v5123
        %v5125 = vrot.slane %v1961, 6
        %v5126 = vsel %vm3491, %v5123, %v5125
        %v5127 = vrot.slane %v1962, 6
        %v5128 = vsel %vm3491, %v5125, %v5127
        %v5129 = vrot.slane %v1963, 6
        %v5130 = vsel %vm3491, %v5127, %v5129
        %v5131 = vrot.slane %v1964, 6
        %v5132 = vsel %vm3491, %v5129, %v5131
        %v5133 = vrot.slane %v1965, 6
        %v5134 = vsel %vm3491, %v5131, %v5133
        %v5135 = vrot.slane %v1966, 6
        %v5136 = vsel %vm3491, %v5133, %v5135
        %v5137 = vsel %vm2222, %v5122, 0
        %v5139 = vsel %vm2222, %v5124, 0
        %v5141 = vsel %vm2222, %v5126, 0
        %v5143 = vsel %vm2222, %v5128, 0
        %v5145 = vsel %vm2222, %v5130, 0
        %v5147 = vsel %vm2222, %v5132, 0
        %v5149 = vsel %vm2222, %v5134, 0
        %v5151 = vsel %vm2222, %v5136, 0
        %v5154 = vsel %vm2070, %v5120, 0
        %5156 = vmatpush.msra.mxu0 0.0
        %5157 = vmatpush.msra.mxu0 0.0
        %5158 = vmatpush.msra.mxu0 0.0
        %5159 = vmatpush.msra.mxu0 0.0
        %5160 = vmatpush.msra.mxu0 0.0
        %5161 = vmatpush.msra.mxu0 0.0
        %5162 = vmatpush.msra.mxu0 0.0
        %5163 = vmatpush.msra.mxu0 0.0
        %5164 = vmatpush.msra.mxu0 0.0
        %5165 = vmatpush.msra.mxu0 0.0
        %5166 = vmatpush.msra.mxu0 0.0
        %5167 = vmatpush.msra.mxu0 0.0
        %5168 = vmatpush.msra.mxu0 0.0
        %5169 = vmatpush.msra.mxu0 0.0
        %5170 = vmatpush.msra.mxu0 0.0
        %5171 = vmatpush.msra.mxu0 %v5154
        %5172 = vmatmul.f32.gmra.mxu0 %v3659
        %v5173 = vpop.f32.mrf.mxu0
        %v5174 = vadd.f32 0.0, %v5173
        %5175 = vmatmul.f32.gmra.mxu0 %v3661
        %v5176 = vpop.f32.mrf.mxu0
        %v5177 = vadd.f32 0.0, %v5176
        %5178 = vmatmul.f32.gmra.mxu0 %v3663
        %v5179 = vpop.f32.mrf.mxu0
        %v5180 = vadd.f32 0.0, %v5179
        %5181 = vmatmul.f32.gmra.mxu0 %v3665
        %v5182 = vpop.f32.mrf.mxu0
        %v5183 = vadd.f32 0.0, %v5182
        %5184 = vmatmul.f32.gmra.mxu0 %v3667
        %v5185 = vpop.f32.mrf.mxu0
        %5186 = vmatmul.f32.gmra.mxu0 %v3669
        %v5187 = vpop.f32.mrf.mxu0
        %5188 = vmatmul.f32.gmra.mxu0 %v3671
        %v5189 = vpop.f32.mrf.mxu0
        %5190 = vmatmul.f32.gmra.mxu0 %v3673
        %v5191 = vpop.f32.mrf.mxu0
        %5192 = vmatmul.f32.gmra.mxu0 %v3675
        %v5193 = vpop.f32.mrf.mxu0
        %v5194 = vadd.f32 0.0, %v5193
        %5195 = vmatmul.f32.gmra.mxu0 %v3677
        %v5196 = vpop.f32.mrf.mxu0
        %v5197 = vadd.f32 0.0, %v5196
        %5198 = vmatmul.f32.gmra.mxu0 %v3679
        %v5199 = vpop.f32.mrf.mxu0
        %v5200 = vadd.f32 0.0, %v5199
        %5201 = vmatmul.f32.gmra.mxu0 %v3681
        %v5202 = vpop.f32.mrf.mxu0
        %v5203 = vadd.f32 0.0, %v5202
        %5204 = vmatmul.f32.gmra.mxu0 %v3683
        %v5205 = vpop.f32.mrf.mxu0
        %5206 = vmatmul.f32.gmra.mxu0 %v3685
        %v5207 = vpop.f32.mrf.mxu0
        %5208 = vmatmul.f32.gmra.mxu0 %v3687
        %v5209 = vpop.f32.mrf.mxu0
        %5210 = vmatmul.f32.gmra.mxu0 %v3689
        %v5211 = vpop.f32.mrf.mxu0
        %5212 = vmatmul.f32.gmra.mxu0 %v3691
        %v5213 = vpop.f32.mrf.mxu0
        %v5214 = vadd.f32 0.0, %v5213
        %5215 = vmatmul.f32.gmra.mxu0 %v3693
        %v5216 = vpop.f32.mrf.mxu0
        %v5217 = vadd.f32 0.0, %v5216
        %5218 = vmatmul.f32.gmra.mxu0 %v3695
        %v5219 = vpop.f32.mrf.mxu0
        %v5220 = vadd.f32 0.0, %v5219
        %5221 = vmatmul.f32.gmra.mxu0 %v3697
        %v5222 = vpop.f32.mrf.mxu0
        %v5223 = vadd.f32 0.0, %v5222
        %5224 = vmatmul.f32.gmra.mxu0 %v3699
        %v5225 = vpop.f32.mrf.mxu0
        %5226 = vmatmul.f32.gmra.mxu0 %v3701
        %v5227 = vpop.f32.mrf.mxu0
        %5228 = vmatmul.f32.gmra.mxu0 %v3703
        %v5229 = vpop.f32.mrf.mxu0
        %5230 = vmatmul.f32.gmra.mxu0 %v3705
        %v5231 = vpop.f32.mrf.mxu0
        %5232 = vmatmul.f32.gmra.mxu0 %v3707
        %v5233 = vpop.f32.mrf.mxu0
        %v5234 = vadd.f32 0.0, %v5233
        %5235 = vmatmul.f32.gmra.mxu0 %v3709
        %v5236 = vpop.f32.mrf.mxu0
        %v5237 = vadd.f32 0.0, %v5236
        %5238 = vmatmul.f32.gmra.mxu0 %v3711
        %v5239 = vpop.f32.mrf.mxu0
        %v5240 = vadd.f32 0.0, %v5239
        %5241 = vmatmul.f32.gmra.mxu0 %v3713
        %v5242 = vpop.f32.mrf.mxu0
        %v5243 = vadd.f32 0.0, %v5242
        %5244 = vmatmul.f32.gmra.mxu0 %v3715
        %v5245 = vpop.f32.mrf.mxu0
        %5246 = vmatmul.f32.gmra.mxu0 %v3717
        %v5247 = vpop.f32.mrf.mxu0
        %5248 = vmatmul.f32.gmra.mxu0 %v3719
        %v5249 = vpop.f32.mrf.mxu0
        %5250 = vmatmul.f32.gmra.mxu0 %v3721
        %v5251 = vpop.f32.mrf.mxu0
        %5252 = vmatmul.f32.gmra.mxu0 %v3723
        %v5253 = vpop.f32.mrf.mxu0
        %v5254 = vadd.f32 0.0, %v5253
        %5255 = vmatmul.f32.gmra.mxu0 %v3725
        %v5256 = vpop.f32.mrf.mxu0
        %v5257 = vadd.f32 0.0, %v5256
        %5258 = vmatmul.f32.gmra.mxu0 %v3727
        %v5259 = vpop.f32.mrf.mxu0
        %v5260 = vadd.f32 0.0, %v5259
        %5261 = vmatmul.f32.gmra.mxu0 %v3729
        %v5262 = vpop.f32.mrf.mxu0
        %v5263 = vadd.f32 0.0, %v5262
        %5264 = vmatmul.f32.gmra.mxu0 %v3731
        %v5265 = vpop.f32.mrf.mxu0
        %5266 = vmatmul.f32.gmra.mxu0 %v3733
        %v5267 = vpop.f32.mrf.mxu0
        %5268 = vmatmul.f32.gmra.mxu0 %v3735
        %v5269 = vpop.f32.mrf.mxu0
        %5270 = vmatmul.f32.gmra.mxu0 %v3737
        %v5271 = vpop.f32.mrf.mxu0
        %5272 = vmatmul.f32.gmra.mxu0 %v3739
        %v5273 = vpop.f32.mrf.mxu0
        %v5274 = vadd.f32 0.0, %v5273
        %5275 = vmatmul.f32.gmra.mxu0 %v3741
        %v5276 = vpop.f32.mrf.mxu0
        %v5277 = vadd.f32 0.0, %v5276
        %5278 = vmatmul.f32.gmra.mxu0 %v3743
        %v5279 = vpop.f32.mrf.mxu0
        %v5280 = vadd.f32 0.0, %v5279
        %5281 = vmatmul.f32.gmra.mxu0 %v3745
        %v5282 = vpop.f32.mrf.mxu0
        %v5283 = vadd.f32 0.0, %v5282
        %5284 = vmatmul.f32.gmra.mxu0 %v3747
        %v5285 = vpop.f32.mrf.mxu0
        %5286 = vmatmul.f32.gmra.mxu0 %v3749
        %v5287 = vpop.f32.mrf.mxu0
        %5288 = vmatmul.f32.gmra.mxu0 %v3751
        %v5289 = vpop.f32.mrf.mxu0
        %5290 = vmatmul.f32.gmra.mxu0 %v3753
        %v5291 = vpop.f32.mrf.mxu0
        %5292 = vmatmul.f32.gmra.mxu0 %v3755
        %v5293 = vpop.f32.mrf.mxu0
        %v5294 = vadd.f32 0.0, %v5293
        %5295 = vmatmul.f32.gmra.mxu0 %v3757
        %v5296 = vpop.f32.mrf.mxu0
        %v5297 = vadd.f32 0.0, %v5296
        %5298 = vmatmul.f32.gmra.mxu0 %v3759
        %v5299 = vpop.f32.mrf.mxu0
        %v5300 = vadd.f32 0.0, %v5299
        %5301 = vmatmul.f32.gmra.mxu0 %v3761
        %v5302 = vpop.f32.mrf.mxu0
        %v5303 = vadd.f32 0.0, %v5302
        %5304 = vmatmul.f32.gmra.mxu0 %v3763
        %v5305 = vpop.f32.mrf.mxu0
        %5306 = vmatmul.f32.gmra.mxu0 %v3765
        %v5307 = vpop.f32.mrf.mxu0
        %5308 = vmatmul.f32.gmra.mxu0 %v3767
        %v5309 = vpop.f32.mrf.mxu0
        %5310 = vmatmul.f32.gmra.mxu0 %v3769
        %v5311 = vpop.f32.mrf.mxu0
        %5312 = vmatmul.f32.gmra.mxu0 %v3771
        %v5313 = vpop.f32.mrf.mxu0
        %v5314 = vadd.f32 0.0, %v5313
        %5315 = vmatmul.f32.gmra.mxu0 %v3773
        %v5316 = vpop.f32.mrf.mxu0
        %v5317 = vadd.f32 0.0, %v5316
        %5318 = vmatmul.f32.gmra.mxu0 %v3775
        %v5319 = vpop.f32.mrf.mxu0
        %v5320 = vadd.f32 0.0, %v5319
        %5321 = vmatmul.f32.gmra.mxu0 %v3777
        %v5322 = vpop.f32.mrf.mxu0
        %v5323 = vadd.f32 0.0, %v5322
        %5324 = vmatmul.f32.gmra.mxu0 %v3779
        %v5325 = vpop.f32.mrf.mxu0
        %5326 = vmatmul.f32.gmra.mxu0 %v3781
        %v5327 = vpop.f32.mrf.mxu0
        %5328 = vmatmul.f32.gmra.mxu0 %v3783
        %v5329 = vpop.f32.mrf.mxu0
        %5330 = vmatmul.f32.gmra.mxu0 %v3785
        %v5331 = vpop.f32.mrf.mxu0
        %5332 = vmatmul.f32.gmra.mxu0 %v3787
        %v5333 = vpop.f32.mrf.mxu0
        %v5334 = vadd.f32 0.0, %v5333
        %5335 = vmatmul.f32.gmra.mxu0 %v3789
        %v5336 = vpop.f32.mrf.mxu0
        %v5337 = vadd.f32 0.0, %v5336
        %5338 = vmatmul.f32.gmra.mxu0 %v3791
        %v5339 = vpop.f32.mrf.mxu0
        %v5340 = vadd.f32 0.0, %v5339
        %5341 = vmatmul.f32.gmra.mxu0 %v5137
        %v5342 = vpop.f32.mrf.mxu0
        %5343 = vmatmul.f32.gmra.mxu0 %v5139
        %v5344 = vpop.f32.mrf.mxu0
        %5345 = vmatmul.f32.gmra.mxu0 %v5141
        %v5346 = vpop.f32.mrf.mxu0
        %5347 = vmatmul.f32.gmra.mxu0 %v5143
        %v5348 = vpop.f32.mrf.mxu0
        %5349 = vmatmul.f32.gmra.mxu0 %v5145
        %v5350 = vpop.f32.mrf.mxu0
        %5351 = vmatmul.f32.gmra.mxu0 %v5147
        %v5352 = vpop.f32.mrf.mxu0
        %v5353 = vadd.f32 0.0, %v5352
        %5354 = vmatmul.f32.gmra.mxu0 %v5149
        %v5355 = vpop.f32.mrf.mxu0
        %v5356 = vadd.f32 0.0, %v5355
        %5357 = vmatmul.f32.gmra.mxu0 %v5151
        %v5358 = vpop.f32.mrf.mxu0
        %v5359 = vadd.f32 0.0, %v5358
        %5360 = vdwg.mxu0
        %v5361 = vadd.f32 %v5081, %v5174
        %v5362 = vadd.f32 %v5082, %v5177
        %v5363 = vadd.f32 %v5083, %v5180
        %v5364 = vadd.f32 %v5084, %v5183
        %v5365 = vadd.f32 %v5085, %v5194
        %v5366 = vadd.f32 %v5086, %v5197
        %v5367 = vadd.f32 %v5087, %v5200
        %v5368 = vadd.f32 %v5088, %v5203
        %v5369 = vadd.f32 %v5089, %v5214
        %v5370 = vadd.f32 %v5090, %v5217
        %v5371 = vadd.f32 %v5091, %v5220
        %v5372 = vadd.f32 %v5092, %v5223
        %v5373 = vadd.f32 %v5093, %v5234
        %v5374 = vadd.f32 %v5094, %v5237
        %v5375 = vadd.f32 %v5095, %v5240
        %v5376 = vadd.f32 %v5096, %v5243
        %v5377 = vadd.f32 %v5097, %v5254
        %v5378 = vadd.f32 %v5098, %v5257
        %v5379 = vadd.f32 %v5099, %v5260
        %v5380 = vadd.f32 %v5100, %v5263
        %v5381 = vadd.f32 %v5101, %v5274
        %v5382 = vadd.f32 %v5102, %v5277
        %v5383 = vadd.f32 %v5103, %v5280
        %v5384 = vadd.f32 %v5104, %v5283
        %v5385 = vadd.f32 %v5105, %v5294
        %v5386 = vadd.f32 %v5106, %v5297
        %v5387 = vadd.f32 %v5107, %v5300
        %v5388 = vadd.f32 %v5108, %v5303
        %v5389 = vadd.f32 %v5109, %v5314
        %v5390 = vadd.f32 %v5110, %v5317
        %v5391 = vadd.f32 %v5111, %v5320
        %v5392 = vadd.f32 %v5112, %v5323
        %v5393 = vadd.f32 %v5113, %v5334
        %v5394 = vadd.f32 %v5114, %v5337
        %v5395 = vadd.f32 %v5115, %v5340
        %v5396 = vadd.f32 %v5116, %v5353
        %v5397 = vadd.f32 %v5117, %v5356
        %v5398 = vadd.f32 %v5118, %v5359
        %s5399 = scalar_lea.vmem %s3, 72
        %v5400 = vld [vmem:[%s5399] sm:$0x3f]
        %v5401 = vsel %vm2222, %v1966, 0
        %v5404 = vsel %vm2070, %v5400, 0
        %5406 = vmatpush.msra.mxu0 0.0
        %5407 = vmatpush.msra.mxu0 0.0
        %5408 = vmatpush.msra.mxu0 0.0
        %5409 = vmatpush.msra.mxu0 0.0
        %5410 = vmatpush.msra.mxu0 0.0
        %5411 = vmatpush.msra.mxu0 0.0
        %5412 = vmatpush.msra.mxu0 0.0
        %5413 = vmatpush.msra.mxu0 0.0
        %5414 = vmatpush.msra.mxu0 0.0
        %5415 = vmatpush.msra.mxu0 0.0
        %5416 = vmatpush.msra.mxu0 0.0
        %5417 = vmatpush.msra.mxu0 0.0
        %5418 = vmatpush.msra.mxu0 0.0
        %5419 = vmatpush.msra.mxu0 0.0
        %5420 = vmatpush.msra.mxu0 0.0
        %5421 = vmatpush.msra.mxu0 %v5404
        %5422 = vmatmul.f32.gmra.mxu0 %v2599
        %v5423 = vpop.f32.mrf.mxu0
        %v5424 = vadd.f32 0.0, %v5423
        %5425 = vmatmul.f32.gmra.mxu0 %v2601
        %v5426 = vpop.f32.mrf.mxu0
        %v5427 = vadd.f32 0.0, %v5426
        %5428 = vmatmul.f32.gmra.mxu0 %v2603
        %v5429 = vpop.f32.mrf.mxu0
        %v5430 = vadd.f32 0.0, %v5429
        %5431 = vmatmul.f32.gmra.mxu0 %v2605
        %v5432 = vpop.f32.mrf.mxu0
        %v5433 = vadd.f32 0.0, %v5432
        %5434 = vmatmul.f32.gmra.mxu0 %v2607
        %v5435 = vpop.f32.mrf.mxu0
        %5436 = vmatmul.f32.gmra.mxu0 %v2609
        %v5437 = vpop.f32.mrf.mxu0
        %5438 = vmatmul.f32.gmra.mxu0 %v2611
        %v5439 = vpop.f32.mrf.mxu0
        %5440 = vmatmul.f32.gmra.mxu0 %v2613
        %v5441 = vpop.f32.mrf.mxu0
        %5442 = vmatmul.f32.gmra.mxu0 %v2615
        %v5443 = vpop.f32.mrf.mxu0
        %v5444 = vadd.f32 0.0, %v5443
        %5445 = vmatmul.f32.gmra.mxu0 %v2617
        %v5446 = vpop.f32.mrf.mxu0
        %v5447 = vadd.f32 0.0, %v5446
        %5448 = vmatmul.f32.gmra.mxu0 %v2619
        %v5449 = vpop.f32.mrf.mxu0
        %v5450 = vadd.f32 0.0, %v5449
        %5451 = vmatmul.f32.gmra.mxu0 %v2621
        %v5452 = vpop.f32.mrf.mxu0
        %v5453 = vadd.f32 0.0, %v5452
        %5454 = vmatmul.f32.gmra.mxu0 %v2623
        %v5455 = vpop.f32.mrf.mxu0
        %5456 = vmatmul.f32.gmra.mxu0 %v2625
        %v5457 = vpop.f32.mrf.mxu0
        %5458 = vmatmul.f32.gmra.mxu0 %v2627
        %v5459 = vpop.f32.mrf.mxu0
        %5460 = vmatmul.f32.gmra.mxu0 %v2629
        %v5461 = vpop.f32.mrf.mxu0
        %5462 = vmatmul.f32.gmra.mxu0 %v2631
        %v5463 = vpop.f32.mrf.mxu0
        %v5464 = vadd.f32 0.0, %v5463
        %5465 = vmatmul.f32.gmra.mxu0 %v2633
        %v5466 = vpop.f32.mrf.mxu0
        %v5467 = vadd.f32 0.0, %v5466
        %5468 = vmatmul.f32.gmra.mxu0 %v2635
        %v5469 = vpop.f32.mrf.mxu0
        %v5470 = vadd.f32 0.0, %v5469
        %5471 = vmatmul.f32.gmra.mxu0 %v2637
        %v5472 = vpop.f32.mrf.mxu0
        %v5473 = vadd.f32 0.0, %v5472
        %5474 = vmatmul.f32.gmra.mxu0 %v2639
        %v5475 = vpop.f32.mrf.mxu0
        %5476 = vmatmul.f32.gmra.mxu0 %v2641
        %v5477 = vpop.f32.mrf.mxu0
        %5478 = vmatmul.f32.gmra.mxu0 %v2643
        %v5479 = vpop.f32.mrf.mxu0
        %5480 = vmatmul.f32.gmra.mxu0 %v2645
        %v5481 = vpop.f32.mrf.mxu0
        %5482 = vmatmul.f32.gmra.mxu0 %v2647
        %v5483 = vpop.f32.mrf.mxu0
        %v5484 = vadd.f32 0.0, %v5483
        %5485 = vmatmul.f32.gmra.mxu0 %v2649
        %v5486 = vpop.f32.mrf.mxu0
        %v5487 = vadd.f32 0.0, %v5486
        %5488 = vmatmul.f32.gmra.mxu0 %v2651
        %v5489 = vpop.f32.mrf.mxu0
        %v5490 = vadd.f32 0.0, %v5489
        %5491 = vmatmul.f32.gmra.mxu0 %v2653
        %v5492 = vpop.f32.mrf.mxu0
        %v5493 = vadd.f32 0.0, %v5492
        %5494 = vmatmul.f32.gmra.mxu0 %v2655
        %v5495 = vpop.f32.mrf.mxu0
        %5496 = vmatmul.f32.gmra.mxu0 %v2657
        %v5497 = vpop.f32.mrf.mxu0
        %5498 = vmatmul.f32.gmra.mxu0 %v2659
        %v5499 = vpop.f32.mrf.mxu0
        %5500 = vmatmul.f32.gmra.mxu0 %v2661
        %v5501 = vpop.f32.mrf.mxu0
        %5502 = vmatmul.f32.gmra.mxu0 %v2663
        %v5503 = vpop.f32.mrf.mxu0
        %v5504 = vadd.f32 0.0, %v5503
        %5505 = vmatmul.f32.gmra.mxu0 %v2665
        %v5506 = vpop.f32.mrf.mxu0
        %v5507 = vadd.f32 0.0, %v5506
        %5508 = vmatmul.f32.gmra.mxu0 %v2667
        %v5509 = vpop.f32.mrf.mxu0
        %v5510 = vadd.f32 0.0, %v5509
        %5511 = vmatmul.f32.gmra.mxu0 %v2669
        %v5512 = vpop.f32.mrf.mxu0
        %v5513 = vadd.f32 0.0, %v5512
        %5514 = vmatmul.f32.gmra.mxu0 %v2671
        %v5515 = vpop.f32.mrf.mxu0
        %5516 = vmatmul.f32.gmra.mxu0 %v2673
        %v5517 = vpop.f32.mrf.mxu0
        %5518 = vmatmul.f32.gmra.mxu0 %v2675
        %v5519 = vpop.f32.mrf.mxu0
        %5520 = vmatmul.f32.gmra.mxu0 %v2677
        %v5521 = vpop.f32.mrf.mxu0
        %5522 = vmatmul.f32.gmra.mxu0 %v2679
        %v5523 = vpop.f32.mrf.mxu0
        %v5524 = vadd.f32 0.0, %v5523
        %5525 = vmatmul.f32.gmra.mxu0 %v2681
        %v5526 = vpop.f32.mrf.mxu0
        %v5527 = vadd.f32 0.0, %v5526
        %5528 = vmatmul.f32.gmra.mxu0 %v2683
        %v5529 = vpop.f32.mrf.mxu0
        %v5530 = vadd.f32 0.0, %v5529
        %5531 = vmatmul.f32.gmra.mxu0 %v2685
        %v5532 = vpop.f32.mrf.mxu0
        %v5533 = vadd.f32 0.0, %v5532
        %5534 = vmatmul.f32.gmra.mxu0 %v2687
        %v5535 = vpop.f32.mrf.mxu0
        %5536 = vmatmul.f32.gmra.mxu0 %v2689
        %v5537 = vpop.f32.mrf.mxu0
        %5538 = vmatmul.f32.gmra.mxu0 %v2691
        %v5539 = vpop.f32.mrf.mxu0
        %5540 = vmatmul.f32.gmra.mxu0 %v2693
        %v5541 = vpop.f32.mrf.mxu0
        %5542 = vmatmul.f32.gmra.mxu0 %v2695
        %v5543 = vpop.f32.mrf.mxu0
        %v5544 = vadd.f32 0.0, %v5543
        %5545 = vmatmul.f32.gmra.mxu0 %v2697
        %v5546 = vpop.f32.mrf.mxu0
        %v5547 = vadd.f32 0.0, %v5546
        %5548 = vmatmul.f32.gmra.mxu0 %v2699
        %v5549 = vpop.f32.mrf.mxu0
        %v5550 = vadd.f32 0.0, %v5549
        %5551 = vmatmul.f32.gmra.mxu0 %v2701
        %v5552 = vpop.f32.mrf.mxu0
        %v5553 = vadd.f32 0.0, %v5552
        %5554 = vmatmul.f32.gmra.mxu0 %v2703
        %v5555 = vpop.f32.mrf.mxu0
        %5556 = vmatmul.f32.gmra.mxu0 %v2705
        %v5557 = vpop.f32.mrf.mxu0
        %5558 = vmatmul.f32.gmra.mxu0 %v2707
        %v5559 = vpop.f32.mrf.mxu0
        %5560 = vmatmul.f32.gmra.mxu0 %v2709
        %v5561 = vpop.f32.mrf.mxu0
        %5562 = vmatmul.f32.gmra.mxu0 %v2711
        %v5563 = vpop.f32.mrf.mxu0
        %v5564 = vadd.f32 0.0, %v5563
        %5565 = vmatmul.f32.gmra.mxu0 %v2713
        %v5566 = vpop.f32.mrf.mxu0
        %v5567 = vadd.f32 0.0, %v5566
        %5568 = vmatmul.f32.gmra.mxu0 %v2715
        %v5569 = vpop.f32.mrf.mxu0
        %v5570 = vadd.f32 0.0, %v5569
        %5571 = vmatmul.f32.gmra.mxu0 %v2717
        %v5572 = vpop.f32.mrf.mxu0
        %v5573 = vadd.f32 0.0, %v5572
        %5574 = vmatmul.f32.gmra.mxu0 %v2719
        %v5575 = vpop.f32.mrf.mxu0
        %5576 = vmatmul.f32.gmra.mxu0 %v2721
        %v5577 = vpop.f32.mrf.mxu0
        %5578 = vmatmul.f32.gmra.mxu0 %v2723
        %v5579 = vpop.f32.mrf.mxu0
        %5580 = vmatmul.f32.gmra.mxu0 %v2725
        %v5581 = vpop.f32.mrf.mxu0
        %5582 = vmatmul.f32.gmra.mxu0 %v2727
        %v5583 = vpop.f32.mrf.mxu0
        %v5584 = vadd.f32 0.0, %v5583
        %5585 = vmatmul.f32.gmra.mxu0 %v2729
        %v5586 = vpop.f32.mrf.mxu0
        %v5587 = vadd.f32 0.0, %v5586
        %5588 = vmatmul.f32.gmra.mxu0 %v4041
        %v5589 = vpop.f32.mrf.mxu0
        %v5590 = vadd.f32 0.0, %v5589
        %5591 = vmatmul.f32.gmra.mxu0 %v4292
        %v5592 = vpop.f32.mrf.mxu0
        %5593 = vmatmul.f32.gmra.mxu0 %v4295
        %v5594 = vpop.f32.mrf.mxu0
        %5595 = vmatmul.f32.gmra.mxu0 %v4298
        %v5596 = vpop.f32.mrf.mxu0
        %5597 = vmatmul.f32.gmra.mxu0 %v4301
        %v5598 = vpop.f32.mrf.mxu0
        %5599 = vmatmul.f32.gmra.mxu0 %v4304
        %v5600 = vpop.f32.mrf.mxu0
        %5601 = vmatmul.f32.gmra.mxu0 %v4307
        %v5602 = vpop.f32.mrf.mxu0
        %v5603 = vadd.f32 0.0, %v5602
        %5604 = vmatmul.f32.gmra.mxu0 %v4310
        %v5605 = vpop.f32.mrf.mxu0
        %v5606 = vadd.f32 0.0, %v5605
        %5607 = vmatmul.f32.gmra.mxu0 %v5401
        %v5608 = vpop.f32.mrf.mxu0
        %v5609 = vadd.f32 0.0, %v5608
        %5610 = vdwg.mxu0
        %v5611 = vadd.f32 %v5361, %v5424
        %v5612 = vadd.f32 %v5362, %v5427
        %v5613 = vadd.f32 %v5363, %v5430
        %v5614 = vadd.f32 %v5364, %v5433
        %v5615 = vadd.f32 %v5365, %v5444
        %v5616 = vadd.f32 %v5366, %v5447
        %v5617 = vadd.f32 %v5367, %v5450
        %v5618 = vadd.f32 %v5368, %v5453
        %v5619 = vadd.f32 %v5369, %v5464
        %v5620 = vadd.f32 %v5370, %v5467
        %v5621 = vadd.f32 %v5371, %v5470
        %v5622 = vadd.f32 %v5372, %v5473
        %v5623 = vadd.f32 %v5373, %v5484
        %v5624 = vadd.f32 %v5374, %v5487
        %v5625 = vadd.f32 %v5375, %v5490
        %v5626 = vadd.f32 %v5376, %v5493
        %v5627 = vadd.f32 %v5377, %v5504
        %v5628 = vadd.f32 %v5378, %v5507
        %v5629 = vadd.f32 %v5379, %v5510
        %v5630 = vadd.f32 %v5380, %v5513
        %v5631 = vadd.f32 %v5381, %v5524
        %v5632 = vadd.f32 %v5382, %v5527
        %v5633 = vadd.f32 %v5383, %v5530
        %v5634 = vadd.f32 %v5384, %v5533
        %v5635 = vadd.f32 %v5385, %v5544
        %v5636 = vadd.f32 %v5386, %v5547
        %v5637 = vadd.f32 %v5387, %v5550
        %v5638 = vadd.f32 %v5388, %v5553
        %v5639 = vadd.f32 %v5389, %v5564
        %v5640 = vadd.f32 %v5390, %v5567
        %v5641 = vadd.f32 %v5391, %v5570
        %v5642 = vadd.f32 %v5392, %v5573
        %v5643 = vadd.f32 %v5393, %v5584
        %v5644 = vadd.f32 %v5394, %v5587
        %v5645 = vadd.f32 %v5395, %v5590
        %v5646 = vadd.f32 %v5396, %v5603
        %v5647 = vadd.f32 %v5397, %v5606
        %v5648 = vadd.f32 %v5398, %v5609
        %s5649 = scalar_lea.vmem %s3, 80
        %v5650 = vld [vmem:[%s5649] sm:$0x3f]
        %v5652 = vsel %vm2222, %v1967, 0
        %v5655 = vsel %vm2222, %v1968, 0
        %v5658 = vsel %vm2222, %v1969, 0
        %v5661 = vsel %vm2222, %v1970, 0
        %v5664 = vsel %vm2222, %v1971, 0
        %v5667 = vsel %vm2222, %v1972, 0
        %v5670 = vsel %vm2222, %v1973, 0
        %v5673 = vsel %vm2070, %v5650, 0
        %5675 = vmatpush.msra.mxu0 0.0
        %5676 = vmatpush.msra.mxu0 0.0
        %5677 = vmatpush.msra.mxu0 0.0
        %5678 = vmatpush.msra.mxu0 0.0
        %5679 = vmatpush.msra.mxu0 0.0
        %5680 = vmatpush.msra.mxu0 0.0
        %5681 = vmatpush.msra.mxu0 0.0
        %5682 = vmatpush.msra.mxu0 0.0
        %5683 = vmatpush.msra.mxu0 0.0
        %5684 = vmatpush.msra.mxu0 0.0
        %5685 = vmatpush.msra.mxu0 0.0
        %5686 = vmatpush.msra.mxu0 0.0
        %5687 = vmatpush.msra.mxu0 0.0
        %5688 = vmatpush.msra.mxu0 0.0
        %5689 = vmatpush.msra.mxu0 0.0
        %5690 = vmatpush.msra.mxu0 %v5673
        %5691 = vmatmul.f32.gmra.mxu0 %v2613
        %v5692 = vpop.f32.mrf.mxu0
        %v5693 = vadd.f32 0.0, %v5692
        %5694 = vmatmul.f32.gmra.mxu0 %v2615
        %v5695 = vpop.f32.mrf.mxu0
        %v5696 = vadd.f32 0.0, %v5695
        %5697 = vmatmul.f32.gmra.mxu0 %v2617
        %v5698 = vpop.f32.mrf.mxu0
        %v5699 = vadd.f32 0.0, %v5698
        %5700 = vmatmul.f32.gmra.mxu0 %v2619
        %v5701 = vpop.f32.mrf.mxu0
        %v5702 = vadd.f32 0.0, %v5701
        %5703 = vmatmul.f32.gmra.mxu0 %v2621
        %v5704 = vpop.f32.mrf.mxu0
        %5705 = vmatmul.f32.gmra.mxu0 %v2623
        %v5706 = vpop.f32.mrf.mxu0
        %5707 = vmatmul.f32.gmra.mxu0 %v2625
        %v5708 = vpop.f32.mrf.mxu0
        %5709 = vmatmul.f32.gmra.mxu0 %v2627
        %v5710 = vpop.f32.mrf.mxu0
        %5711 = vmatmul.f32.gmra.mxu0 %v2629
        %v5712 = vpop.f32.mrf.mxu0
        %v5713 = vadd.f32 0.0, %v5712
        %5714 = vmatmul.f32.gmra.mxu0 %v2631
        %v5715 = vpop.f32.mrf.mxu0
        %v5716 = vadd.f32 0.0, %v5715
        %5717 = vmatmul.f32.gmra.mxu0 %v2633
        %v5718 = vpop.f32.mrf.mxu0
        %v5719 = vadd.f32 0.0, %v5718
        %5720 = vmatmul.f32.gmra.mxu0 %v2635
        %v5721 = vpop.f32.mrf.mxu0
        %v5722 = vadd.f32 0.0, %v5721
        %5723 = vmatmul.f32.gmra.mxu0 %v2637
        %v5724 = vpop.f32.mrf.mxu0
        %5725 = vmatmul.f32.gmra.mxu0 %v2639
        %v5726 = vpop.f32.mrf.mxu0
        %5727 = vmatmul.f32.gmra.mxu0 %v2641
        %v5728 = vpop.f32.mrf.mxu0
        %5729 = vmatmul.f32.gmra.mxu0 %v2643
        %v5730 = vpop.f32.mrf.mxu0
        %5731 = vmatmul.f32.gmra.mxu0 %v2645
        %v5732 = vpop.f32.mrf.mxu0
        %v5733 = vadd.f32 0.0, %v5732
        %5734 = vmatmul.f32.gmra.mxu0 %v2647
        %v5735 = vpop.f32.mrf.mxu0
        %v5736 = vadd.f32 0.0, %v5735
        %5737 = vmatmul.f32.gmra.mxu0 %v2649
        %v5738 = vpop.f32.mrf.mxu0
        %v5739 = vadd.f32 0.0, %v5738
        %5740 = vmatmul.f32.gmra.mxu0 %v2651
        %v5741 = vpop.f32.mrf.mxu0
        %v5742 = vadd.f32 0.0, %v5741
        %5743 = vmatmul.f32.gmra.mxu0 %v2653
        %v5744 = vpop.f32.mrf.mxu0
        %5745 = vmatmul.f32.gmra.mxu0 %v2655
        %v5746 = vpop.f32.mrf.mxu0
        %5747 = vmatmul.f32.gmra.mxu0 %v2657
        %v5748 = vpop.f32.mrf.mxu0
        %5749 = vmatmul.f32.gmra.mxu0 %v2659
        %v5750 = vpop.f32.mrf.mxu0
        %5751 = vmatmul.f32.gmra.mxu0 %v2661
        %v5752 = vpop.f32.mrf.mxu0
        %v5753 = vadd.f32 0.0, %v5752
        %5754 = vmatmul.f32.gmra.mxu0 %v2663
        %v5755 = vpop.f32.mrf.mxu0
        %v5756 = vadd.f32 0.0, %v5755
        %5757 = vmatmul.f32.gmra.mxu0 %v2665
        %v5758 = vpop.f32.mrf.mxu0
        %v5759 = vadd.f32 0.0, %v5758
        %5760 = vmatmul.f32.gmra.mxu0 %v2667
        %v5761 = vpop.f32.mrf.mxu0
        %v5762 = vadd.f32 0.0, %v5761
        %5763 = vmatmul.f32.gmra.mxu0 %v2669
        %v5764 = vpop.f32.mrf.mxu0
        %5765 = vmatmul.f32.gmra.mxu0 %v2671
        %v5766 = vpop.f32.mrf.mxu0
        %5767 = vmatmul.f32.gmra.mxu0 %v2673
        %v5768 = vpop.f32.mrf.mxu0
        %5769 = vmatmul.f32.gmra.mxu0 %v2675
        %v5770 = vpop.f32.mrf.mxu0
        %5771 = vmatmul.f32.gmra.mxu0 %v2677
        %v5772 = vpop.f32.mrf.mxu0
        %v5773 = vadd.f32 0.0, %v5772
        %5774 = vmatmul.f32.gmra.mxu0 %v2679
        %v5775 = vpop.f32.mrf.mxu0
        %v5776 = vadd.f32 0.0, %v5775
        %5777 = vmatmul.f32.gmra.mxu0 %v2681
        %v5778 = vpop.f32.mrf.mxu0
        %v5779 = vadd.f32 0.0, %v5778
        %5780 = vmatmul.f32.gmra.mxu0 %v2683
        %v5781 = vpop.f32.mrf.mxu0
        %v5782 = vadd.f32 0.0, %v5781
        %5783 = vmatmul.f32.gmra.mxu0 %v2685
        %v5784 = vpop.f32.mrf.mxu0
        %5785 = vmatmul.f32.gmra.mxu0 %v2687
        %v5786 = vpop.f32.mrf.mxu0
        %5787 = vmatmul.f32.gmra.mxu0 %v2689
        %v5788 = vpop.f32.mrf.mxu0
        %5789 = vmatmul.f32.gmra.mxu0 %v2691
        %v5790 = vpop.f32.mrf.mxu0
        %5791 = vmatmul.f32.gmra.mxu0 %v2693
        %v5792 = vpop.f32.mrf.mxu0
        %v5793 = vadd.f32 0.0, %v5792
        %5794 = vmatmul.f32.gmra.mxu0 %v2695
        %v5795 = vpop.f32.mrf.mxu0
        %v5796 = vadd.f32 0.0, %v5795
        %5797 = vmatmul.f32.gmra.mxu0 %v2697
        %v5798 = vpop.f32.mrf.mxu0
        %v5799 = vadd.f32 0.0, %v5798
        %5800 = vmatmul.f32.gmra.mxu0 %v2699
        %v5801 = vpop.f32.mrf.mxu0
        %v5802 = vadd.f32 0.0, %v5801
        %5803 = vmatmul.f32.gmra.mxu0 %v2701
        %v5804 = vpop.f32.mrf.mxu0
        %5805 = vmatmul.f32.gmra.mxu0 %v2703
        %v5806 = vpop.f32.mrf.mxu0
        %5807 = vmatmul.f32.gmra.mxu0 %v2705
        %v5808 = vpop.f32.mrf.mxu0
        %5809 = vmatmul.f32.gmra.mxu0 %v2707
        %v5810 = vpop.f32.mrf.mxu0
        %5811 = vmatmul.f32.gmra.mxu0 %v2709
        %v5812 = vpop.f32.mrf.mxu0
        %v5813 = vadd.f32 0.0, %v5812
        %5814 = vmatmul.f32.gmra.mxu0 %v2711
        %v5815 = vpop.f32.mrf.mxu0
        %v5816 = vadd.f32 0.0, %v5815
        %5817 = vmatmul.f32.gmra.mxu0 %v2713
        %v5818 = vpop.f32.mrf.mxu0
        %v5819 = vadd.f32 0.0, %v5818
        %5820 = vmatmul.f32.gmra.mxu0 %v2715
        %v5821 = vpop.f32.mrf.mxu0
        %v5822 = vadd.f32 0.0, %v5821
        %5823 = vmatmul.f32.gmra.mxu0 %v2717
        %v5824 = vpop.f32.mrf.mxu0
        %5825 = vmatmul.f32.gmra.mxu0 %v2719
        %v5826 = vpop.f32.mrf.mxu0
        %5827 = vmatmul.f32.gmra.mxu0 %v2721
        %v5828 = vpop.f32.mrf.mxu0
        %5829 = vmatmul.f32.gmra.mxu0 %v2723
        %v5830 = vpop.f32.mrf.mxu0
        %5831 = vmatmul.f32.gmra.mxu0 %v2725
        %v5832 = vpop.f32.mrf.mxu0
        %v5833 = vadd.f32 0.0, %v5832
        %5834 = vmatmul.f32.gmra.mxu0 %v2727
        %v5835 = vpop.f32.mrf.mxu0
        %v5836 = vadd.f32 0.0, %v5835
        %5837 = vmatmul.f32.gmra.mxu0 %v2729
        %v5838 = vpop.f32.mrf.mxu0
        %v5839 = vadd.f32 0.0, %v5838
        %5840 = vmatmul.f32.gmra.mxu0 %v4041
        %v5841 = vpop.f32.mrf.mxu0
        %v5842 = vadd.f32 0.0, %v5841
        %5843 = vmatmul.f32.gmra.mxu0 %v4292
        %v5844 = vpop.f32.mrf.mxu0
        %5845 = vmatmul.f32.gmra.mxu0 %v4295
        %v5846 = vpop.f32.mrf.mxu0
        %5847 = vmatmul.f32.gmra.mxu0 %v4298
        %v5848 = vpop.f32.mrf.mxu0
        %5849 = vmatmul.f32.gmra.mxu0 %v4301
        %v5850 = vpop.f32.mrf.mxu0
        %5851 = vmatmul.f32.gmra.mxu0 %v4304
        %v5852 = vpop.f32.mrf.mxu0
        %v5853 = vadd.f32 0.0, %v5852
        %5854 = vmatmul.f32.gmra.mxu0 %v4307
        %v5855 = vpop.f32.mrf.mxu0
        %v5856 = vadd.f32 0.0, %v5855
        %5857 = vmatmul.f32.gmra.mxu0 %v4310
        %v5858 = vpop.f32.mrf.mxu0
        %v5859 = vadd.f32 0.0, %v5858
        %5860 = vmatmul.f32.gmra.mxu0 %v5401
        %v5861 = vpop.f32.mrf.mxu0
        %5862 = vmatmul.f32.gmra.mxu0 %v5652
        %v5863 = vpop.f32.mrf.mxu0
        %5864 = vmatmul.f32.gmra.mxu0 %v5655
        %v5865 = vpop.f32.mrf.mxu0
        %5866 = vmatmul.f32.gmra.mxu0 %v5658
        %v5867 = vpop.f32.mrf.mxu0
        %5868 = vmatmul.f32.gmra.mxu0 %v5661
        %v5869 = vpop.f32.mrf.mxu0
        %5870 = vmatmul.f32.gmra.mxu0 %v5664
        %v5871 = vpop.f32.mrf.mxu0
        %v5872 = vadd.f32 0.0, %v5871
        %5873 = vmatmul.f32.gmra.mxu0 %v5667
        %v5874 = vpop.f32.mrf.mxu0
        %v5875 = vadd.f32 0.0, %v5874
        %5876 = vmatmul.f32.gmra.mxu0 %v5670
        %v5877 = vpop.f32.mrf.mxu0
        %v5878 = vadd.f32 0.0, %v5877
        %5879 = vdwg.mxu0
        %v5880 = vadd.f32 %v5611, %v5693
        %v5881 = vadd.f32 %v5612, %v5696
        %v5882 = vadd.f32 %v5613, %v5699
        %v5883 = vadd.f32 %v5614, %v5702
        %v5884 = vadd.f32 %v5615, %v5713
        %v5885 = vadd.f32 %v5616, %v5716
        %v5886 = vadd.f32 %v5617, %v5719
        %v5887 = vadd.f32 %v5618, %v5722
        %v5888 = vadd.f32 %v5619, %v5733
        %v5889 = vadd.f32 %v5620, %v5736
        %v5890 = vadd.f32 %v5621, %v5739
        %v5891 = vadd.f32 %v5622, %v5742
        %v5892 = vadd.f32 %v5623, %v5753
        %v5893 = vadd.f32 %v5624, %v5756
        %v5894 = vadd.f32 %v5625, %v5759
        %v5895 = vadd.f32 %v5626, %v5762
        %v5896 = vadd.f32 %v5627, %v5773
        %v5897 = vadd.f32 %v5628, %v5776
        %v5898 = vadd.f32 %v5629, %v5779
        %v5899 = vadd.f32 %v5630, %v5782
        %v5900 = vadd.f32 %v5631, %v5793
        %v5901 = vadd.f32 %v5632, %v5796
        %v5902 = vadd.f32 %v5633, %v5799
        %v5903 = vadd.f32 %v5634, %v5802
        %v5904 = vadd.f32 %v5635, %v5813
        %v5905 = vadd.f32 %v5636, %v5816
        %v5906 = vadd.f32 %v5637, %v5819
        %v5907 = vadd.f32 %v5638, %v5822
        %v5908 = vadd.f32 %v5639, %v5833
        %v5909 = vadd.f32 %v5640, %v5836
        %v5910 = vadd.f32 %v5641, %v5839
        %v5911 = vadd.f32 %v5642, %v5842
        %v5912 = vadd.f32 %v5643, %v5853
        %v5913 = vadd.f32 %v5644, %v5856
        %v5914 = vadd.f32 %v5645, %v5859
        %v5915 = vadd.f32 %v5646, %v5872
        %v5916 = vadd.f32 %v5647, %v5875
        %v5917 = vadd.f32 %v5648, %v5878
        %s5918 = scalar_lea.vmem %s3, 88
        %v5919 = vld [vmem:[%s5918] sm:$0x3f]
        %v5921 = vrot.slane %v1967, 2
        %v5922 = vsel %vm2070, %v4575, %v5921
        %v5923 = vrot.slane %v1968, 2
        %v5924 = vsel %vm2070, %v5921, %v5923
        %v5925 = vrot.slane %v1969, 2
        %v5926 = vsel %vm2070, %v5923, %v5925
        %v5927 = vrot.slane %v1970, 2
        %v5928 = vsel %vm2070, %v5925, %v5927
        %v5929 = vrot.slane %v1971, 2
        %v5930 = vsel %vm2070, %v5927, %v5929
        %v5931 = vrot.slane %v1972, 2
        %v5932 = vsel %vm2070, %v5929, %v5931
        %v5933 = vrot.slane %v1973, 2
        %v5934 = vsel %vm2070, %v5931, %v5933
        %v5935 = vrot.slane %v1974, 2
        %v5936 = vsel %vm2070, %v5933, %v5935
        %v5937 = vsel %vm2222, %v5922, 0
        %v5939 = vsel %vm2222, %v5924, 0
        %v5941 = vsel %vm2222, %v5926, 0
        %v5943 = vsel %vm2222, %v5928, 0
        %v5945 = vsel %vm2222, %v5930, 0
        %v5947 = vsel %vm2222, %v5932, 0
        %v5949 = vsel %vm2222, %v5934, 0
        %v5951 = vsel %vm2222, %v5936, 0
        %v5954 = vsel %vm2070, %v5919, 0
        %5956 = vmatpush.msra.mxu0 0.0
        %5957 = vmatpush.msra.mxu0 0.0
        %5958 = vmatpush.msra.mxu0 0.0
        %5959 = vmatpush.msra.mxu0 0.0
        %5960 = vmatpush.msra.mxu0 0.0
        %5961 = vmatpush.msra.mxu0 0.0
        %5962 = vmatpush.msra.mxu0 0.0
        %5963 = vmatpush.msra.mxu0 0.0
        %5964 = vmatpush.msra.mxu0 0.0
        %5965 = vmatpush.msra.mxu0 0.0
        %5966 = vmatpush.msra.mxu0 0.0
        %5967 = vmatpush.msra.mxu0 0.0
        %5968 = vmatpush.msra.mxu0 0.0
        %5969 = vmatpush.msra.mxu0 0.0
        %5970 = vmatpush.msra.mxu0 0.0
        %5971 = vmatpush.msra.mxu0 %v5954
        %5972 = vmatmul.f32.gmra.mxu0 %v2255
        %v5973 = vpop.f32.mrf.mxu0
        %v5974 = vadd.f32 0.0, %v5973
        %5975 = vmatmul.f32.gmra.mxu0 %v2257
        %v5976 = vpop.f32.mrf.mxu0
        %v5977 = vadd.f32 0.0, %v5976
        %5978 = vmatmul.f32.gmra.mxu0 %v2259
        %v5979 = vpop.f32.mrf.mxu0
        %v5980 = vadd.f32 0.0, %v5979
        %5981 = vmatmul.f32.gmra.mxu0 %v2261
        %v5982 = vpop.f32.mrf.mxu0
        %v5983 = vadd.f32 0.0, %v5982
        %5984 = vmatmul.f32.gmra.mxu0 %v2263
        %v5985 = vpop.f32.mrf.mxu0
        %5986 = vmatmul.f32.gmra.mxu0 %v2265
        %v5987 = vpop.f32.mrf.mxu0
        %5988 = vmatmul.f32.gmra.mxu0 %v2267
        %v5989 = vpop.f32.mrf.mxu0
        %5990 = vmatmul.f32.gmra.mxu0 %v2269
        %v5991 = vpop.f32.mrf.mxu0
        %5992 = vmatmul.f32.gmra.mxu0 %v2271
        %v5993 = vpop.f32.mrf.mxu0
        %v5994 = vadd.f32 0.0, %v5993
        %5995 = vmatmul.f32.gmra.mxu0 %v2273
        %v5996 = vpop.f32.mrf.mxu0
        %v5997 = vadd.f32 0.0, %v5996
        %5998 = vmatmul.f32.gmra.mxu0 %v2275
        %v5999 = vpop.f32.mrf.mxu0
        %v6000 = vadd.f32 0.0, %v5999
        %6001 = vmatmul.f32.gmra.mxu0 %v2277
        %v6002 = vpop.f32.mrf.mxu0
        %v6003 = vadd.f32 0.0, %v6002
        %6004 = vmatmul.f32.gmra.mxu0 %v2279
        %v6005 = vpop.f32.mrf.mxu0
        %6006 = vmatmul.f32.gmra.mxu0 %v2281
        %v6007 = vpop.f32.mrf.mxu0
        %6008 = vmatmul.f32.gmra.mxu0 %v2283
        %v6009 = vpop.f32.mrf.mxu0
        %6010 = vmatmul.f32.gmra.mxu0 %v2285
        %v6011 = vpop.f32.mrf.mxu0
        %6012 = vmatmul.f32.gmra.mxu0 %v2287
        %v6013 = vpop.f32.mrf.mxu0
        %v6014 = vadd.f32 0.0, %v6013
        %6015 = vmatmul.f32.gmra.mxu0 %v2289
        %v6016 = vpop.f32.mrf.mxu0
        %v6017 = vadd.f32 0.0, %v6016
        %6018 = vmatmul.f32.gmra.mxu0 %v2291
        %v6019 = vpop.f32.mrf.mxu0
        %v6020 = vadd.f32 0.0, %v6019
        %6021 = vmatmul.f32.gmra.mxu0 %v2293
        %v6022 = vpop.f32.mrf.mxu0
        %v6023 = vadd.f32 0.0, %v6022
        %6024 = vmatmul.f32.gmra.mxu0 %v2295
        %v6025 = vpop.f32.mrf.mxu0
        %6026 = vmatmul.f32.gmra.mxu0 %v2297
        %v6027 = vpop.f32.mrf.mxu0
        %6028 = vmatmul.f32.gmra.mxu0 %v2299
        %v6029 = vpop.f32.mrf.mxu0
        %6030 = vmatmul.f32.gmra.mxu0 %v2301
        %v6031 = vpop.f32.mrf.mxu0
        %6032 = vmatmul.f32.gmra.mxu0 %v2303
        %v6033 = vpop.f32.mrf.mxu0
        %v6034 = vadd.f32 0.0, %v6033
        %6035 = vmatmul.f32.gmra.mxu0 %v2305
        %v6036 = vpop.f32.mrf.mxu0
        %v6037 = vadd.f32 0.0, %v6036
        %6038 = vmatmul.f32.gmra.mxu0 %v2307
        %v6039 = vpop.f32.mrf.mxu0
        %v6040 = vadd.f32 0.0, %v6039
        %6041 = vmatmul.f32.gmra.mxu0 %v2309
        %v6042 = vpop.f32.mrf.mxu0
        %v6043 = vadd.f32 0.0, %v6042
        %6044 = vmatmul.f32.gmra.mxu0 %v2311
        %v6045 = vpop.f32.mrf.mxu0
        %6046 = vmatmul.f32.gmra.mxu0 %v2313
        %v6047 = vpop.f32.mrf.mxu0
        %6048 = vmatmul.f32.gmra.mxu0 %v2315
        %v6049 = vpop.f32.mrf.mxu0
        %6050 = vmatmul.f32.gmra.mxu0 %v2317
        %v6051 = vpop.f32.mrf.mxu0
        %6052 = vmatmul.f32.gmra.mxu0 %v2319
        %v6053 = vpop.f32.mrf.mxu0
        %v6054 = vadd.f32 0.0, %v6053
        %6055 = vmatmul.f32.gmra.mxu0 %v2321
        %v6056 = vpop.f32.mrf.mxu0
        %v6057 = vadd.f32 0.0, %v6056
        %6058 = vmatmul.f32.gmra.mxu0 %v2323
        %v6059 = vpop.f32.mrf.mxu0
        %v6060 = vadd.f32 0.0, %v6059
        %6061 = vmatmul.f32.gmra.mxu0 %v2325
        %v6062 = vpop.f32.mrf.mxu0
        %v6063 = vadd.f32 0.0, %v6062
        %6064 = vmatmul.f32.gmra.mxu0 %v2327
        %v6065 = vpop.f32.mrf.mxu0
        %6066 = vmatmul.f32.gmra.mxu0 %v2329
        %v6067 = vpop.f32.mrf.mxu0
        %6068 = vmatmul.f32.gmra.mxu0 %v2331
        %v6069 = vpop.f32.mrf.mxu0
        %6070 = vmatmul.f32.gmra.mxu0 %v2333
        %v6071 = vpop.f32.mrf.mxu0
        %6072 = vmatmul.f32.gmra.mxu0 %v2335
        %v6073 = vpop.f32.mrf.mxu0
        %v6074 = vadd.f32 0.0, %v6073
        %6075 = vmatmul.f32.gmra.mxu0 %v2337
        %v6076 = vpop.f32.mrf.mxu0
        %v6077 = vadd.f32 0.0, %v6076
        %6078 = vmatmul.f32.gmra.mxu0 %v2339
        %v6079 = vpop.f32.mrf.mxu0
        %v6080 = vadd.f32 0.0, %v6079
        %6081 = vmatmul.f32.gmra.mxu0 %v2341
        %v6082 = vpop.f32.mrf.mxu0
        %v6083 = vadd.f32 0.0, %v6082
        %6084 = vmatmul.f32.gmra.mxu0 %v2343
        %v6085 = vpop.f32.mrf.mxu0
        %6086 = vmatmul.f32.gmra.mxu0 %v2345
        %v6087 = vpop.f32.mrf.mxu0
        %6088 = vmatmul.f32.gmra.mxu0 %v2347
        %v6089 = vpop.f32.mrf.mxu0
        %6090 = vmatmul.f32.gmra.mxu0 %v2349
        %v6091 = vpop.f32.mrf.mxu0
        %6092 = vmatmul.f32.gmra.mxu0 %v2351
        %v6093 = vpop.f32.mrf.mxu0
        %v6094 = vadd.f32 0.0, %v6093
        %6095 = vmatmul.f32.gmra.mxu0 %v2353
        %v6096 = vpop.f32.mrf.mxu0
        %v6097 = vadd.f32 0.0, %v6096
        %6098 = vmatmul.f32.gmra.mxu0 %v2355
        %v6099 = vpop.f32.mrf.mxu0
        %v6100 = vadd.f32 0.0, %v6099
        %6101 = vmatmul.f32.gmra.mxu0 %v2357
        %v6102 = vpop.f32.mrf.mxu0
        %v6103 = vadd.f32 0.0, %v6102
        %6104 = vmatmul.f32.gmra.mxu0 %v2359
        %v6105 = vpop.f32.mrf.mxu0
        %6106 = vmatmul.f32.gmra.mxu0 %v2361
        %v6107 = vpop.f32.mrf.mxu0
        %6108 = vmatmul.f32.gmra.mxu0 %v2363
        %v6109 = vpop.f32.mrf.mxu0
        %6110 = vmatmul.f32.gmra.mxu0 %v2365
        %v6111 = vpop.f32.mrf.mxu0
        %6112 = vmatmul.f32.gmra.mxu0 %v2367
        %v6113 = vpop.f32.mrf.mxu0
        %v6114 = vadd.f32 0.0, %v6113
        %6115 = vmatmul.f32.gmra.mxu0 %v2369
        %v6116 = vpop.f32.mrf.mxu0
        %v6117 = vadd.f32 0.0, %v6116
        %6118 = vmatmul.f32.gmra.mxu0 %v2371
        %v6119 = vpop.f32.mrf.mxu0
        %v6120 = vadd.f32 0.0, %v6119
        %6121 = vmatmul.f32.gmra.mxu0 %v4577
        %v6122 = vpop.f32.mrf.mxu0
        %v6123 = vadd.f32 0.0, %v6122
        %6124 = vmatmul.f32.gmra.mxu0 %v4579
        %v6125 = vpop.f32.mrf.mxu0
        %6126 = vmatmul.f32.gmra.mxu0 %v4581
        %v6127 = vpop.f32.mrf.mxu0
        %6128 = vmatmul.f32.gmra.mxu0 %v4583
        %v6129 = vpop.f32.mrf.mxu0
        %6130 = vmatmul.f32.gmra.mxu0 %v4585
        %v6131 = vpop.f32.mrf.mxu0
        %6132 = vmatmul.f32.gmra.mxu0 %v4587
        %v6133 = vpop.f32.mrf.mxu0
        %v6134 = vadd.f32 0.0, %v6133
        %6135 = vmatmul.f32.gmra.mxu0 %v4589
        %v6136 = vpop.f32.mrf.mxu0
        %v6137 = vadd.f32 0.0, %v6136
        %6138 = vmatmul.f32.gmra.mxu0 %v4591
        %v6139 = vpop.f32.mrf.mxu0
        %v6140 = vadd.f32 0.0, %v6139
        %6141 = vmatmul.f32.gmra.mxu0 %v5937
        %v6142 = vpop.f32.mrf.mxu0
        %6143 = vmatmul.f32.gmra.mxu0 %v5939
        %v6144 = vpop.f32.mrf.mxu0
        %6145 = vmatmul.f32.gmra.mxu0 %v5941
        %v6146 = vpop.f32.mrf.mxu0
        %6147 = vmatmul.f32.gmra.mxu0 %v5943
        %v6148 = vpop.f32.mrf.mxu0
        %6149 = vmatmul.f32.gmra.mxu0 %v5945
        %v6150 = vpop.f32.mrf.mxu0
        %6151 = vmatmul.f32.gmra.mxu0 %v5947
        %v6152 = vpop.f32.mrf.mxu0
        %v6153 = vadd.f32 0.0, %v6152
        %6154 = vmatmul.f32.gmra.mxu0 %v5949
        %v6155 = vpop.f32.mrf.mxu0
        %v6156 = vadd.f32 0.0, %v6155
        %6157 = vmatmul.f32.gmra.mxu0 %v5951
        %v6158 = vpop.f32.mrf.mxu0
        %v6159 = vadd.f32 0.0, %v6158
        %6160 = vdwg.mxu0
        %v6161 = vadd.f32 %v5880, %v5974
        %v6162 = vadd.f32 %v5881, %v5977
        %v6163 = vadd.f32 %v5882, %v5980
        %v6164 = vadd.f32 %v5883, %v5983
        %v6165 = vadd.f32 %v5884, %v5994
        %v6166 = vadd.f32 %v5885, %v5997
        %v6167 = vadd.f32 %v5886, %v6000
        %v6168 = vadd.f32 %v5887, %v6003
        %v6169 = vadd.f32 %v5888, %v6014
        %v6170 = vadd.f32 %v5889, %v6017
        %v6171 = vadd.f32 %v5890, %v6020
        %v6172 = vadd.f32 %v5891, %v6023
        %v6173 = vadd.f32 %v5892, %v6034
        %v6174 = vadd.f32 %v5893, %v6037
        %v6175 = vadd.f32 %v5894, %v6040
        %v6176 = vadd.f32 %v5895, %v6043
        %v6177 = vadd.f32 %v5896, %v6054
        %v6178 = vadd.f32 %v5897, %v6057
        %v6179 = vadd.f32 %v5898, %v6060
        %v6180 = vadd.f32 %v5899, %v6063
        %v6181 = vadd.f32 %v5900, %v6074
        %v6182 = vadd.f32 %v5901, %v6077
        %v6183 = vadd.f32 %v5902, %v6080
        %v6184 = vadd.f32 %v5903, %v6083
        %v6185 = vadd.f32 %v5904, %v6094
        %v6186 = vadd.f32 %v5905, %v6097
        %v6187 = vadd.f32 %v5906, %v6100
        %v6188 = vadd.f32 %v5907, %v6103
        %v6189 = vadd.f32 %v5908, %v6114
        %v6190 = vadd.f32 %v5909, %v6117
        %v6191 = vadd.f32 %v5910, %v6120
        %v6192 = vadd.f32 %v5911, %v6123
        %v6193 = vadd.f32 %v5912, %v6134
        %v6194 = vadd.f32 %v5913, %v6137
        %v6195 = vadd.f32 %v5914, %v6140
        %v6196 = vadd.f32 %v5915, %v6153
        %v6197 = vadd.f32 %v5916, %v6156
        %v6198 = vadd.f32 %v5917, %v6159
        %s6199 = scalar_lea.vmem %s3, 96
        %v6200 = vld [vmem:[%s6199] sm:$0x3f]
        %v6201 = vrot.slane %v1967, 4
        %v6202 = vsel %vm2941, %v4855, %v6201
        %v6203 = vrot.slane %v1968, 4
        %v6204 = vsel %vm2941, %v6201, %v6203
        %v6205 = vrot.slane %v1969, 4
        %v6206 = vsel %vm2941, %v6203, %v6205
        %v6207 = vrot.slane %v1970, 4
        %v6208 = vsel %vm2941, %v6205, %v6207
        %v6209 = vrot.slane %v1971, 4
        %v6210 = vsel %vm2941, %v6207, %v6209
        %v6211 = vrot.slane %v1972, 4
        %v6212 = vsel %vm2941, %v6209, %v6211
        %v6213 = vrot.slane %v1973, 4
        %v6214 = vsel %vm2941, %v6211, %v6213
        %v6215 = vrot.slane %v1974, 4
        %v6216 = vsel %vm2941, %v6213, %v6215
        %v6217 = vsel %vm2222, %v6202, 0
        %v6219 = vsel %vm2222, %v6204, 0
        %v6221 = vsel %vm2222, %v6206, 0
        %v6223 = vsel %vm2222, %v6208, 0
        %v6225 = vsel %vm2222, %v6210, 0
        %v6227 = vsel %vm2222, %v6212, 0
        %v6229 = vsel %vm2222, %v6214, 0
        %v6231 = vsel %vm2222, %v6216, 0
        %v6234 = vsel %vm2070, %v6200, 0
        %6236 = vmatpush.msra.mxu0 0.0
        %6237 = vmatpush.msra.mxu0 0.0
        %6238 = vmatpush.msra.mxu0 0.0
        %6239 = vmatpush.msra.mxu0 0.0
        %6240 = vmatpush.msra.mxu0 0.0
        %6241 = vmatpush.msra.mxu0 0.0
        %6242 = vmatpush.msra.mxu0 0.0
        %6243 = vmatpush.msra.mxu0 0.0
        %6244 = vmatpush.msra.mxu0 0.0
        %6245 = vmatpush.msra.mxu0 0.0
        %6246 = vmatpush.msra.mxu0 0.0
        %6247 = vmatpush.msra.mxu0 0.0
        %6248 = vmatpush.msra.mxu0 0.0
        %6249 = vmatpush.msra.mxu0 0.0
        %6250 = vmatpush.msra.mxu0 0.0
        %6251 = vmatpush.msra.mxu0 %v6234
        %6252 = vmatmul.f32.gmra.mxu0 %v3125
        %v6253 = vpop.f32.mrf.mxu0
        %v6254 = vadd.f32 0.0, %v6253
        %6255 = vmatmul.f32.gmra.mxu0 %v3127
        %v6256 = vpop.f32.mrf.mxu0
        %v6257 = vadd.f32 0.0, %v6256
        %6258 = vmatmul.f32.gmra.mxu0 %v3129
        %v6259 = vpop.f32.mrf.mxu0
        %v6260 = vadd.f32 0.0, %v6259
        %6261 = vmatmul.f32.gmra.mxu0 %v3131
        %v6262 = vpop.f32.mrf.mxu0
        %v6263 = vadd.f32 0.0, %v6262
        %6264 = vmatmul.f32.gmra.mxu0 %v3133
        %v6265 = vpop.f32.mrf.mxu0
        %6266 = vmatmul.f32.gmra.mxu0 %v3135
        %v6267 = vpop.f32.mrf.mxu0
        %6268 = vmatmul.f32.gmra.mxu0 %v3137
        %v6269 = vpop.f32.mrf.mxu0
        %6270 = vmatmul.f32.gmra.mxu0 %v3139
        %v6271 = vpop.f32.mrf.mxu0
        %6272 = vmatmul.f32.gmra.mxu0 %v3141
        %v6273 = vpop.f32.mrf.mxu0
        %v6274 = vadd.f32 0.0, %v6273
        %6275 = vmatmul.f32.gmra.mxu0 %v3143
        %v6276 = vpop.f32.mrf.mxu0
        %v6277 = vadd.f32 0.0, %v6276
        %6278 = vmatmul.f32.gmra.mxu0 %v3145
        %v6279 = vpop.f32.mrf.mxu0
        %v6280 = vadd.f32 0.0, %v6279
        %6281 = vmatmul.f32.gmra.mxu0 %v3147
        %v6282 = vpop.f32.mrf.mxu0
        %v6283 = vadd.f32 0.0, %v6282
        %6284 = vmatmul.f32.gmra.mxu0 %v3149
        %v6285 = vpop.f32.mrf.mxu0
        %6286 = vmatmul.f32.gmra.mxu0 %v3151
        %v6287 = vpop.f32.mrf.mxu0
        %6288 = vmatmul.f32.gmra.mxu0 %v3153
        %v6289 = vpop.f32.mrf.mxu0
        %6290 = vmatmul.f32.gmra.mxu0 %v3155
        %v6291 = vpop.f32.mrf.mxu0
        %6292 = vmatmul.f32.gmra.mxu0 %v3157
        %v6293 = vpop.f32.mrf.mxu0
        %v6294 = vadd.f32 0.0, %v6293
        %6295 = vmatmul.f32.gmra.mxu0 %v3159
        %v6296 = vpop.f32.mrf.mxu0
        %v6297 = vadd.f32 0.0, %v6296
        %6298 = vmatmul.f32.gmra.mxu0 %v3161
        %v6299 = vpop.f32.mrf.mxu0
        %v6300 = vadd.f32 0.0, %v6299
        %6301 = vmatmul.f32.gmra.mxu0 %v3163
        %v6302 = vpop.f32.mrf.mxu0
        %v6303 = vadd.f32 0.0, %v6302
        %6304 = vmatmul.f32.gmra.mxu0 %v3165
        %v6305 = vpop.f32.mrf.mxu0
        %6306 = vmatmul.f32.gmra.mxu0 %v3167
        %v6307 = vpop.f32.mrf.mxu0
        %6308 = vmatmul.f32.gmra.mxu0 %v3169
        %v6309 = vpop.f32.mrf.mxu0
        %6310 = vmatmul.f32.gmra.mxu0 %v3171
        %v6311 = vpop.f32.mrf.mxu0
        %6312 = vmatmul.f32.gmra.mxu0 %v3173
        %v6313 = vpop.f32.mrf.mxu0
        %v6314 = vadd.f32 0.0, %v6313
        %6315 = vmatmul.f32.gmra.mxu0 %v3175
        %v6316 = vpop.f32.mrf.mxu0
        %v6317 = vadd.f32 0.0, %v6316
        %6318 = vmatmul.f32.gmra.mxu0 %v3177
        %v6319 = vpop.f32.mrf.mxu0
        %v6320 = vadd.f32 0.0, %v6319
        %6321 = vmatmul.f32.gmra.mxu0 %v3179
        %v6322 = vpop.f32.mrf.mxu0
        %v6323 = vadd.f32 0.0, %v6322
        %6324 = vmatmul.f32.gmra.mxu0 %v3181
        %v6325 = vpop.f32.mrf.mxu0
        %6326 = vmatmul.f32.gmra.mxu0 %v3183
        %v6327 = vpop.f32.mrf.mxu0
        %6328 = vmatmul.f32.gmra.mxu0 %v3185
        %v6329 = vpop.f32.mrf.mxu0
        %6330 = vmatmul.f32.gmra.mxu0 %v3187
        %v6331 = vpop.f32.mrf.mxu0
        %6332 = vmatmul.f32.gmra.mxu0 %v3189
        %v6333 = vpop.f32.mrf.mxu0
        %v6334 = vadd.f32 0.0, %v6333
        %6335 = vmatmul.f32.gmra.mxu0 %v3191
        %v6336 = vpop.f32.mrf.mxu0
        %v6337 = vadd.f32 0.0, %v6336
        %6338 = vmatmul.f32.gmra.mxu0 %v3193
        %v6339 = vpop.f32.mrf.mxu0
        %v6340 = vadd.f32 0.0, %v6339
        %6341 = vmatmul.f32.gmra.mxu0 %v3195
        %v6342 = vpop.f32.mrf.mxu0
        %v6343 = vadd.f32 0.0, %v6342
        %6344 = vmatmul.f32.gmra.mxu0 %v3197
        %v6345 = vpop.f32.mrf.mxu0
        %6346 = vmatmul.f32.gmra.mxu0 %v3199
        %v6347 = vpop.f32.mrf.mxu0
        %6348 = vmatmul.f32.gmra.mxu0 %v3201
        %v6349 = vpop.f32.mrf.mxu0
        %6350 = vmatmul.f32.gmra.mxu0 %v3203
        %v6351 = vpop.f32.mrf.mxu0
        %6352 = vmatmul.f32.gmra.mxu0 %v3205
        %v6353 = vpop.f32.mrf.mxu0
        %v6354 = vadd.f32 0.0, %v6353
        %6355 = vmatmul.f32.gmra.mxu0 %v3207
        %v6356 = vpop.f32.mrf.mxu0
        %v6357 = vadd.f32 0.0, %v6356
        %6358 = vmatmul.f32.gmra.mxu0 %v3209
        %v6359 = vpop.f32.mrf.mxu0
        %v6360 = vadd.f32 0.0, %v6359
        %6361 = vmatmul.f32.gmra.mxu0 %v3211
        %v6362 = vpop.f32.mrf.mxu0
        %v6363 = vadd.f32 0.0, %v6362
        %6364 = vmatmul.f32.gmra.mxu0 %v3213
        %v6365 = vpop.f32.mrf.mxu0
        %6366 = vmatmul.f32.gmra.mxu0 %v3215
        %v6367 = vpop.f32.mrf.mxu0
        %6368 = vmatmul.f32.gmra.mxu0 %v3217
        %v6369 = vpop.f32.mrf.mxu0
        %6370 = vmatmul.f32.gmra.mxu0 %v3219
        %v6371 = vpop.f32.mrf.mxu0
        %6372 = vmatmul.f32.gmra.mxu0 %v3221
        %v6373 = vpop.f32.mrf.mxu0
        %v6374 = vadd.f32 0.0, %v6373
        %6375 = vmatmul.f32.gmra.mxu0 %v3223
        %v6376 = vpop.f32.mrf.mxu0
        %v6377 = vadd.f32 0.0, %v6376
        %6378 = vmatmul.f32.gmra.mxu0 %v3225
        %v6379 = vpop.f32.mrf.mxu0
        %v6380 = vadd.f32 0.0, %v6379
        %6381 = vmatmul.f32.gmra.mxu0 %v3227
        %v6382 = vpop.f32.mrf.mxu0
        %v6383 = vadd.f32 0.0, %v6382
        %6384 = vmatmul.f32.gmra.mxu0 %v3229
        %v6385 = vpop.f32.mrf.mxu0
        %6386 = vmatmul.f32.gmra.mxu0 %v3231
        %v6387 = vpop.f32.mrf.mxu0
        %6388 = vmatmul.f32.gmra.mxu0 %v3233
        %v6389 = vpop.f32.mrf.mxu0
        %6390 = vmatmul.f32.gmra.mxu0 %v3235
        %v6391 = vpop.f32.mrf.mxu0
        %6392 = vmatmul.f32.gmra.mxu0 %v3237
        %v6393 = vpop.f32.mrf.mxu0
        %v6394 = vadd.f32 0.0, %v6393
        %6395 = vmatmul.f32.gmra.mxu0 %v3239
        %v6396 = vpop.f32.mrf.mxu0
        %v6397 = vadd.f32 0.0, %v6396
        %6398 = vmatmul.f32.gmra.mxu0 %v3241
        %v6399 = vpop.f32.mrf.mxu0
        %v6400 = vadd.f32 0.0, %v6399
        %6401 = vmatmul.f32.gmra.mxu0 %v4857
        %v6402 = vpop.f32.mrf.mxu0
        %v6403 = vadd.f32 0.0, %v6402
        %6404 = vmatmul.f32.gmra.mxu0 %v4859
        %v6405 = vpop.f32.mrf.mxu0
        %6406 = vmatmul.f32.gmra.mxu0 %v4861
        %v6407 = vpop.f32.mrf.mxu0
        %6408 = vmatmul.f32.gmra.mxu0 %v4863
        %v6409 = vpop.f32.mrf.mxu0
        %6410 = vmatmul.f32.gmra.mxu0 %v4865
        %v6411 = vpop.f32.mrf.mxu0
        %6412 = vmatmul.f32.gmra.mxu0 %v4867
        %v6413 = vpop.f32.mrf.mxu0
        %v6414 = vadd.f32 0.0, %v6413
        %6415 = vmatmul.f32.gmra.mxu0 %v4869
        %v6416 = vpop.f32.mrf.mxu0
        %v6417 = vadd.f32 0.0, %v6416
        %6418 = vmatmul.f32.gmra.mxu0 %v4871
        %v6419 = vpop.f32.mrf.mxu0
        %v6420 = vadd.f32 0.0, %v6419
        %6421 = vmatmul.f32.gmra.mxu0 %v6217
        %v6422 = vpop.f32.mrf.mxu0
        %6423 = vmatmul.f32.gmra.mxu0 %v6219
        %v6424 = vpop.f32.mrf.mxu0
        %6425 = vmatmul.f32.gmra.mxu0 %v6221
        %v6426 = vpop.f32.mrf.mxu0
        %6427 = vmatmul.f32.gmra.mxu0 %v6223
        %v6428 = vpop.f32.mrf.mxu0
        %6429 = vmatmul.f32.gmra.mxu0 %v6225
        %v6430 = vpop.f32.mrf.mxu0
        %6431 = vmatmul.f32.gmra.mxu0 %v6227
        %v6432 = vpop.f32.mrf.mxu0
        %v6433 = vadd.f32 0.0, %v6432
        %6434 = vmatmul.f32.gmra.mxu0 %v6229
        %v6435 = vpop.f32.mrf.mxu0
        %v6436 = vadd.f32 0.0, %v6435
        %6437 = vmatmul.f32.gmra.mxu0 %v6231
        %v6438 = vpop.f32.mrf.mxu0
        %v6439 = vadd.f32 0.0, %v6438
        %6440 = vdwg.mxu0
        %v6441 = vadd.f32 %v6161, %v6254
        %v6442 = vadd.f32 %v6162, %v6257
        %v6443 = vadd.f32 %v6163, %v6260
        %v6444 = vadd.f32 %v6164, %v6263
        %v6445 = vadd.f32 %v6165, %v6274
        %v6446 = vadd.f32 %v6166, %v6277
        %v6447 = vadd.f32 %v6167, %v6280
        %v6448 = vadd.f32 %v6168, %v6283
        %v6449 = vadd.f32 %v6169, %v6294
        %v6450 = vadd.f32 %v6170, %v6297
        %v6451 = vadd.f32 %v6171, %v6300
        %v6452 = vadd.f32 %v6172, %v6303
        %v6453 = vadd.f32 %v6173, %v6314
        %v6454 = vadd.f32 %v6174, %v6317
        %v6455 = vadd.f32 %v6175, %v6320
        %v6456 = vadd.f32 %v6176, %v6323
        %v6457 = vadd.f32 %v6177, %v6334
        %v6458 = vadd.f32 %v6178, %v6337
        %v6459 = vadd.f32 %v6179, %v6340
        %v6460 = vadd.f32 %v6180, %v6343
        %v6461 = vadd.f32 %v6181, %v6354
        %v6462 = vadd.f32 %v6182, %v6357
        %v6463 = vadd.f32 %v6183, %v6360
        %v6464 = vadd.f32 %v6184, %v6363
        %v6465 = vadd.f32 %v6185, %v6374
        %v6466 = vadd.f32 %v6186, %v6377
        %v6467 = vadd.f32 %v6187, %v6380
        %v6468 = vadd.f32 %v6188, %v6383
        %v6469 = vadd.f32 %v6189, %v6394
        %v6470 = vadd.f32 %v6190, %v6397
        %v6471 = vadd.f32 %v6191, %v6400
        %v6472 = vadd.f32 %v6192, %v6403
        %v6473 = vadd.f32 %v6193, %v6414
        %v6474 = vadd.f32 %v6194, %v6417
        %v6475 = vadd.f32 %v6195, %v6420
        %v6476 = vadd.f32 %v6196, %v6433
        %v6477 = vadd.f32 %v6197, %v6436
        %v6478 = vadd.f32 %v6198, %v6439
        %s6479 = scalar_lea.vmem %s3, 104
        %v6480 = vld [vmem:[%s6479] sm:$0x3f]
        %v6481 = vrot.slane %v1967, 6
        %v6482 = vsel %vm3491, %v5135, %v6481
        %v6483 = vrot.slane %v1968, 6
        %v6484 = vsel %vm3491, %v6481, %v6483
        %v6485 = vrot.slane %v1969, 6
        %v6486 = vsel %vm3491, %v6483, %v6485
        %v6487 = vrot.slane %v1970, 6
        %v6488 = vsel %vm3491, %v6485, %v6487
        %v6489 = vrot.slane %v1971, 6
        %v6490 = vsel %vm3491, %v6487, %v6489
        %v6491 = vrot.slane %v1972, 6
        %v6492 = vsel %vm3491, %v6489, %v6491
        %v6493 = vrot.slane %v1973, 6
        %v6494 = vsel %vm3491, %v6491, %v6493
        %v6495 = vrot.slane %v1974, 6
        %v6496 = vsel %vm3491, %v6493, %v6495
        %v6497 = vsel %vm2222, %v6482, 0
        %v6499 = vsel %vm2222, %v6484, 0
        %v6501 = vsel %vm2222, %v6486, 0
        %v6503 = vsel %vm2222, %v6488, 0
        %v6505 = vsel %vm2222, %v6490, 0
        %v6507 = vsel %vm2222, %v6492, 0
        %v6509 = vsel %vm2222, %v6494, 0
        %v6511 = vsel %vm2222, %v6496, 0
        %v6514 = vsel %vm2070, %v6480, 0
        %6516 = vmatpush.msra.mxu0 0.0
        %6517 = vmatpush.msra.mxu0 0.0
        %6518 = vmatpush.msra.mxu0 0.0
        %6519 = vmatpush.msra.mxu0 0.0
        %6520 = vmatpush.msra.mxu0 0.0
        %6521 = vmatpush.msra.mxu0 0.0
        %6522 = vmatpush.msra.mxu0 0.0
        %6523 = vmatpush.msra.mxu0 0.0
        %6524 = vmatpush.msra.mxu0 0.0
        %6525 = vmatpush.msra.mxu0 0.0
        %6526 = vmatpush.msra.mxu0 0.0
        %6527 = vmatpush.msra.mxu0 0.0
        %6528 = vmatpush.msra.mxu0 0.0
        %6529 = vmatpush.msra.mxu0 0.0
        %6530 = vmatpush.msra.mxu0 0.0
        %6531 = vmatpush.msra.mxu0 %v6514
        %6532 = vmatmul.f32.gmra.mxu0 %v3675
        %v6533 = vpop.f32.mrf.mxu0
        %v6534 = vadd.f32 0.0, %v6533
        %6535 = vmatmul.f32.gmra.mxu0 %v3677
        %v6536 = vpop.f32.mrf.mxu0
        %v6537 = vadd.f32 0.0, %v6536
        %6538 = vmatmul.f32.gmra.mxu0 %v3679
        %v6539 = vpop.f32.mrf.mxu0
        %v6540 = vadd.f32 0.0, %v6539
        %6541 = vmatmul.f32.gmra.mxu0 %v3681
        %v6542 = vpop.f32.mrf.mxu0
        %v6543 = vadd.f32 0.0, %v6542
        %6544 = vmatmul.f32.gmra.mxu0 %v3683
        %v6545 = vpop.f32.mrf.mxu0
        %6546 = vmatmul.f32.gmra.mxu0 %v3685
        %v6547 = vpop.f32.mrf.mxu0
        %6548 = vmatmul.f32.gmra.mxu0 %v3687
        %v6549 = vpop.f32.mrf.mxu0
        %6550 = vmatmul.f32.gmra.mxu0 %v3689
        %v6551 = vpop.f32.mrf.mxu0
        %6552 = vmatmul.f32.gmra.mxu0 %v3691
        %v6553 = vpop.f32.mrf.mxu0
        %v6554 = vadd.f32 0.0, %v6553
        %6555 = vmatmul.f32.gmra.mxu0 %v3693
        %v6556 = vpop.f32.mrf.mxu0
        %v6557 = vadd.f32 0.0, %v6556
        %6558 = vmatmul.f32.gmra.mxu0 %v3695
        %v6559 = vpop.f32.mrf.mxu0
        %v6560 = vadd.f32 0.0, %v6559
        %6561 = vmatmul.f32.gmra.mxu0 %v3697
        %v6562 = vpop.f32.mrf.mxu0
        %v6563 = vadd.f32 0.0, %v6562
        %6564 = vmatmul.f32.gmra.mxu0 %v3699
        %v6565 = vpop.f32.mrf.mxu0
        %6566 = vmatmul.f32.gmra.mxu0 %v3701
        %v6567 = vpop.f32.mrf.mxu0
        %6568 = vmatmul.f32.gmra.mxu0 %v3703
        %v6569 = vpop.f32.mrf.mxu0
        %6570 = vmatmul.f32.gmra.mxu0 %v3705
        %v6571 = vpop.f32.mrf.mxu0
        %6572 = vmatmul.f32.gmra.mxu0 %v3707
        %v6573 = vpop.f32.mrf.mxu0
        %v6574 = vadd.f32 0.0, %v6573
        %6575 = vmatmul.f32.gmra.mxu0 %v3709
        %v6576 = vpop.f32.mrf.mxu0
        %v6577 = vadd.f32 0.0, %v6576
        %6578 = vmatmul.f32.gmra.mxu0 %v3711
        %v6579 = vpop.f32.mrf.mxu0
        %v6580 = vadd.f32 0.0, %v6579
        %6581 = vmatmul.f32.gmra.mxu0 %v3713
        %v6582 = vpop.f32.mrf.mxu0
        %v6583 = vadd.f32 0.0, %v6582
        %6584 = vmatmul.f32.gmra.mxu0 %v3715
        %v6585 = vpop.f32.mrf.mxu0
        %6586 = vmatmul.f32.gmra.mxu0 %v3717
        %v6587 = vpop.f32.mrf.mxu0
        %6588 = vmatmul.f32.gmra.mxu0 %v3719
        %v6589 = vpop.f32.mrf.mxu0
        %6590 = vmatmul.f32.gmra.mxu0 %v3721
        %v6591 = vpop.f32.mrf.mxu0
        %6592 = vmatmul.f32.gmra.mxu0 %v3723
        %v6593 = vpop.f32.mrf.mxu0
        %v6594 = vadd.f32 0.0, %v6593
        %6595 = vmatmul.f32.gmra.mxu0 %v3725
        %v6596 = vpop.f32.mrf.mxu0
        %v6597 = vadd.f32 0.0, %v6596
        %6598 = vmatmul.f32.gmra.mxu0 %v3727
        %v6599 = vpop.f32.mrf.mxu0
        %v6600 = vadd.f32 0.0, %v6599
        %6601 = vmatmul.f32.gmra.mxu0 %v3729
        %v6602 = vpop.f32.mrf.mxu0
        %v6603 = vadd.f32 0.0, %v6602
        %6604 = vmatmul.f32.gmra.mxu0 %v3731
        %v6605 = vpop.f32.mrf.mxu0
        %6606 = vmatmul.f32.gmra.mxu0 %v3733
        %v6607 = vpop.f32.mrf.mxu0
        %6608 = vmatmul.f32.gmra.mxu0 %v3735
        %v6609 = vpop.f32.mrf.mxu0
        %6610 = vmatmul.f32.gmra.mxu0 %v3737
        %v6611 = vpop.f32.mrf.mxu0
        %6612 = vmatmul.f32.gmra.mxu0 %v3739
        %v6613 = vpop.f32.mrf.mxu0
        %v6614 = vadd.f32 0.0, %v6613
        %6615 = vmatmul.f32.gmra.mxu0 %v3741
        %v6616 = vpop.f32.mrf.mxu0
        %v6617 = vadd.f32 0.0, %v6616
        %6618 = vmatmul.f32.gmra.mxu0 %v3743
        %v6619 = vpop.f32.mrf.mxu0
        %v6620 = vadd.f32 0.0, %v6619
        %6621 = vmatmul.f32.gmra.mxu0 %v3745
        %v6622 = vpop.f32.mrf.mxu0
        %v6623 = vadd.f32 0.0, %v6622
        %6624 = vmatmul.f32.gmra.mxu0 %v3747
        %v6625 = vpop.f32.mrf.mxu0
        %6626 = vmatmul.f32.gmra.mxu0 %v3749
        %v6627 = vpop.f32.mrf.mxu0
        %6628 = vmatmul.f32.gmra.mxu0 %v3751
        %v6629 = vpop.f32.mrf.mxu0
        %6630 = vmatmul.f32.gmra.mxu0 %v3753
        %v6631 = vpop.f32.mrf.mxu0
        %6632 = vmatmul.f32.gmra.mxu0 %v3755
        %v6633 = vpop.f32.mrf.mxu0
        %v6634 = vadd.f32 0.0, %v6633
        %6635 = vmatmul.f32.gmra.mxu0 %v3757
        %v6636 = vpop.f32.mrf.mxu0
        %v6637 = vadd.f32 0.0, %v6636
        %6638 = vmatmul.f32.gmra.mxu0 %v3759
        %v6639 = vpop.f32.mrf.mxu0
        %v6640 = vadd.f32 0.0, %v6639
        %6641 = vmatmul.f32.gmra.mxu0 %v3761
        %v6642 = vpop.f32.mrf.mxu0
        %v6643 = vadd.f32 0.0, %v6642
        %6644 = vmatmul.f32.gmra.mxu0 %v3763
        %v6645 = vpop.f32.mrf.mxu0
        %6646 = vmatmul.f32.gmra.mxu0 %v3765
        %v6647 = vpop.f32.mrf.mxu0
        %6648 = vmatmul.f32.gmra.mxu0 %v3767
        %v6649 = vpop.f32.mrf.mxu0
        %6650 = vmatmul.f32.gmra.mxu0 %v3769
        %v6651 = vpop.f32.mrf.mxu0
        %6652 = vmatmul.f32.gmra.mxu0 %v3771
        %v6653 = vpop.f32.mrf.mxu0
        %v6654 = vadd.f32 0.0, %v6653
        %6655 = vmatmul.f32.gmra.mxu0 %v3773
        %v6656 = vpop.f32.mrf.mxu0
        %v6657 = vadd.f32 0.0, %v6656
        %6658 = vmatmul.f32.gmra.mxu0 %v3775
        %v6659 = vpop.f32.mrf.mxu0
        %v6660 = vadd.f32 0.0, %v6659
        %6661 = vmatmul.f32.gmra.mxu0 %v3777
        %v6662 = vpop.f32.mrf.mxu0
        %v6663 = vadd.f32 0.0, %v6662
        %6664 = vmatmul.f32.gmra.mxu0 %v3779
        %v6665 = vpop.f32.mrf.mxu0
        %6666 = vmatmul.f32.gmra.mxu0 %v3781
        %v6667 = vpop.f32.mrf.mxu0
        %6668 = vmatmul.f32.gmra.mxu0 %v3783
        %v6669 = vpop.f32.mrf.mxu0
        %6670 = vmatmul.f32.gmra.mxu0 %v3785
        %v6671 = vpop.f32.mrf.mxu0
        %6672 = vmatmul.f32.gmra.mxu0 %v3787
        %v6673 = vpop.f32.mrf.mxu0
        %v6674 = vadd.f32 0.0, %v6673
        %6675 = vmatmul.f32.gmra.mxu0 %v3789
        %v6676 = vpop.f32.mrf.mxu0
        %v6677 = vadd.f32 0.0, %v6676
        %6678 = vmatmul.f32.gmra.mxu0 %v3791
        %v6679 = vpop.f32.mrf.mxu0
        %v6680 = vadd.f32 0.0, %v6679
        %6681 = vmatmul.f32.gmra.mxu0 %v5137
        %v6682 = vpop.f32.mrf.mxu0
        %v6683 = vadd.f32 0.0, %v6682
        %6684 = vmatmul.f32.gmra.mxu0 %v5139
        %v6685 = vpop.f32.mrf.mxu0
        %6686 = vmatmul.f32.gmra.mxu0 %v5141
        %v6687 = vpop.f32.mrf.mxu0
        %6688 = vmatmul.f32.gmra.mxu0 %v5143
        %v6689 = vpop.f32.mrf.mxu0
        %6690 = vmatmul.f32.gmra.mxu0 %v5145
        %v6691 = vpop.f32.mrf.mxu0
        %6692 = vmatmul.f32.gmra.mxu0 %v5147
        %v6693 = vpop.f32.mrf.mxu0
        %v6694 = vadd.f32 0.0, %v6693
        %6695 = vmatmul.f32.gmra.mxu0 %v5149
        %v6696 = vpop.f32.mrf.mxu0
        %v6697 = vadd.f32 0.0, %v6696
        %6698 = vmatmul.f32.gmra.mxu0 %v5151
        %v6699 = vpop.f32.mrf.mxu0
        %v6700 = vadd.f32 0.0, %v6699
        %6701 = vmatmul.f32.gmra.mxu0 %v6497
        %v6702 = vpop.f32.mrf.mxu0
        %6703 = vmatmul.f32.gmra.mxu0 %v6499
        %v6704 = vpop.f32.mrf.mxu0
        %6705 = vmatmul.f32.gmra.mxu0 %v6501
        %v6706 = vpop.f32.mrf.mxu0
        %6707 = vmatmul.f32.gmra.mxu0 %v6503
        %v6708 = vpop.f32.mrf.mxu0
        %6709 = vmatmul.f32.gmra.mxu0 %v6505
        %v6710 = vpop.f32.mrf.mxu0
        %6711 = vmatmul.f32.gmra.mxu0 %v6507
        %v6712 = vpop.f32.mrf.mxu0
        %v6713 = vadd.f32 0.0, %v6712
        %6714 = vmatmul.f32.gmra.mxu0 %v6509
        %v6715 = vpop.f32.mrf.mxu0
        %v6716 = vadd.f32 0.0, %v6715
        %6717 = vmatmul.f32.gmra.mxu0 %v6511
        %v6718 = vpop.f32.mrf.mxu0
        %v6719 = vadd.f32 0.0, %v6718
        %6720 = vdwg.mxu0
        %v6721 = vadd.f32 %v6441, %v6534
        %v6722 = vadd.f32 %v6442, %v6537
        %v6723 = vadd.f32 %v6443, %v6540
        %v6724 = vadd.f32 %v6444, %v6543
        %v6725 = vadd.f32 %v6445, %v6554
        %v6726 = vadd.f32 %v6446, %v6557
        %v6727 = vadd.f32 %v6447, %v6560
        %v6728 = vadd.f32 %v6448, %v6563
        %v6729 = vadd.f32 %v6449, %v6574
        %v6730 = vadd.f32 %v6450, %v6577
        %v6731 = vadd.f32 %v6451, %v6580
        %v6732 = vadd.f32 %v6452, %v6583
        %v6733 = vadd.f32 %v6453, %v6594
        %v6734 = vadd.f32 %v6454, %v6597
        %v6735 = vadd.f32 %v6455, %v6600
        %v6736 = vadd.f32 %v6456, %v6603
        %v6737 = vadd.f32 %v6457, %v6614
        %v6738 = vadd.f32 %v6458, %v6617
        %v6739 = vadd.f32 %v6459, %v6620
        %v6740 = vadd.f32 %v6460, %v6623
        %v6741 = vadd.f32 %v6461, %v6634
        %v6742 = vadd.f32 %v6462, %v6637
        %v6743 = vadd.f32 %v6463, %v6640
        %v6744 = vadd.f32 %v6464, %v6643
        %v6745 = vadd.f32 %v6465, %v6654
        %v6746 = vadd.f32 %v6466, %v6657
        %v6747 = vadd.f32 %v6467, %v6660
        %v6748 = vadd.f32 %v6468, %v6663
        %v6749 = vadd.f32 %v6469, %v6674
        %v6750 = vadd.f32 %v6470, %v6677
        %v6751 = vadd.f32 %v6471, %v6680
        %v6752 = vadd.f32 %v6472, %v6683
        %v6753 = vadd.f32 %v6473, %v6694
        %v6754 = vadd.f32 %v6474, %v6697
        %v6755 = vadd.f32 %v6475, %v6700
        %v6756 = vadd.f32 %v6476, %v6713
        %v6757 = vadd.f32 %v6477, %v6716
        %v6758 = vadd.f32 %v6478, %v6719
        %s6759 = scalar_lea.vmem %s3, 112
        %v6760 = vld [vmem:[%s6759] sm:$0x3f]
        %v6761 = vsel %vm2222, %v1974, 0
        %v6764 = vsel %vm2070, %v6760, 0
        %6766 = vmatpush.msra.mxu0 0.0
        %6767 = vmatpush.msra.mxu0 0.0
        %6768 = vmatpush.msra.mxu0 0.0
        %6769 = vmatpush.msra.mxu0 0.0
        %6770 = vmatpush.msra.mxu0 0.0
        %6771 = vmatpush.msra.mxu0 0.0
        %6772 = vmatpush.msra.mxu0 0.0
        %6773 = vmatpush.msra.mxu0 0.0
        %6774 = vmatpush.msra.mxu0 0.0
        %6775 = vmatpush.msra.mxu0 0.0
        %6776 = vmatpush.msra.mxu0 0.0
        %6777 = vmatpush.msra.mxu0 0.0
        %6778 = vmatpush.msra.mxu0 0.0
        %6779 = vmatpush.msra.mxu0 0.0
        %6780 = vmatpush.msra.mxu0 0.0
        %6781 = vmatpush.msra.mxu0 %v6764
        %6782 = vmatmul.f32.gmra.mxu0 %v2615
        %v6783 = vpop.f32.mrf.mxu0
        %v6784 = vadd.f32 0.0, %v6783
        %6785 = vmatmul.f32.gmra.mxu0 %v2617
        %v6786 = vpop.f32.mrf.mxu0
        %v6787 = vadd.f32 0.0, %v6786
        %6788 = vmatmul.f32.gmra.mxu0 %v2619
        %v6789 = vpop.f32.mrf.mxu0
        %v6790 = vadd.f32 0.0, %v6789
        %6791 = vmatmul.f32.gmra.mxu0 %v2621
        %v6792 = vpop.f32.mrf.mxu0
        %v6793 = vadd.f32 0.0, %v6792
        %6794 = vmatmul.f32.gmra.mxu0 %v2623
        %v6795 = vpop.f32.mrf.mxu0
        %6796 = vmatmul.f32.gmra.mxu0 %v2625
        %v6797 = vpop.f32.mrf.mxu0
        %6798 = vmatmul.f32.gmra.mxu0 %v2627
        %v6799 = vpop.f32.mrf.mxu0
        %6800 = vmatmul.f32.gmra.mxu0 %v2629
        %v6801 = vpop.f32.mrf.mxu0
        %6802 = vmatmul.f32.gmra.mxu0 %v2631
        %v6803 = vpop.f32.mrf.mxu0
        %v6804 = vadd.f32 0.0, %v6803
        %6805 = vmatmul.f32.gmra.mxu0 %v2633
        %v6806 = vpop.f32.mrf.mxu0
        %v6807 = vadd.f32 0.0, %v6806
        %6808 = vmatmul.f32.gmra.mxu0 %v2635
        %v6809 = vpop.f32.mrf.mxu0
        %v6810 = vadd.f32 0.0, %v6809
        %6811 = vmatmul.f32.gmra.mxu0 %v2637
        %v6812 = vpop.f32.mrf.mxu0
        %v6813 = vadd.f32 0.0, %v6812
        %6814 = vmatmul.f32.gmra.mxu0 %v2639
        %v6815 = vpop.f32.mrf.mxu0
        %6816 = vmatmul.f32.gmra.mxu0 %v2641
        %v6817 = vpop.f32.mrf.mxu0
        %6818 = vmatmul.f32.gmra.mxu0 %v2643
        %v6819 = vpop.f32.mrf.mxu0
        %6820 = vmatmul.f32.gmra.mxu0 %v2645
        %v6821 = vpop.f32.mrf.mxu0
        %6822 = vmatmul.f32.gmra.mxu0 %v2647
        %v6823 = vpop.f32.mrf.mxu0
        %v6824 = vadd.f32 0.0, %v6823
        %6825 = vmatmul.f32.gmra.mxu0 %v2649
        %v6826 = vpop.f32.mrf.mxu0
        %v6827 = vadd.f32 0.0, %v6826
        %6828 = vmatmul.f32.gmra.mxu0 %v2651
        %v6829 = vpop.f32.mrf.mxu0
        %v6830 = vadd.f32 0.0, %v6829
        %6831 = vmatmul.f32.gmra.mxu0 %v2653
        %v6832 = vpop.f32.mrf.mxu0
        %v6833 = vadd.f32 0.0, %v6832
        %6834 = vmatmul.f32.gmra.mxu0 %v2655
        %v6835 = vpop.f32.mrf.mxu0
        %6836 = vmatmul.f32.gmra.mxu0 %v2657
        %v6837 = vpop.f32.mrf.mxu0
        %6838 = vmatmul.f32.gmra.mxu0 %v2659
        %v6839 = vpop.f32.mrf.mxu0
        %6840 = vmatmul.f32.gmra.mxu0 %v2661
        %v6841 = vpop.f32.mrf.mxu0
        %6842 = vmatmul.f32.gmra.mxu0 %v2663
        %v6843 = vpop.f32.mrf.mxu0
        %v6844 = vadd.f32 0.0, %v6843
        %6845 = vmatmul.f32.gmra.mxu0 %v2665
        %v6846 = vpop.f32.mrf.mxu0
        %v6847 = vadd.f32 0.0, %v6846
        %6848 = vmatmul.f32.gmra.mxu0 %v2667
        %v6849 = vpop.f32.mrf.mxu0
        %v6850 = vadd.f32 0.0, %v6849
        %6851 = vmatmul.f32.gmra.mxu0 %v2669
        %v6852 = vpop.f32.mrf.mxu0
        %v6853 = vadd.f32 0.0, %v6852
        %6854 = vmatmul.f32.gmra.mxu0 %v2671
        %v6855 = vpop.f32.mrf.mxu0
        %6856 = vmatmul.f32.gmra.mxu0 %v2673
        %v6857 = vpop.f32.mrf.mxu0
        %6858 = vmatmul.f32.gmra.mxu0 %v2675
        %v6859 = vpop.f32.mrf.mxu0
        %6860 = vmatmul.f32.gmra.mxu0 %v2677
        %v6861 = vpop.f32.mrf.mxu0
        %6862 = vmatmul.f32.gmra.mxu0 %v2679
        %v6863 = vpop.f32.mrf.mxu0
        %v6864 = vadd.f32 0.0, %v6863
        %6865 = vmatmul.f32.gmra.mxu0 %v2681
        %v6866 = vpop.f32.mrf.mxu0
        %v6867 = vadd.f32 0.0, %v6866
        %6868 = vmatmul.f32.gmra.mxu0 %v2683
        %v6869 = vpop.f32.mrf.mxu0
        %v6870 = vadd.f32 0.0, %v6869
        %6871 = vmatmul.f32.gmra.mxu0 %v2685
        %v6872 = vpop.f32.mrf.mxu0
        %v6873 = vadd.f32 0.0, %v6872
        %6874 = vmatmul.f32.gmra.mxu0 %v2687
        %v6875 = vpop.f32.mrf.mxu0
        %6876 = vmatmul.f32.gmra.mxu0 %v2689
        %v6877 = vpop.f32.mrf.mxu0
        %6878 = vmatmul.f32.gmra.mxu0 %v2691
        %v6879 = vpop.f32.mrf.mxu0
        %6880 = vmatmul.f32.gmra.mxu0 %v2693
        %v6881 = vpop.f32.mrf.mxu0
        %6882 = vmatmul.f32.gmra.mxu0 %v2695
        %v6883 = vpop.f32.mrf.mxu0
        %v6884 = vadd.f32 0.0, %v6883
        %6885 = vmatmul.f32.gmra.mxu0 %v2697
        %v6886 = vpop.f32.mrf.mxu0
        %v6887 = vadd.f32 0.0, %v6886
        %6888 = vmatmul.f32.gmra.mxu0 %v2699
        %v6889 = vpop.f32.mrf.mxu0
        %v6890 = vadd.f32 0.0, %v6889
        %6891 = vmatmul.f32.gmra.mxu0 %v2701
        %v6892 = vpop.f32.mrf.mxu0
        %v6893 = vadd.f32 0.0, %v6892
        %6894 = vmatmul.f32.gmra.mxu0 %v2703
        %v6895 = vpop.f32.mrf.mxu0
        %6896 = vmatmul.f32.gmra.mxu0 %v2705
        %v6897 = vpop.f32.mrf.mxu0
        %6898 = vmatmul.f32.gmra.mxu0 %v2707
        %v6899 = vpop.f32.mrf.mxu0
        %6900 = vmatmul.f32.gmra.mxu0 %v2709
        %v6901 = vpop.f32.mrf.mxu0
        %6902 = vmatmul.f32.gmra.mxu0 %v2711
        %v6903 = vpop.f32.mrf.mxu0
        %v6904 = vadd.f32 0.0, %v6903
        %6905 = vmatmul.f32.gmra.mxu0 %v2713
        %v6906 = vpop.f32.mrf.mxu0
        %v6907 = vadd.f32 0.0, %v6906
        %6908 = vmatmul.f32.gmra.mxu0 %v2715
        %v6909 = vpop.f32.mrf.mxu0
        %v6910 = vadd.f32 0.0, %v6909
        %6911 = vmatmul.f32.gmra.mxu0 %v2717
        %v6912 = vpop.f32.mrf.mxu0
        %v6913 = vadd.f32 0.0, %v6912
        %6914 = vmatmul.f32.gmra.mxu0 %v2719
        %v6915 = vpop.f32.mrf.mxu0
        %6916 = vmatmul.f32.gmra.mxu0 %v2721
        %v6917 = vpop.f32.mrf.mxu0
        %6918 = vmatmul.f32.gmra.mxu0 %v2723
        %v6919 = vpop.f32.mrf.mxu0
        %6920 = vmatmul.f32.gmra.mxu0 %v2725
        %v6921 = vpop.f32.mrf.mxu0
        %6922 = vmatmul.f32.gmra.mxu0 %v2727
        %v6923 = vpop.f32.mrf.mxu0
        %v6924 = vadd.f32 0.0, %v6923
        %6925 = vmatmul.f32.gmra.mxu0 %v2729
        %v6926 = vpop.f32.mrf.mxu0
        %v6927 = vadd.f32 0.0, %v6926
        %6928 = vmatmul.f32.gmra.mxu0 %v4041
        %v6929 = vpop.f32.mrf.mxu0
        %v6930 = vadd.f32 0.0, %v6929
        %6931 = vmatmul.f32.gmra.mxu0 %v4292
        %v6932 = vpop.f32.mrf.mxu0
        %v6933 = vadd.f32 0.0, %v6932
        %6934 = vmatmul.f32.gmra.mxu0 %v4295
        %v6935 = vpop.f32.mrf.mxu0
        %6936 = vmatmul.f32.gmra.mxu0 %v4298
        %v6937 = vpop.f32.mrf.mxu0
        %6938 = vmatmul.f32.gmra.mxu0 %v4301
        %v6939 = vpop.f32.mrf.mxu0
        %6940 = vmatmul.f32.gmra.mxu0 %v4304
        %v6941 = vpop.f32.mrf.mxu0
        %6942 = vmatmul.f32.gmra.mxu0 %v4307
        %v6943 = vpop.f32.mrf.mxu0
        %v6944 = vadd.f32 0.0, %v6943
        %6945 = vmatmul.f32.gmra.mxu0 %v4310
        %v6946 = vpop.f32.mrf.mxu0
        %v6947 = vadd.f32 0.0, %v6946
        %6948 = vmatmul.f32.gmra.mxu0 %v5401
        %v6949 = vpop.f32.mrf.mxu0
        %v6950 = vadd.f32 0.0, %v6949
        %6951 = vmatmul.f32.gmra.mxu0 %v5652
        %v6952 = vpop.f32.mrf.mxu0
        %6953 = vmatmul.f32.gmra.mxu0 %v5655
        %v6954 = vpop.f32.mrf.mxu0
        %6955 = vmatmul.f32.gmra.mxu0 %v5658
        %v6956 = vpop.f32.mrf.mxu0
        %6957 = vmatmul.f32.gmra.mxu0 %v5661
        %v6958 = vpop.f32.mrf.mxu0
        %6959 = vmatmul.f32.gmra.mxu0 %v5664
        %v6960 = vpop.f32.mrf.mxu0
        %6961 = vmatmul.f32.gmra.mxu0 %v5667
        %v6962 = vpop.f32.mrf.mxu0
        %v6963 = vadd.f32 0.0, %v6962
        %6964 = vmatmul.f32.gmra.mxu0 %v5670
        %v6965 = vpop.f32.mrf.mxu0
        %v6966 = vadd.f32 0.0, %v6965
        %6967 = vmatmul.f32.gmra.mxu0 %v6761
        %v6968 = vpop.f32.mrf.mxu0
        %v6969 = vadd.f32 0.0, %v6968
        %6970 = vdwg.mxu0
        %v6971 = vadd.f32 %v6721, %v6784
        %v6972 = vadd.f32 %v6722, %v6787
        %v6973 = vadd.f32 %v6723, %v6790
        %v6974 = vadd.f32 %v6724, %v6793
        %v6975 = vadd.f32 %v6725, %v6804
        %v6976 = vadd.f32 %v6726, %v6807
        %v6977 = vadd.f32 %v6727, %v6810
        %v6978 = vadd.f32 %v6728, %v6813
        %v6979 = vadd.f32 %v6729, %v6824
        %v6980 = vadd.f32 %v6730, %v6827
        %v6981 = vadd.f32 %v6731, %v6830
        %v6982 = vadd.f32 %v6732, %v6833
        %v6983 = vadd.f32 %v6733, %v6844
        %v6984 = vadd.f32 %v6734, %v6847
        %v6985 = vadd.f32 %v6735, %v6850
        %v6986 = vadd.f32 %v6736, %v6853
        %v6987 = vadd.f32 %v6737, %v6864
        %v6988 = vadd.f32 %v6738, %v6867
        %v6989 = vadd.f32 %v6739, %v6870
        %v6990 = vadd.f32 %v6740, %v6873
        %v6991 = vadd.f32 %v6741, %v6884
        %v6992 = vadd.f32 %v6742, %v6887
        %v6993 = vadd.f32 %v6743, %v6890
        %v6994 = vadd.f32 %v6744, %v6893
        %v6995 = vadd.f32 %v6745, %v6904
        %v6996 = vadd.f32 %v6746, %v6907
        %v6997 = vadd.f32 %v6747, %v6910
        %v6998 = vadd.f32 %v6748, %v6913
        %v6999 = vadd.f32 %v6749, %v6924
        %v7000 = vadd.f32 %v6750, %v6927
        %v7001 = vadd.f32 %v6751, %v6930
        %v7002 = vadd.f32 %v6752, %v6933
        %v7003 = vadd.f32 %v6753, %v6944
        %v7004 = vadd.f32 %v6754, %v6947
        %v7005 = vadd.f32 %v6755, %v6950
        %v7006 = vadd.f32 %v6756, %v6963
        %v7007 = vadd.f32 %v6757, %v6966
        %v7008 = vadd.f32 %v6758, %v6969
        %s7009 = scalar_lea.vmem %s3, 120
        %v7010 = vld [vmem:[%s7009] sm:$0x3f]
        %v7012 = vsel %vm2222, %v1975, 0
        %v7015 = vsel %vm2222, %v1976, 0
        %v7018 = vsel %vm2222, %v1977, 0
        %v7021 = vsel %vm2222, %v1978, 0
        %v7024 = vsel %vm2222, %v1979, 0
        %v7027 = vsel %vm2222, %v1980, 0
        %v7030 = vsel %vm2222, %v1981, 0
        %v7033 = vsel %vm2070, %v7010, 0
        %7035 = vmatpush.msra.mxu0 0.0
        %7036 = vmatpush.msra.mxu0 0.0
        %7037 = vmatpush.msra.mxu0 0.0
        %7038 = vmatpush.msra.mxu0 0.0
        %7039 = vmatpush.msra.mxu0 0.0
        %7040 = vmatpush.msra.mxu0 0.0
        %7041 = vmatpush.msra.mxu0 0.0
        %7042 = vmatpush.msra.mxu0 0.0
        %7043 = vmatpush.msra.mxu0 0.0
        %7044 = vmatpush.msra.mxu0 0.0
        %7045 = vmatpush.msra.mxu0 0.0
        %7046 = vmatpush.msra.mxu0 0.0
        %7047 = vmatpush.msra.mxu0 0.0
        %7048 = vmatpush.msra.mxu0 0.0
        %7049 = vmatpush.msra.mxu0 0.0
        %7050 = vmatpush.msra.mxu0 %v7033
        %7051 = vmatmul.f32.gmra.mxu0 %v2629
        %v7052 = vpop.f32.mrf.mxu0
        %v7053 = vadd.f32 0.0, %v7052
        %7054 = vmatmul.f32.gmra.mxu0 %v2631
        %v7055 = vpop.f32.mrf.mxu0
        %v7056 = vadd.f32 0.0, %v7055
        %7057 = vmatmul.f32.gmra.mxu0 %v2633
        %v7058 = vpop.f32.mrf.mxu0
        %v7059 = vadd.f32 0.0, %v7058
        %7060 = vmatmul.f32.gmra.mxu0 %v2635
        %v7061 = vpop.f32.mrf.mxu0
        %v7062 = vadd.f32 0.0, %v7061
        %7063 = vmatmul.f32.gmra.mxu0 %v2637
        %v7064 = vpop.f32.mrf.mxu0
        %7065 = vmatmul.f32.gmra.mxu0 %v2639
        %v7066 = vpop.f32.mrf.mxu0
        %7067 = vmatmul.f32.gmra.mxu0 %v2641
        %v7068 = vpop.f32.mrf.mxu0
        %7069 = vmatmul.f32.gmra.mxu0 %v2643
        %v7070 = vpop.f32.mrf.mxu0
        %7071 = vmatmul.f32.gmra.mxu0 %v2645
        %v7072 = vpop.f32.mrf.mxu0
        %v7073 = vadd.f32 0.0, %v7072
        %7074 = vmatmul.f32.gmra.mxu0 %v2647
        %v7075 = vpop.f32.mrf.mxu0
        %v7076 = vadd.f32 0.0, %v7075
        %7077 = vmatmul.f32.gmra.mxu0 %v2649
        %v7078 = vpop.f32.mrf.mxu0
        %v7079 = vadd.f32 0.0, %v7078
        %7080 = vmatmul.f32.gmra.mxu0 %v2651
        %v7081 = vpop.f32.mrf.mxu0
        %v7082 = vadd.f32 0.0, %v7081
        %7083 = vmatmul.f32.gmra.mxu0 %v2653
        %v7084 = vpop.f32.mrf.mxu0
        %7085 = vmatmul.f32.gmra.mxu0 %v2655
        %v7086 = vpop.f32.mrf.mxu0
        %7087 = vmatmul.f32.gmra.mxu0 %v2657
        %v7088 = vpop.f32.mrf.mxu0
        %7089 = vmatmul.f32.gmra.mxu0 %v2659
        %v7090 = vpop.f32.mrf.mxu0
        %7091 = vmatmul.f32.gmra.mxu0 %v2661
        %v7092 = vpop.f32.mrf.mxu0
        %v7093 = vadd.f32 0.0, %v7092
        %7094 = vmatmul.f32.gmra.mxu0 %v2663
        %v7095 = vpop.f32.mrf.mxu0
        %v7096 = vadd.f32 0.0, %v7095
        %7097 = vmatmul.f32.gmra.mxu0 %v2665
        %v7098 = vpop.f32.mrf.mxu0
        %v7099 = vadd.f32 0.0, %v7098
        %7100 = vmatmul.f32.gmra.mxu0 %v2667
        %v7101 = vpop.f32.mrf.mxu0
        %v7102 = vadd.f32 0.0, %v7101
        %7103 = vmatmul.f32.gmra.mxu0 %v2669
        %v7104 = vpop.f32.mrf.mxu0
        %7105 = vmatmul.f32.gmra.mxu0 %v2671
        %v7106 = vpop.f32.mrf.mxu0
        %7107 = vmatmul.f32.gmra.mxu0 %v2673
        %v7108 = vpop.f32.mrf.mxu0
        %7109 = vmatmul.f32.gmra.mxu0 %v2675
        %v7110 = vpop.f32.mrf.mxu0
        %7111 = vmatmul.f32.gmra.mxu0 %v2677
        %v7112 = vpop.f32.mrf.mxu0
        %v7113 = vadd.f32 0.0, %v7112
        %7114 = vmatmul.f32.gmra.mxu0 %v2679
        %v7115 = vpop.f32.mrf.mxu0
        %v7116 = vadd.f32 0.0, %v7115
        %7117 = vmatmul.f32.gmra.mxu0 %v2681
        %v7118 = vpop.f32.mrf.mxu0
        %v7119 = vadd.f32 0.0, %v7118
        %7120 = vmatmul.f32.gmra.mxu0 %v2683
        %v7121 = vpop.f32.mrf.mxu0
        %v7122 = vadd.f32 0.0, %v7121
        %7123 = vmatmul.f32.gmra.mxu0 %v2685
        %v7124 = vpop.f32.mrf.mxu0
        %7125 = vmatmul.f32.gmra.mxu0 %v2687
        %v7126 = vpop.f32.mrf.mxu0
        %7127 = vmatmul.f32.gmra.mxu0 %v2689
        %v7128 = vpop.f32.mrf.mxu0
        %7129 = vmatmul.f32.gmra.mxu0 %v2691
        %v7130 = vpop.f32.mrf.mxu0
        %7131 = vmatmul.f32.gmra.mxu0 %v2693
        %v7132 = vpop.f32.mrf.mxu0
        %v7133 = vadd.f32 0.0, %v7132
        %7134 = vmatmul.f32.gmra.mxu0 %v2695
        %v7135 = vpop.f32.mrf.mxu0
        %v7136 = vadd.f32 0.0, %v7135
        %7137 = vmatmul.f32.gmra.mxu0 %v2697
        %v7138 = vpop.f32.mrf.mxu0
        %v7139 = vadd.f32 0.0, %v7138
        %7140 = vmatmul.f32.gmra.mxu0 %v2699
        %v7141 = vpop.f32.mrf.mxu0
        %v7142 = vadd.f32 0.0, %v7141
        %7143 = vmatmul.f32.gmra.mxu0 %v2701
        %v7144 = vpop.f32.mrf.mxu0
        %7145 = vmatmul.f32.gmra.mxu0 %v2703
        %v7146 = vpop.f32.mrf.mxu0
        %7147 = vmatmul.f32.gmra.mxu0 %v2705
        %v7148 = vpop.f32.mrf.mxu0
        %7149 = vmatmul.f32.gmra.mxu0 %v2707
        %v7150 = vpop.f32.mrf.mxu0
        %7151 = vmatmul.f32.gmra.mxu0 %v2709
        %v7152 = vpop.f32.mrf.mxu0
        %v7153 = vadd.f32 0.0, %v7152
        %7154 = vmatmul.f32.gmra.mxu0 %v2711
        %v7155 = vpop.f32.mrf.mxu0
        %v7156 = vadd.f32 0.0, %v7155
        %7157 = vmatmul.f32.gmra.mxu0 %v2713
        %v7158 = vpop.f32.mrf.mxu0
        %v7159 = vadd.f32 0.0, %v7158
        %7160 = vmatmul.f32.gmra.mxu0 %v2715
        %v7161 = vpop.f32.mrf.mxu0
        %v7162 = vadd.f32 0.0, %v7161
        %7163 = vmatmul.f32.gmra.mxu0 %v2717
        %v7164 = vpop.f32.mrf.mxu0
        %7165 = vmatmul.f32.gmra.mxu0 %v2719
        %v7166 = vpop.f32.mrf.mxu0
        %7167 = vmatmul.f32.gmra.mxu0 %v2721
        %v7168 = vpop.f32.mrf.mxu0
        %7169 = vmatmul.f32.gmra.mxu0 %v2723
        %v7170 = vpop.f32.mrf.mxu0
        %7171 = vmatmul.f32.gmra.mxu0 %v2725
        %v7172 = vpop.f32.mrf.mxu0
        %v7173 = vadd.f32 0.0, %v7172
        %7174 = vmatmul.f32.gmra.mxu0 %v2727
        %v7175 = vpop.f32.mrf.mxu0
        %v7176 = vadd.f32 0.0, %v7175
        %7177 = vmatmul.f32.gmra.mxu0 %v2729
        %v7178 = vpop.f32.mrf.mxu0
        %v7179 = vadd.f32 0.0, %v7178
        %7180 = vmatmul.f32.gmra.mxu0 %v4041
        %v7181 = vpop.f32.mrf.mxu0
        %v7182 = vadd.f32 0.0, %v7181
        %7183 = vmatmul.f32.gmra.mxu0 %v4292
        %v7184 = vpop.f32.mrf.mxu0
        %7185 = vmatmul.f32.gmra.mxu0 %v4295
        %v7186 = vpop.f32.mrf.mxu0
        %7187 = vmatmul.f32.gmra.mxu0 %v4298
        %v7188 = vpop.f32.mrf.mxu0
        %7189 = vmatmul.f32.gmra.mxu0 %v4301
        %v7190 = vpop.f32.mrf.mxu0
        %7191 = vmatmul.f32.gmra.mxu0 %v4304
        %v7192 = vpop.f32.mrf.mxu0
        %v7193 = vadd.f32 0.0, %v7192
        %7194 = vmatmul.f32.gmra.mxu0 %v4307
        %v7195 = vpop.f32.mrf.mxu0
        %v7196 = vadd.f32 0.0, %v7195
        %7197 = vmatmul.f32.gmra.mxu0 %v4310
        %v7198 = vpop.f32.mrf.mxu0
        %v7199 = vadd.f32 0.0, %v7198
        %7200 = vmatmul.f32.gmra.mxu0 %v5401
        %v7201 = vpop.f32.mrf.mxu0
        %v7202 = vadd.f32 0.0, %v7201
        %7203 = vmatmul.f32.gmra.mxu0 %v5652
        %v7204 = vpop.f32.mrf.mxu0
        %7205 = vmatmul.f32.gmra.mxu0 %v5655
        %v7206 = vpop.f32.mrf.mxu0
        %7207 = vmatmul.f32.gmra.mxu0 %v5658
        %v7208 = vpop.f32.mrf.mxu0
        %7209 = vmatmul.f32.gmra.mxu0 %v5661
        %v7210 = vpop.f32.mrf.mxu0
        %7211 = vmatmul.f32.gmra.mxu0 %v5664
        %v7212 = vpop.f32.mrf.mxu0
        %v7213 = vadd.f32 0.0, %v7212
        %7214 = vmatmul.f32.gmra.mxu0 %v5667
        %v7215 = vpop.f32.mrf.mxu0
        %v7216 = vadd.f32 0.0, %v7215
        %7217 = vmatmul.f32.gmra.mxu0 %v5670
        %v7218 = vpop.f32.mrf.mxu0
        %v7219 = vadd.f32 0.0, %v7218
        %7220 = vmatmul.f32.gmra.mxu0 %v6761
        %v7221 = vpop.f32.mrf.mxu0
        %7222 = vmatmul.f32.gmra.mxu0 %v7012
        %v7223 = vpop.f32.mrf.mxu0
        %7224 = vmatmul.f32.gmra.mxu0 %v7015
        %v7225 = vpop.f32.mrf.mxu0
        %7226 = vmatmul.f32.gmra.mxu0 %v7018
        %v7227 = vpop.f32.mrf.mxu0
        %7228 = vmatmul.f32.gmra.mxu0 %v7021
        %v7229 = vpop.f32.mrf.mxu0
        %7230 = vmatmul.f32.gmra.mxu0 %v7024
        %v7231 = vpop.f32.mrf.mxu0
        %v7232 = vadd.f32 0.0, %v7231
        %7233 = vmatmul.f32.gmra.mxu0 %v7027
        %v7234 = vpop.f32.mrf.mxu0
        %v7235 = vadd.f32 0.0, %v7234
        %7236 = vmatmul.f32.gmra.mxu0 %v7030
        %v7237 = vpop.f32.mrf.mxu0
        %v7238 = vadd.f32 0.0, %v7237
        %7239 = vdwg.mxu0
        %v7240 = vadd.f32 %v6971, %v7053
        %v7241 = vadd.f32 %v6972, %v7056
        %v7242 = vadd.f32 %v6973, %v7059
        %v7243 = vadd.f32 %v6974, %v7062
        %v7244 = vadd.f32 %v6975, %v7073
        %v7245 = vadd.f32 %v6976, %v7076
        %v7246 = vadd.f32 %v6977, %v7079
        %v7247 = vadd.f32 %v6978, %v7082
        %v7248 = vadd.f32 %v6979, %v7093
        %v7249 = vadd.f32 %v6980, %v7096
        %v7250 = vadd.f32 %v6981, %v7099
        %v7251 = vadd.f32 %v6982, %v7102
        %v7252 = vadd.f32 %v6983, %v7113
        %v7253 = vadd.f32 %v6984, %v7116
        %v7254 = vadd.f32 %v6985, %v7119
        %v7255 = vadd.f32 %v6986, %v7122
        %v7256 = vadd.f32 %v6987, %v7133
        %v7257 = vadd.f32 %v6988, %v7136
        %v7258 = vadd.f32 %v6989, %v7139
        %v7259 = vadd.f32 %v6990, %v7142
        %v7260 = vadd.f32 %v6991, %v7153
        %v7261 = vadd.f32 %v6992, %v7156
        %v7262 = vadd.f32 %v6993, %v7159
        %v7263 = vadd.f32 %v6994, %v7162
        %v7264 = vadd.f32 %v6995, %v7173
        %v7265 = vadd.f32 %v6996, %v7176
        %v7266 = vadd.f32 %v6997, %v7179
        %v7267 = vadd.f32 %v6998, %v7182
        %v7268 = vadd.f32 %v6999, %v7193
        %v7269 = vadd.f32 %v7000, %v7196
        %v7270 = vadd.f32 %v7001, %v7199
        %v7271 = vadd.f32 %v7002, %v7202
        %v7272 = vadd.f32 %v7003, %v7213
        %v7273 = vadd.f32 %v7004, %v7216
        %v7274 = vadd.f32 %v7005, %v7219
        %v7275 = vadd.f32 %v7006, %v7232
        %v7276 = vadd.f32 %v7007, %v7235
        %v7277 = vadd.f32 %v7008, %v7238
        %s7278 = scalar_lea.vmem %s3, 128
        %v7279 = vld [vmem:[%s7278] sm:$0x3f]
        %v7281 = vrot.slane %v1975, 2
        %v7282 = vsel %vm2070, %v5935, %v7281
        %v7283 = vrot.slane %v1976, 2
        %v7284 = vsel %vm2070, %v7281, %v7283
        %v7285 = vrot.slane %v1977, 2
        %v7286 = vsel %vm2070, %v7283, %v7285
        %v7287 = vrot.slane %v1978, 2
        %v7288 = vsel %vm2070, %v7285, %v7287
        %v7289 = vrot.slane %v1979, 2
        %v7290 = vsel %vm2070, %v7287, %v7289
        %v7291 = vrot.slane %v1980, 2
        %v7292 = vsel %vm2070, %v7289, %v7291
        %v7293 = vrot.slane %v1981, 2
        %v7294 = vsel %vm2070, %v7291, %v7293
        %v7295 = vrot.slane %v1982, 2
        %v7296 = vsel %vm2070, %v7293, %v7295
        %v7297 = vsel %vm2222, %v7282, 0
        %v7299 = vsel %vm2222, %v7284, 0
        %v7301 = vsel %vm2222, %v7286, 0
        %v7303 = vsel %vm2222, %v7288, 0
        %v7305 = vsel %vm2222, %v7290, 0
        %v7307 = vsel %vm2222, %v7292, 0
        %v7309 = vsel %vm2222, %v7294, 0
        %v7311 = vsel %vm2222, %v7296, 0
        %v7314 = vsel %vm2070, %v7279, 0
        %7316 = vmatpush.msra.mxu0 0.0
        %7317 = vmatpush.msra.mxu0 0.0
        %7318 = vmatpush.msra.mxu0 0.0
        %7319 = vmatpush.msra.mxu0 0.0
        %7320 = vmatpush.msra.mxu0 0.0
        %7321 = vmatpush.msra.mxu0 0.0
        %7322 = vmatpush.msra.mxu0 0.0
        %7323 = vmatpush.msra.mxu0 0.0
        %7324 = vmatpush.msra.mxu0 0.0
        %7325 = vmatpush.msra.mxu0 0.0
        %7326 = vmatpush.msra.mxu0 0.0
        %7327 = vmatpush.msra.mxu0 0.0
        %7328 = vmatpush.msra.mxu0 0.0
        %7329 = vmatpush.msra.mxu0 0.0
        %7330 = vmatpush.msra.mxu0 0.0
        %7331 = vmatpush.msra.mxu0 %v7314
        %7332 = vmatmul.f32.gmra.mxu0 %v2271
        %v7333 = vpop.f32.mrf.mxu0
        %v7334 = vadd.f32 0.0, %v7333
        %7335 = vmatmul.f32.gmra.mxu0 %v2273
        %v7336 = vpop.f32.mrf.mxu0
        %v7337 = vadd.f32 0.0, %v7336
        %7338 = vmatmul.f32.gmra.mxu0 %v2275
        %v7339 = vpop.f32.mrf.mxu0
        %v7340 = vadd.f32 0.0, %v7339
        %7341 = vmatmul.f32.gmra.mxu0 %v2277
        %v7342 = vpop.f32.mrf.mxu0
        %v7343 = vadd.f32 0.0, %v7342
        %7344 = vmatmul.f32.gmra.mxu0 %v2279
        %v7345 = vpop.f32.mrf.mxu0
        %7346 = vmatmul.f32.gmra.mxu0 %v2281
        %v7347 = vpop.f32.mrf.mxu0
        %7348 = vmatmul.f32.gmra.mxu0 %v2283
        %v7349 = vpop.f32.mrf.mxu0
        %7350 = vmatmul.f32.gmra.mxu0 %v2285
        %v7351 = vpop.f32.mrf.mxu0
        %7352 = vmatmul.f32.gmra.mxu0 %v2287
        %v7353 = vpop.f32.mrf.mxu0
        %v7354 = vadd.f32 0.0, %v7353
        %7355 = vmatmul.f32.gmra.mxu0 %v2289
        %v7356 = vpop.f32.mrf.mxu0
        %v7357 = vadd.f32 0.0, %v7356
        %7358 = vmatmul.f32.gmra.mxu0 %v2291
        %v7359 = vpop.f32.mrf.mxu0
        %v7360 = vadd.f32 0.0, %v7359
        %7361 = vmatmul.f32.gmra.mxu0 %v2293
        %v7362 = vpop.f32.mrf.mxu0
        %v7363 = vadd.f32 0.0, %v7362
        %7364 = vmatmul.f32.gmra.mxu0 %v2295
        %v7365 = vpop.f32.mrf.mxu0
        %7366 = vmatmul.f32.gmra.mxu0 %v2297
        %v7367 = vpop.f32.mrf.mxu0
        %7368 = vmatmul.f32.gmra.mxu0 %v2299
        %v7369 = vpop.f32.mrf.mxu0
        %7370 = vmatmul.f32.gmra.mxu0 %v2301
        %v7371 = vpop.f32.mrf.mxu0
        %7372 = vmatmul.f32.gmra.mxu0 %v2303
        %v7373 = vpop.f32.mrf.mxu0
        %v7374 = vadd.f32 0.0, %v7373
        %7375 = vmatmul.f32.gmra.mxu0 %v2305
        %v7376 = vpop.f32.mrf.mxu0
        %v7377 = vadd.f32 0.0, %v7376
        %7378 = vmatmul.f32.gmra.mxu0 %v2307
        %v7379 = vpop.f32.mrf.mxu0
        %v7380 = vadd.f32 0.0, %v7379
        %7381 = vmatmul.f32.gmra.mxu0 %v2309
        %v7382 = vpop.f32.mrf.mxu0
        %v7383 = vadd.f32 0.0, %v7382
        %7384 = vmatmul.f32.gmra.mxu0 %v2311
        %v7385 = vpop.f32.mrf.mxu0
        %7386 = vmatmul.f32.gmra.mxu0 %v2313
        %v7387 = vpop.f32.mrf.mxu0
        %7388 = vmatmul.f32.gmra.mxu0 %v2315
        %v7389 = vpop.f32.mrf.mxu0
        %7390 = vmatmul.f32.gmra.mxu0 %v2317
        %v7391 = vpop.f32.mrf.mxu0
        %7392 = vmatmul.f32.gmra.mxu0 %v2319
        %v7393 = vpop.f32.mrf.mxu0
        %v7394 = vadd.f32 0.0, %v7393
        %7395 = vmatmul.f32.gmra.mxu0 %v2321
        %v7396 = vpop.f32.mrf.mxu0
        %v7397 = vadd.f32 0.0, %v7396
        %7398 = vmatmul.f32.gmra.mxu0 %v2323
        %v7399 = vpop.f32.mrf.mxu0
        %v7400 = vadd.f32 0.0, %v7399
        %7401 = vmatmul.f32.gmra.mxu0 %v2325
        %v7402 = vpop.f32.mrf.mxu0
        %v7403 = vadd.f32 0.0, %v7402
        %7404 = vmatmul.f32.gmra.mxu0 %v2327
        %v7405 = vpop.f32.mrf.mxu0
        %7406 = vmatmul.f32.gmra.mxu0 %v2329
        %v7407 = vpop.f32.mrf.mxu0
        %7408 = vmatmul.f32.gmra.mxu0 %v2331
        %v7409 = vpop.f32.mrf.mxu0
        %7410 = vmatmul.f32.gmra.mxu0 %v2333
        %v7411 = vpop.f32.mrf.mxu0
        %7412 = vmatmul.f32.gmra.mxu0 %v2335
        %v7413 = vpop.f32.mrf.mxu0
        %v7414 = vadd.f32 0.0, %v7413
        %7415 = vmatmul.f32.gmra.mxu0 %v2337
        %v7416 = vpop.f32.mrf.mxu0
        %v7417 = vadd.f32 0.0, %v7416
        %7418 = vmatmul.f32.gmra.mxu0 %v2339
        %v7419 = vpop.f32.mrf.mxu0
        %v7420 = vadd.f32 0.0, %v7419
        %7421 = vmatmul.f32.gmra.mxu0 %v2341
        %v7422 = vpop.f32.mrf.mxu0
        %v7423 = vadd.f32 0.0, %v7422
        %7424 = vmatmul.f32.gmra.mxu0 %v2343
        %v7425 = vpop.f32.mrf.mxu0
        %7426 = vmatmul.f32.gmra.mxu0 %v2345
        %v7427 = vpop.f32.mrf.mxu0
        %7428 = vmatmul.f32.gmra.mxu0 %v2347
        %v7429 = vpop.f32.mrf.mxu0
        %7430 = vmatmul.f32.gmra.mxu0 %v2349
        %v7431 = vpop.f32.mrf.mxu0
        %7432 = vmatmul.f32.gmra.mxu0 %v2351
        %v7433 = vpop.f32.mrf.mxu0
        %v7434 = vadd.f32 0.0, %v7433
        %7435 = vmatmul.f32.gmra.mxu0 %v2353
        %v7436 = vpop.f32.mrf.mxu0
        %v7437 = vadd.f32 0.0, %v7436
        %7438 = vmatmul.f32.gmra.mxu0 %v2355
        %v7439 = vpop.f32.mrf.mxu0
        %v7440 = vadd.f32 0.0, %v7439
        %7441 = vmatmul.f32.gmra.mxu0 %v2357
        %v7442 = vpop.f32.mrf.mxu0
        %v7443 = vadd.f32 0.0, %v7442
        %7444 = vmatmul.f32.gmra.mxu0 %v2359
        %v7445 = vpop.f32.mrf.mxu0
        %7446 = vmatmul.f32.gmra.mxu0 %v2361
        %v7447 = vpop.f32.mrf.mxu0
        %7448 = vmatmul.f32.gmra.mxu0 %v2363
        %v7449 = vpop.f32.mrf.mxu0
        %7450 = vmatmul.f32.gmra.mxu0 %v2365
        %v7451 = vpop.f32.mrf.mxu0
        %7452 = vmatmul.f32.gmra.mxu0 %v2367
        %v7453 = vpop.f32.mrf.mxu0
        %v7454 = vadd.f32 0.0, %v7453
        %7455 = vmatmul.f32.gmra.mxu0 %v2369
        %v7456 = vpop.f32.mrf.mxu0
        %v7457 = vadd.f32 0.0, %v7456
        %7458 = vmatmul.f32.gmra.mxu0 %v2371
        %v7459 = vpop.f32.mrf.mxu0
        %v7460 = vadd.f32 0.0, %v7459
        %7461 = vmatmul.f32.gmra.mxu0 %v4577
        %v7462 = vpop.f32.mrf.mxu0
        %v7463 = vadd.f32 0.0, %v7462
        %7464 = vmatmul.f32.gmra.mxu0 %v4579
        %v7465 = vpop.f32.mrf.mxu0
        %7466 = vmatmul.f32.gmra.mxu0 %v4581
        %v7467 = vpop.f32.mrf.mxu0
        %7468 = vmatmul.f32.gmra.mxu0 %v4583
        %v7469 = vpop.f32.mrf.mxu0
        %7470 = vmatmul.f32.gmra.mxu0 %v4585
        %v7471 = vpop.f32.mrf.mxu0
        %7472 = vmatmul.f32.gmra.mxu0 %v4587
        %v7473 = vpop.f32.mrf.mxu0
        %v7474 = vadd.f32 0.0, %v7473
        %7475 = vmatmul.f32.gmra.mxu0 %v4589
        %v7476 = vpop.f32.mrf.mxu0
        %v7477 = vadd.f32 0.0, %v7476
        %7478 = vmatmul.f32.gmra.mxu0 %v4591
        %v7479 = vpop.f32.mrf.mxu0
        %v7480 = vadd.f32 0.0, %v7479
        %7481 = vmatmul.f32.gmra.mxu0 %v5937
        %v7482 = vpop.f32.mrf.mxu0
        %v7483 = vadd.f32 0.0, %v7482
        %7484 = vmatmul.f32.gmra.mxu0 %v5939
        %v7485 = vpop.f32.mrf.mxu0
        %7486 = vmatmul.f32.gmra.mxu0 %v5941
        %v7487 = vpop.f32.mrf.mxu0
        %7488 = vmatmul.f32.gmra.mxu0 %v5943
        %v7489 = vpop.f32.mrf.mxu0
        %7490 = vmatmul.f32.gmra.mxu0 %v5945
        %v7491 = vpop.f32.mrf.mxu0
        %7492 = vmatmul.f32.gmra.mxu0 %v5947
        %v7493 = vpop.f32.mrf.mxu0
        %v7494 = vadd.f32 0.0, %v7493
        %7495 = vmatmul.f32.gmra.mxu0 %v5949
        %v7496 = vpop.f32.mrf.mxu0
        %v7497 = vadd.f32 0.0, %v7496
        %7498 = vmatmul.f32.gmra.mxu0 %v5951
        %v7499 = vpop.f32.mrf.mxu0
        %v7500 = vadd.f32 0.0, %v7499
        %7501 = vmatmul.f32.gmra.mxu0 %v7297
        %v7502 = vpop.f32.mrf.mxu0
        %7503 = vmatmul.f32.gmra.mxu0 %v7299
        %v7504 = vpop.f32.mrf.mxu0
        %7505 = vmatmul.f32.gmra.mxu0 %v7301
        %v7506 = vpop.f32.mrf.mxu0
        %7507 = vmatmul.f32.gmra.mxu0 %v7303
        %v7508 = vpop.f32.mrf.mxu0
        %7509 = vmatmul.f32.gmra.mxu0 %v7305
        %v7510 = vpop.f32.mrf.mxu0
        %7511 = vmatmul.f32.gmra.mxu0 %v7307
        %v7512 = vpop.f32.mrf.mxu0
        %v7513 = vadd.f32 0.0, %v7512
        %7514 = vmatmul.f32.gmra.mxu0 %v7309
        %v7515 = vpop.f32.mrf.mxu0
        %v7516 = vadd.f32 0.0, %v7515
        %7517 = vmatmul.f32.gmra.mxu0 %v7311
        %v7518 = vpop.f32.mrf.mxu0
        %v7519 = vadd.f32 0.0, %v7518
        %7520 = vdwg.mxu0
        %v7521 = vadd.f32 %v7240, %v7334
        %v7522 = vadd.f32 %v7241, %v7337
        %v7523 = vadd.f32 %v7242, %v7340
        %v7524 = vadd.f32 %v7243, %v7343
        %v7525 = vadd.f32 %v7244, %v7354
        %v7526 = vadd.f32 %v7245, %v7357
        %v7527 = vadd.f32 %v7246, %v7360
        %v7528 = vadd.f32 %v7247, %v7363
        %v7529 = vadd.f32 %v7248, %v7374
        %v7530 = vadd.f32 %v7249, %v7377
        %v7531 = vadd.f32 %v7250, %v7380
        %v7532 = vadd.f32 %v7251, %v7383
        %v7533 = vadd.f32 %v7252, %v7394
        %v7534 = vadd.f32 %v7253, %v7397
        %v7535 = vadd.f32 %v7254, %v7400
        %v7536 = vadd.f32 %v7255, %v7403
        %v7537 = vadd.f32 %v7256, %v7414
        %v7538 = vadd.f32 %v7257, %v7417
        %v7539 = vadd.f32 %v7258, %v7420
        %v7540 = vadd.f32 %v7259, %v7423
        %v7541 = vadd.f32 %v7260, %v7434
        %v7542 = vadd.f32 %v7261, %v7437
        %v7543 = vadd.f32 %v7262, %v7440
        %v7544 = vadd.f32 %v7263, %v7443
        %v7545 = vadd.f32 %v7264, %v7454
        %v7546 = vadd.f32 %v7265, %v7457
        %v7547 = vadd.f32 %v7266, %v7460
        %v7548 = vadd.f32 %v7267, %v7463
        %v7549 = vadd.f32 %v7268, %v7474
        %v7550 = vadd.f32 %v7269, %v7477
        %v7551 = vadd.f32 %v7270, %v7480
        %v7552 = vadd.f32 %v7271, %v7483
        %v7553 = vadd.f32 %v7272, %v7494
        %v7554 = vadd.f32 %v7273, %v7497
        %v7555 = vadd.f32 %v7274, %v7500
        %v7556 = vadd.f32 %v7275, %v7513
        %v7557 = vadd.f32 %v7276, %v7516
        %v7558 = vadd.f32 %v7277, %v7519
        %s7559 = scalar_lea.vmem %s3, 136
        %v7560 = vld [vmem:[%s7559] sm:$0x3f]
        %v7561 = vrot.slane %v1975, 4
        %v7562 = vsel %vm2941, %v6215, %v7561
        %v7563 = vrot.slane %v1976, 4
        %v7564 = vsel %vm2941, %v7561, %v7563
        %v7565 = vrot.slane %v1977, 4
        %v7566 = vsel %vm2941, %v7563, %v7565
        %v7567 = vrot.slane %v1978, 4
        %v7568 = vsel %vm2941, %v7565, %v7567
        %v7569 = vrot.slane %v1979, 4
        %v7570 = vsel %vm2941, %v7567, %v7569
        %v7571 = vrot.slane %v1980, 4
        %v7572 = vsel %vm2941, %v7569, %v7571
        %v7573 = vrot.slane %v1981, 4
        %v7574 = vsel %vm2941, %v7571, %v7573
        %v7575 = vrot.slane %v1982, 4
        %v7576 = vsel %vm2941, %v7573, %v7575
        %v7577 = vsel %vm2222, %v7562, 0
        %v7579 = vsel %vm2222, %v7564, 0
        %v7581 = vsel %vm2222, %v7566, 0
        %v7583 = vsel %vm2222, %v7568, 0
        %v7585 = vsel %vm2222, %v7570, 0
        %v7587 = vsel %vm2222, %v7572, 0
        %v7589 = vsel %vm2222, %v7574, 0
        %v7591 = vsel %vm2222, %v7576, 0
        %v7594 = vsel %vm2070, %v7560, 0
        %7596 = vmatpush.msra.mxu0 0.0
        %7597 = vmatpush.msra.mxu0 0.0
        %7598 = vmatpush.msra.mxu0 0.0
        %7599 = vmatpush.msra.mxu0 0.0
        %7600 = vmatpush.msra.mxu0 0.0
        %7601 = vmatpush.msra.mxu0 0.0
        %7602 = vmatpush.msra.mxu0 0.0
        %7603 = vmatpush.msra.mxu0 0.0
        %7604 = vmatpush.msra.mxu0 0.0
        %7605 = vmatpush.msra.mxu0 0.0
        %7606 = vmatpush.msra.mxu0 0.0
        %7607 = vmatpush.msra.mxu0 0.0
        %7608 = vmatpush.msra.mxu0 0.0
        %7609 = vmatpush.msra.mxu0 0.0
        %7610 = vmatpush.msra.mxu0 0.0
        %7611 = vmatpush.msra.mxu0 %v7594
        %7612 = vmatmul.f32.gmra.mxu0 %v3141
        %v7613 = vpop.f32.mrf.mxu0
        %v7614 = vadd.f32 0.0, %v7613
        %7615 = vmatmul.f32.gmra.mxu0 %v3143
        %v7616 = vpop.f32.mrf.mxu0
        %v7617 = vadd.f32 0.0, %v7616
        %7618 = vmatmul.f32.gmra.mxu0 %v3145
        %v7619 = vpop.f32.mrf.mxu0
        %v7620 = vadd.f32 0.0, %v7619
        %7621 = vmatmul.f32.gmra.mxu0 %v3147
        %v7622 = vpop.f32.mrf.mxu0
        %v7623 = vadd.f32 0.0, %v7622
        %7624 = vmatmul.f32.gmra.mxu0 %v3149
        %v7625 = vpop.f32.mrf.mxu0
        %7626 = vmatmul.f32.gmra.mxu0 %v3151
        %v7627 = vpop.f32.mrf.mxu0
        %7628 = vmatmul.f32.gmra.mxu0 %v3153
        %v7629 = vpop.f32.mrf.mxu0
        %7630 = vmatmul.f32.gmra.mxu0 %v3155
        %v7631 = vpop.f32.mrf.mxu0
        %7632 = vmatmul.f32.gmra.mxu0 %v3157
        %v7633 = vpop.f32.mrf.mxu0
        %v7634 = vadd.f32 0.0, %v7633
        %7635 = vmatmul.f32.gmra.mxu0 %v3159
        %v7636 = vpop.f32.mrf.mxu0
        %v7637 = vadd.f32 0.0, %v7636
        %7638 = vmatmul.f32.gmra.mxu0 %v3161
        %v7639 = vpop.f32.mrf.mxu0
        %v7640 = vadd.f32 0.0, %v7639
        %7641 = vmatmul.f32.gmra.mxu0 %v3163
        %v7642 = vpop.f32.mrf.mxu0
        %v7643 = vadd.f32 0.0, %v7642
        %7644 = vmatmul.f32.gmra.mxu0 %v3165
        %v7645 = vpop.f32.mrf.mxu0
        %7646 = vmatmul.f32.gmra.mxu0 %v3167
        %v7647 = vpop.f32.mrf.mxu0
        %7648 = vmatmul.f32.gmra.mxu0 %v3169
        %v7649 = vpop.f32.mrf.mxu0
        %7650 = vmatmul.f32.gmra.mxu0 %v3171
        %v7651 = vpop.f32.mrf.mxu0
        %7652 = vmatmul.f32.gmra.mxu0 %v3173
        %v7653 = vpop.f32.mrf.mxu0
        %v7654 = vadd.f32 0.0, %v7653
        %7655 = vmatmul.f32.gmra.mxu0 %v3175
        %v7656 = vpop.f32.mrf.mxu0
        %v7657 = vadd.f32 0.0, %v7656
        %7658 = vmatmul.f32.gmra.mxu0 %v3177
        %v7659 = vpop.f32.mrf.mxu0
        %v7660 = vadd.f32 0.0, %v7659
        %7661 = vmatmul.f32.gmra.mxu0 %v3179
        %v7662 = vpop.f32.mrf.mxu0
        %v7663 = vadd.f32 0.0, %v7662
        %7664 = vmatmul.f32.gmra.mxu0 %v3181
        %v7665 = vpop.f32.mrf.mxu0
        %7666 = vmatmul.f32.gmra.mxu0 %v3183
        %v7667 = vpop.f32.mrf.mxu0
        %7668 = vmatmul.f32.gmra.mxu0 %v3185
        %v7669 = vpop.f32.mrf.mxu0
        %7670 = vmatmul.f32.gmra.mxu0 %v3187
        %v7671 = vpop.f32.mrf.mxu0
        %7672 = vmatmul.f32.gmra.mxu0 %v3189
        %v7673 = vpop.f32.mrf.mxu0
        %v7674 = vadd.f32 0.0, %v7673
        %7675 = vmatmul.f32.gmra.mxu0 %v3191
        %v7676 = vpop.f32.mrf.mxu0
        %v7677 = vadd.f32 0.0, %v7676
        %7678 = vmatmul.f32.gmra.mxu0 %v3193
        %v7679 = vpop.f32.mrf.mxu0
        %v7680 = vadd.f32 0.0, %v7679
        %7681 = vmatmul.f32.gmra.mxu0 %v3195
        %v7682 = vpop.f32.mrf.mxu0
        %v7683 = vadd.f32 0.0, %v7682
        %7684 = vmatmul.f32.gmra.mxu0 %v3197
        %v7685 = vpop.f32.mrf.mxu0
        %7686 = vmatmul.f32.gmra.mxu0 %v3199
        %v7687 = vpop.f32.mrf.mxu0
        %7688 = vmatmul.f32.gmra.mxu0 %v3201
        %v7689 = vpop.f32.mrf.mxu0
        %7690 = vmatmul.f32.gmra.mxu0 %v3203
        %v7691 = vpop.f32.mrf.mxu0
        %7692 = vmatmul.f32.gmra.mxu0 %v3205
        %v7693 = vpop.f32.mrf.mxu0
        %v7694 = vadd.f32 0.0, %v7693
        %7695 = vmatmul.f32.gmra.mxu0 %v3207
        %v7696 = vpop.f32.mrf.mxu0
        %v7697 = vadd.f32 0.0, %v7696
        %7698 = vmatmul.f32.gmra.mxu0 %v3209
        %v7699 = vpop.f32.mrf.mxu0
        %v7700 = vadd.f32 0.0, %v7699
        %7701 = vmatmul.f32.gmra.mxu0 %v3211
        %v7702 = vpop.f32.mrf.mxu0
        %v7703 = vadd.f32 0.0, %v7702
        %7704 = vmatmul.f32.gmra.mxu0 %v3213
        %v7705 = vpop.f32.mrf.mxu0
        %7706 = vmatmul.f32.gmra.mxu0 %v3215
        %v7707 = vpop.f32.mrf.mxu0
        %7708 = vmatmul.f32.gmra.mxu0 %v3217
        %v7709 = vpop.f32.mrf.mxu0
        %7710 = vmatmul.f32.gmra.mxu0 %v3219
        %v7711 = vpop.f32.mrf.mxu0
        %7712 = vmatmul.f32.gmra.mxu0 %v3221
        %v7713 = vpop.f32.mrf.mxu0
        %v7714 = vadd.f32 0.0, %v7713
        %7715 = vmatmul.f32.gmra.mxu0 %v3223
        %v7716 = vpop.f32.mrf.mxu0
        %v7717 = vadd.f32 0.0, %v7716
        %7718 = vmatmul.f32.gmra.mxu0 %v3225
        %v7719 = vpop.f32.mrf.mxu0
        %v7720 = vadd.f32 0.0, %v7719
        %7721 = vmatmul.f32.gmra.mxu0 %v3227
        %v7722 = vpop.f32.mrf.mxu0
        %v7723 = vadd.f32 0.0, %v7722
        %7724 = vmatmul.f32.gmra.mxu0 %v3229
        %v7725 = vpop.f32.mrf.mxu0
        %7726 = vmatmul.f32.gmra.mxu0 %v3231
        %v7727 = vpop.f32.mrf.mxu0
        %7728 = vmatmul.f32.gmra.mxu0 %v3233
        %v7729 = vpop.f32.mrf.mxu0
        %7730 = vmatmul.f32.gmra.mxu0 %v3235
        %v7731 = vpop.f32.mrf.mxu0
        %7732 = vmatmul.f32.gmra.mxu0 %v3237
        %v7733 = vpop.f32.mrf.mxu0
        %v7734 = vadd.f32 0.0, %v7733
        %7735 = vmatmul.f32.gmra.mxu0 %v3239
        %v7736 = vpop.f32.mrf.mxu0
        %v7737 = vadd.f32 0.0, %v7736
        %7738 = vmatmul.f32.gmra.mxu0 %v3241
        %v7739 = vpop.f32.mrf.mxu0
        %v7740 = vadd.f32 0.0, %v7739
        %7741 = vmatmul.f32.gmra.mxu0 %v4857
        %v7742 = vpop.f32.mrf.mxu0
        %v7743 = vadd.f32 0.0, %v7742
        %7744 = vmatmul.f32.gmra.mxu0 %v4859
        %v7745 = vpop.f32.mrf.mxu0
        %7746 = vmatmul.f32.gmra.mxu0 %v4861
        %v7747 = vpop.f32.mrf.mxu0
        %7748 = vmatmul.f32.gmra.mxu0 %v4863
        %v7749 = vpop.f32.mrf.mxu0
        %7750 = vmatmul.f32.gmra.mxu0 %v4865
        %v7751 = vpop.f32.mrf.mxu0
        %7752 = vmatmul.f32.gmra.mxu0 %v4867
        %v7753 = vpop.f32.mrf.mxu0
        %v7754 = vadd.f32 0.0, %v7753
        %7755 = vmatmul.f32.gmra.mxu0 %v4869
        %v7756 = vpop.f32.mrf.mxu0
        %v7757 = vadd.f32 0.0, %v7756
        %7758 = vmatmul.f32.gmra.mxu0 %v4871
        %v7759 = vpop.f32.mrf.mxu0
        %v7760 = vadd.f32 0.0, %v7759
        %7761 = vmatmul.f32.gmra.mxu0 %v6217
        %v7762 = vpop.f32.mrf.mxu0
        %v7763 = vadd.f32 0.0, %v7762
        %7764 = vmatmul.f32.gmra.mxu0 %v6219
        %v7765 = vpop.f32.mrf.mxu0
        %7766 = vmatmul.f32.gmra.mxu0 %v6221
        %v7767 = vpop.f32.mrf.mxu0
        %7768 = vmatmul.f32.gmra.mxu0 %v6223
        %v7769 = vpop.f32.mrf.mxu0
        %7770 = vmatmul.f32.gmra.mxu0 %v6225
        %v7771 = vpop.f32.mrf.mxu0
        %7772 = vmatmul.f32.gmra.mxu0 %v6227
        %v7773 = vpop.f32.mrf.mxu0
        %v7774 = vadd.f32 0.0, %v7773
        %7775 = vmatmul.f32.gmra.mxu0 %v6229
        %v7776 = vpop.f32.mrf.mxu0
        %v7777 = vadd.f32 0.0, %v7776
        %7778 = vmatmul.f32.gmra.mxu0 %v6231
        %v7779 = vpop.f32.mrf.mxu0
        %v7780 = vadd.f32 0.0, %v7779
        %7781 = vmatmul.f32.gmra.mxu0 %v7577
        %v7782 = vpop.f32.mrf.mxu0
        %7783 = vmatmul.f32.gmra.mxu0 %v7579
        %v7784 = vpop.f32.mrf.mxu0
        %7785 = vmatmul.f32.gmra.mxu0 %v7581
        %v7786 = vpop.f32.mrf.mxu0
        %7787 = vmatmul.f32.gmra.mxu0 %v7583
        %v7788 = vpop.f32.mrf.mxu0
        %7789 = vmatmul.f32.gmra.mxu0 %v7585
        %v7790 = vpop.f32.mrf.mxu0
        %7791 = vmatmul.f32.gmra.mxu0 %v7587
        %v7792 = vpop.f32.mrf.mxu0
        %v7793 = vadd.f32 0.0, %v7792
        %7794 = vmatmul.f32.gmra.mxu0 %v7589
        %v7795 = vpop.f32.mrf.mxu0
        %v7796 = vadd.f32 0.0, %v7795
        %7797 = vmatmul.f32.gmra.mxu0 %v7591
        %v7798 = vpop.f32.mrf.mxu0
        %v7799 = vadd.f32 0.0, %v7798
        %7800 = vdwg.mxu0
        %v7801 = vadd.f32 %v7521, %v7614
        %v7802 = vadd.f32 %v7522, %v7617
        %v7803 = vadd.f32 %v7523, %v7620
        %v7804 = vadd.f32 %v7524, %v7623
        %v7805 = vadd.f32 %v7525, %v7634
        %v7806 = vadd.f32 %v7526, %v7637
        %v7807 = vadd.f32 %v7527, %v7640
        %v7808 = vadd.f32 %v7528, %v7643
        %v7809 = vadd.f32 %v7529, %v7654
        %v7810 = vadd.f32 %v7530, %v7657
        %v7811 = vadd.f32 %v7531, %v7660
        %v7812 = vadd.f32 %v7532, %v7663
        %v7813 = vadd.f32 %v7533, %v7674
        %v7814 = vadd.f32 %v7534, %v7677
        %v7815 = vadd.f32 %v7535, %v7680
        %v7816 = vadd.f32 %v7536, %v7683
        %v7817 = vadd.f32 %v7537, %v7694
        %v7818 = vadd.f32 %v7538, %v7697
        %v7819 = vadd.f32 %v7539, %v7700
        %v7820 = vadd.f32 %v7540, %v7703
        %v7821 = vadd.f32 %v7541, %v7714
        %v7822 = vadd.f32 %v7542, %v7717
        %v7823 = vadd.f32 %v7543, %v7720
        %v7824 = vadd.f32 %v7544, %v7723
        %v7825 = vadd.f32 %v7545, %v7734
        %v7826 = vadd.f32 %v7546, %v7737
        %v7827 = vadd.f32 %v7547, %v7740
        %v7828 = vadd.f32 %v7548, %v7743
        %v7829 = vadd.f32 %v7549, %v7754
        %v7830 = vadd.f32 %v7550, %v7757
        %v7831 = vadd.f32 %v7551, %v7760
        %v7832 = vadd.f32 %v7552, %v7763
        %v7833 = vadd.f32 %v7553, %v7774
        %v7834 = vadd.f32 %v7554, %v7777
        %v7835 = vadd.f32 %v7555, %v7780
        %v7836 = vadd.f32 %v7556, %v7793
        %v7837 = vadd.f32 %v7557, %v7796
        %v7838 = vadd.f32 %v7558, %v7799
        %s7839 = scalar_lea.vmem %s3, 144
        %v7840 = vld [vmem:[%s7839] sm:$0x3f]
        %v7841 = vrot.slane %v1975, 6
        %v7842 = vsel %vm3491, %v6495, %v7841
        %v7843 = vrot.slane %v1976, 6
        %v7844 = vsel %vm3491, %v7841, %v7843
        %v7845 = vrot.slane %v1977, 6
        %v7846 = vsel %vm3491, %v7843, %v7845
        %v7847 = vrot.slane %v1978, 6
        %v7848 = vsel %vm3491, %v7845, %v7847
        %v7849 = vrot.slane %v1979, 6
        %v7850 = vsel %vm3491, %v7847, %v7849
        %v7851 = vrot.slane %v1980, 6
        %v7852 = vsel %vm3491, %v7849, %v7851
        %v7853 = vrot.slane %v1981, 6
        %v7854 = vsel %vm3491, %v7851, %v7853
        %v7855 = vrot.slane %v1982, 6
        %v7856 = vsel %vm3491, %v7853, %v7855
        %v7857 = vsel %vm2222, %v7842, 0
        %v7859 = vsel %vm2222, %v7844, 0
        %v7861 = vsel %vm2222, %v7846, 0
        %v7863 = vsel %vm2222, %v7848, 0
        %v7865 = vsel %vm2222, %v7850, 0
        %v7867 = vsel %vm2222, %v7852, 0
        %v7869 = vsel %vm2222, %v7854, 0
        %v7871 = vsel %vm2222, %v7856, 0
        %v7874 = vsel %vm2070, %v7840, 0
        %7876 = vmatpush.msra.mxu0 0.0
        %7877 = vmatpush.msra.mxu0 0.0
        %7878 = vmatpush.msra.mxu0 0.0
        %7879 = vmatpush.msra.mxu0 0.0
        %7880 = vmatpush.msra.mxu0 0.0
        %7881 = vmatpush.msra.mxu0 0.0
        %7882 = vmatpush.msra.mxu0 0.0
        %7883 = vmatpush.msra.mxu0 0.0
        %7884 = vmatpush.msra.mxu0 0.0
        %7885 = vmatpush.msra.mxu0 0.0
        %7886 = vmatpush.msra.mxu0 0.0
        %7887 = vmatpush.msra.mxu0 0.0
        %7888 = vmatpush.msra.mxu0 0.0
        %7889 = vmatpush.msra.mxu0 0.0
        %7890 = vmatpush.msra.mxu0 0.0
        %7891 = vmatpush.msra.mxu0 %v7874
        %7892 = vmatmul.f32.gmra.mxu0 %v3691
        %v7893 = vpop.f32.mrf.mxu0
        %v7894 = vadd.f32 0.0, %v7893
        %7895 = vmatmul.f32.gmra.mxu0 %v3693
        %v7896 = vpop.f32.mrf.mxu0
        %v7897 = vadd.f32 0.0, %v7896
        %7898 = vmatmul.f32.gmra.mxu0 %v3695
        %v7899 = vpop.f32.mrf.mxu0
        %v7900 = vadd.f32 0.0, %v7899
        %7901 = vmatmul.f32.gmra.mxu0 %v3697
        %v7902 = vpop.f32.mrf.mxu0
        %v7903 = vadd.f32 0.0, %v7902
        %7904 = vmatmul.f32.gmra.mxu0 %v3699
        %v7905 = vpop.f32.mrf.mxu0
        %7906 = vmatmul.f32.gmra.mxu0 %v3701
        %v7907 = vpop.f32.mrf.mxu0
        %7908 = vmatmul.f32.gmra.mxu0 %v3703
        %v7909 = vpop.f32.mrf.mxu0
        %7910 = vmatmul.f32.gmra.mxu0 %v3705
        %v7911 = vpop.f32.mrf.mxu0
        %7912 = vmatmul.f32.gmra.mxu0 %v3707
        %v7913 = vpop.f32.mrf.mxu0
        %v7914 = vadd.f32 0.0, %v7913
        %7915 = vmatmul.f32.gmra.mxu0 %v3709
        %v7916 = vpop.f32.mrf.mxu0
        %v7917 = vadd.f32 0.0, %v7916
        %7918 = vmatmul.f32.gmra.mxu0 %v3711
        %v7919 = vpop.f32.mrf.mxu0
        %v7920 = vadd.f32 0.0, %v7919
        %7921 = vmatmul.f32.gmra.mxu0 %v3713
        %v7922 = vpop.f32.mrf.mxu0
        %v7923 = vadd.f32 0.0, %v7922
        %7924 = vmatmul.f32.gmra.mxu0 %v3715
        %v7925 = vpop.f32.mrf.mxu0
        %7926 = vmatmul.f32.gmra.mxu0 %v3717
        %v7927 = vpop.f32.mrf.mxu0
        %7928 = vmatmul.f32.gmra.mxu0 %v3719
        %v7929 = vpop.f32.mrf.mxu0
        %7930 = vmatmul.f32.gmra.mxu0 %v3721
        %v7931 = vpop.f32.mrf.mxu0
        %7932 = vmatmul.f32.gmra.mxu0 %v3723
        %v7933 = vpop.f32.mrf.mxu0
        %v7934 = vadd.f32 0.0, %v7933
        %7935 = vmatmul.f32.gmra.mxu0 %v3725
        %v7936 = vpop.f32.mrf.mxu0
        %v7937 = vadd.f32 0.0, %v7936
        %7938 = vmatmul.f32.gmra.mxu0 %v3727
        %v7939 = vpop.f32.mrf.mxu0
        %v7940 = vadd.f32 0.0, %v7939
        %7941 = vmatmul.f32.gmra.mxu0 %v3729
        %v7942 = vpop.f32.mrf.mxu0
        %v7943 = vadd.f32 0.0, %v7942
        %7944 = vmatmul.f32.gmra.mxu0 %v3731
        %v7945 = vpop.f32.mrf.mxu0
        %7946 = vmatmul.f32.gmra.mxu0 %v3733
        %v7947 = vpop.f32.mrf.mxu0
        %7948 = vmatmul.f32.gmra.mxu0 %v3735
        %v7949 = vpop.f32.mrf.mxu0
        %7950 = vmatmul.f32.gmra.mxu0 %v3737
        %v7951 = vpop.f32.mrf.mxu0
        %7952 = vmatmul.f32.gmra.mxu0 %v3739
        %v7953 = vpop.f32.mrf.mxu0
        %v7954 = vadd.f32 0.0, %v7953
        %7955 = vmatmul.f32.gmra.mxu0 %v3741
        %v7956 = vpop.f32.mrf.mxu0
        %v7957 = vadd.f32 0.0, %v7956
        %7958 = vmatmul.f32.gmra.mxu0 %v3743
        %v7959 = vpop.f32.mrf.mxu0
        %v7960 = vadd.f32 0.0, %v7959
        %7961 = vmatmul.f32.gmra.mxu0 %v3745
        %v7962 = vpop.f32.mrf.mxu0
        %v7963 = vadd.f32 0.0, %v7962
        %7964 = vmatmul.f32.gmra.mxu0 %v3747
        %v7965 = vpop.f32.mrf.mxu0
        %7966 = vmatmul.f32.gmra.mxu0 %v3749
        %v7967 = vpop.f32.mrf.mxu0
        %7968 = vmatmul.f32.gmra.mxu0 %v3751
        %v7969 = vpop.f32.mrf.mxu0
        %7970 = vmatmul.f32.gmra.mxu0 %v3753
        %v7971 = vpop.f32.mrf.mxu0
        %7972 = vmatmul.f32.gmra.mxu0 %v3755
        %v7973 = vpop.f32.mrf.mxu0
        %v7974 = vadd.f32 0.0, %v7973
        %7975 = vmatmul.f32.gmra.mxu0 %v3757
        %v7976 = vpop.f32.mrf.mxu0
        %v7977 = vadd.f32 0.0, %v7976
        %7978 = vmatmul.f32.gmra.mxu0 %v3759
        %v7979 = vpop.f32.mrf.mxu0
        %v7980 = vadd.f32 0.0, %v7979
        %7981 = vmatmul.f32.gmra.mxu0 %v3761
        %v7982 = vpop.f32.mrf.mxu0
        %v7983 = vadd.f32 0.0, %v7982
        %7984 = vmatmul.f32.gmra.mxu0 %v3763
        %v7985 = vpop.f32.mrf.mxu0
        %7986 = vmatmul.f32.gmra.mxu0 %v3765
        %v7987 = vpop.f32.mrf.mxu0
        %7988 = vmatmul.f32.gmra.mxu0 %v3767
        %v7989 = vpop.f32.mrf.mxu0
        %7990 = vmatmul.f32.gmra.mxu0 %v3769
        %v7991 = vpop.f32.mrf.mxu0
        %7992 = vmatmul.f32.gmra.mxu0 %v3771
        %v7993 = vpop.f32.mrf.mxu0
        %v7994 = vadd.f32 0.0, %v7993
        %7995 = vmatmul.f32.gmra.mxu0 %v3773
        %v7996 = vpop.f32.mrf.mxu0
        %v7997 = vadd.f32 0.0, %v7996
        %7998 = vmatmul.f32.gmra.mxu0 %v3775
        %v7999 = vpop.f32.mrf.mxu0
        %v8000 = vadd.f32 0.0, %v7999
        %8001 = vmatmul.f32.gmra.mxu0 %v3777
        %v8002 = vpop.f32.mrf.mxu0
        %v8003 = vadd.f32 0.0, %v8002
        %8004 = vmatmul.f32.gmra.mxu0 %v3779
        %v8005 = vpop.f32.mrf.mxu0
        %8006 = vmatmul.f32.gmra.mxu0 %v3781
        %v8007 = vpop.f32.mrf.mxu0
        %8008 = vmatmul.f32.gmra.mxu0 %v3783
        %v8009 = vpop.f32.mrf.mxu0
        %8010 = vmatmul.f32.gmra.mxu0 %v3785
        %v8011 = vpop.f32.mrf.mxu0
        %8012 = vmatmul.f32.gmra.mxu0 %v3787
        %v8013 = vpop.f32.mrf.mxu0
        %v8014 = vadd.f32 0.0, %v8013
        %8015 = vmatmul.f32.gmra.mxu0 %v3789
        %v8016 = vpop.f32.mrf.mxu0
        %v8017 = vadd.f32 0.0, %v8016
        %8018 = vmatmul.f32.gmra.mxu0 %v3791
        %v8019 = vpop.f32.mrf.mxu0
        %v8020 = vadd.f32 0.0, %v8019
        %8021 = vmatmul.f32.gmra.mxu0 %v5137
        %v8022 = vpop.f32.mrf.mxu0
        %v8023 = vadd.f32 0.0, %v8022
        %8024 = vmatmul.f32.gmra.mxu0 %v5139
        %v8025 = vpop.f32.mrf.mxu0
        %8026 = vmatmul.f32.gmra.mxu0 %v5141
        %v8027 = vpop.f32.mrf.mxu0
        %8028 = vmatmul.f32.gmra.mxu0 %v5143
        %v8029 = vpop.f32.mrf.mxu0
        %8030 = vmatmul.f32.gmra.mxu0 %v5145
        %v8031 = vpop.f32.mrf.mxu0
        %8032 = vmatmul.f32.gmra.mxu0 %v5147
        %v8033 = vpop.f32.mrf.mxu0
        %v8034 = vadd.f32 0.0, %v8033
        %8035 = vmatmul.f32.gmra.mxu0 %v5149
        %v8036 = vpop.f32.mrf.mxu0
        %v8037 = vadd.f32 0.0, %v8036
        %8038 = vmatmul.f32.gmra.mxu0 %v5151
        %v8039 = vpop.f32.mrf.mxu0
        %v8040 = vadd.f32 0.0, %v8039
        %8041 = vmatmul.f32.gmra.mxu0 %v6497
        %v8042 = vpop.f32.mrf.mxu0
        %v8043 = vadd.f32 0.0, %v8042
        %8044 = vmatmul.f32.gmra.mxu0 %v6499
        %v8045 = vpop.f32.mrf.mxu0
        %8046 = vmatmul.f32.gmra.mxu0 %v6501
        %v8047 = vpop.f32.mrf.mxu0
        %8048 = vmatmul.f32.gmra.mxu0 %v6503
        %v8049 = vpop.f32.mrf.mxu0
        %8050 = vmatmul.f32.gmra.mxu0 %v6505
        %v8051 = vpop.f32.mrf.mxu0
        %8052 = vmatmul.f32.gmra.mxu0 %v6507
        %v8053 = vpop.f32.mrf.mxu0
        %v8054 = vadd.f32 0.0, %v8053
        %8055 = vmatmul.f32.gmra.mxu0 %v6509
        %v8056 = vpop.f32.mrf.mxu0
        %v8057 = vadd.f32 0.0, %v8056
        %8058 = vmatmul.f32.gmra.mxu0 %v6511
        %v8059 = vpop.f32.mrf.mxu0
        %v8060 = vadd.f32 0.0, %v8059
        %8061 = vmatmul.f32.gmra.mxu0 %v7857
        %v8062 = vpop.f32.mrf.mxu0
        %8063 = vmatmul.f32.gmra.mxu0 %v7859
        %v8064 = vpop.f32.mrf.mxu0
        %8065 = vmatmul.f32.gmra.mxu0 %v7861
        %v8066 = vpop.f32.mrf.mxu0
        %8067 = vmatmul.f32.gmra.mxu0 %v7863
        %v8068 = vpop.f32.mrf.mxu0
        %8069 = vmatmul.f32.gmra.mxu0 %v7865
        %v8070 = vpop.f32.mrf.mxu0
        %8071 = vmatmul.f32.gmra.mxu0 %v7867
        %v8072 = vpop.f32.mrf.mxu0
        %v8073 = vadd.f32 0.0, %v8072
        %8074 = vmatmul.f32.gmra.mxu0 %v7869
        %v8075 = vpop.f32.mrf.mxu0
        %v8076 = vadd.f32 0.0, %v8075
        %8077 = vmatmul.f32.gmra.mxu0 %v7871
        %v8078 = vpop.f32.mrf.mxu0
        %v8079 = vadd.f32 0.0, %v8078
        %8080 = vdwg.mxu0
        %v8081 = vadd.f32 %v7801, %v7894
        %v8082 = vadd.f32 %v7802, %v7897
        %v8083 = vadd.f32 %v7803, %v7900
        %v8084 = vadd.f32 %v7804, %v7903
        %v8085 = vadd.f32 %v7805, %v7914
        %v8086 = vadd.f32 %v7806, %v7917
        %v8087 = vadd.f32 %v7807, %v7920
        %v8088 = vadd.f32 %v7808, %v7923
        %v8089 = vadd.f32 %v7809, %v7934
        %v8090 = vadd.f32 %v7810, %v7937
        %v8091 = vadd.f32 %v7811, %v7940
        %v8092 = vadd.f32 %v7812, %v7943
        %v8093 = vadd.f32 %v7813, %v7954
        %v8094 = vadd.f32 %v7814, %v7957
        %v8095 = vadd.f32 %v7815, %v7960
        %v8096 = vadd.f32 %v7816, %v7963
        %v8097 = vadd.f32 %v7817, %v7974
        %v8098 = vadd.f32 %v7818, %v7977
        %v8099 = vadd.f32 %v7819, %v7980
        %v8100 = vadd.f32 %v7820, %v7983
        %v8101 = vadd.f32 %v7821, %v7994
        %v8102 = vadd.f32 %v7822, %v7997
        %v8103 = vadd.f32 %v7823, %v8000
        %v8104 = vadd.f32 %v7824, %v8003
        %v8105 = vadd.f32 %v7825, %v8014
        %v8106 = vadd.f32 %v7826, %v8017
        %v8107 = vadd.f32 %v7827, %v8020
        %v8108 = vadd.f32 %v7828, %v8023
        %v8109 = vadd.f32 %v7829, %v8034
        %v8110 = vadd.f32 %v7830, %v8037
        %v8111 = vadd.f32 %v7831, %v8040
        %v8112 = vadd.f32 %v7832, %v8043
        %v8113 = vadd.f32 %v7833, %v8054
        %v8114 = vadd.f32 %v7834, %v8057
        %v8115 = vadd.f32 %v7835, %v8060
        %v8116 = vadd.f32 %v7836, %v8073
        %v8117 = vadd.f32 %v7837, %v8076
        %v8118 = vadd.f32 %v7838, %v8079
        %s8119 = scalar_lea.vmem %s3, 152
        %v8120 = vld [vmem:[%s8119] sm:$0x3f]
        %v8121 = vsel %vm2222, %v1982, 0
        %v8124 = vsel %vm2070, %v8120, 0
        %8126 = vmatpush.msra.mxu0 0.0
        %8127 = vmatpush.msra.mxu0 0.0
        %8128 = vmatpush.msra.mxu0 0.0
        %8129 = vmatpush.msra.mxu0 0.0
        %8130 = vmatpush.msra.mxu0 0.0
        %8131 = vmatpush.msra.mxu0 0.0
        %8132 = vmatpush.msra.mxu0 0.0
        %8133 = vmatpush.msra.mxu0 0.0
        %8134 = vmatpush.msra.mxu0 0.0
        %8135 = vmatpush.msra.mxu0 0.0
        %8136 = vmatpush.msra.mxu0 0.0
        %8137 = vmatpush.msra.mxu0 0.0
        %8138 = vmatpush.msra.mxu0 0.0
        %8139 = vmatpush.msra.mxu0 0.0
        %8140 = vmatpush.msra.mxu0 0.0
        %8141 = vmatpush.msra.mxu0 %v8124
        %8142 = vmatmul.f32.gmra.mxu0 %v2631
        %v8143 = vpop.f32.mrf.mxu0
        %v8144 = vadd.f32 0.0, %v8143
        %8145 = vmatmul.f32.gmra.mxu0 %v2633
        %v8146 = vpop.f32.mrf.mxu0
        %v8147 = vadd.f32 0.0, %v8146
        %8148 = vmatmul.f32.gmra.mxu0 %v2635
        %v8149 = vpop.f32.mrf.mxu0
        %v8150 = vadd.f32 0.0, %v8149
        %8151 = vmatmul.f32.gmra.mxu0 %v2637
        %v8152 = vpop.f32.mrf.mxu0
        %v8153 = vadd.f32 0.0, %v8152
        %8154 = vmatmul.f32.gmra.mxu0 %v2639
        %v8155 = vpop.f32.mrf.mxu0
        %8156 = vmatmul.f32.gmra.mxu0 %v2641
        %v8157 = vpop.f32.mrf.mxu0
        %8158 = vmatmul.f32.gmra.mxu0 %v2643
        %v8159 = vpop.f32.mrf.mxu0
        %8160 = vmatmul.f32.gmra.mxu0 %v2645
        %v8161 = vpop.f32.mrf.mxu0
        %8162 = vmatmul.f32.gmra.mxu0 %v2647
        %v8163 = vpop.f32.mrf.mxu0
        %v8164 = vadd.f32 0.0, %v8163
        %8165 = vmatmul.f32.gmra.mxu0 %v2649
        %v8166 = vpop.f32.mrf.mxu0
        %v8167 = vadd.f32 0.0, %v8166
        %8168 = vmatmul.f32.gmra.mxu0 %v2651
        %v8169 = vpop.f32.mrf.mxu0
        %v8170 = vadd.f32 0.0, %v8169
        %8171 = vmatmul.f32.gmra.mxu0 %v2653
        %v8172 = vpop.f32.mrf.mxu0
        %v8173 = vadd.f32 0.0, %v8172
        %8174 = vmatmul.f32.gmra.mxu0 %v2655
        %v8175 = vpop.f32.mrf.mxu0
        %8176 = vmatmul.f32.gmra.mxu0 %v2657
        %v8177 = vpop.f32.mrf.mxu0
        %8178 = vmatmul.f32.gmra.mxu0 %v2659
        %v8179 = vpop.f32.mrf.mxu0
        %8180 = vmatmul.f32.gmra.mxu0 %v2661
        %v8181 = vpop.f32.mrf.mxu0
        %8182 = vmatmul.f32.gmra.mxu0 %v2663
        %v8183 = vpop.f32.mrf.mxu0
        %v8184 = vadd.f32 0.0, %v8183
        %8185 = vmatmul.f32.gmra.mxu0 %v2665
        %v8186 = vpop.f32.mrf.mxu0
        %v8187 = vadd.f32 0.0, %v8186
        %8188 = vmatmul.f32.gmra.mxu0 %v2667
        %v8189 = vpop.f32.mrf.mxu0
        %v8190 = vadd.f32 0.0, %v8189
        %8191 = vmatmul.f32.gmra.mxu0 %v2669
        %v8192 = vpop.f32.mrf.mxu0
        %v8193 = vadd.f32 0.0, %v8192
        %8194 = vmatmul.f32.gmra.mxu0 %v2671
        %v8195 = vpop.f32.mrf.mxu0
        %8196 = vmatmul.f32.gmra.mxu0 %v2673
        %v8197 = vpop.f32.mrf.mxu0
        %8198 = vmatmul.f32.gmra.mxu0 %v2675
        %v8199 = vpop.f32.mrf.mxu0
        %8200 = vmatmul.f32.gmra.mxu0 %v2677
        %v8201 = vpop.f32.mrf.mxu0
        %8202 = vmatmul.f32.gmra.mxu0 %v2679
        %v8203 = vpop.f32.mrf.mxu0
        %v8204 = vadd.f32 0.0, %v8203
        %8205 = vmatmul.f32.gmra.mxu0 %v2681
        %v8206 = vpop.f32.mrf.mxu0
        %v8207 = vadd.f32 0.0, %v8206
        %8208 = vmatmul.f32.gmra.mxu0 %v2683
        %v8209 = vpop.f32.mrf.mxu0
        %v8210 = vadd.f32 0.0, %v8209
        %8211 = vmatmul.f32.gmra.mxu0 %v2685
        %v8212 = vpop.f32.mrf.mxu0
        %v8213 = vadd.f32 0.0, %v8212
        %8214 = vmatmul.f32.gmra.mxu0 %v2687
        %v8215 = vpop.f32.mrf.mxu0
        %8216 = vmatmul.f32.gmra.mxu0 %v2689
        %v8217 = vpop.f32.mrf.mxu0
        %8218 = vmatmul.f32.gmra.mxu0 %v2691
        %v8219 = vpop.f32.mrf.mxu0
        %8220 = vmatmul.f32.gmra.mxu0 %v2693
        %v8221 = vpop.f32.mrf.mxu0
        %8222 = vmatmul.f32.gmra.mxu0 %v2695
        %v8223 = vpop.f32.mrf.mxu0
        %v8224 = vadd.f32 0.0, %v8223
        %8225 = vmatmul.f32.gmra.mxu0 %v2697
        %v8226 = vpop.f32.mrf.mxu0
        %v8227 = vadd.f32 0.0, %v8226
        %8228 = vmatmul.f32.gmra.mxu0 %v2699
        %v8229 = vpop.f32.mrf.mxu0
        %v8230 = vadd.f32 0.0, %v8229
        %8231 = vmatmul.f32.gmra.mxu0 %v2701
        %v8232 = vpop.f32.mrf.mxu0
        %v8233 = vadd.f32 0.0, %v8232
        %8234 = vmatmul.f32.gmra.mxu0 %v2703
        %v8235 = vpop.f32.mrf.mxu0
        %8236 = vmatmul.f32.gmra.mxu0 %v2705
        %v8237 = vpop.f32.mrf.mxu0
        %8238 = vmatmul.f32.gmra.mxu0 %v2707
        %v8239 = vpop.f32.mrf.mxu0
        %8240 = vmatmul.f32.gmra.mxu0 %v2709
        %v8241 = vpop.f32.mrf.mxu0
        %8242 = vmatmul.f32.gmra.mxu0 %v2711
        %v8243 = vpop.f32.mrf.mxu0
        %v8244 = vadd.f32 0.0, %v8243
        %8245 = vmatmul.f32.gmra.mxu0 %v2713
        %v8246 = vpop.f32.mrf.mxu0
        %v8247 = vadd.f32 0.0, %v8246
        %8248 = vmatmul.f32.gmra.mxu0 %v2715
        %v8249 = vpop.f32.mrf.mxu0
        %v8250 = vadd.f32 0.0, %v8249
        %8251 = vmatmul.f32.gmra.mxu0 %v2717
        %v8252 = vpop.f32.mrf.mxu0
        %v8253 = vadd.f32 0.0, %v8252
        %8254 = vmatmul.f32.gmra.mxu0 %v2719
        %v8255 = vpop.f32.mrf.mxu0
        %8256 = vmatmul.f32.gmra.mxu0 %v2721
        %v8257 = vpop.f32.mrf.mxu0
        %8258 = vmatmul.f32.gmra.mxu0 %v2723
        %v8259 = vpop.f32.mrf.mxu0
        %8260 = vmatmul.f32.gmra.mxu0 %v2725
        %v8261 = vpop.f32.mrf.mxu0
        %8262 = vmatmul.f32.gmra.mxu0 %v2727
        %v8263 = vpop.f32.mrf.mxu0
        %v8264 = vadd.f32 0.0, %v8263
        %8265 = vmatmul.f32.gmra.mxu0 %v2729
        %v8266 = vpop.f32.mrf.mxu0
        %v8267 = vadd.f32 0.0, %v8266
        %8268 = vmatmul.f32.gmra.mxu0 %v4041
        %v8269 = vpop.f32.mrf.mxu0
        %v8270 = vadd.f32 0.0, %v8269
        %8271 = vmatmul.f32.gmra.mxu0 %v4292
        %v8272 = vpop.f32.mrf.mxu0
        %v8273 = vadd.f32 0.0, %v8272
        %8274 = vmatmul.f32.gmra.mxu0 %v4295
        %v8275 = vpop.f32.mrf.mxu0
        %8276 = vmatmul.f32.gmra.mxu0 %v4298
        %v8277 = vpop.f32.mrf.mxu0
        %8278 = vmatmul.f32.gmra.mxu0 %v4301
        %v8279 = vpop.f32.mrf.mxu0
        %8280 = vmatmul.f32.gmra.mxu0 %v4304
        %v8281 = vpop.f32.mrf.mxu0
        %8282 = vmatmul.f32.gmra.mxu0 %v4307
        %v8283 = vpop.f32.mrf.mxu0
        %v8284 = vadd.f32 0.0, %v8283
        %8285 = vmatmul.f32.gmra.mxu0 %v4310
        %v8286 = vpop.f32.mrf.mxu0
        %v8287 = vadd.f32 0.0, %v8286
        %8288 = vmatmul.f32.gmra.mxu0 %v5401
        %v8289 = vpop.f32.mrf.mxu0
        %v8290 = vadd.f32 0.0, %v8289
        %8291 = vmatmul.f32.gmra.mxu0 %v5652
        %v8292 = vpop.f32.mrf.mxu0
        %v8293 = vadd.f32 0.0, %v8292
        %8294 = vmatmul.f32.gmra.mxu0 %v5655
        %v8295 = vpop.f32.mrf.mxu0
        %8296 = vmatmul.f32.gmra.mxu0 %v5658
        %v8297 = vpop.f32.mrf.mxu0
        %8298 = vmatmul.f32.gmra.mxu0 %v5661
        %v8299 = vpop.f32.mrf.mxu0
        %8300 = vmatmul.f32.gmra.mxu0 %v5664
        %v8301 = vpop.f32.mrf.mxu0
        %8302 = vmatmul.f32.gmra.mxu0 %v5667
        %v8303 = vpop.f32.mrf.mxu0
        %v8304 = vadd.f32 0.0, %v8303
        %8305 = vmatmul.f32.gmra.mxu0 %v5670
        %v8306 = vpop.f32.mrf.mxu0
        %v8307 = vadd.f32 0.0, %v8306
        %8308 = vmatmul.f32.gmra.mxu0 %v6761
        %v8309 = vpop.f32.mrf.mxu0
        %v8310 = vadd.f32 0.0, %v8309
        %8311 = vmatmul.f32.gmra.mxu0 %v7012
        %v8312 = vpop.f32.mrf.mxu0
        %8313 = vmatmul.f32.gmra.mxu0 %v7015
        %v8314 = vpop.f32.mrf.mxu0
        %8315 = vmatmul.f32.gmra.mxu0 %v7018
        %v8316 = vpop.f32.mrf.mxu0
        %8317 = vmatmul.f32.gmra.mxu0 %v7021
        %v8318 = vpop.f32.mrf.mxu0
        %8319 = vmatmul.f32.gmra.mxu0 %v7024
        %v8320 = vpop.f32.mrf.mxu0
        %8321 = vmatmul.f32.gmra.mxu0 %v7027
        %v8322 = vpop.f32.mrf.mxu0
        %v8323 = vadd.f32 0.0, %v8322
        %8324 = vmatmul.f32.gmra.mxu0 %v7030
        %v8325 = vpop.f32.mrf.mxu0
        %v8326 = vadd.f32 0.0, %v8325
        %8327 = vmatmul.f32.gmra.mxu0 %v8121
        %v8328 = vpop.f32.mrf.mxu0
        %v8329 = vadd.f32 0.0, %v8328
        %8330 = vdwg.mxu0
        %v8331 = vadd.f32 %v8081, %v8144
        %v8332 = vadd.f32 %v8082, %v8147
        %v8333 = vadd.f32 %v8083, %v8150
        %v8334 = vadd.f32 %v8084, %v8153
        %v8335 = vadd.f32 %v8085, %v8164
        %v8336 = vadd.f32 %v8086, %v8167
        %v8337 = vadd.f32 %v8087, %v8170
        %v8338 = vadd.f32 %v8088, %v8173
        %v8339 = vadd.f32 %v8089, %v8184
        %v8340 = vadd.f32 %v8090, %v8187
        %v8341 = vadd.f32 %v8091, %v8190
        %v8342 = vadd.f32 %v8092, %v8193
        %v8343 = vadd.f32 %v8093, %v8204
        %v8344 = vadd.f32 %v8094, %v8207
        %v8345 = vadd.f32 %v8095, %v8210
        %v8346 = vadd.f32 %v8096, %v8213
        %v8347 = vadd.f32 %v8097, %v8224
        %v8348 = vadd.f32 %v8098, %v8227
        %v8349 = vadd.f32 %v8099, %v8230
        %v8350 = vadd.f32 %v8100, %v8233
        %v8351 = vadd.f32 %v8101, %v8244
        %v8352 = vadd.f32 %v8102, %v8247
        %v8353 = vadd.f32 %v8103, %v8250
        %v8354 = vadd.f32 %v8104, %v8253
        %v8355 = vadd.f32 %v8105, %v8264
        %v8356 = vadd.f32 %v8106, %v8267
        %v8357 = vadd.f32 %v8107, %v8270
        %v8358 = vadd.f32 %v8108, %v8273
        %v8359 = vadd.f32 %v8109, %v8284
        %v8360 = vadd.f32 %v8110, %v8287
        %v8361 = vadd.f32 %v8111, %v8290
        %v8362 = vadd.f32 %v8112, %v8293
        %v8363 = vadd.f32 %v8113, %v8304
        %v8364 = vadd.f32 %v8114, %v8307
        %v8365 = vadd.f32 %v8115, %v8310
        %v8366 = vadd.f32 %v8116, %v8323
        %v8367 = vadd.f32 %v8117, %v8326
        %v8368 = vadd.f32 %v8118, %v8329
        %s8369 = scalar_lea.vmem %s3, 160
        %v8370 = vld [vmem:[%s8369] sm:$0x3f]
        %v8372 = vsel %vm2222, %v1983, 0
        %v8375 = vsel %vm2222, %v1984, 0
        %v8378 = vsel %vm2222, %v1985, 0
        %v8381 = vsel %vm2222, %v1986, 0
        %v8384 = vsel %vm2222, %v1987, 0
        %v8387 = vsel %vm2222, %v1988, 0
        %v8390 = vsel %vm2222, %v1989, 0
        %v8393 = vsel %vm2070, %v8370, 0
        %8395 = vmatpush.msra.mxu0 0.0
        %8396 = vmatpush.msra.mxu0 0.0
        %8397 = vmatpush.msra.mxu0 0.0
        %8398 = vmatpush.msra.mxu0 0.0
        %8399 = vmatpush.msra.mxu0 0.0
        %8400 = vmatpush.msra.mxu0 0.0
        %8401 = vmatpush.msra.mxu0 0.0
        %8402 = vmatpush.msra.mxu0 0.0
        %8403 = vmatpush.msra.mxu0 0.0
        %8404 = vmatpush.msra.mxu0 0.0
        %8405 = vmatpush.msra.mxu0 0.0
        %8406 = vmatpush.msra.mxu0 0.0
        %8407 = vmatpush.msra.mxu0 0.0
        %8408 = vmatpush.msra.mxu0 0.0
        %8409 = vmatpush.msra.mxu0 0.0
        %8410 = vmatpush.msra.mxu0 %v8393
        %8411 = vmatmul.f32.gmra.mxu0 %v2645
        %v8412 = vpop.f32.mrf.mxu0
        %v8413 = vadd.f32 0.0, %v8412
        %8414 = vmatmul.f32.gmra.mxu0 %v2647
        %v8415 = vpop.f32.mrf.mxu0
        %v8416 = vadd.f32 0.0, %v8415
        %8417 = vmatmul.f32.gmra.mxu0 %v2649
        %v8418 = vpop.f32.mrf.mxu0
        %v8419 = vadd.f32 0.0, %v8418
        %8420 = vmatmul.f32.gmra.mxu0 %v2651
        %v8421 = vpop.f32.mrf.mxu0
        %v8422 = vadd.f32 0.0, %v8421
        %8423 = vmatmul.f32.gmra.mxu0 %v2653
        %v8424 = vpop.f32.mrf.mxu0
        %8425 = vmatmul.f32.gmra.mxu0 %v2655
        %v8426 = vpop.f32.mrf.mxu0
        %8427 = vmatmul.f32.gmra.mxu0 %v2657
        %v8428 = vpop.f32.mrf.mxu0
        %8429 = vmatmul.f32.gmra.mxu0 %v2659
        %v8430 = vpop.f32.mrf.mxu0
        %8431 = vmatmul.f32.gmra.mxu0 %v2661
        %v8432 = vpop.f32.mrf.mxu0
        %v8433 = vadd.f32 0.0, %v8432
        %8434 = vmatmul.f32.gmra.mxu0 %v2663
        %v8435 = vpop.f32.mrf.mxu0
        %v8436 = vadd.f32 0.0, %v8435
        %8437 = vmatmul.f32.gmra.mxu0 %v2665
        %v8438 = vpop.f32.mrf.mxu0
        %v8439 = vadd.f32 0.0, %v8438
        %8440 = vmatmul.f32.gmra.mxu0 %v2667
        %v8441 = vpop.f32.mrf.mxu0
        %v8442 = vadd.f32 0.0, %v8441
        %8443 = vmatmul.f32.gmra.mxu0 %v2669
        %v8444 = vpop.f32.mrf.mxu0
        %8445 = vmatmul.f32.gmra.mxu0 %v2671
        %v8446 = vpop.f32.mrf.mxu0
        %8447 = vmatmul.f32.gmra.mxu0 %v2673
        %v8448 = vpop.f32.mrf.mxu0
        %8449 = vmatmul.f32.gmra.mxu0 %v2675
        %v8450 = vpop.f32.mrf.mxu0
        %8451 = vmatmul.f32.gmra.mxu0 %v2677
        %v8452 = vpop.f32.mrf.mxu0
        %v8453 = vadd.f32 0.0, %v8452
        %8454 = vmatmul.f32.gmra.mxu0 %v2679
        %v8455 = vpop.f32.mrf.mxu0
        %v8456 = vadd.f32 0.0, %v8455
        %8457 = vmatmul.f32.gmra.mxu0 %v2681
        %v8458 = vpop.f32.mrf.mxu0
        %v8459 = vadd.f32 0.0, %v8458
        %8460 = vmatmul.f32.gmra.mxu0 %v2683
        %v8461 = vpop.f32.mrf.mxu0
        %v8462 = vadd.f32 0.0, %v8461
        %8463 = vmatmul.f32.gmra.mxu0 %v2685
        %v8464 = vpop.f32.mrf.mxu0
        %8465 = vmatmul.f32.gmra.mxu0 %v2687
        %v8466 = vpop.f32.mrf.mxu0
        %8467 = vmatmul.f32.gmra.mxu0 %v2689
        %v8468 = vpop.f32.mrf.mxu0
        %8469 = vmatmul.f32.gmra.mxu0 %v2691
        %v8470 = vpop.f32.mrf.mxu0
        %8471 = vmatmul.f32.gmra.mxu0 %v2693
        %v8472 = vpop.f32.mrf.mxu0
        %v8473 = vadd.f32 0.0, %v8472
        %8474 = vmatmul.f32.gmra.mxu0 %v2695
        %v8475 = vpop.f32.mrf.mxu0
        %v8476 = vadd.f32 0.0, %v8475
        %8477 = vmatmul.f32.gmra.mxu0 %v2697
        %v8478 = vpop.f32.mrf.mxu0
        %v8479 = vadd.f32 0.0, %v8478
        %8480 = vmatmul.f32.gmra.mxu0 %v2699
        %v8481 = vpop.f32.mrf.mxu0
        %v8482 = vadd.f32 0.0, %v8481
        %8483 = vmatmul.f32.gmra.mxu0 %v2701
        %v8484 = vpop.f32.mrf.mxu0
        %8485 = vmatmul.f32.gmra.mxu0 %v2703
        %v8486 = vpop.f32.mrf.mxu0
        %8487 = vmatmul.f32.gmra.mxu0 %v2705
        %v8488 = vpop.f32.mrf.mxu0
        %8489 = vmatmul.f32.gmra.mxu0 %v2707
        %v8490 = vpop.f32.mrf.mxu0
        %8491 = vmatmul.f32.gmra.mxu0 %v2709
        %v8492 = vpop.f32.mrf.mxu0
        %v8493 = vadd.f32 0.0, %v8492
        %8494 = vmatmul.f32.gmra.mxu0 %v2711
        %v8495 = vpop.f32.mrf.mxu0
        %v8496 = vadd.f32 0.0, %v8495
        %8497 = vmatmul.f32.gmra.mxu0 %v2713
        %v8498 = vpop.f32.mrf.mxu0
        %v8499 = vadd.f32 0.0, %v8498
        %8500 = vmatmul.f32.gmra.mxu0 %v2715
        %v8501 = vpop.f32.mrf.mxu0
        %v8502 = vadd.f32 0.0, %v8501
        %8503 = vmatmul.f32.gmra.mxu0 %v2717
        %v8504 = vpop.f32.mrf.mxu0
        %8505 = vmatmul.f32.gmra.mxu0 %v2719
        %v8506 = vpop.f32.mrf.mxu0
        %8507 = vmatmul.f32.gmra.mxu0 %v2721
        %v8508 = vpop.f32.mrf.mxu0
        %8509 = vmatmul.f32.gmra.mxu0 %v2723
        %v8510 = vpop.f32.mrf.mxu0
        %8511 = vmatmul.f32.gmra.mxu0 %v2725
        %v8512 = vpop.f32.mrf.mxu0
        %v8513 = vadd.f32 0.0, %v8512
        %8514 = vmatmul.f32.gmra.mxu0 %v2727
        %v8515 = vpop.f32.mrf.mxu0
        %v8516 = vadd.f32 0.0, %v8515
        %8517 = vmatmul.f32.gmra.mxu0 %v2729
        %v8518 = vpop.f32.mrf.mxu0
        %v8519 = vadd.f32 0.0, %v8518
        %8520 = vmatmul.f32.gmra.mxu0 %v4041
        %v8521 = vpop.f32.mrf.mxu0
        %v8522 = vadd.f32 0.0, %v8521
        %8523 = vmatmul.f32.gmra.mxu0 %v4292
        %v8524 = vpop.f32.mrf.mxu0
        %8525 = vmatmul.f32.gmra.mxu0 %v4295
        %v8526 = vpop.f32.mrf.mxu0
        %8527 = vmatmul.f32.gmra.mxu0 %v4298
        %v8528 = vpop.f32.mrf.mxu0
        %8529 = vmatmul.f32.gmra.mxu0 %v4301
        %v8530 = vpop.f32.mrf.mxu0
        %8531 = vmatmul.f32.gmra.mxu0 %v4304
        %v8532 = vpop.f32.mrf.mxu0
        %v8533 = vadd.f32 0.0, %v8532
        %8534 = vmatmul.f32.gmra.mxu0 %v4307
        %v8535 = vpop.f32.mrf.mxu0
        %v8536 = vadd.f32 0.0, %v8535
        %8537 = vmatmul.f32.gmra.mxu0 %v4310
        %v8538 = vpop.f32.mrf.mxu0
        %v8539 = vadd.f32 0.0, %v8538
        %8540 = vmatmul.f32.gmra.mxu0 %v5401
        %v8541 = vpop.f32.mrf.mxu0
        %v8542 = vadd.f32 0.0, %v8541
        %8543 = vmatmul.f32.gmra.mxu0 %v5652
        %v8544 = vpop.f32.mrf.mxu0
        %8545 = vmatmul.f32.gmra.mxu0 %v5655
        %v8546 = vpop.f32.mrf.mxu0
        %8547 = vmatmul.f32.gmra.mxu0 %v5658
        %v8548 = vpop.f32.mrf.mxu0
        %8549 = vmatmul.f32.gmra.mxu0 %v5661
        %v8550 = vpop.f32.mrf.mxu0
        %8551 = vmatmul.f32.gmra.mxu0 %v5664
        %v8552 = vpop.f32.mrf.mxu0
        %v8553 = vadd.f32 0.0, %v8552
        %8554 = vmatmul.f32.gmra.mxu0 %v5667
        %v8555 = vpop.f32.mrf.mxu0
        %v8556 = vadd.f32 0.0, %v8555
        %8557 = vmatmul.f32.gmra.mxu0 %v5670
        %v8558 = vpop.f32.mrf.mxu0
        %v8559 = vadd.f32 0.0, %v8558
        %8560 = vmatmul.f32.gmra.mxu0 %v6761
        %v8561 = vpop.f32.mrf.mxu0
        %v8562 = vadd.f32 0.0, %v8561
        %8563 = vmatmul.f32.gmra.mxu0 %v7012
        %v8564 = vpop.f32.mrf.mxu0
        %8565 = vmatmul.f32.gmra.mxu0 %v7015
        %v8566 = vpop.f32.mrf.mxu0
        %8567 = vmatmul.f32.gmra.mxu0 %v7018
        %v8568 = vpop.f32.mrf.mxu0
        %8569 = vmatmul.f32.gmra.mxu0 %v7021
        %v8570 = vpop.f32.mrf.mxu0
        %8571 = vmatmul.f32.gmra.mxu0 %v7024
        %v8572 = vpop.f32.mrf.mxu0
        %v8573 = vadd.f32 0.0, %v8572
        %8574 = vmatmul.f32.gmra.mxu0 %v7027
        %v8575 = vpop.f32.mrf.mxu0
        %v8576 = vadd.f32 0.0, %v8575
        %8577 = vmatmul.f32.gmra.mxu0 %v7030
        %v8578 = vpop.f32.mrf.mxu0
        %v8579 = vadd.f32 0.0, %v8578
        %8580 = vmatmul.f32.gmra.mxu0 %v8121
        %v8581 = vpop.f32.mrf.mxu0
        %8582 = vmatmul.f32.gmra.mxu0 %v8372
        %v8583 = vpop.f32.mrf.mxu0
        %8584 = vmatmul.f32.gmra.mxu0 %v8375
        %v8585 = vpop.f32.mrf.mxu0
        %8586 = vmatmul.f32.gmra.mxu0 %v8378
        %v8587 = vpop.f32.mrf.mxu0
        %8588 = vmatmul.f32.gmra.mxu0 %v8381
        %v8589 = vpop.f32.mrf.mxu0
        %8590 = vmatmul.f32.gmra.mxu0 %v8384
        %v8591 = vpop.f32.mrf.mxu0
        %v8592 = vadd.f32 0.0, %v8591
        %8593 = vmatmul.f32.gmra.mxu0 %v8387
        %v8594 = vpop.f32.mrf.mxu0
        %v8595 = vadd.f32 0.0, %v8594
        %8596 = vmatmul.f32.gmra.mxu0 %v8390
        %v8597 = vpop.f32.mrf.mxu0
        %v8598 = vadd.f32 0.0, %v8597
        %8599 = vdwg.mxu0
        %v8600 = vadd.f32 %v8331, %v8413
        %v8601 = vadd.f32 %v8332, %v8416
        %v8602 = vadd.f32 %v8333, %v8419
        %v8603 = vadd.f32 %v8334, %v8422
        %v8604 = vadd.f32 %v8335, %v8433
        %v8605 = vadd.f32 %v8336, %v8436
        %v8606 = vadd.f32 %v8337, %v8439
        %v8607 = vadd.f32 %v8338, %v8442
        %v8608 = vadd.f32 %v8339, %v8453
        %v8609 = vadd.f32 %v8340, %v8456
        %v8610 = vadd.f32 %v8341, %v8459
        %v8611 = vadd.f32 %v8342, %v8462
        %v8612 = vadd.f32 %v8343, %v8473
        %v8613 = vadd.f32 %v8344, %v8476
        %v8614 = vadd.f32 %v8345, %v8479
        %v8615 = vadd.f32 %v8346, %v8482
        %v8616 = vadd.f32 %v8347, %v8493
        %v8617 = vadd.f32 %v8348, %v8496
        %v8618 = vadd.f32 %v8349, %v8499
        %v8619 = vadd.f32 %v8350, %v8502
        %v8620 = vadd.f32 %v8351, %v8513
        %v8621 = vadd.f32 %v8352, %v8516
        %v8622 = vadd.f32 %v8353, %v8519
        %v8623 = vadd.f32 %v8354, %v8522
        %v8624 = vadd.f32 %v8355, %v8533
        %v8625 = vadd.f32 %v8356, %v8536
        %v8626 = vadd.f32 %v8357, %v8539
        %v8627 = vadd.f32 %v8358, %v8542
        %v8628 = vadd.f32 %v8359, %v8553
        %v8629 = vadd.f32 %v8360, %v8556
        %v8630 = vadd.f32 %v8361, %v8559
        %v8631 = vadd.f32 %v8362, %v8562
        %v8632 = vadd.f32 %v8363, %v8573
        %v8633 = vadd.f32 %v8364, %v8576
        %v8634 = vadd.f32 %v8365, %v8579
        %v8635 = vadd.f32 %v8366, %v8592
        %v8636 = vadd.f32 %v8367, %v8595
        %v8637 = vadd.f32 %v8368, %v8598
        %s8638 = scalar_lea.vmem %s3, 168
        %v8639 = vld [vmem:[%s8638] sm:$0x3f]
        %v8641 = vrot.slane %v1983, 2
        %v8642 = vsel %vm2070, %v7295, %v8641
        %v8643 = vrot.slane %v1984, 2
        %v8644 = vsel %vm2070, %v8641, %v8643
        %v8645 = vrot.slane %v1985, 2
        %v8646 = vsel %vm2070, %v8643, %v8645
        %v8647 = vrot.slane %v1986, 2
        %v8648 = vsel %vm2070, %v8645, %v8647
        %v8649 = vrot.slane %v1987, 2
        %v8650 = vsel %vm2070, %v8647, %v8649
        %v8651 = vrot.slane %v1988, 2
        %v8652 = vsel %vm2070, %v8649, %v8651
        %v8653 = vrot.slane %v1989, 2
        %v8654 = vsel %vm2070, %v8651, %v8653
        %v8655 = vrot.slane %v1990, 2
        %v8656 = vsel %vm2070, %v8653, %v8655
        %v8657 = vsel %vm2222, %v8642, 0
        %v8659 = vsel %vm2222, %v8644, 0
        %v8661 = vsel %vm2222, %v8646, 0
        %v8663 = vsel %vm2222, %v8648, 0
        %v8665 = vsel %vm2222, %v8650, 0
        %v8667 = vsel %vm2222, %v8652, 0
        %v8669 = vsel %vm2222, %v8654, 0
        %v8671 = vsel %vm2222, %v8656, 0
        %v8674 = vsel %vm2070, %v8639, 0
        %8676 = vmatpush.msra.mxu0 0.0
        %8677 = vmatpush.msra.mxu0 0.0
        %8678 = vmatpush.msra.mxu0 0.0
        %8679 = vmatpush.msra.mxu0 0.0
        %8680 = vmatpush.msra.mxu0 0.0
        %8681 = vmatpush.msra.mxu0 0.0
        %8682 = vmatpush.msra.mxu0 0.0
        %8683 = vmatpush.msra.mxu0 0.0
        %8684 = vmatpush.msra.mxu0 0.0
        %8685 = vmatpush.msra.mxu0 0.0
        %8686 = vmatpush.msra.mxu0 0.0
        %8687 = vmatpush.msra.mxu0 0.0
        %8688 = vmatpush.msra.mxu0 0.0
        %8689 = vmatpush.msra.mxu0 0.0
        %8690 = vmatpush.msra.mxu0 0.0
        %8691 = vmatpush.msra.mxu0 %v8674
        %8692 = vmatmul.f32.gmra.mxu0 %v2287
        %v8693 = vpop.f32.mrf.mxu0
        %v8694 = vadd.f32 0.0, %v8693
        %8695 = vmatmul.f32.gmra.mxu0 %v2289
        %v8696 = vpop.f32.mrf.mxu0
        %v8697 = vadd.f32 0.0, %v8696
        %8698 = vmatmul.f32.gmra.mxu0 %v2291
        %v8699 = vpop.f32.mrf.mxu0
        %v8700 = vadd.f32 0.0, %v8699
        %8701 = vmatmul.f32.gmra.mxu0 %v2293
        %v8702 = vpop.f32.mrf.mxu0
        %v8703 = vadd.f32 0.0, %v8702
        %8704 = vmatmul.f32.gmra.mxu0 %v2295
        %v8705 = vpop.f32.mrf.mxu0
        %8706 = vmatmul.f32.gmra.mxu0 %v2297
        %v8707 = vpop.f32.mrf.mxu0
        %8708 = vmatmul.f32.gmra.mxu0 %v2299
        %v8709 = vpop.f32.mrf.mxu0
        %8710 = vmatmul.f32.gmra.mxu0 %v2301
        %v8711 = vpop.f32.mrf.mxu0
        %8712 = vmatmul.f32.gmra.mxu0 %v2303
        %v8713 = vpop.f32.mrf.mxu0
        %v8714 = vadd.f32 0.0, %v8713
        %8715 = vmatmul.f32.gmra.mxu0 %v2305
        %v8716 = vpop.f32.mrf.mxu0
        %v8717 = vadd.f32 0.0, %v8716
        %8718 = vmatmul.f32.gmra.mxu0 %v2307
        %v8719 = vpop.f32.mrf.mxu0
        %v8720 = vadd.f32 0.0, %v8719
        %8721 = vmatmul.f32.gmra.mxu0 %v2309
        %v8722 = vpop.f32.mrf.mxu0
        %v8723 = vadd.f32 0.0, %v8722
        %8724 = vmatmul.f32.gmra.mxu0 %v2311
        %v8725 = vpop.f32.mrf.mxu0
        %8726 = vmatmul.f32.gmra.mxu0 %v2313
        %v8727 = vpop.f32.mrf.mxu0
        %8728 = vmatmul.f32.gmra.mxu0 %v2315
        %v8729 = vpop.f32.mrf.mxu0
        %8730 = vmatmul.f32.gmra.mxu0 %v2317
        %v8731 = vpop.f32.mrf.mxu0
        %8732 = vmatmul.f32.gmra.mxu0 %v2319
        %v8733 = vpop.f32.mrf.mxu0
        %v8734 = vadd.f32 0.0, %v8733
        %8735 = vmatmul.f32.gmra.mxu0 %v2321
        %v8736 = vpop.f32.mrf.mxu0
        %v8737 = vadd.f32 0.0, %v8736
        %8738 = vmatmul.f32.gmra.mxu0 %v2323
        %v8739 = vpop.f32.mrf.mxu0
        %v8740 = vadd.f32 0.0, %v8739
        %8741 = vmatmul.f32.gmra.mxu0 %v2325
        %v8742 = vpop.f32.mrf.mxu0
        %v8743 = vadd.f32 0.0, %v8742
        %8744 = vmatmul.f32.gmra.mxu0 %v2327
        %v8745 = vpop.f32.mrf.mxu0
        %8746 = vmatmul.f32.gmra.mxu0 %v2329
        %v8747 = vpop.f32.mrf.mxu0
        %8748 = vmatmul.f32.gmra.mxu0 %v2331
        %v8749 = vpop.f32.mrf.mxu0
        %8750 = vmatmul.f32.gmra.mxu0 %v2333
        %v8751 = vpop.f32.mrf.mxu0
        %8752 = vmatmul.f32.gmra.mxu0 %v2335
        %v8753 = vpop.f32.mrf.mxu0
        %v8754 = vadd.f32 0.0, %v8753
        %8755 = vmatmul.f32.gmra.mxu0 %v2337
        %v8756 = vpop.f32.mrf.mxu0
        %v8757 = vadd.f32 0.0, %v8756
        %8758 = vmatmul.f32.gmra.mxu0 %v2339
        %v8759 = vpop.f32.mrf.mxu0
        %v8760 = vadd.f32 0.0, %v8759
        %8761 = vmatmul.f32.gmra.mxu0 %v2341
        %v8762 = vpop.f32.mrf.mxu0
        %v8763 = vadd.f32 0.0, %v8762
        %8764 = vmatmul.f32.gmra.mxu0 %v2343
        %v8765 = vpop.f32.mrf.mxu0
        %8766 = vmatmul.f32.gmra.mxu0 %v2345
        %v8767 = vpop.f32.mrf.mxu0
        %8768 = vmatmul.f32.gmra.mxu0 %v2347
        %v8769 = vpop.f32.mrf.mxu0
        %8770 = vmatmul.f32.gmra.mxu0 %v2349
        %v8771 = vpop.f32.mrf.mxu0
        %8772 = vmatmul.f32.gmra.mxu0 %v2351
        %v8773 = vpop.f32.mrf.mxu0
        %v8774 = vadd.f32 0.0, %v8773
        %8775 = vmatmul.f32.gmra.mxu0 %v2353
        %v8776 = vpop.f32.mrf.mxu0
        %v8777 = vadd.f32 0.0, %v8776
        %8778 = vmatmul.f32.gmra.mxu0 %v2355
        %v8779 = vpop.f32.mrf.mxu0
        %v8780 = vadd.f32 0.0, %v8779
        %8781 = vmatmul.f32.gmra.mxu0 %v2357
        %v8782 = vpop.f32.mrf.mxu0
        %v8783 = vadd.f32 0.0, %v8782
        %8784 = vmatmul.f32.gmra.mxu0 %v2359
        %v8785 = vpop.f32.mrf.mxu0
        %8786 = vmatmul.f32.gmra.mxu0 %v2361
        %v8787 = vpop.f32.mrf.mxu0
        %8788 = vmatmul.f32.gmra.mxu0 %v2363
        %v8789 = vpop.f32.mrf.mxu0
        %8790 = vmatmul.f32.gmra.mxu0 %v2365
        %v8791 = vpop.f32.mrf.mxu0
        %8792 = vmatmul.f32.gmra.mxu0 %v2367
        %v8793 = vpop.f32.mrf.mxu0
        %v8794 = vadd.f32 0.0, %v8793
        %8795 = vmatmul.f32.gmra.mxu0 %v2369
        %v8796 = vpop.f32.mrf.mxu0
        %v8797 = vadd.f32 0.0, %v8796
        %8798 = vmatmul.f32.gmra.mxu0 %v2371
        %v8799 = vpop.f32.mrf.mxu0
        %v8800 = vadd.f32 0.0, %v8799
        %8801 = vmatmul.f32.gmra.mxu0 %v4577
        %v8802 = vpop.f32.mrf.mxu0
        %v8803 = vadd.f32 0.0, %v8802
        %8804 = vmatmul.f32.gmra.mxu0 %v4579
        %v8805 = vpop.f32.mrf.mxu0
        %8806 = vmatmul.f32.gmra.mxu0 %v4581
        %v8807 = vpop.f32.mrf.mxu0
        %8808 = vmatmul.f32.gmra.mxu0 %v4583
        %v8809 = vpop.f32.mrf.mxu0
        %8810 = vmatmul.f32.gmra.mxu0 %v4585
        %v8811 = vpop.f32.mrf.mxu0
        %8812 = vmatmul.f32.gmra.mxu0 %v4587
        %v8813 = vpop.f32.mrf.mxu0
        %v8814 = vadd.f32 0.0, %v8813
        %8815 = vmatmul.f32.gmra.mxu0 %v4589
        %v8816 = vpop.f32.mrf.mxu0
        %v8817 = vadd.f32 0.0, %v8816
        %8818 = vmatmul.f32.gmra.mxu0 %v4591
        %v8819 = vpop.f32.mrf.mxu0
        %v8820 = vadd.f32 0.0, %v8819
        %8821 = vmatmul.f32.gmra.mxu0 %v5937
        %v8822 = vpop.f32.mrf.mxu0
        %v8823 = vadd.f32 0.0, %v8822
        %8824 = vmatmul.f32.gmra.mxu0 %v5939
        %v8825 = vpop.f32.mrf.mxu0
        %8826 = vmatmul.f32.gmra.mxu0 %v5941
        %v8827 = vpop.f32.mrf.mxu0
        %8828 = vmatmul.f32.gmra.mxu0 %v5943
        %v8829 = vpop.f32.mrf.mxu0
        %8830 = vmatmul.f32.gmra.mxu0 %v5945
        %v8831 = vpop.f32.mrf.mxu0
        %8832 = vmatmul.f32.gmra.mxu0 %v5947
        %v8833 = vpop.f32.mrf.mxu0
        %v8834 = vadd.f32 0.0, %v8833
        %8835 = vmatmul.f32.gmra.mxu0 %v5949
        %v8836 = vpop.f32.mrf.mxu0
        %v8837 = vadd.f32 0.0, %v8836
        %8838 = vmatmul.f32.gmra.mxu0 %v5951
        %v8839 = vpop.f32.mrf.mxu0
        %v8840 = vadd.f32 0.0, %v8839
        %8841 = vmatmul.f32.gmra.mxu0 %v7297
        %v8842 = vpop.f32.mrf.mxu0
        %v8843 = vadd.f32 0.0, %v8842
        %8844 = vmatmul.f32.gmra.mxu0 %v7299
        %v8845 = vpop.f32.mrf.mxu0
        %8846 = vmatmul.f32.gmra.mxu0 %v7301
        %v8847 = vpop.f32.mrf.mxu0
        %8848 = vmatmul.f32.gmra.mxu0 %v7303
        %v8849 = vpop.f32.mrf.mxu0
        %8850 = vmatmul.f32.gmra.mxu0 %v7305
        %v8851 = vpop.f32.mrf.mxu0
        %8852 = vmatmul.f32.gmra.mxu0 %v7307
        %v8853 = vpop.f32.mrf.mxu0
        %v8854 = vadd.f32 0.0, %v8853
        %8855 = vmatmul.f32.gmra.mxu0 %v7309
        %v8856 = vpop.f32.mrf.mxu0
        %v8857 = vadd.f32 0.0, %v8856
        %8858 = vmatmul.f32.gmra.mxu0 %v7311
        %v8859 = vpop.f32.mrf.mxu0
        %v8860 = vadd.f32 0.0, %v8859
        %8861 = vmatmul.f32.gmra.mxu0 %v8657
        %v8862 = vpop.f32.mrf.mxu0
        %8863 = vmatmul.f32.gmra.mxu0 %v8659
        %v8864 = vpop.f32.mrf.mxu0
        %8865 = vmatmul.f32.gmra.mxu0 %v8661
        %v8866 = vpop.f32.mrf.mxu0
        %8867 = vmatmul.f32.gmra.mxu0 %v8663
        %v8868 = vpop.f32.mrf.mxu0
        %8869 = vmatmul.f32.gmra.mxu0 %v8665
        %v8870 = vpop.f32.mrf.mxu0
        %8871 = vmatmul.f32.gmra.mxu0 %v8667
        %v8872 = vpop.f32.mrf.mxu0
        %v8873 = vadd.f32 0.0, %v8872
        %8874 = vmatmul.f32.gmra.mxu0 %v8669
        %v8875 = vpop.f32.mrf.mxu0
        %v8876 = vadd.f32 0.0, %v8875
        %8877 = vmatmul.f32.gmra.mxu0 %v8671
        %v8878 = vpop.f32.mrf.mxu0
        %v8879 = vadd.f32 0.0, %v8878
        %8880 = vdwg.mxu0
        %v8881 = vadd.f32 %v8600, %v8694
        %v8882 = vadd.f32 %v8601, %v8697
        %v8883 = vadd.f32 %v8602, %v8700
        %v8884 = vadd.f32 %v8603, %v8703
        %v8885 = vadd.f32 %v8604, %v8714
        %v8886 = vadd.f32 %v8605, %v8717
        %v8887 = vadd.f32 %v8606, %v8720
        %v8888 = vadd.f32 %v8607, %v8723
        %v8889 = vadd.f32 %v8608, %v8734
        %v8890 = vadd.f32 %v8609, %v8737
        %v8891 = vadd.f32 %v8610, %v8740
        %v8892 = vadd.f32 %v8611, %v8743
        %v8893 = vadd.f32 %v8612, %v8754
        %v8894 = vadd.f32 %v8613, %v8757
        %v8895 = vadd.f32 %v8614, %v8760
        %v8896 = vadd.f32 %v8615, %v8763
        %v8897 = vadd.f32 %v8616, %v8774
        %v8898 = vadd.f32 %v8617, %v8777
        %v8899 = vadd.f32 %v8618, %v8780
        %v8900 = vadd.f32 %v8619, %v8783
        %v8901 = vadd.f32 %v8620, %v8794
        %v8902 = vadd.f32 %v8621, %v8797
        %v8903 = vadd.f32 %v8622, %v8800
        %v8904 = vadd.f32 %v8623, %v8803
        %v8905 = vadd.f32 %v8624, %v8814
        %v8906 = vadd.f32 %v8625, %v8817
        %v8907 = vadd.f32 %v8626, %v8820
        %v8908 = vadd.f32 %v8627, %v8823
        %v8909 = vadd.f32 %v8628, %v8834
        %v8910 = vadd.f32 %v8629, %v8837
        %v8911 = vadd.f32 %v8630, %v8840
        %v8912 = vadd.f32 %v8631, %v8843
        %v8913 = vadd.f32 %v8632, %v8854
        %v8914 = vadd.f32 %v8633, %v8857
        %v8915 = vadd.f32 %v8634, %v8860
        %v8916 = vadd.f32 %v8635, %v8873
        %v8917 = vadd.f32 %v8636, %v8876
        %v8918 = vadd.f32 %v8637, %v8879
        %s8919 = scalar_lea.vmem %s3, 176
        %v8920 = vld [vmem:[%s8919] sm:$0x3f]
        %v8921 = vrot.slane %v1983, 4
        %v8922 = vsel %vm2941, %v7575, %v8921
        %v8923 = vrot.slane %v1984, 4
        %v8924 = vsel %vm2941, %v8921, %v8923
        %v8925 = vrot.slane %v1985, 4
        %v8926 = vsel %vm2941, %v8923, %v8925
        %v8927 = vrot.slane %v1986, 4
        %v8928 = vsel %vm2941, %v8925, %v8927
        %v8929 = vrot.slane %v1987, 4
        %v8930 = vsel %vm2941, %v8927, %v8929
        %v8931 = vrot.slane %v1988, 4
        %v8932 = vsel %vm2941, %v8929, %v8931
        %v8933 = vrot.slane %v1989, 4
        %v8934 = vsel %vm2941, %v8931, %v8933
        %v8935 = vrot.slane %v1990, 4
        %v8936 = vsel %vm2941, %v8933, %v8935
        %v8937 = vsel %vm2222, %v8922, 0
        %v8939 = vsel %vm2222, %v8924, 0
        %v8941 = vsel %vm2222, %v8926, 0
        %v8943 = vsel %vm2222, %v8928, 0
        %v8945 = vsel %vm2222, %v8930, 0
        %v8947 = vsel %vm2222, %v8932, 0
        %v8949 = vsel %vm2222, %v8934, 0
        %v8951 = vsel %vm2222, %v8936, 0
        %v8954 = vsel %vm2070, %v8920, 0
        %8956 = vmatpush.msra.mxu0 0.0
        %8957 = vmatpush.msra.mxu0 0.0
        %8958 = vmatpush.msra.mxu0 0.0
        %8959 = vmatpush.msra.mxu0 0.0
        %8960 = vmatpush.msra.mxu0 0.0
        %8961 = vmatpush.msra.mxu0 0.0
        %8962 = vmatpush.msra.mxu0 0.0
        %8963 = vmatpush.msra.mxu0 0.0
        %8964 = vmatpush.msra.mxu0 0.0
        %8965 = vmatpush.msra.mxu0 0.0
        %8966 = vmatpush.msra.mxu0 0.0
        %8967 = vmatpush.msra.mxu0 0.0
        %8968 = vmatpush.msra.mxu0 0.0
        %8969 = vmatpush.msra.mxu0 0.0
        %8970 = vmatpush.msra.mxu0 0.0
        %8971 = vmatpush.msra.mxu0 %v8954
        %8972 = vmatmul.f32.gmra.mxu0 %v3157
        %v8973 = vpop.f32.mrf.mxu0
        %v8974 = vadd.f32 0.0, %v8973
        %8975 = vmatmul.f32.gmra.mxu0 %v3159
        %v8976 = vpop.f32.mrf.mxu0
        %v8977 = vadd.f32 0.0, %v8976
        %8978 = vmatmul.f32.gmra.mxu0 %v3161
        %v8979 = vpop.f32.mrf.mxu0
        %v8980 = vadd.f32 0.0, %v8979
        %8981 = vmatmul.f32.gmra.mxu0 %v3163
        %v8982 = vpop.f32.mrf.mxu0
        %v8983 = vadd.f32 0.0, %v8982
        %8984 = vmatmul.f32.gmra.mxu0 %v3165
        %v8985 = vpop.f32.mrf.mxu0
        %8986 = vmatmul.f32.gmra.mxu0 %v3167
        %v8987 = vpop.f32.mrf.mxu0
        %8988 = vmatmul.f32.gmra.mxu0 %v3169
        %v8989 = vpop.f32.mrf.mxu0
        %8990 = vmatmul.f32.gmra.mxu0 %v3171
        %v8991 = vpop.f32.mrf.mxu0
        %8992 = vmatmul.f32.gmra.mxu0 %v3173
        %v8993 = vpop.f32.mrf.mxu0
        %v8994 = vadd.f32 0.0, %v8993
        %8995 = vmatmul.f32.gmra.mxu0 %v3175
        %v8996 = vpop.f32.mrf.mxu0
        %v8997 = vadd.f32 0.0, %v8996
        %8998 = vmatmul.f32.gmra.mxu0 %v3177
        %v8999 = vpop.f32.mrf.mxu0
        %v9000 = vadd.f32 0.0, %v8999
        %9001 = vmatmul.f32.gmra.mxu0 %v3179
        %v9002 = vpop.f32.mrf.mxu0
        %v9003 = vadd.f32 0.0, %v9002
        %9004 = vmatmul.f32.gmra.mxu0 %v3181
        %v9005 = vpop.f32.mrf.mxu0
        %9006 = vmatmul.f32.gmra.mxu0 %v3183
        %v9007 = vpop.f32.mrf.mxu0
        %9008 = vmatmul.f32.gmra.mxu0 %v3185
        %v9009 = vpop.f32.mrf.mxu0
        %9010 = vmatmul.f32.gmra.mxu0 %v3187
        %v9011 = vpop.f32.mrf.mxu0
        %9012 = vmatmul.f32.gmra.mxu0 %v3189
        %v9013 = vpop.f32.mrf.mxu0
        %v9014 = vadd.f32 0.0, %v9013
        %9015 = vmatmul.f32.gmra.mxu0 %v3191
        %v9016 = vpop.f32.mrf.mxu0
        %v9017 = vadd.f32 0.0, %v9016
        %9018 = vmatmul.f32.gmra.mxu0 %v3193
        %v9019 = vpop.f32.mrf.mxu0
        %v9020 = vadd.f32 0.0, %v9019
        %9021 = vmatmul.f32.gmra.mxu0 %v3195
        %v9022 = vpop.f32.mrf.mxu0
        %v9023 = vadd.f32 0.0, %v9022
        %9024 = vmatmul.f32.gmra.mxu0 %v3197
        %v9025 = vpop.f32.mrf.mxu0
        %9026 = vmatmul.f32.gmra.mxu0 %v3199
        %v9027 = vpop.f32.mrf.mxu0
        %9028 = vmatmul.f32.gmra.mxu0 %v3201
        %v9029 = vpop.f32.mrf.mxu0
        %9030 = vmatmul.f32.gmra.mxu0 %v3203
        %v9031 = vpop.f32.mrf.mxu0
        %9032 = vmatmul.f32.gmra.mxu0 %v3205
        %v9033 = vpop.f32.mrf.mxu0
        %v9034 = vadd.f32 0.0, %v9033
        %9035 = vmatmul.f32.gmra.mxu0 %v3207
        %v9036 = vpop.f32.mrf.mxu0
        %v9037 = vadd.f32 0.0, %v9036
        %9038 = vmatmul.f32.gmra.mxu0 %v3209
        %v9039 = vpop.f32.mrf.mxu0
        %v9040 = vadd.f32 0.0, %v9039
        %9041 = vmatmul.f32.gmra.mxu0 %v3211
        %v9042 = vpop.f32.mrf.mxu0
        %v9043 = vadd.f32 0.0, %v9042
        %9044 = vmatmul.f32.gmra.mxu0 %v3213
        %v9045 = vpop.f32.mrf.mxu0
        %9046 = vmatmul.f32.gmra.mxu0 %v3215
        %v9047 = vpop.f32.mrf.mxu0
        %9048 = vmatmul.f32.gmra.mxu0 %v3217
        %v9049 = vpop.f32.mrf.mxu0
        %9050 = vmatmul.f32.gmra.mxu0 %v3219
        %v9051 = vpop.f32.mrf.mxu0
        %9052 = vmatmul.f32.gmra.mxu0 %v3221
        %v9053 = vpop.f32.mrf.mxu0
        %v9054 = vadd.f32 0.0, %v9053
        %9055 = vmatmul.f32.gmra.mxu0 %v3223
        %v9056 = vpop.f32.mrf.mxu0
        %v9057 = vadd.f32 0.0, %v9056
        %9058 = vmatmul.f32.gmra.mxu0 %v3225
        %v9059 = vpop.f32.mrf.mxu0
        %v9060 = vadd.f32 0.0, %v9059
        %9061 = vmatmul.f32.gmra.mxu0 %v3227
        %v9062 = vpop.f32.mrf.mxu0
        %v9063 = vadd.f32 0.0, %v9062
        %9064 = vmatmul.f32.gmra.mxu0 %v3229
        %v9065 = vpop.f32.mrf.mxu0
        %9066 = vmatmul.f32.gmra.mxu0 %v3231
        %v9067 = vpop.f32.mrf.mxu0
        %9068 = vmatmul.f32.gmra.mxu0 %v3233
        %v9069 = vpop.f32.mrf.mxu0
        %9070 = vmatmul.f32.gmra.mxu0 %v3235
        %v9071 = vpop.f32.mrf.mxu0
        %9072 = vmatmul.f32.gmra.mxu0 %v3237
        %v9073 = vpop.f32.mrf.mxu0
        %v9074 = vadd.f32 0.0, %v9073
        %9075 = vmatmul.f32.gmra.mxu0 %v3239
        %v9076 = vpop.f32.mrf.mxu0
        %v9077 = vadd.f32 0.0, %v9076
        %9078 = vmatmul.f32.gmra.mxu0 %v3241
        %v9079 = vpop.f32.mrf.mxu0
        %v9080 = vadd.f32 0.0, %v9079
        %9081 = vmatmul.f32.gmra.mxu0 %v4857
        %v9082 = vpop.f32.mrf.mxu0
        %v9083 = vadd.f32 0.0, %v9082
        %9084 = vmatmul.f32.gmra.mxu0 %v4859
        %v9085 = vpop.f32.mrf.mxu0
        %9086 = vmatmul.f32.gmra.mxu0 %v4861
        %v9087 = vpop.f32.mrf.mxu0
        %9088 = vmatmul.f32.gmra.mxu0 %v4863
        %v9089 = vpop.f32.mrf.mxu0
        %9090 = vmatmul.f32.gmra.mxu0 %v4865
        %v9091 = vpop.f32.mrf.mxu0
        %9092 = vmatmul.f32.gmra.mxu0 %v4867
        %v9093 = vpop.f32.mrf.mxu0
        %v9094 = vadd.f32 0.0, %v9093
        %9095 = vmatmul.f32.gmra.mxu0 %v4869
        %v9096 = vpop.f32.mrf.mxu0
        %v9097 = vadd.f32 0.0, %v9096
        %9098 = vmatmul.f32.gmra.mxu0 %v4871
        %v9099 = vpop.f32.mrf.mxu0
        %v9100 = vadd.f32 0.0, %v9099
        %9101 = vmatmul.f32.gmra.mxu0 %v6217
        %v9102 = vpop.f32.mrf.mxu0
        %v9103 = vadd.f32 0.0, %v9102
        %9104 = vmatmul.f32.gmra.mxu0 %v6219
        %v9105 = vpop.f32.mrf.mxu0
        %9106 = vmatmul.f32.gmra.mxu0 %v6221
        %v9107 = vpop.f32.mrf.mxu0
        %9108 = vmatmul.f32.gmra.mxu0 %v6223
        %v9109 = vpop.f32.mrf.mxu0
        %9110 = vmatmul.f32.gmra.mxu0 %v6225
        %v9111 = vpop.f32.mrf.mxu0
        %9112 = vmatmul.f32.gmra.mxu0 %v6227
        %v9113 = vpop.f32.mrf.mxu0
        %v9114 = vadd.f32 0.0, %v9113
        %9115 = vmatmul.f32.gmra.mxu0 %v6229
        %v9116 = vpop.f32.mrf.mxu0
        %v9117 = vadd.f32 0.0, %v9116
        %9118 = vmatmul.f32.gmra.mxu0 %v6231
        %v9119 = vpop.f32.mrf.mxu0
        %v9120 = vadd.f32 0.0, %v9119
        %9121 = vmatmul.f32.gmra.mxu0 %v7577
        %v9122 = vpop.f32.mrf.mxu0
        %v9123 = vadd.f32 0.0, %v9122
        %9124 = vmatmul.f32.gmra.mxu0 %v7579
        %v9125 = vpop.f32.mrf.mxu0
        %9126 = vmatmul.f32.gmra.mxu0 %v7581
        %v9127 = vpop.f32.mrf.mxu0
        %9128 = vmatmul.f32.gmra.mxu0 %v7583
        %v9129 = vpop.f32.mrf.mxu0
        %9130 = vmatmul.f32.gmra.mxu0 %v7585
        %v9131 = vpop.f32.mrf.mxu0
        %9132 = vmatmul.f32.gmra.mxu0 %v7587
        %v9133 = vpop.f32.mrf.mxu0
        %v9134 = vadd.f32 0.0, %v9133
        %9135 = vmatmul.f32.gmra.mxu0 %v7589
        %v9136 = vpop.f32.mrf.mxu0
        %v9137 = vadd.f32 0.0, %v9136
        %9138 = vmatmul.f32.gmra.mxu0 %v7591
        %v9139 = vpop.f32.mrf.mxu0
        %v9140 = vadd.f32 0.0, %v9139
        %9141 = vmatmul.f32.gmra.mxu0 %v8937
        %v9142 = vpop.f32.mrf.mxu0
        %9143 = vmatmul.f32.gmra.mxu0 %v8939
        %v9144 = vpop.f32.mrf.mxu0
        %9145 = vmatmul.f32.gmra.mxu0 %v8941
        %v9146 = vpop.f32.mrf.mxu0
        %9147 = vmatmul.f32.gmra.mxu0 %v8943
        %v9148 = vpop.f32.mrf.mxu0
        %9149 = vmatmul.f32.gmra.mxu0 %v8945
        %v9150 = vpop.f32.mrf.mxu0
        %9151 = vmatmul.f32.gmra.mxu0 %v8947
        %v9152 = vpop.f32.mrf.mxu0
        %v9153 = vadd.f32 0.0, %v9152
        %9154 = vmatmul.f32.gmra.mxu0 %v8949
        %v9155 = vpop.f32.mrf.mxu0
        %v9156 = vadd.f32 0.0, %v9155
        %9157 = vmatmul.f32.gmra.mxu0 %v8951
        %v9158 = vpop.f32.mrf.mxu0
        %v9159 = vadd.f32 0.0, %v9158
        %9160 = vdwg.mxu0
        %v9161 = vadd.f32 %v8881, %v8974
        %v9162 = vadd.f32 %v8882, %v8977
        %v9163 = vadd.f32 %v8883, %v8980
        %v9164 = vadd.f32 %v8884, %v8983
        %v9165 = vadd.f32 %v8885, %v8994
        %v9166 = vadd.f32 %v8886, %v8997
        %v9167 = vadd.f32 %v8887, %v9000
        %v9168 = vadd.f32 %v8888, %v9003
        %v9169 = vadd.f32 %v8889, %v9014
        %v9170 = vadd.f32 %v8890, %v9017
        %v9171 = vadd.f32 %v8891, %v9020
        %v9172 = vadd.f32 %v8892, %v9023
        %v9173 = vadd.f32 %v8893, %v9034
        %v9174 = vadd.f32 %v8894, %v9037
        %v9175 = vadd.f32 %v8895, %v9040
        %v9176 = vadd.f32 %v8896, %v9043
        %v9177 = vadd.f32 %v8897, %v9054
        %v9178 = vadd.f32 %v8898, %v9057
        %v9179 = vadd.f32 %v8899, %v9060
        %v9180 = vadd.f32 %v8900, %v9063
        %v9181 = vadd.f32 %v8901, %v9074
        %v9182 = vadd.f32 %v8902, %v9077
        %v9183 = vadd.f32 %v8903, %v9080
        %v9184 = vadd.f32 %v8904, %v9083
        %v9185 = vadd.f32 %v8905, %v9094
        %v9186 = vadd.f32 %v8906, %v9097
        %v9187 = vadd.f32 %v8907, %v9100
        %v9188 = vadd.f32 %v8908, %v9103
        %v9189 = vadd.f32 %v8909, %v9114
        %v9190 = vadd.f32 %v8910, %v9117
        %v9191 = vadd.f32 %v8911, %v9120
        %v9192 = vadd.f32 %v8912, %v9123
        %v9193 = vadd.f32 %v8913, %v9134
        %v9194 = vadd.f32 %v8914, %v9137
        %v9195 = vadd.f32 %v8915, %v9140
        %v9196 = vadd.f32 %v8916, %v9153
        %v9197 = vadd.f32 %v8917, %v9156
        %v9198 = vadd.f32 %v8918, %v9159
        %s9199 = scalar_lea.vmem %s3, 184
        %v9200 = vld [vmem:[%s9199] sm:$0x3f]
        %v9201 = vrot.slane %v1983, 6
        %v9202 = vsel %vm3491, %v7855, %v9201
        %v9203 = vrot.slane %v1984, 6
        %v9204 = vsel %vm3491, %v9201, %v9203
        %v9205 = vrot.slane %v1985, 6
        %v9206 = vsel %vm3491, %v9203, %v9205
        %v9207 = vrot.slane %v1986, 6
        %v9208 = vsel %vm3491, %v9205, %v9207
        %v9209 = vrot.slane %v1987, 6
        %v9210 = vsel %vm3491, %v9207, %v9209
        %v9211 = vrot.slane %v1988, 6
        %v9212 = vsel %vm3491, %v9209, %v9211
        %v9213 = vrot.slane %v1989, 6
        %v9214 = vsel %vm3491, %v9211, %v9213
        %v9215 = vrot.slane %v1990, 6
        %v9216 = vsel %vm3491, %v9213, %v9215
        %v9217 = vsel %vm2222, %v9202, 0
        %v9219 = vsel %vm2222, %v9204, 0
        %v9221 = vsel %vm2222, %v9206, 0
        %v9223 = vsel %vm2222, %v9208, 0
        %v9225 = vsel %vm2222, %v9210, 0
        %v9227 = vsel %vm2222, %v9212, 0
        %v9229 = vsel %vm2222, %v9214, 0
        %v9231 = vsel %vm2222, %v9216, 0
        %v9234 = vsel %vm2070, %v9200, 0
        %9236 = vmatpush.msra.mxu0 0.0
        %9237 = vmatpush.msra.mxu0 0.0
        %9238 = vmatpush.msra.mxu0 0.0
        %9239 = vmatpush.msra.mxu0 0.0
        %9240 = vmatpush.msra.mxu0 0.0
        %9241 = vmatpush.msra.mxu0 0.0
        %9242 = vmatpush.msra.mxu0 0.0
        %9243 = vmatpush.msra.mxu0 0.0
        %9244 = vmatpush.msra.mxu0 0.0
        %9245 = vmatpush.msra.mxu0 0.0
        %9246 = vmatpush.msra.mxu0 0.0
        %9247 = vmatpush.msra.mxu0 0.0
        %9248 = vmatpush.msra.mxu0 0.0
        %9249 = vmatpush.msra.mxu0 0.0
        %9250 = vmatpush.msra.mxu0 0.0
        %9251 = vmatpush.msra.mxu0 %v9234
        %9252 = vmatmul.f32.gmra.mxu0 %v3707
        %v9253 = vpop.f32.mrf.mxu0
        %v9254 = vadd.f32 0.0, %v9253
        %9255 = vmatmul.f32.gmra.mxu0 %v3709
        %v9256 = vpop.f32.mrf.mxu0
        %v9257 = vadd.f32 0.0, %v9256
        %9258 = vmatmul.f32.gmra.mxu0 %v3711
        %v9259 = vpop.f32.mrf.mxu0
        %v9260 = vadd.f32 0.0, %v9259
        %9261 = vmatmul.f32.gmra.mxu0 %v3713
        %v9262 = vpop.f32.mrf.mxu0
        %v9263 = vadd.f32 0.0, %v9262
        %9264 = vmatmul.f32.gmra.mxu0 %v3715
        %v9265 = vpop.f32.mrf.mxu0
        %9266 = vmatmul.f32.gmra.mxu0 %v3717
        %v9267 = vpop.f32.mrf.mxu0
        %9268 = vmatmul.f32.gmra.mxu0 %v3719
        %v9269 = vpop.f32.mrf.mxu0
        %9270 = vmatmul.f32.gmra.mxu0 %v3721
        %v9271 = vpop.f32.mrf.mxu0
        %9272 = vmatmul.f32.gmra.mxu0 %v3723
        %v9273 = vpop.f32.mrf.mxu0
        %v9274 = vadd.f32 0.0, %v9273
        %9275 = vmatmul.f32.gmra.mxu0 %v3725
        %v9276 = vpop.f32.mrf.mxu0
        %v9277 = vadd.f32 0.0, %v9276
        %9278 = vmatmul.f32.gmra.mxu0 %v3727
        %v9279 = vpop.f32.mrf.mxu0
        %v9280 = vadd.f32 0.0, %v9279
        %9281 = vmatmul.f32.gmra.mxu0 %v3729
        %v9282 = vpop.f32.mrf.mxu0
        %v9283 = vadd.f32 0.0, %v9282
        %9284 = vmatmul.f32.gmra.mxu0 %v3731
        %v9285 = vpop.f32.mrf.mxu0
        %9286 = vmatmul.f32.gmra.mxu0 %v3733
        %v9287 = vpop.f32.mrf.mxu0
        %9288 = vmatmul.f32.gmra.mxu0 %v3735
        %v9289 = vpop.f32.mrf.mxu0
        %9290 = vmatmul.f32.gmra.mxu0 %v3737
        %v9291 = vpop.f32.mrf.mxu0
        %9292 = vmatmul.f32.gmra.mxu0 %v3739
        %v9293 = vpop.f32.mrf.mxu0
        %v9294 = vadd.f32 0.0, %v9293
        %9295 = vmatmul.f32.gmra.mxu0 %v3741
        %v9296 = vpop.f32.mrf.mxu0
        %v9297 = vadd.f32 0.0, %v9296
        %9298 = vmatmul.f32.gmra.mxu0 %v3743
        %v9299 = vpop.f32.mrf.mxu0
        %v9300 = vadd.f32 0.0, %v9299
        %9301 = vmatmul.f32.gmra.mxu0 %v3745
        %v9302 = vpop.f32.mrf.mxu0
        %v9303 = vadd.f32 0.0, %v9302
        %9304 = vmatmul.f32.gmra.mxu0 %v3747
        %v9305 = vpop.f32.mrf.mxu0
        %9306 = vmatmul.f32.gmra.mxu0 %v3749
        %v9307 = vpop.f32.mrf.mxu0
        %9308 = vmatmul.f32.gmra.mxu0 %v3751
        %v9309 = vpop.f32.mrf.mxu0
        %9310 = vmatmul.f32.gmra.mxu0 %v3753
        %v9311 = vpop.f32.mrf.mxu0
        %9312 = vmatmul.f32.gmra.mxu0 %v3755
        %v9313 = vpop.f32.mrf.mxu0
        %v9314 = vadd.f32 0.0, %v9313
        %9315 = vmatmul.f32.gmra.mxu0 %v3757
        %v9316 = vpop.f32.mrf.mxu0
        %v9317 = vadd.f32 0.0, %v9316
        %9318 = vmatmul.f32.gmra.mxu0 %v3759
        %v9319 = vpop.f32.mrf.mxu0
        %v9320 = vadd.f32 0.0, %v9319
        %9321 = vmatmul.f32.gmra.mxu0 %v3761
        %v9322 = vpop.f32.mrf.mxu0
        %v9323 = vadd.f32 0.0, %v9322
        %9324 = vmatmul.f32.gmra.mxu0 %v3763
        %v9325 = vpop.f32.mrf.mxu0
        %9326 = vmatmul.f32.gmra.mxu0 %v3765
        %v9327 = vpop.f32.mrf.mxu0
        %9328 = vmatmul.f32.gmra.mxu0 %v3767
        %v9329 = vpop.f32.mrf.mxu0
        %9330 = vmatmul.f32.gmra.mxu0 %v3769
        %v9331 = vpop.f32.mrf.mxu0
        %9332 = vmatmul.f32.gmra.mxu0 %v3771
        %v9333 = vpop.f32.mrf.mxu0
        %v9334 = vadd.f32 0.0, %v9333
        %9335 = vmatmul.f32.gmra.mxu0 %v3773
        %v9336 = vpop.f32.mrf.mxu0
        %v9337 = vadd.f32 0.0, %v9336
        %9338 = vmatmul.f32.gmra.mxu0 %v3775
        %v9339 = vpop.f32.mrf.mxu0
        %v9340 = vadd.f32 0.0, %v9339
        %9341 = vmatmul.f32.gmra.mxu0 %v3777
        %v9342 = vpop.f32.mrf.mxu0
        %v9343 = vadd.f32 0.0, %v9342
        %9344 = vmatmul.f32.gmra.mxu0 %v3779
        %v9345 = vpop.f32.mrf.mxu0
        %9346 = vmatmul.f32.gmra.mxu0 %v3781
        %v9347 = vpop.f32.mrf.mxu0
        %9348 = vmatmul.f32.gmra.mxu0 %v3783
        %v9349 = vpop.f32.mrf.mxu0
        %9350 = vmatmul.f32.gmra.mxu0 %v3785
        %v9351 = vpop.f32.mrf.mxu0
        %9352 = vmatmul.f32.gmra.mxu0 %v3787
        %v9353 = vpop.f32.mrf.mxu0
        %v9354 = vadd.f32 0.0, %v9353
        %9355 = vmatmul.f32.gmra.mxu0 %v3789
        %v9356 = vpop.f32.mrf.mxu0
        %v9357 = vadd.f32 0.0, %v9356
        %9358 = vmatmul.f32.gmra.mxu0 %v3791
        %v9359 = vpop.f32.mrf.mxu0
        %v9360 = vadd.f32 0.0, %v9359
        %9361 = vmatmul.f32.gmra.mxu0 %v5137
        %v9362 = vpop.f32.mrf.mxu0
        %v9363 = vadd.f32 0.0, %v9362
        %9364 = vmatmul.f32.gmra.mxu0 %v5139
        %v9365 = vpop.f32.mrf.mxu0
        %9366 = vmatmul.f32.gmra.mxu0 %v5141
        %v9367 = vpop.f32.mrf.mxu0
        %9368 = vmatmul.f32.gmra.mxu0 %v5143
        %v9369 = vpop.f32.mrf.mxu0
        %9370 = vmatmul.f32.gmra.mxu0 %v5145
        %v9371 = vpop.f32.mrf.mxu0
        %9372 = vmatmul.f32.gmra.mxu0 %v5147
        %v9373 = vpop.f32.mrf.mxu0
        %v9374 = vadd.f32 0.0, %v9373
        %9375 = vmatmul.f32.gmra.mxu0 %v5149
        %v9376 = vpop.f32.mrf.mxu0
        %v9377 = vadd.f32 0.0, %v9376
        %9378 = vmatmul.f32.gmra.mxu0 %v5151
        %v9379 = vpop.f32.mrf.mxu0
        %v9380 = vadd.f32 0.0, %v9379
        %9381 = vmatmul.f32.gmra.mxu0 %v6497
        %v9382 = vpop.f32.mrf.mxu0
        %v9383 = vadd.f32 0.0, %v9382
        %9384 = vmatmul.f32.gmra.mxu0 %v6499
        %v9385 = vpop.f32.mrf.mxu0
        %9386 = vmatmul.f32.gmra.mxu0 %v6501
        %v9387 = vpop.f32.mrf.mxu0
        %9388 = vmatmul.f32.gmra.mxu0 %v6503
        %v9389 = vpop.f32.mrf.mxu0
        %9390 = vmatmul.f32.gmra.mxu0 %v6505
        %v9391 = vpop.f32.mrf.mxu0
        %9392 = vmatmul.f32.gmra.mxu0 %v6507
        %v9393 = vpop.f32.mrf.mxu0
        %v9394 = vadd.f32 0.0, %v9393
        %9395 = vmatmul.f32.gmra.mxu0 %v6509
        %v9396 = vpop.f32.mrf.mxu0
        %v9397 = vadd.f32 0.0, %v9396
        %9398 = vmatmul.f32.gmra.mxu0 %v6511
        %v9399 = vpop.f32.mrf.mxu0
        %v9400 = vadd.f32 0.0, %v9399
        %9401 = vmatmul.f32.gmra.mxu0 %v7857
        %v9402 = vpop.f32.mrf.mxu0
        %v9403 = vadd.f32 0.0, %v9402
        %9404 = vmatmul.f32.gmra.mxu0 %v7859
        %v9405 = vpop.f32.mrf.mxu0
        %9406 = vmatmul.f32.gmra.mxu0 %v7861
        %v9407 = vpop.f32.mrf.mxu0
        %9408 = vmatmul.f32.gmra.mxu0 %v7863
        %v9409 = vpop.f32.mrf.mxu0
        %9410 = vmatmul.f32.gmra.mxu0 %v7865
        %v9411 = vpop.f32.mrf.mxu0
        %9412 = vmatmul.f32.gmra.mxu0 %v7867
        %v9413 = vpop.f32.mrf.mxu0
        %v9414 = vadd.f32 0.0, %v9413
        %9415 = vmatmul.f32.gmra.mxu0 %v7869
        %v9416 = vpop.f32.mrf.mxu0
        %v9417 = vadd.f32 0.0, %v9416
        %9418 = vmatmul.f32.gmra.mxu0 %v7871
        %v9419 = vpop.f32.mrf.mxu0
        %v9420 = vadd.f32 0.0, %v9419
        %9421 = vmatmul.f32.gmra.mxu0 %v9217
        %v9422 = vpop.f32.mrf.mxu0
        %9423 = vmatmul.f32.gmra.mxu0 %v9219
        %v9424 = vpop.f32.mrf.mxu0
        %9425 = vmatmul.f32.gmra.mxu0 %v9221
        %v9426 = vpop.f32.mrf.mxu0
        %9427 = vmatmul.f32.gmra.mxu0 %v9223
        %v9428 = vpop.f32.mrf.mxu0
        %9429 = vmatmul.f32.gmra.mxu0 %v9225
        %v9430 = vpop.f32.mrf.mxu0
        %9431 = vmatmul.f32.gmra.mxu0 %v9227
        %v9432 = vpop.f32.mrf.mxu0
        %v9433 = vadd.f32 0.0, %v9432
        %9434 = vmatmul.f32.gmra.mxu0 %v9229
        %v9435 = vpop.f32.mrf.mxu0
        %v9436 = vadd.f32 0.0, %v9435
        %9437 = vmatmul.f32.gmra.mxu0 %v9231
        %v9438 = vpop.f32.mrf.mxu0
        %v9439 = vadd.f32 0.0, %v9438
        %9440 = vdwg.mxu0
        %v9441 = vadd.f32 %v9161, %v9254
        %v9442 = vadd.f32 %v9162, %v9257
        %v9443 = vadd.f32 %v9163, %v9260
        %v9444 = vadd.f32 %v9164, %v9263
        %v9445 = vadd.f32 %v9165, %v9274
        %v9446 = vadd.f32 %v9166, %v9277
        %v9447 = vadd.f32 %v9167, %v9280
        %v9448 = vadd.f32 %v9168, %v9283
        %v9449 = vadd.f32 %v9169, %v9294
        %v9450 = vadd.f32 %v9170, %v9297
        %v9451 = vadd.f32 %v9171, %v9300
        %v9452 = vadd.f32 %v9172, %v9303
        %v9453 = vadd.f32 %v9173, %v9314
        %v9454 = vadd.f32 %v9174, %v9317
        %v9455 = vadd.f32 %v9175, %v9320
        %v9456 = vadd.f32 %v9176, %v9323
        %v9457 = vadd.f32 %v9177, %v9334
        %v9458 = vadd.f32 %v9178, %v9337
        %v9459 = vadd.f32 %v9179, %v9340
        %v9460 = vadd.f32 %v9180, %v9343
        %v9461 = vadd.f32 %v9181, %v9354
        %v9462 = vadd.f32 %v9182, %v9357
        %v9463 = vadd.f32 %v9183, %v9360
        %v9464 = vadd.f32 %v9184, %v9363
        %v9465 = vadd.f32 %v9185, %v9374
        %v9466 = vadd.f32 %v9186, %v9377
        %v9467 = vadd.f32 %v9187, %v9380
        %v9468 = vadd.f32 %v9188, %v9383
        %v9469 = vadd.f32 %v9189, %v9394
        %v9470 = vadd.f32 %v9190, %v9397
        %v9471 = vadd.f32 %v9191, %v9400
        %v9472 = vadd.f32 %v9192, %v9403
        %v9473 = vadd.f32 %v9193, %v9414
        %v9474 = vadd.f32 %v9194, %v9417
        %v9475 = vadd.f32 %v9195, %v9420
        %v9476 = vadd.f32 %v9196, %v9433
        %v9477 = vadd.f32 %v9197, %v9436
        %v9478 = vadd.f32 %v9198, %v9439
        %s9479 = scalar_lea.vmem %s3, 192
        %v9480 = vld [vmem:[%s9479] sm:$0x3f]
        %v9481 = vsel %vm2222, %v1990, 0
        %v9484 = vsel %vm2070, %v9480, 0
        %9486 = vmatpush.msra.mxu0 0.0
        %9487 = vmatpush.msra.mxu0 0.0
        %9488 = vmatpush.msra.mxu0 0.0
        %9489 = vmatpush.msra.mxu0 0.0
        %9490 = vmatpush.msra.mxu0 0.0
        %9491 = vmatpush.msra.mxu0 0.0
        %9492 = vmatpush.msra.mxu0 0.0
        %9493 = vmatpush.msra.mxu0 0.0
        %9494 = vmatpush.msra.mxu0 0.0
        %9495 = vmatpush.msra.mxu0 0.0
        %9496 = vmatpush.msra.mxu0 0.0
        %9497 = vmatpush.msra.mxu0 0.0
        %9498 = vmatpush.msra.mxu0 0.0
        %9499 = vmatpush.msra.mxu0 0.0
        %9500 = vmatpush.msra.mxu0 0.0
        %9501 = vmatpush.msra.mxu0 %v9484
        %9502 = vmatmul.f32.gmra.mxu0 %v2647
        %v9503 = vpop.f32.mrf.mxu0
        %v9504 = vadd.f32 0.0, %v9503
        %9505 = vmatmul.f32.gmra.mxu0 %v2649
        %v9506 = vpop.f32.mrf.mxu0
        %v9507 = vadd.f32 0.0, %v9506
        %9508 = vmatmul.f32.gmra.mxu0 %v2651
        %v9509 = vpop.f32.mrf.mxu0
        %v9510 = vadd.f32 0.0, %v9509
        %9511 = vmatmul.f32.gmra.mxu0 %v2653
        %v9512 = vpop.f32.mrf.mxu0
        %v9513 = vadd.f32 0.0, %v9512
        %9514 = vmatmul.f32.gmra.mxu0 %v2655
        %v9515 = vpop.f32.mrf.mxu0
        %9516 = vmatmul.f32.gmra.mxu0 %v2657
        %v9517 = vpop.f32.mrf.mxu0
        %9518 = vmatmul.f32.gmra.mxu0 %v2659
        %v9519 = vpop.f32.mrf.mxu0
        %9520 = vmatmul.f32.gmra.mxu0 %v2661
        %v9521 = vpop.f32.mrf.mxu0
        %9522 = vmatmul.f32.gmra.mxu0 %v2663
        %v9523 = vpop.f32.mrf.mxu0
        %v9524 = vadd.f32 0.0, %v9523
        %9525 = vmatmul.f32.gmra.mxu0 %v2665
        %v9526 = vpop.f32.mrf.mxu0
        %v9527 = vadd.f32 0.0, %v9526
        %9528 = vmatmul.f32.gmra.mxu0 %v2667
        %v9529 = vpop.f32.mrf.mxu0
        %v9530 = vadd.f32 0.0, %v9529
        %9531 = vmatmul.f32.gmra.mxu0 %v2669
        %v9532 = vpop.f32.mrf.mxu0
        %v9533 = vadd.f32 0.0, %v9532
        %9534 = vmatmul.f32.gmra.mxu0 %v2671
        %v9535 = vpop.f32.mrf.mxu0
        %9536 = vmatmul.f32.gmra.mxu0 %v2673
        %v9537 = vpop.f32.mrf.mxu0
        %9538 = vmatmul.f32.gmra.mxu0 %v2675
        %v9539 = vpop.f32.mrf.mxu0
        %9540 = vmatmul.f32.gmra.mxu0 %v2677
        %v9541 = vpop.f32.mrf.mxu0
        %9542 = vmatmul.f32.gmra.mxu0 %v2679
        %v9543 = vpop.f32.mrf.mxu0
        %v9544 = vadd.f32 0.0, %v9543
        %9545 = vmatmul.f32.gmra.mxu0 %v2681
        %v9546 = vpop.f32.mrf.mxu0
        %v9547 = vadd.f32 0.0, %v9546
        %9548 = vmatmul.f32.gmra.mxu0 %v2683
        %v9549 = vpop.f32.mrf.mxu0
        %v9550 = vadd.f32 0.0, %v9549
        %9551 = vmatmul.f32.gmra.mxu0 %v2685
        %v9552 = vpop.f32.mrf.mxu0
        %v9553 = vadd.f32 0.0, %v9552
        %9554 = vmatmul.f32.gmra.mxu0 %v2687
        %v9555 = vpop.f32.mrf.mxu0
        %9556 = vmatmul.f32.gmra.mxu0 %v2689
        %v9557 = vpop.f32.mrf.mxu0
        %9558 = vmatmul.f32.gmra.mxu0 %v2691
        %v9559 = vpop.f32.mrf.mxu0
        %9560 = vmatmul.f32.gmra.mxu0 %v2693
        %v9561 = vpop.f32.mrf.mxu0
        %9562 = vmatmul.f32.gmra.mxu0 %v2695
        %v9563 = vpop.f32.mrf.mxu0
        %v9564 = vadd.f32 0.0, %v9563
        %9565 = vmatmul.f32.gmra.mxu0 %v2697
        %v9566 = vpop.f32.mrf.mxu0
        %v9567 = vadd.f32 0.0, %v9566
        %9568 = vmatmul.f32.gmra.mxu0 %v2699
        %v9569 = vpop.f32.mrf.mxu0
        %v9570 = vadd.f32 0.0, %v9569
        %9571 = vmatmul.f32.gmra.mxu0 %v2701
        %v9572 = vpop.f32.mrf.mxu0
        %v9573 = vadd.f32 0.0, %v9572
        %9574 = vmatmul.f32.gmra.mxu0 %v2703
        %v9575 = vpop.f32.mrf.mxu0
        %9576 = vmatmul.f32.gmra.mxu0 %v2705
        %v9577 = vpop.f32.mrf.mxu0
        %9578 = vmatmul.f32.gmra.mxu0 %v2707
        %v9579 = vpop.f32.mrf.mxu0
        %9580 = vmatmul.f32.gmra.mxu0 %v2709
        %v9581 = vpop.f32.mrf.mxu0
        %9582 = vmatmul.f32.gmra.mxu0 %v2711
        %v9583 = vpop.f32.mrf.mxu0
        %v9584 = vadd.f32 0.0, %v9583
        %9585 = vmatmul.f32.gmra.mxu0 %v2713
        %v9586 = vpop.f32.mrf.mxu0
        %v9587 = vadd.f32 0.0, %v9586
        %9588 = vmatmul.f32.gmra.mxu0 %v2715
        %v9589 = vpop.f32.mrf.mxu0
        %v9590 = vadd.f32 0.0, %v9589
        %9591 = vmatmul.f32.gmra.mxu0 %v2717
        %v9592 = vpop.f32.mrf.mxu0
        %v9593 = vadd.f32 0.0, %v9592
        %9594 = vmatmul.f32.gmra.mxu0 %v2719
        %v9595 = vpop.f32.mrf.mxu0
        %9596 = vmatmul.f32.gmra.mxu0 %v2721
        %v9597 = vpop.f32.mrf.mxu0
        %9598 = vmatmul.f32.gmra.mxu0 %v2723
        %v9599 = vpop.f32.mrf.mxu0
        %9600 = vmatmul.f32.gmra.mxu0 %v2725
        %v9601 = vpop.f32.mrf.mxu0
        %9602 = vmatmul.f32.gmra.mxu0 %v2727
        %v9603 = vpop.f32.mrf.mxu0
        %v9604 = vadd.f32 0.0, %v9603
        %9605 = vmatmul.f32.gmra.mxu0 %v2729
        %v9606 = vpop.f32.mrf.mxu0
        %v9607 = vadd.f32 0.0, %v9606
        %9608 = vmatmul.f32.gmra.mxu0 %v4041
        %v9609 = vpop.f32.mrf.mxu0
        %v9610 = vadd.f32 0.0, %v9609
        %9611 = vmatmul.f32.gmra.mxu0 %v4292
        %v9612 = vpop.f32.mrf.mxu0
        %v9613 = vadd.f32 0.0, %v9612
        %9614 = vmatmul.f32.gmra.mxu0 %v4295
        %v9615 = vpop.f32.mrf.mxu0
        %9616 = vmatmul.f32.gmra.mxu0 %v4298
        %v9617 = vpop.f32.mrf.mxu0
        %9618 = vmatmul.f32.gmra.mxu0 %v4301
        %v9619 = vpop.f32.mrf.mxu0
        %9620 = vmatmul.f32.gmra.mxu0 %v4304
        %v9621 = vpop.f32.mrf.mxu0
        %9622 = vmatmul.f32.gmra.mxu0 %v4307
        %v9623 = vpop.f32.mrf.mxu0
        %v9624 = vadd.f32 0.0, %v9623
        %9625 = vmatmul.f32.gmra.mxu0 %v4310
        %v9626 = vpop.f32.mrf.mxu0
        %v9627 = vadd.f32 0.0, %v9626
        %9628 = vmatmul.f32.gmra.mxu0 %v5401
        %v9629 = vpop.f32.mrf.mxu0
        %v9630 = vadd.f32 0.0, %v9629
        %9631 = vmatmul.f32.gmra.mxu0 %v5652
        %v9632 = vpop.f32.mrf.mxu0
        %v9633 = vadd.f32 0.0, %v9632
        %9634 = vmatmul.f32.gmra.mxu0 %v5655
        %v9635 = vpop.f32.mrf.mxu0
        %9636 = vmatmul.f32.gmra.mxu0 %v5658
        %v9637 = vpop.f32.mrf.mxu0
        %9638 = vmatmul.f32.gmra.mxu0 %v5661
        %v9639 = vpop.f32.mrf.mxu0
        %9640 = vmatmul.f32.gmra.mxu0 %v5664
        %v9641 = vpop.f32.mrf.mxu0
        %9642 = vmatmul.f32.gmra.mxu0 %v5667
        %v9643 = vpop.f32.mrf.mxu0
        %v9644 = vadd.f32 0.0, %v9643
        %9645 = vmatmul.f32.gmra.mxu0 %v5670
        %v9646 = vpop.f32.mrf.mxu0
        %v9647 = vadd.f32 0.0, %v9646
        %9648 = vmatmul.f32.gmra.mxu0 %v6761
        %v9649 = vpop.f32.mrf.mxu0
        %v9650 = vadd.f32 0.0, %v9649
        %9651 = vmatmul.f32.gmra.mxu0 %v7012
        %v9652 = vpop.f32.mrf.mxu0
        %v9653 = vadd.f32 0.0, %v9652
        %9654 = vmatmul.f32.gmra.mxu0 %v7015
        %v9655 = vpop.f32.mrf.mxu0
        %9656 = vmatmul.f32.gmra.mxu0 %v7018
        %v9657 = vpop.f32.mrf.mxu0
        %9658 = vmatmul.f32.gmra.mxu0 %v7021
        %v9659 = vpop.f32.mrf.mxu0
        %9660 = vmatmul.f32.gmra.mxu0 %v7024
        %v9661 = vpop.f32.mrf.mxu0
        %9662 = vmatmul.f32.gmra.mxu0 %v7027
        %v9663 = vpop.f32.mrf.mxu0
        %v9664 = vadd.f32 0.0, %v9663
        %9665 = vmatmul.f32.gmra.mxu0 %v7030
        %v9666 = vpop.f32.mrf.mxu0
        %v9667 = vadd.f32 0.0, %v9666
        %9668 = vmatmul.f32.gmra.mxu0 %v8121
        %v9669 = vpop.f32.mrf.mxu0
        %v9670 = vadd.f32 0.0, %v9669
        %9671 = vmatmul.f32.gmra.mxu0 %v8372
        %v9672 = vpop.f32.mrf.mxu0
        %9673 = vmatmul.f32.gmra.mxu0 %v8375
        %v9674 = vpop.f32.mrf.mxu0
        %9675 = vmatmul.f32.gmra.mxu0 %v8378
        %v9676 = vpop.f32.mrf.mxu0
        %9677 = vmatmul.f32.gmra.mxu0 %v8381
        %v9678 = vpop.f32.mrf.mxu0
        %9679 = vmatmul.f32.gmra.mxu0 %v8384
        %v9680 = vpop.f32.mrf.mxu0
        %9681 = vmatmul.f32.gmra.mxu0 %v8387
        %v9682 = vpop.f32.mrf.mxu0
        %v9683 = vadd.f32 0.0, %v9682
        %9684 = vmatmul.f32.gmra.mxu0 %v8390
        %v9685 = vpop.f32.mrf.mxu0
        %v9686 = vadd.f32 0.0, %v9685
        %9687 = vmatmul.f32.gmra.mxu0 %v9481
        %v9688 = vpop.f32.mrf.mxu0
        %v9689 = vadd.f32 0.0, %v9688
        %9690 = vdwg.mxu0
        %v9691 = vadd.f32 %v9441, %v9504
        %v9692 = vadd.f32 %v9442, %v9507
        %v9693 = vadd.f32 %v9443, %v9510
        %v9694 = vadd.f32 %v9444, %v9513
        %v9695 = vadd.f32 %v9445, %v9524
        %v9696 = vadd.f32 %v9446, %v9527
        %v9697 = vadd.f32 %v9447, %v9530
        %v9698 = vadd.f32 %v9448, %v9533
        %v9699 = vadd.f32 %v9449, %v9544
        %v9700 = vadd.f32 %v9450, %v9547
        %v9701 = vadd.f32 %v9451, %v9550
        %v9702 = vadd.f32 %v9452, %v9553
        %v9703 = vadd.f32 %v9453, %v9564
        %v9704 = vadd.f32 %v9454, %v9567
        %v9705 = vadd.f32 %v9455, %v9570
        %v9706 = vadd.f32 %v9456, %v9573
        %v9707 = vadd.f32 %v9457, %v9584
        %v9708 = vadd.f32 %v9458, %v9587
        %v9709 = vadd.f32 %v9459, %v9590
        %v9710 = vadd.f32 %v9460, %v9593
        %v9711 = vadd.f32 %v9461, %v9604
        %v9712 = vadd.f32 %v9462, %v9607
        %v9713 = vadd.f32 %v9463, %v9610
        %v9714 = vadd.f32 %v9464, %v9613
        %v9715 = vadd.f32 %v9465, %v9624
        %v9716 = vadd.f32 %v9466, %v9627
        %v9717 = vadd.f32 %v9467, %v9630
        %v9718 = vadd.f32 %v9468, %v9633
        %v9719 = vadd.f32 %v9469, %v9644
        %v9720 = vadd.f32 %v9470, %v9647
        %v9721 = vadd.f32 %v9471, %v9650
        %v9722 = vadd.f32 %v9472, %v9653
        %v9723 = vadd.f32 %v9473, %v9664
        %v9724 = vadd.f32 %v9474, %v9667
        %v9725 = vadd.f32 %v9475, %v9670
        %v9726 = vadd.f32 %v9476, %v9683
        %v9727 = vadd.f32 %v9477, %v9686
        %v9728 = vadd.f32 %v9478, %v9689
        %v9729 = vld [vmem:[%s4] sm:$0x1]
        %v9731 = vperm.slane %v9729, 0
        %v9733 = vadd.f32 %v9691, %v9731
        %v9734 = vadd.f32 %v9692, %v9731
        %v9735 = vadd.f32 %v9693, %v9731
        %v9736 = vadd.f32 %v9694, %v9731
        %v9737 = vadd.f32 %v9695, %v9731
        %v9738 = vadd.f32 %v9696, %v9731
        %v9739 = vadd.f32 %v9697, %v9731
        %v9740 = vadd.f32 %v9698, %v9731
        %v9741 = vadd.f32 %v9699, %v9731
        %v9742 = vadd.f32 %v9700, %v9731
        %v9743 = vadd.f32 %v9701, %v9731
        %v9744 = vadd.f32 %v9702, %v9731
        %v9745 = vadd.f32 %v9703, %v9731
        %v9746 = vadd.f32 %v9704, %v9731
        %v9747 = vadd.f32 %v9705, %v9731
        %v9748 = vadd.f32 %v9706, %v9731
        %v9749 = vadd.f32 %v9707, %v9731
        %v9750 = vadd.f32 %v9708, %v9731
        %v9751 = vadd.f32 %v9709, %v9731
        %v9752 = vadd.f32 %v9710, %v9731
        %v9753 = vadd.f32 %v9711, %v9731
        %v9754 = vadd.f32 %v9712, %v9731
        %v9755 = vadd.f32 %v9713, %v9731
        %v9756 = vadd.f32 %v9714, %v9731
        %v9757 = vadd.f32 %v9715, %v9731
        %v9758 = vadd.f32 %v9716, %v9731
        %v9759 = vadd.f32 %v9717, %v9731
        %v9760 = vadd.f32 %v9718, %v9731
        %v9761 = vadd.f32 %v9719, %v9731
        %v9762 = vadd.f32 %v9720, %v9731
        %v9763 = vadd.f32 %v9721, %v9731
        %v9764 = vadd.f32 %v9722, %v9731
        %v9765 = vadd.f32 %v9723, %v9731
        %v9766 = vadd.f32 %v9724, %v9731
        %v9767 = vadd.f32 %v9725, %v9731
        %v9768 = vadd.f32 %v9726, %v9731
        %v9769 = vadd.f32 %v9727, %v9731
        %v9770 = vadd.f32 %v9728, %v9731
        %v9771 = vmax.f32 %v9733, 0.0
        %v9772 = vmax.f32 %v9734, 0.0
        %v9773 = vmax.f32 %v9735, 0.0
        %v9774 = vmax.f32 %v9736, 0.0
        %v9775 = vmax.f32 %v9737, 0.0
        %v9776 = vmax.f32 %v9738, 0.0
        %v9777 = vmax.f32 %v9739, 0.0
        %v9778 = vmax.f32 %v9740, 0.0
        %v9779 = vmax.f32 %v9741, 0.0
        %v9780 = vmax.f32 %v9742, 0.0
        %v9781 = vmax.f32 %v9743, 0.0
        %v9782 = vmax.f32 %v9744, 0.0
        %v9783 = vmax.f32 %v9745, 0.0
        %v9784 = vmax.f32 %v9746, 0.0
        %v9785 = vmax.f32 %v9747, 0.0
        %v9786 = vmax.f32 %v9748, 0.0
        %v9787 = vmax.f32 %v9749, 0.0
        %v9788 = vmax.f32 %v9750, 0.0
        %v9789 = vmax.f32 %v9751, 0.0
        %v9790 = vmax.f32 %v9752, 0.0
        %v9791 = vmax.f32 %v9753, 0.0
        %v9792 = vmax.f32 %v9754, 0.0
        %v9793 = vmax.f32 %v9755, 0.0
        %v9794 = vmax.f32 %v9756, 0.0
        %v9795 = vmax.f32 %v9757, 0.0
        %v9796 = vmax.f32 %v9758, 0.0
        %v9797 = vmax.f32 %v9759, 0.0
        %v9798 = vmax.f32 %v9760, 0.0
        %v9799 = vmax.f32 %v9761, 0.0
        %v9800 = vmax.f32 %v9762, 0.0
        %v9801 = vmax.f32 %v9763, 0.0
        %v9802 = vmax.f32 %v9764, 0.0
        %v9803 = vmax.f32 %v9765, 0.0
        %v9804 = vmax.f32 %v9766, 0.0
        %v9805 = vmax.f32 %v9767, 0.0
        %v9806 = vmax.f32 %v9768, 0.0
        %v9807 = vmax.f32 %v9769, 0.0
        %v9808 = vmax.f32 %v9770, 0.0
        %v9828 = vrot.slane %v9771, 2
        %v9829 = vrot.slane %v9772, 2
        %v9830 = vsel %vm2070, %v9828, %v9829
        %v9831 = vrot.slane %v9773, 2
        %v9832 = vsel %vm2070, %v9829, %v9831
        %v9833 = vrot.slane %v9774, 2
        %v9834 = vsel %vm2070, %v9831, %v9833
        %v9835 = vrot.slane %v9779, 2
        %v9836 = vrot.slane %v9780, 2
        %v9837 = vsel %vm2070, %v9835, %v9836
        %v9838 = vrot.slane %v9781, 2
        %v9839 = vsel %vm2070, %v9836, %v9838
        %v9840 = vrot.slane %v9782, 2
        %v9841 = vsel %vm2070, %v9838, %v9840
        %v9842 = vrot.slane %v9787, 2
        %v9843 = vrot.slane %v9788, 2
        %v9844 = vsel %vm2070, %v9842, %v9843
        %v9845 = vrot.slane %v9789, 2
        %v9846 = vsel %vm2070, %v9843, %v9845
        %v9847 = vrot.slane %v9790, 2
        %v9848 = vsel %vm2070, %v9845, %v9847
        %v9849 = vrot.slane %v9795, 2
        %v9850 = vrot.slane %v9796, 2
        %v9851 = vsel %vm2070, %v9849, %v9850
        %v9852 = vrot.slane %v9797, 2
        %v9853 = vsel %vm2070, %v9850, %v9852
        %v9854 = vrot.slane %v9798, 2
        %v9855 = vsel %vm2070, %v9852, %v9854
        %v9856 = vrot.slane %v9803, 2
        %v9857 = vrot.slane %v9804, 2
        %v9858 = vsel %vm2070, %v9856, %v9857
        %v9859 = vrot.slane %v9805, 2
        %v9860 = vsel %vm2070, %v9857, %v9859
        %v9876 = vmax.f32 %v9771, %v9830
        %v9877 = vmax.f32 %v9772, %v9832
        %v9878 = vmax.f32 %v9773, %v9834
        %v9879 = vmax.f32 %v9779, %v9837
        %v9880 = vmax.f32 %v9780, %v9839
        %v9881 = vmax.f32 %v9781, %v9841
        %v9882 = vmax.f32 %v9787, %v9844
        %v9883 = vmax.f32 %v9788, %v9846
        %v9884 = vmax.f32 %v9789, %v9848
        %v9885 = vmax.f32 %v9795, %v9851
        %v9886 = vmax.f32 %v9796, %v9853
        %v9887 = vmax.f32 %v9797, %v9855
        %v9888 = vmax.f32 %v9803, %v9858
        %v9889 = vmax.f32 %v9804, %v9860
        %v9890 = vmax.f32 %v9805, %v9859
        %v9910 = vrot.slane %v9775, 2
        %v9911 = vrot.slane %v9776, 2
        %v9912 = vsel %vm2070, %v9910, %v9911
        %v9913 = vrot.slane %v9777, 2
        %v9914 = vsel %vm2070, %v9911, %v9913
        %v9915 = vrot.slane %v9778, 2
        %v9916 = vsel %vm2070, %v9913, %v9915
        %v9917 = vrot.slane %v9783, 2
        %v9918 = vrot.slane %v9784, 2
        %v9919 = vsel %vm2070, %v9917, %v9918
        %v9920 = vrot.slane %v9785, 2
        %v9921 = vsel %vm2070, %v9918, %v9920
        %v9922 = vrot.slane %v9786, 2
        %v9923 = vsel %vm2070, %v9920, %v9922
        %v9924 = vrot.slane %v9791, 2
        %v9925 = vrot.slane %v9792, 2
        %v9926 = vsel %vm2070, %v9924, %v9925
        %v9927 = vrot.slane %v9793, 2
        %v9928 = vsel %vm2070, %v9925, %v9927
        %v9929 = vrot.slane %v9794, 2
        %v9930 = vsel %vm2070, %v9927, %v9929
        %v9931 = vrot.slane %v9799, 2
        %v9932 = vrot.slane %v9800, 2
        %v9933 = vsel %vm2070, %v9931, %v9932
        %v9934 = vrot.slane %v9801, 2
        %v9935 = vsel %vm2070, %v9932, %v9934
        %v9936 = vrot.slane %v9802, 2
        %v9937 = vsel %vm2070, %v9934, %v9936
        %v9938 = vrot.slane %v9806, 2
        %v9939 = vrot.slane %v9807, 2
        %v9940 = vsel %vm2070, %v9938, %v9939
        %v9941 = vrot.slane %v9808, 2
        %v9942 = vsel %vm2070, %v9939, %v9941
        %v9958 = vmax.f32 %v9775, %v9912
        %v9959 = vmax.f32 %v9776, %v9914
        %v9960 = vmax.f32 %v9777, %v9916
        %v9961 = vmax.f32 %v9783, %v9919
        %v9962 = vmax.f32 %v9784, %v9921
        %v9963 = vmax.f32 %v9785, %v9923
        %v9964 = vmax.f32 %v9791, %v9926
        %v9965 = vmax.f32 %v9792, %v9928
        %v9966 = vmax.f32 %v9793, %v9930
        %v9967 = vmax.f32 %v9799, %v9933
        %v9968 = vmax.f32 %v9800, %v9935
        %v9969 = vmax.f32 %v9801, %v9937
        %v9970 = vmax.f32 %v9806, %v9940
        %v9971 = vmax.f32 %v9807, %v9942
        %v9972 = vmax.f32 %v9808, %v9941
        %v9973 = vmax.f32 %v9876, %v9958
        %v9974 = vmax.f32 %v9877, %v9959
        %v9975 = vmax.f32 %v9878, %v9960
        %v9976 = vmax.f32 %v9879, %v9961
        %v9977 = vmax.f32 %v9880, %v9962
        %v9978 = vmax.f32 %v9881, %v9963
        %v9979 = vmax.f32 %v9882, %v9964
        %v9980 = vmax.f32 %v9883, %v9965
        %v9981 = vmax.f32 %v9884, %v9966
        %v9982 = vmax.f32 %v9885, %v9967
        %v9983 = vmax.f32 %v9886, %v9968
        %v9984 = vmax.f32 %v9887, %v9969
        %v9985 = vmax.f32 %v9888, %v9970
        %v9986 = vmax.f32 %v9889, %v9971
        %v9987 = vmax.f32 %v9890, %v9972
        %v9988 = vld [vmem:[%s5] sm:$0xff]
        %v9989 = vld [vmem:[%s5 + $0x8] sm:$0xff]
        %s9990 = scalar_lea.vmem %s5, 16
        %v9991 = vld [vmem:[%s9990] sm:$0xff]
        %v9992 = vld [vmem:[%s9990 + $0x8] sm:$0xff]
        %v9994 = vrot.slane %v9973, 4
        %vm9995 = vcmask 130048
        %v9996 = vsel %vm9995, %v9994, 0
        %9998 = vmatpush.msra.mxu0 0.0
        %9999 = vmatpush.msra.mxu0 0.0
        %10000 = vmatpush.msra.mxu0 0.0
        %10001 = vmatpush.msra.mxu0 0.0
        %10002 = vmatpush.msra.mxu0 0.0
        %10003 = vmatpush.msra.mxu0 0.0
        %10004 = vmatpush.msra.mxu0 0.0
        %10005 = vmatpush.msra.mxu0 0.0
        %10006 = vmatpush.msra.mxu0 0.0
        %10007 = vmatpush.msra.mxu0 0.0
        %10008 = vmatpush.msra.mxu0 0.0
        %10009 = vmatpush.msra.mxu0 0.0
        %10010 = vmatpush.msra.mxu0 0.0
        %10011 = vmatpush.msra.mxu0 0.0
        %10012 = vmatpush.msra.mxu0 %v9992
        %10013 = vmatpush.msra.mxu0 %v9991
        %10014 = vmatmul.f32.gmra.mxu0 %v9996
        %v10015 = vpop.f32.mrf.mxu0
        %v10016 = vadd.f32 0.0, %v10015
        %10017 = vdwg.mxu0
        %v10018 = vsel %vm9995, %v9973, 0
        %10020 = vmatpush.msra.mxu0 0.0
        %10021 = vmatpush.msra.mxu0 0.0
        %10022 = vmatpush.msra.mxu0 0.0
        %10023 = vmatpush.msra.mxu0 0.0
        %10024 = vmatpush.msra.mxu0 0.0
        %10025 = vmatpush.msra.mxu0 0.0
        %10026 = vmatpush.msra.mxu0 0.0
        %10027 = vmatpush.msra.mxu0 0.0
        %10028 = vmatpush.msra.mxu0 0.0
        %10029 = vmatpush.msra.mxu0 0.0
        %10030 = vmatpush.msra.mxu0 0.0
        %10031 = vmatpush.msra.mxu0 0.0
        %10032 = vmatpush.msra.mxu0 0.0
        %10033 = vmatpush.msra.mxu0 0.0
        %10034 = vmatpush.msra.mxu0 %v9989
        %10035 = vmatpush.msra.mxu0 %v9988
        %10036 = vmatmul.f32.gmra.mxu0 %v10018
        %v10037 = vpop.f32.mrf.mxu0
        %v10038 = vadd.f32 %v10016, %v10037
        %10039 = vdwg.mxu0
        %s10040 = scalar_lea.vmem %s5, 32
        %v10041 = vld [vmem:[%s10040] sm:$0xff]
        %v10042 = vld [vmem:[%s10040 + $0x8] sm:$0xff]
        %v10044 = vsel %vm9995, %v9974, 0
        %10046 = vmatpush.msra.mxu0 0.0
        %10047 = vmatpush.msra.mxu0 0.0
        %10048 = vmatpush.msra.mxu0 0.0
        %10049 = vmatpush.msra.mxu0 0.0
        %10050 = vmatpush.msra.mxu0 0.0
        %10051 = vmatpush.msra.mxu0 0.0
        %10052 = vmatpush.msra.mxu0 0.0
        %10053 = vmatpush.msra.mxu0 0.0
        %10054 = vmatpush.msra.mxu0 0.0
        %10055 = vmatpush.msra.mxu0 0.0
        %10056 = vmatpush.msra.mxu0 0.0
        %10057 = vmatpush.msra.mxu0 0.0
        %10058 = vmatpush.msra.mxu0 0.0
        %10059 = vmatpush.msra.mxu0 0.0
        %10060 = vmatpush.msra.mxu0 %v10042
        %10061 = vmatpush.msra.mxu0 %v10041
        %10062 = vmatmul.f32.gmra.mxu0 %v10044
        %v10063 = vpop.f32.mrf.mxu0
        %v10064 = vadd.f32 0.0, %v10063
        %10065 = vdwg.mxu0
        %v10066 = vadd.f32 %v10038, %v10064
        %s10067 = scalar_lea.vmem %s5, 48
        %v10068 = vld [vmem:[%s10067] sm:$0xff]
        %v10069 = vld [vmem:[%s10067 + $0x8] sm:$0xff]
        %v10070 = vrot.slane %v9974, 4
        %v10071 = vsel %vm9995, %v10070, 0
        %10073 = vmatpush.msra.mxu0 0.0
        %10074 = vmatpush.msra.mxu0 0.0
        %10075 = vmatpush.msra.mxu0 0.0
        %10076 = vmatpush.msra.mxu0 0.0
        %10077 = vmatpush.msra.mxu0 0.0
        %10078 = vmatpush.msra.mxu0 0.0
        %10079 = vmatpush.msra.mxu0 0.0
        %10080 = vmatpush.msra.mxu0 0.0
        %10081 = vmatpush.msra.mxu0 0.0
        %10082 = vmatpush.msra.mxu0 0.0
        %10083 = vmatpush.msra.mxu0 0.0
        %10084 = vmatpush.msra.mxu0 0.0
        %10085 = vmatpush.msra.mxu0 0.0
        %10086 = vmatpush.msra.mxu0 0.0
        %10087 = vmatpush.msra.mxu0 %v10069
        %10088 = vmatpush.msra.mxu0 %v10068
        %10089 = vmatmul.f32.gmra.mxu0 %v10071
        %v10090 = vpop.f32.mrf.mxu0
        %v10091 = vadd.f32 0.0, %v10090
        %10092 = vdwg.mxu0
        %v10093 = vadd.f32 %v10066, %v10091
        %s10094 = scalar_lea.vmem %s5, 64
        %v10095 = vld [vmem:[%s10094] sm:$0xff]
        %v10096 = vld [vmem:[%s10094 + $0x8] sm:$0xff]
        %v10098 = vsel %vm9995, %v9975, 0
        %10100 = vmatpush.msra.mxu0 0.0
        %10101 = vmatpush.msra.mxu0 0.0
        %10102 = vmatpush.msra.mxu0 0.0
        %10103 = vmatpush.msra.mxu0 0.0
        %10104 = vmatpush.msra.mxu0 0.0
        %10105 = vmatpush.msra.mxu0 0.0
        %10106 = vmatpush.msra.mxu0 0.0
        %10107 = vmatpush.msra.mxu0 0.0
        %10108 = vmatpush.msra.mxu0 0.0
        %10109 = vmatpush.msra.mxu0 0.0
        %10110 = vmatpush.msra.mxu0 0.0
        %10111 = vmatpush.msra.mxu0 0.0
        %10112 = vmatpush.msra.mxu0 0.0
        %10113 = vmatpush.msra.mxu0 0.0
        %10114 = vmatpush.msra.mxu0 %v10096
        %10115 = vmatpush.msra.mxu0 %v10095
        %10116 = vmatmul.f32.gmra.mxu0 %v10098
        %v10117 = vpop.f32.mrf.mxu0
        %v10118 = vadd.f32 0.0, %v10117
        %10119 = vdwg.mxu0
        %v10120 = vadd.f32 %v10093, %v10118
        %s10121 = scalar_lea.vmem %s5, 80
        %v10122 = vld [vmem:[%s10121] sm:$0xff]
        %v10123 = vld [vmem:[%s10121 + $0x8] sm:$0xff]
        %v10125 = vsel %vm9995, %v9976, 0
        %10127 = vmatpush.msra.mxu0 0.0
        %10128 = vmatpush.msra.mxu0 0.0
        %10129 = vmatpush.msra.mxu0 0.0
        %10130 = vmatpush.msra.mxu0 0.0
        %10131 = vmatpush.msra.mxu0 0.0
        %10132 = vmatpush.msra.mxu0 0.0
        %10133 = vmatpush.msra.mxu0 0.0
        %10134 = vmatpush.msra.mxu0 0.0
        %10135 = vmatpush.msra.mxu0 0.0
        %10136 = vmatpush.msra.mxu0 0.0
        %10137 = vmatpush.msra.mxu0 0.0
        %10138 = vmatpush.msra.mxu0 0.0
        %10139 = vmatpush.msra.mxu0 0.0
        %10140 = vmatpush.msra.mxu0 0.0
        %10141 = vmatpush.msra.mxu0 %v10123
        %10142 = vmatpush.msra.mxu0 %v10122
        %10143 = vmatmul.f32.gmra.mxu0 %v10125
        %v10144 = vpop.f32.mrf.mxu0
        %v10145 = vadd.f32 0.0, %v10144
        %10146 = vdwg.mxu0
        %v10147 = vadd.f32 %v10120, %v10145
        %s10148 = scalar_lea.vmem %s5, 96
        %v10149 = vld [vmem:[%s10148] sm:$0xff]
        %v10150 = vld [vmem:[%s10148 + $0x8] sm:$0xff]
        %v10151 = vrot.slane %v9976, 4
        %v10152 = vsel %vm9995, %v10151, 0
        %10154 = vmatpush.msra.mxu0 0.0
        %10155 = vmatpush.msra.mxu0 0.0
        %10156 = vmatpush.msra.mxu0 0.0
        %10157 = vmatpush.msra.mxu0 0.0
        %10158 = vmatpush.msra.mxu0 0.0
        %10159 = vmatpush.msra.mxu0 0.0
        %10160 = vmatpush.msra.mxu0 0.0
        %10161 = vmatpush.msra.mxu0 0.0
        %10162 = vmatpush.msra.mxu0 0.0
        %10163 = vmatpush.msra.mxu0 0.0
        %10164 = vmatpush.msra.mxu0 0.0
        %10165 = vmatpush.msra.mxu0 0.0
        %10166 = vmatpush.msra.mxu0 0.0
        %10167 = vmatpush.msra.mxu0 0.0
        %10168 = vmatpush.msra.mxu0 %v10150
        %10169 = vmatpush.msra.mxu0 %v10149
        %10170 = vmatmul.f32.gmra.mxu0 %v10152
        %v10171 = vpop.f32.mrf.mxu0
        %v10172 = vadd.f32 0.0, %v10171
        %10173 = vdwg.mxu0
        %v10174 = vadd.f32 %v10147, %v10172
        %s10175 = scalar_lea.vmem %s5, 112
        %v10176 = vld [vmem:[%s10175] sm:$0xff]
        %v10177 = vld [vmem:[%s10175 + $0x8] sm:$0xff]
        %v10179 = vsel %vm9995, %v9977, 0
        %10181 = vmatpush.msra.mxu0 0.0
        %10182 = vmatpush.msra.mxu0 0.0
        %10183 = vmatpush.msra.mxu0 0.0
        %10184 = vmatpush.msra.mxu0 0.0
        %10185 = vmatpush.msra.mxu0 0.0
        %10186 = vmatpush.msra.mxu0 0.0
        %10187 = vmatpush.msra.mxu0 0.0
        %10188 = vmatpush.msra.mxu0 0.0
        %10189 = vmatpush.msra.mxu0 0.0
        %10190 = vmatpush.msra.mxu0 0.0
        %10191 = vmatpush.msra.mxu0 0.0
        %10192 = vmatpush.msra.mxu0 0.0
        %10193 = vmatpush.msra.mxu0 0.0
        %10194 = vmatpush.msra.mxu0 0.0
        %10195 = vmatpush.msra.mxu0 %v10177
        %10196 = vmatpush.msra.mxu0 %v10176
        %10197 = vmatmul.f32.gmra.mxu0 %v10179
        %v10198 = vpop.f32.mrf.mxu0
        %v10199 = vadd.f32 0.0, %v10198
        %10200 = vdwg.mxu0
        %v10201 = vadd.f32 %v10174, %v10199
        %s10202 = scalar_lea.vmem %s5, 128
        %v10203 = vld [vmem:[%s10202] sm:$0xff]
        %v10204 = vld [vmem:[%s10202 + $0x8] sm:$0xff]
        %v10205 = vrot.slane %v9977, 4
        %v10206 = vsel %vm9995, %v10205, 0
        %10208 = vmatpush.msra.mxu0 0.0
        %10209 = vmatpush.msra.mxu0 0.0
        %10210 = vmatpush.msra.mxu0 0.0
        %10211 = vmatpush.msra.mxu0 0.0
        %10212 = vmatpush.msra.mxu0 0.0
        %10213 = vmatpush.msra.mxu0 0.0
        %10214 = vmatpush.msra.mxu0 0.0
        %10215 = vmatpush.msra.mxu0 0.0
        %10216 = vmatpush.msra.mxu0 0.0
        %10217 = vmatpush.msra.mxu0 0.0
        %10218 = vmatpush.msra.mxu0 0.0
        %10219 = vmatpush.msra.mxu0 0.0
        %10220 = vmatpush.msra.mxu0 0.0
        %10221 = vmatpush.msra.mxu0 0.0
        %10222 = vmatpush.msra.mxu0 %v10204
        %10223 = vmatpush.msra.mxu0 %v10203
        %10224 = vmatmul.f32.gmra.mxu0 %v10206
        %v10225 = vpop.f32.mrf.mxu0
        %v10226 = vadd.f32 0.0, %v10225
        %10227 = vdwg.mxu0
        %v10228 = vadd.f32 %v10201, %v10226
        %s10229 = scalar_lea.vmem %s5, 144
        %v10230 = vld [vmem:[%s10229] sm:$0xff]
        %v10231 = vld [vmem:[%s10229 + $0x8] sm:$0xff]
        %v10233 = vsel %vm9995, %v9978, 0
        %10235 = vmatpush.msra.mxu0 0.0
        %10236 = vmatpush.msra.mxu0 0.0
        %10237 = vmatpush.msra.mxu0 0.0
        %10238 = vmatpush.msra.mxu0 0.0
        %10239 = vmatpush.msra.mxu0 0.0
        %10240 = vmatpush.msra.mxu0 0.0
        %10241 = vmatpush.msra.mxu0 0.0
        %10242 = vmatpush.msra.mxu0 0.0
        %10243 = vmatpush.msra.mxu0 0.0
        %10244 = vmatpush.msra.mxu0 0.0
        %10245 = vmatpush.msra.mxu0 0.0
        %10246 = vmatpush.msra.mxu0 0.0
        %10247 = vmatpush.msra.mxu0 0.0
        %10248 = vmatpush.msra.mxu0 0.0
        %10249 = vmatpush.msra.mxu0 %v10231
        %10250 = vmatpush.msra.mxu0 %v10230
        %10251 = vmatmul.f32.gmra.mxu0 %v10233
        %v10252 = vpop.f32.mrf.mxu0
        %v10253 = vadd.f32 0.0, %v10252
        %10254 = vdwg.mxu0
        %v10255 = vadd.f32 %v10228, %v10253
        %s10256 = scalar_lea.vmem %s5, 160
        %v10257 = vld [vmem:[%s10256] sm:$0xff]
        %v10258 = vld [vmem:[%s10256 + $0x8] sm:$0xff]
        %v10260 = vsel %vm9995, %v9979, 0
        %10262 = vmatpush.msra.mxu0 0.0
        %10263 = vmatpush.msra.mxu0 0.0
        %10264 = vmatpush.msra.mxu0 0.0
        %10265 = vmatpush.msra.mxu0 0.0
        %10266 = vmatpush.msra.mxu0 0.0
        %10267 = vmatpush.msra.mxu0 0.0
        %10268 = vmatpush.msra.mxu0 0.0
        %10269 = vmatpush.msra.mxu0 0.0
        %10270 = vmatpush.msra.mxu0 0.0
        %10271 = vmatpush.msra.mxu0 0.0
        %10272 = vmatpush.msra.mxu0 0.0
        %10273 = vmatpush.msra.mxu0 0.0
        %10274 = vmatpush.msra.mxu0 0.0
        %10275 = vmatpush.msra.mxu0 0.0
        %10276 = vmatpush.msra.mxu0 %v10258
        %10277 = vmatpush.msra.mxu0 %v10257
        %10278 = vmatmul.f32.gmra.mxu0 %v10260
        %v10279 = vpop.f32.mrf.mxu0
        %v10280 = vadd.f32 0.0, %v10279
        %10281 = vdwg.mxu0
        %v10282 = vadd.f32 %v10255, %v10280
        %s10283 = scalar_lea.vmem %s5, 176
        %v10284 = vld [vmem:[%s10283] sm:$0xff]
        %v10285 = vld [vmem:[%s10283 + $0x8] sm:$0xff]
        %v10286 = vrot.slane %v9979, 4
        %v10287 = vsel %vm9995, %v10286, 0
        %10289 = vmatpush.msra.mxu0 0.0
        %10290 = vmatpush.msra.mxu0 0.0
        %10291 = vmatpush.msra.mxu0 0.0
        %10292 = vmatpush.msra.mxu0 0.0
        %10293 = vmatpush.msra.mxu0 0.0
        %10294 = vmatpush.msra.mxu0 0.0
        %10295 = vmatpush.msra.mxu0 0.0
        %10296 = vmatpush.msra.mxu0 0.0
        %10297 = vmatpush.msra.mxu0 0.0
        %10298 = vmatpush.msra.mxu0 0.0
        %10299 = vmatpush.msra.mxu0 0.0
        %10300 = vmatpush.msra.mxu0 0.0
        %10301 = vmatpush.msra.mxu0 0.0
        %10302 = vmatpush.msra.mxu0 0.0
        %10303 = vmatpush.msra.mxu0 %v10285
        %10304 = vmatpush.msra.mxu0 %v10284
        %10305 = vmatmul.f32.gmra.mxu0 %v10287
        %v10306 = vpop.f32.mrf.mxu0
        %v10307 = vadd.f32 0.0, %v10306
        %10308 = vdwg.mxu0
        %v10309 = vadd.f32 %v10282, %v10307
        %s10310 = scalar_lea.vmem %s5, 192
        %v10311 = vld [vmem:[%s10310] sm:$0xff]
        %v10312 = vld [vmem:[%s10310 + $0x8] sm:$0xff]
        %v10314 = vsel %vm9995, %v9980, 0
        %10316 = vmatpush.msra.mxu0 0.0
        %10317 = vmatpush.msra.mxu0 0.0
        %10318 = vmatpush.msra.mxu0 0.0
        %10319 = vmatpush.msra.mxu0 0.0
        %10320 = vmatpush.msra.mxu0 0.0
        %10321 = vmatpush.msra.mxu0 0.0
        %10322 = vmatpush.msra.mxu0 0.0
        %10323 = vmatpush.msra.mxu0 0.0
        %10324 = vmatpush.msra.mxu0 0.0
        %10325 = vmatpush.msra.mxu0 0.0
        %10326 = vmatpush.msra.mxu0 0.0
        %10327 = vmatpush.msra.mxu0 0.0
        %10328 = vmatpush.msra.mxu0 0.0
        %10329 = vmatpush.msra.mxu0 0.0
        %10330 = vmatpush.msra.mxu0 %v10312
        %10331 = vmatpush.msra.mxu0 %v10311
        %10332 = vmatmul.f32.gmra.mxu0 %v10314
        %v10333 = vpop.f32.mrf.mxu0
        %v10334 = vadd.f32 0.0, %v10333
        %10335 = vdwg.mxu0
        %v10336 = vadd.f32 %v10309, %v10334
        %s10337 = scalar_lea.vmem %s5, 208
        %v10338 = vld [vmem:[%s10337] sm:$0xff]
        %v10339 = vld [vmem:[%s10337 + $0x8] sm:$0xff]
        %v10340 = vrot.slane %v9980, 4
        %v10341 = vsel %vm9995, %v10340, 0
        %10343 = vmatpush.msra.mxu0 0.0
        %10344 = vmatpush.msra.mxu0 0.0
        %10345 = vmatpush.msra.mxu0 0.0
        %10346 = vmatpush.msra.mxu0 0.0
        %10347 = vmatpush.msra.mxu0 0.0
        %10348 = vmatpush.msra.mxu0 0.0
        %10349 = vmatpush.msra.mxu0 0.0
        %10350 = vmatpush.msra.mxu0 0.0
        %10351 = vmatpush.msra.mxu0 0.0
        %10352 = vmatpush.msra.mxu0 0.0
        %10353 = vmatpush.msra.mxu0 0.0
        %10354 = vmatpush.msra.mxu0 0.0
        %10355 = vmatpush.msra.mxu0 0.0
        %10356 = vmatpush.msra.mxu0 0.0
        %10357 = vmatpush.msra.mxu0 %v10339
        %10358 = vmatpush.msra.mxu0 %v10338
        %10359 = vmatmul.f32.gmra.mxu0 %v10341
        %v10360 = vpop.f32.mrf.mxu0
        %v10361 = vadd.f32 0.0, %v10360
        %10362 = vdwg.mxu0
        %v10363 = vadd.f32 %v10336, %v10361
        %s10364 = scalar_lea.vmem %s5, 224
        %v10365 = vld [vmem:[%s10364] sm:$0xff]
        %v10366 = vld [vmem:[%s10364 + $0x8] sm:$0xff]
        %v10368 = vsel %vm9995, %v9981, 0
        %10370 = vmatpush.msra.mxu0 0.0
        %10371 = vmatpush.msra.mxu0 0.0
        %10372 = vmatpush.msra.mxu0 0.0
        %10373 = vmatpush.msra.mxu0 0.0
        %10374 = vmatpush.msra.mxu0 0.0
        %10375 = vmatpush.msra.mxu0 0.0
        %10376 = vmatpush.msra.mxu0 0.0
        %10377 = vmatpush.msra.mxu0 0.0
        %10378 = vmatpush.msra.mxu0 0.0
        %10379 = vmatpush.msra.mxu0 0.0
        %10380 = vmatpush.msra.mxu0 0.0
        %10381 = vmatpush.msra.mxu0 0.0
        %10382 = vmatpush.msra.mxu0 0.0
        %10383 = vmatpush.msra.mxu0 0.0
        %10384 = vmatpush.msra.mxu0 %v10366
        %10385 = vmatpush.msra.mxu0 %v10365
        %10386 = vmatmul.f32.gmra.mxu0 %v10368
        %v10387 = vpop.f32.mrf.mxu0
        %v10388 = vadd.f32 0.0, %v10387
        %10389 = vdwg.mxu0
        %v10390 = vadd.f32 %v10363, %v10388
        %s10391 = scalar_lea.vmem %s5, 240
        %v10392 = vld [vmem:[%s10391] sm:$0xff]
        %v10393 = vld [vmem:[%s10391 + $0x8] sm:$0xff]
        %v10395 = vsel %vm9995, %v9982, 0
        %10397 = vmatpush.msra.mxu0 0.0
        %10398 = vmatpush.msra.mxu0 0.0
        %10399 = vmatpush.msra.mxu0 0.0
        %10400 = vmatpush.msra.mxu0 0.0
        %10401 = vmatpush.msra.mxu0 0.0
        %10402 = vmatpush.msra.mxu0 0.0
        %10403 = vmatpush.msra.mxu0 0.0
        %10404 = vmatpush.msra.mxu0 0.0
        %10405 = vmatpush.msra.mxu0 0.0
        %10406 = vmatpush.msra.mxu0 0.0
        %10407 = vmatpush.msra.mxu0 0.0
        %10408 = vmatpush.msra.mxu0 0.0
        %10409 = vmatpush.msra.mxu0 0.0
        %10410 = vmatpush.msra.mxu0 0.0
        %10411 = vmatpush.msra.mxu0 %v10393
        %10412 = vmatpush.msra.mxu0 %v10392
        %10413 = vmatmul.f32.gmra.mxu0 %v10395
        %v10414 = vpop.f32.mrf.mxu0
        %v10415 = vadd.f32 0.0, %v10414
        %10416 = vdwg.mxu0
        %v10417 = vadd.f32 %v10390, %v10415
        %s10418 = scalar_lea.vmem %s5, 256
        %v10419 = vld [vmem:[%s10418] sm:$0xff]
        %v10420 = vld [vmem:[%s10418 + $0x8] sm:$0xff]
        %v10421 = vrot.slane %v9982, 4
        %v10422 = vsel %vm9995, %v10421, 0
        %10424 = vmatpush.msra.mxu0 0.0
        %10425 = vmatpush.msra.mxu0 0.0
        %10426 = vmatpush.msra.mxu0 0.0
        %10427 = vmatpush.msra.mxu0 0.0
        %10428 = vmatpush.msra.mxu0 0.0
        %10429 = vmatpush.msra.mxu0 0.0
        %10430 = vmatpush.msra.mxu0 0.0
        %10431 = vmatpush.msra.mxu0 0.0
        %10432 = vmatpush.msra.mxu0 0.0
        %10433 = vmatpush.msra.mxu0 0.0
        %10434 = vmatpush.msra.mxu0 0.0
        %10435 = vmatpush.msra.mxu0 0.0
        %10436 = vmatpush.msra.mxu0 0.0
        %10437 = vmatpush.msra.mxu0 0.0
        %10438 = vmatpush.msra.mxu0 %v10420
        %10439 = vmatpush.msra.mxu0 %v10419
        %10440 = vmatmul.f32.gmra.mxu0 %v10422
        %v10441 = vpop.f32.mrf.mxu0
        %v10442 = vadd.f32 0.0, %v10441
        %10443 = vdwg.mxu0
        %v10444 = vadd.f32 %v10417, %v10442
        %s10445 = scalar_lea.vmem %s5, 272
        %v10446 = vld [vmem:[%s10445] sm:$0xff]
        %v10447 = vld [vmem:[%s10445 + $0x8] sm:$0xff]
        %v10449 = vsel %vm9995, %v9983, 0
        %10451 = vmatpush.msra.mxu0 0.0
        %10452 = vmatpush.msra.mxu0 0.0
        %10453 = vmatpush.msra.mxu0 0.0
        %10454 = vmatpush.msra.mxu0 0.0
        %10455 = vmatpush.msra.mxu0 0.0
        %10456 = vmatpush.msra.mxu0 0.0
        %10457 = vmatpush.msra.mxu0 0.0
        %10458 = vmatpush.msra.mxu0 0.0
        %10459 = vmatpush.msra.mxu0 0.0
        %10460 = vmatpush.msra.mxu0 0.0
        %10461 = vmatpush.msra.mxu0 0.0
        %10462 = vmatpush.msra.mxu0 0.0
        %10463 = vmatpush.msra.mxu0 0.0
        %10464 = vmatpush.msra.mxu0 0.0
        %10465 = vmatpush.msra.mxu0 %v10447
        %10466 = vmatpush.msra.mxu0 %v10446
        %10467 = vmatmul.f32.gmra.mxu0 %v10449
        %v10468 = vpop.f32.mrf.mxu0
        %v10469 = vadd.f32 0.0, %v10468
        %10470 = vdwg.mxu0
        %v10471 = vadd.f32 %v10444, %v10469
        %s10472 = scalar_lea.vmem %s5, 288
        %v10473 = vld [vmem:[%s10472] sm:$0xff]
        %v10474 = vld [vmem:[%s10472 + $0x8] sm:$0xff]
        %v10475 = vrot.slane %v9983, 4
        %v10476 = vsel %vm9995, %v10475, 0
        %10478 = vmatpush.msra.mxu0 0.0
        %10479 = vmatpush.msra.mxu0 0.0
        %10480 = vmatpush.msra.mxu0 0.0
        %10481 = vmatpush.msra.mxu0 0.0
        %10482 = vmatpush.msra.mxu0 0.0
        %10483 = vmatpush.msra.mxu0 0.0
        %10484 = vmatpush.msra.mxu0 0.0
        %10485 = vmatpush.msra.mxu0 0.0
        %10486 = vmatpush.msra.mxu0 0.0
        %10487 = vmatpush.msra.mxu0 0.0
        %10488 = vmatpush.msra.mxu0 0.0
        %10489 = vmatpush.msra.mxu0 0.0
        %10490 = vmatpush.msra.mxu0 0.0
        %10491 = vmatpush.msra.mxu0 0.0
        %10492 = vmatpush.msra.mxu0 %v10474
        %10493 = vmatpush.msra.mxu0 %v10473
        %10494 = vmatmul.f32.gmra.mxu0 %v10476
        %v10495 = vpop.f32.mrf.mxu0
        %v10496 = vadd.f32 0.0, %v10495
        %10497 = vdwg.mxu0
        %v10498 = vadd.f32 %v10471, %v10496
        %s10499 = scalar_lea.vmem %s5, 304
        %v10500 = vld [vmem:[%s10499] sm:$0xff]
        %v10501 = vld [vmem:[%s10499 + $0x8] sm:$0xff]
        %v10503 = vsel %vm9995, %v9984, 0
        %10505 = vmatpush.msra.mxu0 0.0
        %10506 = vmatpush.msra.mxu0 0.0
        %10507 = vmatpush.msra.mxu0 0.0
        %10508 = vmatpush.msra.mxu0 0.0
        %10509 = vmatpush.msra.mxu0 0.0
        %10510 = vmatpush.msra.mxu0 0.0
        %10511 = vmatpush.msra.mxu0 0.0
        %10512 = vmatpush.msra.mxu0 0.0
        %10513 = vmatpush.msra.mxu0 0.0
        %10514 = vmatpush.msra.mxu0 0.0
        %10515 = vmatpush.msra.mxu0 0.0
        %10516 = vmatpush.msra.mxu0 0.0
        %10517 = vmatpush.msra.mxu0 0.0
        %10518 = vmatpush.msra.mxu0 0.0
        %10519 = vmatpush.msra.mxu0 %v10501
        %10520 = vmatpush.msra.mxu0 %v10500
        %10521 = vmatmul.f32.gmra.mxu0 %v10503
        %v10522 = vpop.f32.mrf.mxu0
        %v10523 = vadd.f32 0.0, %v10522
        %10524 = vdwg.mxu0
        %v10525 = vadd.f32 %v10498, %v10523
        %s10526 = scalar_lea.vmem %s5, 320
        %v10527 = vld [vmem:[%s10526] sm:$0xff]
        %v10528 = vld [vmem:[%s10526 + $0x8] sm:$0xff]
        %v10530 = vsel %vm9995, %v9985, 0
        %10532 = vmatpush.msra.mxu0 0.0
        %10533 = vmatpush.msra.mxu0 0.0
        %10534 = vmatpush.msra.mxu0 0.0
        %10535 = vmatpush.msra.mxu0 0.0
        %10536 = vmatpush.msra.mxu0 0.0
        %10537 = vmatpush.msra.mxu0 0.0
        %10538 = vmatpush.msra.mxu0 0.0
        %10539 = vmatpush.msra.mxu0 0.0
        %10540 = vmatpush.msra.mxu0 0.0
        %10541 = vmatpush.msra.mxu0 0.0
        %10542 = vmatpush.msra.mxu0 0.0
        %10543 = vmatpush.msra.mxu0 0.0
        %10544 = vmatpush.msra.mxu0 0.0
        %10545 = vmatpush.msra.mxu0 0.0
        %10546 = vmatpush.msra.mxu0 %v10528
        %10547 = vmatpush.msra.mxu0 %v10527
        %10548 = vmatmul.f32.gmra.mxu0 %v10530
        %v10549 = vpop.f32.mrf.mxu0
        %v10550 = vadd.f32 0.0, %v10549
        %10551 = vdwg.mxu0
        %v10552 = vadd.f32 %v10525, %v10550
        %s10553 = scalar_lea.vmem %s5, 336
        %v10554 = vld [vmem:[%s10553] sm:$0xff]
        %v10555 = vld [vmem:[%s10553 + $0x8] sm:$0xff]
        %v10556 = vrot.slane %v9985, 4
        %v10557 = vsel %vm9995, %v10556, 0
        %10559 = vmatpush.msra.mxu0 0.0
        %10560 = vmatpush.msra.mxu0 0.0
        %10561 = vmatpush.msra.mxu0 0.0
        %10562 = vmatpush.msra.mxu0 0.0
        %10563 = vmatpush.msra.mxu0 0.0
        %10564 = vmatpush.msra.mxu0 0.0
        %10565 = vmatpush.msra.mxu0 0.0
        %10566 = vmatpush.msra.mxu0 0.0
        %10567 = vmatpush.msra.mxu0 0.0
        %10568 = vmatpush.msra.mxu0 0.0
        %10569 = vmatpush.msra.mxu0 0.0
        %10570 = vmatpush.msra.mxu0 0.0
        %10571 = vmatpush.msra.mxu0 0.0
        %10572 = vmatpush.msra.mxu0 0.0
        %10573 = vmatpush.msra.mxu0 %v10555
        %10574 = vmatpush.msra.mxu0 %v10554
        %10575 = vmatmul.f32.gmra.mxu0 %v10557
        %v10576 = vpop.f32.mrf.mxu0
        %v10577 = vadd.f32 0.0, %v10576
        %10578 = vdwg.mxu0
        %v10579 = vadd.f32 %v10552, %v10577
        %s10580 = scalar_lea.vmem %s5, 352
        %v10581 = vld [vmem:[%s10580] sm:$0xff]
        %v10582 = vld [vmem:[%s10580 + $0x8] sm:$0xff]
        %v10584 = vsel %vm9995, %v9986, 0
        %10586 = vmatpush.msra.mxu0 0.0
        %10587 = vmatpush.msra.mxu0 0.0
        %10588 = vmatpush.msra.mxu0 0.0
        %10589 = vmatpush.msra.mxu0 0.0
        %10590 = vmatpush.msra.mxu0 0.0
        %10591 = vmatpush.msra.mxu0 0.0
        %10592 = vmatpush.msra.mxu0 0.0
        %10593 = vmatpush.msra.mxu0 0.0
        %10594 = vmatpush.msra.mxu0 0.0
        %10595 = vmatpush.msra.mxu0 0.0
        %10596 = vmatpush.msra.mxu0 0.0
        %10597 = vmatpush.msra.mxu0 0.0
        %10598 = vmatpush.msra.mxu0 0.0
        %10599 = vmatpush.msra.mxu0 0.0
        %10600 = vmatpush.msra.mxu0 %v10582
        %10601 = vmatpush.msra.mxu0 %v10581
        %10602 = vmatmul.f32.gmra.mxu0 %v10584
        %v10603 = vpop.f32.mrf.mxu0
        %v10604 = vadd.f32 0.0, %v10603
        %10605 = vdwg.mxu0
        %v10606 = vadd.f32 %v10579, %v10604
        %s10607 = scalar_lea.vmem %s5, 368
        %v10608 = vld [vmem:[%s10607] sm:$0xff]
        %v10609 = vld [vmem:[%s10607 + $0x8] sm:$0xff]
        %v10610 = vrot.slane %v9986, 4
        %v10611 = vsel %vm9995, %v10610, 0
        %10613 = vmatpush.msra.mxu0 0.0
        %10614 = vmatpush.msra.mxu0 0.0
        %10615 = vmatpush.msra.mxu0 0.0
        %10616 = vmatpush.msra.mxu0 0.0
        %10617 = vmatpush.msra.mxu0 0.0
        %10618 = vmatpush.msra.mxu0 0.0
        %10619 = vmatpush.msra.mxu0 0.0
        %10620 = vmatpush.msra.mxu0 0.0
        %10621 = vmatpush.msra.mxu0 0.0
        %10622 = vmatpush.msra.mxu0 0.0
        %10623 = vmatpush.msra.mxu0 0.0
        %10624 = vmatpush.msra.mxu0 0.0
        %10625 = vmatpush.msra.mxu0 0.0
        %10626 = vmatpush.msra.mxu0 0.0
        %10627 = vmatpush.msra.mxu0 %v10609
        %10628 = vmatpush.msra.mxu0 %v10608
        %10629 = vmatmul.f32.gmra.mxu0 %v10611
        %v10630 = vpop.f32.mrf.mxu0
        %v10631 = vadd.f32 0.0, %v10630
        %10632 = vdwg.mxu0
        %v10633 = vadd.f32 %v10606, %v10631
        %s10634 = scalar_lea.vmem %s5, 384
        %v10635 = vld [vmem:[%s10634] sm:$0xff]
        %v10636 = vld [vmem:[%s10634 + $0x8] sm:$0xff]
        %v10638 = vsel %vm9995, %v9987, 0
        %10640 = vmatpush.msra.mxu0 0.0
        %10641 = vmatpush.msra.mxu0 0.0
        %10642 = vmatpush.msra.mxu0 0.0
        %10643 = vmatpush.msra.mxu0 0.0
        %10644 = vmatpush.msra.mxu0 0.0
        %10645 = vmatpush.msra.mxu0 0.0
        %10646 = vmatpush.msra.mxu0 0.0
        %10647 = vmatpush.msra.mxu0 0.0
        %10648 = vmatpush.msra.mxu0 0.0
        %10649 = vmatpush.msra.mxu0 0.0
        %10650 = vmatpush.msra.mxu0 0.0
        %10651 = vmatpush.msra.mxu0 0.0
        %10652 = vmatpush.msra.mxu0 0.0
        %10653 = vmatpush.msra.mxu0 0.0
        %10654 = vmatpush.msra.mxu0 %v10636
        %10655 = vmatpush.msra.mxu0 %v10635
        %10656 = vmatmul.f32.gmra.mxu0 %v10638
        %v10657 = vpop.f32.mrf.mxu0
        %v10658 = vadd.f32 0.0, %v10657
        %10659 = vdwg.mxu0
        %v10660 = vadd.f32 %v10633, %v10658
        %v10661 = vld [vmem:[%s6] sm:$0x1]
        %v10662 = vadd.f32 %v10660, %v10661
        %v10663 = vmax.f32 %v10662, 0.0
        %v10664 = vld [vmem:[%s7] sm:$0xff]
        %v10665 = vld [vmem:[%s7 + $0x8] sm:$0xff]
        %v10666 = vld [vmem:[%s7 + $0x10] sm:$0xff]
        %v10667 = vld [vmem:[%s7 + $0x18] sm:$0xff]
        %v10668 = vld [vmem:[%s7 + $0x20] sm:$0xff]
        %v10669 = vld [vmem:[%s7 + $0x28] sm:$0xff]
        %v10670 = vld [vmem:[%s7 + $0x30] sm:$0xff]
        %v10671 = vld [vmem:[%s7 + $0x38] sm:$0xff]
        %v10672 = vld [vmem:[%s7 + $0x40] sm:$0xff]
        %v10673 = vld [vmem:[%s7 + $0x48] sm:$0xff]
        %v10674 = vld [vmem:[%s7 + $0x50] sm:$0xff]
        %v10675 = vld [vmem:[%s7 + $0x58] sm:$0xff]
        %v10676 = vld [vmem:[%s7 + $0x60] sm:$0xff]
        %v10677 = vld [vmem:[%s7 + $0x68] sm:$0xff]
        %v10678 = vld [vmem:[%s7 + $0x70] sm:$0xff]
        %v10679 = vld [vmem:[%s7 + $0x78] sm:$0xff]
        %v10680 = vld [vmem:[%s8] sm:$0x1]
        %10681 = vmatpush.msra.mxu0 %v10679
        %10682 = vmatpush.msra.mxu0 %v10678
        %10683 = vmatpush.msra.mxu0 %v10677
        %10684 = vmatpush.msra.mxu0 %v10676
        %10685 = vmatpush.msra.mxu0 %v10675
        %10686 = vmatpush.msra.mxu0 %v10674
        %10687 = vmatpush.msra.mxu0 %v10673
        %10688 = vmatpush.msra.mxu0 %v10672
        %10689 = vmatpush.msra.mxu0 %v10671
        %10690 = vmatpush.msra.mxu0 %v10670
        %10691 = vmatpush.msra.mxu0 %v10669
        %10692 = vmatpush.msra.mxu0 %v10668
        %10693 = vmatpush.msra.mxu0 %v10667
        %10694 = vmatpush.msra.mxu0 %v10666
        %10695 = vmatpush.msra.mxu0 %v10665
        %10696 = vmatpush.msra.mxu0 %v10664
        %10697 = vmatmul.f32.gmra.mxu0 %v10663
        %v10698 = vpop.f32.mrf.mxu0
        %v10699 = vadd.f32 %v10680, %v10698
        %10700 = vdwg.mxu0
        %v10701 = vmax.f32 %v10699, 0.0
        %v10702 = vld [vmem:[%s9] sm:$0xff]
        %v10703 = vld [vmem:[%s9 + $0x8] sm:$0xff]
        %v10704 = vld [vmem:[%s9 + $0x10] sm:$0xff]
        %v10705 = vld [vmem:[%s9 + $0x18] sm:$0xff]
        %v10706 = vld [vmem:[%s9 + $0x20] sm:$0xff]
        %v10707 = vld [vmem:[%s9 + $0x28] sm:$0xff]
        %v10708 = vld [vmem:[%s9 + $0x30] sm:$0xff]
        %v10709 = vld [vmem:[%s9 + $0x38] sm:$0xff]
        %v10710 = vld [vmem:[%s9 + $0x40] sm:$0xff]
        %v10711 = vld [vmem:[%s9 + $0x48] sm:$0xff]
        %v10712 = vld [vmem:[%s9 + $0x50] sm:$0xff]
        %v10713 = vld [vmem:[%s9 + $0x58] sm:$0xff]
        %v10714 = vld [vmem:[%s9 + $0x60] sm:$0xff]
        %v10715 = vld [vmem:[%s9 + $0x68] sm:$0xff]
        %v10716 = vld [vmem:[%s9 + $0x70] sm:$0xff]
        %v10717 = vld [vmem:[%s9 + $0x78] sm:$0xff]
        %v10718 = vld [vmem:[%s10] sm:$0x1]
        %10719 = vmatpush.msra.mxu0 %v10717
        %10720 = vmatpush.msra.mxu0 %v10716
        %10721 = vmatpush.msra.mxu0 %v10715
        %10722 = vmatpush.msra.mxu0 %v10714
        %10723 = vmatpush.msra.mxu0 %v10713
        %10724 = vmatpush.msra.mxu0 %v10712
        %10725 = vmatpush.msra.mxu0 %v10711
        %10726 = vmatpush.msra.mxu0 %v10710
        %10727 = vmatpush.msra.mxu0 %v10709
        %10728 = vmatpush.msra.mxu0 %v10708
        %10729 = vmatpush.msra.mxu0 %v10707
        %10730 = vmatpush.msra.mxu0 %v10706
        %10731 = vmatpush.msra.mxu0 %v10705
        %10732 = vmatpush.msra.mxu0 %v10704
        %10733 = vmatpush.msra.mxu0 %v10703
        %10734 = vmatpush.msra.mxu0 %v10702
        %10735 = vmatmul.f32.gmra.mxu0 %v10701
        %v10736 = vpop.f32.mrf.mxu0
        %v10737 = vadd.f32 %v10718, %v10736
        %10738 = vdwg.mxu0
        %10739 = vst [vmem:[%s378] sm:$0x1] %v10737
        %s10740 = sand.u32 %s269, 1
        %s10741 = scalar_lea.sflag [#allocation3], %s10740
        %s10742 = sand.u32 %s269, 1
        %s10743 = scalar_lea.vmem [#allocation2], %s10742
        // Predicated region
        $region65: #{tpu_custom_call.1} parent=63 // pred_check
          %p10744 = pneg %p279
        $region66: #{tpu_custom_call.1} parent=63 // pred_check_branch
          %10746 = sbr.rel (%p10744) target = $region68
        $region67: #{tpu_custom_call.1} parent=63 // pred_region
          %10748 = vsyncadd %s10741, 0
          %s10749 = scalar_lea.hbm %s11, %s25
          %s10751 = sshll.u32 %s10743, 4
          %s10752 = int_to_ptr.vmem [resolvable:$true] %s10751
          %s10753 = sshll.u32 %s10749, 4
          %s10754 = int_to_ptr.hbm [resolvable:$true] %s10753
          %10756 = dma.vmem_to_hbm [thread:$0]  %s10752, 16, %s10754, %s10741
        $region68: #{tpu_custom_call.1} parent=63 // pred_fallthru
          _
      $region64: #{tpu_custom_call.1} parent=5 // pred_fallthru
        _
      %p10757 = scmp.le.s32.totalorder 2, %s20
      // Predicated region
      $region69: #{tpu_custom_call.1} parent=5 // pred_check
        %p10758 = pneg %p10757
      $region70: #{tpu_custom_call.1} parent=5 // pred_check_branch
        %10760 = sbr.rel (%p10758) target = $region72
      $region71: #{tpu_custom_call.1} parent=5 // pred_region
        %s10761 = ssub.s32 %s20, 2
        // Predicated region
        $region73: #{tpu_custom_call.1} parent=71 // pred_check
          %p10762 = pneg %p285
        $region74: #{tpu_custom_call.1} parent=71 // pred_check_branch
          %10764 = sbr.rel (%p10762) target = $region76
        $region75: #{tpu_custom_call.1} parent=71 // pred_region
          %s10765 = sand.u32 %s270, 1
          %s10766 = scalar_lea.sflag [#allocation3], %s10765
          %s10767 = sand.u32 %s270, 1
          %s10768 = scalar_lea.vmem [#allocation2], %s10767
          %10770 = dma.done %s10766, 16
        $region76: #{tpu_custom_call.1} parent=71 // pred_fallthru
          _
      $region72: #{tpu_custom_call.1} parent=5 // pred_fallthru
        _
    $region6: #{tpu_custom_call.1} parent=1 // loop_footer
      %s24 = sadd.s32 1, %s20
    $region7: #{tpu_custom_call.1} parent=1 // loop_footer_branch
      %19 = sbr.rel target = $region3
    $region8: #{tpu_custom_call.1} parent=1 // loop_exit
      _
    %10771 = vsyncpa [#allocation3], 1
    %s10772 = scalar_lea.sflag [#allocation3], 1
    %10773 = vsyncpa %s10772, 1

</llo_original>
